<compile_context>
chip_gen: v7x
topology: tpu7x:2x2x1
jax: 0.10.0
libtpu: 0.0.40
codegen_flags: <defaults>
</compile_context>

<pallas_src>
import numpy as np
import jax
import jax.numpy as jnp
from jax import lax
from jax.experimental import pallas as pl
from jax.experimental.pallas import tpu as pltpu

LANE = 128  # TPU lane width: channel dims are padded to a multiple of this.


def _resblock_kernel(xp_ref, w1_ref, b1_ref, w2_ref, b2_ref, ws_ref, o_ref, h1_ref):
    # One batch element per grid step.
    #   xp_ref : (1, H+4, WP+2, Cin)  input, zero-padded (2 top/bottom/left,
    #                                 2+align right), NHWC
    #   w1_ref : (9, Cin, C1P)        conv1 weights, one (Cin, C1P) slab per tap
    #   b1_ref : (1, C1P)
    #   w2_ref : (9, C1P, C2P)        conv2 weights, one (C1P, C2P) slab per tap
    #   b2_ref : (1, C2P)
    #   ws_ref : (Cin, C2P)           1x1 shortcut weight (no bias)
    #   o_ref  : (1, H, W, C2P)       lane-dense output (C2P == 128)
    #   h1_ref : (Hp, WP, C1P) VMEM   conv1 activation on the padded-h1 domain
    _, _, Wp2, Cin = xp_ref.shape
    Hp = xp_ref.shape[1] - 2          # = H + 2 (conv2's padded-input height)
    WP = Wp2 - 2                      # = round_up(W + 2, 8)
    H, W = o_ref.shape[1], o_ref.shape[2]
    C1P = w1_ref.shape[-1]
    C2P = w2_ref.shape[-1]
    Mp = Hp * WP                      # matmul rows for conv1
    M = H * W                         # matmul rows for conv2 / shortcut

    # ---- conv1 (3x3, Cin -> C1P) evaluated on the extended (Hp, WP) domain ----
    # Producing the activation directly on conv2's padded domain means there is
    # no zero-fill of a scratch buffer and no offset-1 partial store.
    acc1 = jnp.zeros((Mp, C1P), jnp.float32)
    for t in range(9):
        ky, kx = t // 3, t % 3
        patch = xp_ref[:, ky:ky + Hp, kx:kx + WP, :].reshape(Mp, Cin)
        acc1 = acc1 + jnp.dot(patch, w1_ref[t],
                              preferred_element_type=jnp.float32)
    h1 = jnp.maximum(acc1 + b1_ref[...], 0.0).reshape(Hp, WP, C1P)

    # Zero the halo ring (+ width-alignment columns): these positions must equal
    # conv2's zero padding, not conv1-of-padded-input (bias/ReLU make them != 0).
    row = lax.broadcasted_iota(jnp.int32, (Hp, WP, C1P), 0)
    col = lax.broadcasted_iota(jnp.int32, (Hp, WP, C1P), 1)
    interior = (row >= 1) & (row <= H) & (col >= 1) & (col <= W)
    h1_ref[...] = jnp.where(interior, h1, 0.0)   # single full aligned store

    # ---- conv2 (3x3, C1P -> C2P) + bias ---------------------------------------
    acc2 = jnp.zeros((M, C2P), jnp.float32)
    for t in range(9):
        ky, kx = t // 3, t % 3
        patch = h1_ref[ky:ky + H, kx:kx + W, :].reshape(M, C1P)
        acc2 = acc2 + jnp.dot(patch, w2_ref[t],
                              preferred_element_type=jnp.float32)
    acc2 = acc2 + b2_ref[...]

    # ---- shortcut (1x1 conv, no bias) -----------------------------------------
    x_int = xp_ref[:, 2:2 + H, 2:2 + W, :].reshape(M, Cin)
    sc = jnp.dot(x_int, ws_ref[...], preferred_element_type=jnp.float32)

    # ---- residual add + ReLU, full-lane-width store ---------------------------
    o_ref[...] = jnp.maximum(acc2 + sc, 0.0).reshape(1, H, W, C2P)


def _pad_last(a, target):
    return jnp.pad(a, [(0, 0)] * (a.ndim - 1) + [(0, target - a.shape[-1])])


def residual_block_pallas(x_nchw, w1, b1, w2, b2, ws):
    """x_nchw: (N, Cin, H, W) f32; weights HWIO. Returns (N, C2, H, W) f32."""
    N, Cin, H, W = x_nchw.shape
    C1 = w1.shape[-1]
    C2 = w2.shape[-1]
    C1P = pl.cdiv(C1, LANE) * LANE
    C2P = pl.cdiv(C2, LANE) * LANE

    Hp = H + 2                       # padded-h1 domain height
    WP = pl.cdiv(W + 2, 8) * 8       # padded-h1 domain width, sublane-aligned

    # --- one-time parameter prep (lane-padded, per-tap flattened) ---
    w1p = _pad_last(w1, C1P).reshape(9, Cin, C1P)
    b1p = _pad_last(b1, C1P).reshape(1, C1P)
    w2p = jnp.pad(w2, ((0, 0), (0, 0), (0, C1P - C1), (0, C2P - C2))
                  ).reshape(9, C1P, C2P)
    b2p = _pad_last(b2, C2P).reshape(1, C2P)
    wsp = _pad_last(ws, C2P)

    # --- input layout + halo padding (pad 2 so conv1 covers the (Hp, WP) domain)
    x_nhwc = jnp.transpose(x_nchw, (0, 2, 3, 1))
    xp = jnp.pad(x_nhwc, ((0, 0), (2, 2), (2, 2 + (WP - (W + 2))), (0, 0)))

    out_nhwc = pl.pallas_call(
        _resblock_kernel,
        out_shape=jax.ShapeDtypeStruct((N, H, W, C2P), jnp.float32),
        grid=(N,),
        in_specs=[
            pl.BlockSpec((1, H + 4, WP + 2, Cin), lambda n: (n, 0, 0, 0)),
            pl.BlockSpec((9, Cin, C1P), lambda n: (0, 0, 0)),
            pl.BlockSpec((1, C1P), lambda n: (0, 0)),
            pl.BlockSpec((9, C1P, C2P), lambda n: (0, 0, 0)),
            pl.BlockSpec((1, C2P), lambda n: (0, 0)),
            pl.BlockSpec((Cin, C2P), lambda n: (0, 0)),
        ],
        out_specs=pl.BlockSpec((1, H, W, C2P), lambda n: (n, 0, 0, 0)),
        scratch_shapes=[pltpu.VMEM((Hp, WP, C1P), jnp.float32)],
        compiler_params=pltpu.CompilerParams(
            dimension_semantics=("parallel",),
            vmem_limit_bytes=32 * 1024 * 1024),
    )(xp, w1p, b1p, w2p, b2p, wsp)

    # Drop the lane padding and return to NCHW.
    return jnp.transpose(out_nhwc[..., :C2], (0, 3, 1, 2))


def residual_block_ref(x_nchw, w1, b1, w2, b2, ws):
    """Pure-JAX reference (lax conv), NCHW in / NCHW out."""
    x = jnp.transpose(x_nchw, (0, 2, 3, 1))
    dn = ("NHWC", "HWIO", "NHWC")
    h = lax.conv_general_dilated(x, w1, (1, 1), "SAME", dimension_numbers=dn) + b1
    h = jnp.maximum(h, 0.0)
    h = lax.conv_general_dilated(h, w2, (1, 1), "SAME", dimension_numbers=dn) + b2
    sc = lax.conv_general_dilated(x, ws.reshape(1, 1, ws.shape[0], ws.shape[1]),
                                  (1, 1), "SAME", dimension_numbers=dn)
    return jnp.transpose(jnp.maximum(h + sc, 0.0), (0, 3, 1, 2))


if __name__ == "__main__":
    # Small shapes consistent with the module; batchnorm=False, dropout=0.0
    # (both inactive), so the block is conv->ReLU->conv (+ 1x1 shortcut) -> ReLU.
    N, Cin, H, W = 2, 4, 16, 16
    C1, C2 = 8, 6                     # channels=[8, 6], kernel_sizes=[3, 3]

    key = jax.random.PRNGKey(0)
    k_x, k_w1, k_b1, k_w2, k_b2, k_ws = jax.random.split(key, 6)

    x = jax.random.normal(k_x, (N, Cin, H, W), jnp.float32)
    w1 = jax.random.normal(k_w1, (3, 3, Cin, C1), jnp.float32) * 0.1
    b1 = jax.random.normal(k_b1, (C1,), jnp.float32) * 0.1
    w2 = jax.random.normal(k_w2, (3, 3, C1, C2), jnp.float32) * 0.1
    b2 = jax.random.normal(k_b2, (C2,), jnp.float32) * 0.1
    ws = jax.random.normal(k_ws, (Cin, C2), jnp.float32) * 0.1   # 1x1 shortcut

    out = jax.block_until_ready(residual_block_pallas(x, w1, b1, w2, b2, ws))
    ref = jax.block_until_ready(residual_block_ref(x, w1, b1, w2, b2, ws))
    np.testing.assert_allclose(np.asarray(out), np.asarray(ref),
                               rtol=1e-4, atol=1e-4)
    print("KERNEL_OK")
</pallas_src>

<mosaic_0001>
module attributes {stable_mosaic.version = 11 : i64} {
  func.func @_resblock_kernel(%arg0: i32, %arg1: memref<1x20x26x4xf32, #tpu.memory_space<vmem>>, %arg2: memref<9x4x128xf32, #tpu.memory_space<vmem>>, %arg3: memref<1x128xf32, #tpu.memory_space<vmem>>, %arg4: memref<9x128x128xf32, #tpu.memory_space<vmem>>, %arg5: memref<1x128xf32, #tpu.memory_space<vmem>>, %arg6: memref<4x128xf32, #tpu.memory_space<vmem>>, %arg7: memref<1x16x16x128xf32, #tpu.memory_space<vmem>>, %arg8: memref<18x24x128xf32, #tpu.memory_space<vmem>>) attributes {dimension_semantics = [#tpu.dimension_semantics<parallel>], iteration_bounds = array<i64: 2>, scalar_prefetch = 0 : i64, scratch_operands = 1 : i64, tpu.core_type = #tpu.core_type<tc>, window_params = [{transform_indices = @transform_0, window_bounds = array<i64: 1, 20, 26, 4>}, {pipeline_mode = #tpu.pipeline_mode<synchronous>, transform_indices = @transform_1, window_bounds = array<i64: 9, 4, 128>}, {pipeline_mode = #tpu.pipeline_mode<synchronous>, transform_indices = @transform_2, window_bounds = array<i64: 1, 128>}, {pipeline_mode = #tpu.pipeline_mode<synchronous>, transform_indices = @transform_3, window_bounds = array<i64: 9, 128, 128>}, {pipeline_mode = #tpu.pipeline_mode<synchronous>, transform_indices = @transform_4, window_bounds = array<i64: 1, 128>}, {pipeline_mode = #tpu.pipeline_mode<synchronous>, transform_indices = @transform_5, window_bounds = array<i64: 4, 128>}, {transform_indices = @transform_6, window_bounds = array<i64: 1, 16, 16, 128>}]} {
    %cst = arith.constant 0.000000e+00 : f32
    %0 = vector.broadcast %cst : f32 to vector<432x128xf32>
    %c0 = arith.constant 0 : index
    %c0_0 = arith.constant 0 : index
    %c0_1 = arith.constant 0 : index
    %c0_2 = arith.constant 0 : index
    %1 = vector.load %arg1[%c0, %c0_0, %c0_1, %c0_2] : memref<1x20x26x4xf32, #tpu.memory_space<vmem>>, vector<1x18x24x4xf32>
    %2 = vector.shape_cast %1 : vector<1x18x24x4xf32> to vector<432x4xf32>
    %c0_3 = arith.constant 0 : index
    %c0_4 = arith.constant 0 : index
    %c0_5 = arith.constant 0 : index
    %3 = vector.load %arg2[%c0_3, %c0_4, %c0_5] : memref<9x4x128xf32, #tpu.memory_space<vmem>>, vector<1x4x128xf32>
    %4 = vector.shape_cast %3 : vector<1x4x128xf32> to vector<4x128xf32>
    %cst_6 = arith.constant dense<0.000000e+00> : vector<432x128xf32>
    %5 = tpu.matmul %2, %4, %cst_6 {dimension_numbers = #tpu.dot_dimension_numbers<[1], [0], [0], [1], [0, 0, 1, 1], [], []>} : vector<432x4xf32>, vector<4x128xf32>, vector<432x128xf32> -> vector<432x128xf32>
    %6 = arith.addf %0, %5 : vector<432x128xf32>
    %c0_7 = arith.constant 0 : index
    %c0_8 = arith.constant 0 : index
    %c1 = arith.constant 1 : index
    %c0_9 = arith.constant 0 : index
    %7 = vector.load %arg1[%c0_7, %c0_8, %c1, %c0_9] : memref<1x20x26x4xf32, #tpu.memory_space<vmem>>, vector<1x18x24x4xf32>
    %8 = vector.shape_cast %7 : vector<1x18x24x4xf32> to vector<432x4xf32>
    %c1_10 = arith.constant 1 : index
    %c0_11 = arith.constant 0 : index
    %c0_12 = arith.constant 0 : index
    %9 = vector.load %arg2[%c1_10, %c0_11, %c0_12] : memref<9x4x128xf32, #tpu.memory_space<vmem>>, vector<1x4x128xf32>
    %10 = vector.shape_cast %9 : vector<1x4x128xf32> to vector<4x128xf32>
    %cst_13 = arith.constant dense<0.000000e+00> : vector<432x128xf32>
    %11 = tpu.matmul %8, %10, %cst_13 {dimension_numbers = #tpu.dot_dimension_numbers<[1], [0], [0], [1], [0, 0, 1, 1], [], []>} : vector<432x4xf32>, vector<4x128xf32>, vector<432x128xf32> -> vector<432x128xf32>
    %12 = arith.addf %6, %11 : vector<432x128xf32>
    %c0_14 = arith.constant 0 : index
    %c0_15 = arith.constant 0 : index
    %c2 = arith.constant 2 : index
    %c0_16 = arith.constant 0 : index
    %13 = vector.load %arg1[%c0_14, %c0_15, %c2, %c0_16] : memref<1x20x26x4xf32, #tpu.memory_space<vmem>>, vector<1x18x24x4xf32>
    %14 = vector.shape_cast %13 : vector<1x18x24x4xf32> to vector<432x4xf32>
    %c2_17 = arith.constant 2 : index
    %c0_18 = arith.constant 0 : index
    %c0_19 = arith.constant 0 : index
    %15 = vector.load %arg2[%c2_17, %c0_18, %c0_19] : memref<9x4x128xf32, #tpu.memory_space<vmem>>, vector<1x4x128xf32>
    %16 = vector.shape_cast %15 : vector<1x4x128xf32> to vector<4x128xf32>
    %cst_20 = arith.constant dense<0.000000e+00> : vector<432x128xf32>
    %17 = tpu.matmul %14, %16, %cst_20 {dimension_numbers = #tpu.dot_dimension_numbers<[1], [0], [0], [1], [0, 0, 1, 1], [], []>} : vector<432x4xf32>, vector<4x128xf32>, vector<432x128xf32> -> vector<432x128xf32>
    %18 = arith.addf %12, %17 : vector<432x128xf32>
    %c0_21 = arith.constant 0 : index
    %c1_22 = arith.constant 1 : index
    %c0_23 = arith.constant 0 : index
    %c0_24 = arith.constant 0 : index
    %19 = vector.load %arg1[%c0_21, %c1_22, %c0_23, %c0_24] : memref<1x20x26x4xf32, #tpu.memory_space<vmem>>, vector<1x18x24x4xf32>
    %20 = vector.shape_cast %19 : vector<1x18x24x4xf32> to vector<432x4xf32>
    %c3 = arith.constant 3 : index
    %c0_25 = arith.constant 0 : index
    %c0_26 = arith.constant 0 : index
    %21 = vector.load %arg2[%c3, %c0_25, %c0_26] : memref<9x4x128xf32, #tpu.memory_space<vmem>>, vector<1x4x128xf32>
    %22 = vector.shape_cast %21 : vector<1x4x128xf32> to vector<4x128xf32>
    %cst_27 = arith.constant dense<0.000000e+00> : vector<432x128xf32>
    %23 = tpu.matmul %20, %22, %cst_27 {dimension_numbers = #tpu.dot_dimension_numbers<[1], [0], [0], [1], [0, 0, 1, 1], [], []>} : vector<432x4xf32>, vector<4x128xf32>, vector<432x128xf32> -> vector<432x128xf32>
    %24 = arith.addf %18, %23 : vector<432x128xf32>
    %c0_28 = arith.constant 0 : index
    %c1_29 = arith.constant 1 : index
    %c1_30 = arith.constant 1 : index
    %c0_31 = arith.constant 0 : index
    %25 = vector.load %arg1[%c0_28, %c1_29, %c1_30, %c0_31] : memref<1x20x26x4xf32, #tpu.memory_space<vmem>>, vector<1x18x24x4xf32>
    %26 = vector.shape_cast %25 : vector<1x18x24x4xf32> to vector<432x4xf32>
    %c4 = arith.constant 4 : index
    %c0_32 = arith.constant 0 : index
    %c0_33 = arith.constant 0 : index
    %27 = vector.load %arg2[%c4, %c0_32, %c0_33] : memref<9x4x128xf32, #tpu.memory_space<vmem>>, vector<1x4x128xf32>
    %28 = vector.shape_cast %27 : vector<1x4x128xf32> to vector<4x128xf32>
    %cst_34 = arith.constant dense<0.000000e+00> : vector<432x128xf32>
    %29 = tpu.matmul %26, %28, %cst_34 {dimension_numbers = #tpu.dot_dimension_numbers<[1], [0], [0], [1], [0, 0, 1, 1], [], []>} : vector<432x4xf32>, vector<4x128xf32>, vector<432x128xf32> -> vector<432x128xf32>
    %30 = arith.addf %24, %29 : vector<432x128xf32>
    %c0_35 = arith.constant 0 : index
    %c1_36 = arith.constant 1 : index
    %c2_37 = arith.constant 2 : index
    %c0_38 = arith.constant 0 : index
    %31 = vector.load %arg1[%c0_35, %c1_36, %c2_37, %c0_38] : memref<1x20x26x4xf32, #tpu.memory_space<vmem>>, vector<1x18x24x4xf32>
    %32 = vector.shape_cast %31 : vector<1x18x24x4xf32> to vector<432x4xf32>
    %c5 = arith.constant 5 : index
    %c0_39 = arith.constant 0 : index
    %c0_40 = arith.constant 0 : index
    %33 = vector.load %arg2[%c5, %c0_39, %c0_40] : memref<9x4x128xf32, #tpu.memory_space<vmem>>, vector<1x4x128xf32>
    %34 = vector.shape_cast %33 : vector<1x4x128xf32> to vector<4x128xf32>
    %cst_41 = arith.constant dense<0.000000e+00> : vector<432x128xf32>
    %35 = tpu.matmul %32, %34, %cst_41 {dimension_numbers = #tpu.dot_dimension_numbers<[1], [0], [0], [1], [0, 0, 1, 1], [], []>} : vector<432x4xf32>, vector<4x128xf32>, vector<432x128xf32> -> vector<432x128xf32>
    %36 = arith.addf %30, %35 : vector<432x128xf32>
    %c0_42 = arith.constant 0 : index
    %c2_43 = arith.constant 2 : index
    %c0_44 = arith.constant 0 : index
    %c0_45 = arith.constant 0 : index
    %37 = vector.load %arg1[%c0_42, %c2_43, %c0_44, %c0_45] : memref<1x20x26x4xf32, #tpu.memory_space<vmem>>, vector<1x18x24x4xf32>
    %38 = vector.shape_cast %37 : vector<1x18x24x4xf32> to vector<432x4xf32>
    %c6 = arith.constant 6 : index
    %c0_46 = arith.constant 0 : index
    %c0_47 = arith.constant 0 : index
    %39 = vector.load %arg2[%c6, %c0_46, %c0_47] : memref<9x4x128xf32, #tpu.memory_space<vmem>>, vector<1x4x128xf32>
    %40 = vector.shape_cast %39 : vector<1x4x128xf32> to vector<4x128xf32>
    %cst_48 = arith.constant dense<0.000000e+00> : vector<432x128xf32>
    %41 = tpu.matmul %38, %40, %cst_48 {dimension_numbers = #tpu.dot_dimension_numbers<[1], [0], [0], [1], [0, 0, 1, 1], [], []>} : vector<432x4xf32>, vector<4x128xf32>, vector<432x128xf32> -> vector<432x128xf32>
    %42 = arith.addf %36, %41 : vector<432x128xf32>
    %c0_49 = arith.constant 0 : index
    %c2_50 = arith.constant 2 : index
    %c1_51 = arith.constant 1 : index
    %c0_52 = arith.constant 0 : index
    %43 = vector.load %arg1[%c0_49, %c2_50, %c1_51, %c0_52] : memref<1x20x26x4xf32, #tpu.memory_space<vmem>>, vector<1x18x24x4xf32>
    %44 = vector.shape_cast %43 : vector<1x18x24x4xf32> to vector<432x4xf32>
    %c7 = arith.constant 7 : index
    %c0_53 = arith.constant 0 : index
    %c0_54 = arith.constant 0 : index
    %45 = vector.load %arg2[%c7, %c0_53, %c0_54] : memref<9x4x128xf32, #tpu.memory_space<vmem>>, vector<1x4x128xf32>
    %46 = vector.shape_cast %45 : vector<1x4x128xf32> to vector<4x128xf32>
    %cst_55 = arith.constant dense<0.000000e+00> : vector<432x128xf32>
    %47 = tpu.matmul %44, %46, %cst_55 {dimension_numbers = #tpu.dot_dimension_numbers<[1], [0], [0], [1], [0, 0, 1, 1], [], []>} : vector<432x4xf32>, vector<4x128xf32>, vector<432x128xf32> -> vector<432x128xf32>
    %48 = arith.addf %42, %47 : vector<432x128xf32>
    %c0_56 = arith.constant 0 : index
    %c2_57 = arith.constant 2 : index
    %c2_58 = arith.constant 2 : index
    %c0_59 = arith.constant 0 : index
    %49 = vector.load %arg1[%c0_56, %c2_57, %c2_58, %c0_59] : memref<1x20x26x4xf32, #tpu.memory_space<vmem>>, vector<1x18x24x4xf32>
    %50 = vector.shape_cast %49 : vector<1x18x24x4xf32> to vector<432x4xf32>
    %c8 = arith.constant 8 : index
    %c0_60 = arith.constant 0 : index
    %c0_61 = arith.constant 0 : index
    %51 = vector.load %arg2[%c8, %c0_60, %c0_61] : memref<9x4x128xf32, #tpu.memory_space<vmem>>, vector<1x4x128xf32>
    %52 = vector.shape_cast %51 : vector<1x4x128xf32> to vector<4x128xf32>
    %cst_62 = arith.constant dense<0.000000e+00> : vector<432x128xf32>
    %53 = tpu.matmul %50, %52, %cst_62 {dimension_numbers = #tpu.dot_dimension_numbers<[1], [0], [0], [1], [0, 0, 1, 1], [], []>} : vector<432x4xf32>, vector<4x128xf32>, vector<432x128xf32> -> vector<432x128xf32>
    %54 = arith.addf %48, %53 : vector<432x128xf32>
    %c0_63 = arith.constant 0 : index
    %c0_64 = arith.constant 0 : index
    %55 = vector.load %arg3[%c0_63, %c0_64] : memref<1x128xf32, #tpu.memory_space<vmem>>, vector<1x128xf32>
    %56 = vector.broadcast %55 : vector<1x128xf32> to vector<432x128xf32>
    %57 = arith.addf %54, %56 : vector<432x128xf32>
    %cst_65 = arith.constant 0.000000e+00 : f32
    %58 = vector.broadcast %cst_65 : f32 to vector<432x128xf32>
    %59 = arith.maximumf %57, %58 : vector<432x128xf32>
    %60 = vector.shape_cast %59 : vector<432x128xf32> to vector<18x24x128xf32>
    %61 = tpu.iota {dimensions = array<i32: 0>} : vector<18x24x128xi32>
    %62 = tpu.iota {dimensions = array<i32: 1>} : vector<18x24x128xi32>
    %c1_i32 = arith.constant 1 : i32
    %63 = vector.broadcast %c1_i32 : i32 to vector<18x24x128xi32>
    %64 = arith.cmpi sge, %61, %63 : vector<18x24x128xi32>
    %c16_i32 = arith.constant 16 : i32
    %65 = vector.broadcast %c16_i32 : i32 to vector<18x24x128xi32>
    %66 = arith.cmpi sle, %61, %65 : vector<18x24x128xi32>
    %67 = arith.andi %64, %66 : vector<18x24x128xi1>
    %c1_i32_66 = arith.constant 1 : i32
    %68 = vector.broadcast %c1_i32_66 : i32 to vector<18x24x128xi32>
    %69 = arith.cmpi sge, %62, %68 : vector<18x24x128xi32>
    %70 = arith.andi %67, %69 : vector<18x24x128xi1>
    %c16_i32_67 = arith.constant 16 : i32
    %71 = vector.broadcast %c16_i32_67 : i32 to vector<18x24x128xi32>
    %72 = arith.cmpi sle, %62, %71 : vector<18x24x128xi32>
    %73 = arith.andi %70, %72 : vector<18x24x128xi1>
    %cst_68 = arith.constant 0.000000e+00 : f32
    %74 = vector.broadcast %cst_68 : f32 to vector<18x24x128xf32>
    %75 = arith.select %73, %60, %74 : vector<18x24x128xi1>, vector<18x24x128xf32>
    %c0_69 = arith.constant 0 : index
    %c0_70 = arith.constant 0 : index
    %c0_71 = arith.constant 0 : index
    %76 = vector.load %arg8[%c0_69, %c0_70, %c0_71] : memref<18x24x128xf32, #tpu.memory_space<vmem>>, vector<18x24x128xf32>
    tpu.vector_store %arg8[%c0_69, %c0_70, %c0_71], %75 {strides = array<i32>} : memref<18x24x128xf32, #tpu.memory_space<vmem>>, vector<18x24x128xf32>,
    %cst_72 = arith.constant 0.000000e+00 : f32
    %77 = vector.broadcast %cst_72 : f32 to vector<256x128xf32>
    %c0_73 = arith.constant 0 : index
    %c0_74 = arith.constant 0 : index
    %c0_75 = arith.constant 0 : index
    %78 = vector.load %arg8[%c0_73, %c0_74, %c0_75] : memref<18x24x128xf32, #tpu.memory_space<vmem>>, vector<16x16x128xf32>
    %79 = vector.shape_cast %78 : vector<16x16x128xf32> to vector<256x128xf32>
    %c0_76 = arith.constant 0 : index
    %c0_77 = arith.constant 0 : index
    %c0_78 = arith.constant 0 : index
    %80 = vector.load %arg4[%c0_76, %c0_77, %c0_78] : memref<9x128x128xf32, #tpu.memory_space<vmem>>, vector<1x128x128xf32>
    %81 = vector.shape_cast %80 : vector<1x128x128xf32> to vector<128x128xf32>
    %cst_79 = arith.constant dense<0.000000e+00> : vector<256x128xf32>
    %82 = tpu.matmul %79, %81, %cst_79 {dimension_numbers = #tpu.dot_dimension_numbers<[1], [0], [0], [1], [0, 0, 1, 1], [], []>} : vector<256x128xf32>, vector<128x128xf32>, vector<256x128xf32> -> vector<256x128xf32>
    %83 = arith.addf %77, %82 : vector<256x128xf32>
    %c0_80 = arith.constant 0 : index
    %c1_81 = arith.constant 1 : index
    %c0_82 = arith.constant 0 : index
    %84 = vector.load %arg8[%c0_80, %c1_81, %c0_82] : memref<18x24x128xf32, #tpu.memory_space<vmem>>, vector<16x16x128xf32>
    %85 = vector.shape_cast %84 : vector<16x16x128xf32> to vector<256x128xf32>
    %c1_83 = arith.constant 1 : index
    %c0_84 = arith.constant 0 : index
    %c0_85 = arith.constant 0 : index
    %86 = vector.load %arg4[%c1_83, %c0_84, %c0_85] : memref<9x128x128xf32, #tpu.memory_space<vmem>>, vector<1x128x128xf32>
    %87 = vector.shape_cast %86 : vector<1x128x128xf32> to vector<128x128xf32>
    %cst_86 = arith.constant dense<0.000000e+00> : vector<256x128xf32>
    %88 = tpu.matmul %85, %87, %cst_86 {dimension_numbers = #tpu.dot_dimension_numbers<[1], [0], [0], [1], [0, 0, 1, 1], [], []>} : vector<256x128xf32>, vector<128x128xf32>, vector<256x128xf32> -> vector<256x128xf32>
    %89 = arith.addf %83, %88 : vector<256x128xf32>
    %c0_87 = arith.constant 0 : index
    %c2_88 = arith.constant 2 : index
    %c0_89 = arith.constant 0 : index
    %90 = vector.load %arg8[%c0_87, %c2_88, %c0_89] : memref<18x24x128xf32, #tpu.memory_space<vmem>>, vector<16x16x128xf32>
    %91 = vector.shape_cast %90 : vector<16x16x128xf32> to vector<256x128xf32>
    %c2_90 = arith.constant 2 : index
    %c0_91 = arith.constant 0 : index
    %c0_92 = arith.constant 0 : index
    %92 = vector.load %arg4[%c2_90, %c0_91, %c0_92] : memref<9x128x128xf32, #tpu.memory_space<vmem>>, vector<1x128x128xf32>
    %93 = vector.shape_cast %92 : vector<1x128x128xf32> to vector<128x128xf32>
    %cst_93 = arith.constant dense<0.000000e+00> : vector<256x128xf32>
    %94 = tpu.matmul %91, %93, %cst_93 {dimension_numbers = #tpu.dot_dimension_numbers<[1], [0], [0], [1], [0, 0, 1, 1], [], []>} : vector<256x128xf32>, vector<128x128xf32>, vector<256x128xf32> -> vector<256x128xf32>
    %95 = arith.addf %89, %94 : vector<256x128xf32>
    %c1_94 = arith.constant 1 : index
    %c0_95 = arith.constant 0 : index
    %c0_96 = arith.constant 0 : index
    %96 = vector.load %arg8[%c1_94, %c0_95, %c0_96] : memref<18x24x128xf32, #tpu.memory_space<vmem>>, vector<16x16x128xf32>
    %97 = vector.shape_cast %96 : vector<16x16x128xf32> to vector<256x128xf32>
    %c3_97 = arith.constant 3 : index
    %c0_98 = arith.constant 0 : index
    %c0_99 = arith.constant 0 : index
    %98 = vector.load %arg4[%c3_97, %c0_98, %c0_99] : memref<9x128x128xf32, #tpu.memory_space<vmem>>, vector<1x128x128xf32>
    %99 = vector.shape_cast %98 : vector<1x128x128xf32> to vector<128x128xf32>
    %cst_100 = arith.constant dense<0.000000e+00> : vector<256x128xf32>
    %100 = tpu.matmul %97, %99, %cst_100 {dimension_numbers = #tpu.dot_dimension_numbers<[1], [0], [0], [1], [0, 0, 1, 1], [], []>} : vector<256x128xf32>, vector<128x128xf32>, vector<256x128xf32> -> vector<256x128xf32>
    %101 = arith.addf %95, %100 : vector<256x128xf32>
    %c1_101 = arith.constant 1 : index
    %c1_102 = arith.constant 1 : index
    %c0_103 = arith.constant 0 : index
    %102 = vector.load %arg8[%c1_101, %c1_102, %c0_103] : memref<18x24x128xf32, #tpu.memory_space<vmem>>, vector<16x16x128xf32>
    %103 = vector.shape_cast %102 : vector<16x16x128xf32> to vector<256x128xf32>
    %c4_104 = arith.constant 4 : index
    %c0_105 = arith.constant 0 : index
    %c0_106 = arith.constant 0 : index
    %104 = vector.load %arg4[%c4_104, %c0_105, %c0_106] : memref<9x128x128xf32, #tpu.memory_space<vmem>>, vector<1x128x128xf32>
    %105 = vector.shape_cast %104 : vector<1x128x128xf32> to vector<128x128xf32>
    %cst_107 = arith.constant dense<0.000000e+00> : vector<256x128xf32>
    %106 = tpu.matmul %103, %105, %cst_107 {dimension_numbers = #tpu.dot_dimension_numbers<[1], [0], [0], [1], [0, 0, 1, 1], [], []>} : vector<256x128xf32>, vector<128x128xf32>, vector<256x128xf32> -> vector<256x128xf32>
    %107 = arith.addf %101, %106 : vector<256x128xf32>
    %c1_108 = arith.constant 1 : index
    %c2_109 = arith.constant 2 : index
    %c0_110 = arith.constant 0 : index
    %108 = vector.load %arg8[%c1_108, %c2_109, %c0_110] : memref<18x24x128xf32, #tpu.memory_space<vmem>>, vector<16x16x128xf32>
    %109 = vector.shape_cast %108 : vector<16x16x128xf32> to vector<256x128xf32>
    %c5_111 = arith.constant 5 : index
    %c0_112 = arith.constant 0 : index
    %c0_113 = arith.constant 0 : index
    %110 = vector.load %arg4[%c5_111, %c0_112, %c0_113] : memref<9x128x128xf32, #tpu.memory_space<vmem>>, vector<1x128x128xf32>
    %111 = vector.shape_cast %110 : vector<1x128x128xf32> to vector<128x128xf32>
    %cst_114 = arith.constant dense<0.000000e+00> : vector<256x128xf32>
    %112 = tpu.matmul %109, %111, %cst_114 {dimension_numbers = #tpu.dot_dimension_numbers<[1], [0], [0], [1], [0, 0, 1, 1], [], []>} : vector<256x128xf32>, vector<128x128xf32>, vector<256x128xf32> -> vector<256x128xf32>
    %113 = arith.addf %107, %112 : vector<256x128xf32>
    %c2_115 = arith.constant 2 : index
    %c0_116 = arith.constant 0 : index
    %c0_117 = arith.constant 0 : index
    %114 = vector.load %arg8[%c2_115, %c0_116, %c0_117] : memref<18x24x128xf32, #tpu.memory_space<vmem>>, vector<16x16x128xf32>
    %115 = vector.shape_cast %114 : vector<16x16x128xf32> to vector<256x128xf32>
    %c6_118 = arith.constant 6 : index
    %c0_119 = arith.constant 0 : index
    %c0_120 = arith.constant 0 : index
    %116 = vector.load %arg4[%c6_118, %c0_119, %c0_120] : memref<9x128x128xf32, #tpu.memory_space<vmem>>, vector<1x128x128xf32>
    %117 = vector.shape_cast %116 : vector<1x128x128xf32> to vector<128x128xf32>
    %cst_121 = arith.constant dense<0.000000e+00> : vector<256x128xf32>
    %118 = tpu.matmul %115, %117, %cst_121 {dimension_numbers = #tpu.dot_dimension_numbers<[1], [0], [0], [1], [0, 0, 1, 1], [], []>} : vector<256x128xf32>, vector<128x128xf32>, vector<256x128xf32> -> vector<256x128xf32>
    %119 = arith.addf %113, %118 : vector<256x128xf32>
    %c2_122 = arith.constant 2 : index
    %c1_123 = arith.constant 1 : index
    %c0_124 = arith.constant 0 : index
    %120 = vector.load %arg8[%c2_122, %c1_123, %c0_124] : memref<18x24x128xf32, #tpu.memory_space<vmem>>, vector<16x16x128xf32>
    %121 = vector.shape_cast %120 : vector<16x16x128xf32> to vector<256x128xf32>
    %c7_125 = arith.constant 7 : index
    %c0_126 = arith.constant 0 : index
    %c0_127 = arith.constant 0 : index
    %122 = vector.load %arg4[%c7_125, %c0_126, %c0_127] : memref<9x128x128xf32, #tpu.memory_space<vmem>>, vector<1x128x128xf32>
    %123 = vector.shape_cast %122 : vector<1x128x128xf32> to vector<128x128xf32>
    %cst_128 = arith.constant dense<0.000000e+00> : vector<256x128xf32>
    %124 = tpu.matmul %121, %123, %cst_128 {dimension_numbers = #tpu.dot_dimension_numbers<[1], [0], [0], [1], [0, 0, 1, 1], [], []>} : vector<256x128xf32>, vector<128x128xf32>, vector<256x128xf32> -> vector<256x128xf32>
    %125 = arith.addf %119, %124 : vector<256x128xf32>
    %c2_129 = arith.constant 2 : index
    %c2_130 = arith.constant 2 : index
    %c0_131 = arith.constant 0 : index
    %126 = vector.load %arg8[%c2_129, %c2_130, %c0_131] : memref<18x24x128xf32, #tpu.memory_space<vmem>>, vector<16x16x128xf32>
    %127 = vector.shape_cast %126 : vector<16x16x128xf32> to vector<256x128xf32>
    %c8_132 = arith.constant 8 : index
    %c0_133 = arith.constant 0 : index
    %c0_134 = arith.constant 0 : index
    %128 = vector.load %arg4[%c8_132, %c0_133, %c0_134] : memref<9x128x128xf32, #tpu.memory_space<vmem>>, vector<1x128x128xf32>
    %129 = vector.shape_cast %128 : vector<1x128x128xf32> to vector<128x128xf32>
    %cst_135 = arith.constant dense<0.000000e+00> : vector<256x128xf32>
    %130 = tpu.matmul %127, %129, %cst_135 {dimension_numbers = #tpu.dot_dimension_numbers<[1], [0], [0], [1], [0, 0, 1, 1], [], []>} : vector<256x128xf32>, vector<128x128xf32>, vector<256x128xf32> -> vector<256x128xf32>
    %131 = arith.addf %125, %130 : vector<256x128xf32>
    %c0_136 = arith.constant 0 : index
    %c0_137 = arith.constant 0 : index
    %132 = vector.load %arg5[%c0_136, %c0_137] : memref<1x128xf32, #tpu.memory_space<vmem>>, vector<1x128xf32>
    %133 = vector.broadcast %132 : vector<1x128xf32> to vector<256x128xf32>
    %134 = arith.addf %131, %133 : vector<256x128xf32>
    %c0_138 = arith.constant 0 : index
    %c2_139 = arith.constant 2 : index
    %c2_140 = arith.constant 2 : index
    %c0_141 = arith.constant 0 : index
    %135 = vector.load %arg1[%c0_138, %c2_139, %c2_140, %c0_141] : memref<1x20x26x4xf32, #tpu.memory_space<vmem>>, vector<1x16x16x4xf32>
    %136 = vector.shape_cast %135 : vector<1x16x16x4xf32> to vector<256x4xf32>
    %c0_142 = arith.constant 0 : index
    %c0_143 = arith.constant 0 : index
    %137 = vector.load %arg6[%c0_142, %c0_143] : memref<4x128xf32, #tpu.memory_space<vmem>>, vector<4x128xf32>
    %cst_144 = arith.constant dense<0.000000e+00> : vector<256x128xf32>
    %138 = tpu.matmul %136, %137, %cst_144 {dimension_numbers = #tpu.dot_dimension_numbers<[1], [0], [0], [1], [0, 0, 1, 1], [], []>} : vector<256x4xf32>, vector<4x128xf32>, vector<256x128xf32> -> vector<256x128xf32>
    %139 = arith.addf %134, %138 : vector<256x128xf32>
    %cst_145 = arith.constant 0.000000e+00 : f32
    %140 = vector.broadcast %cst_145 : f32 to vector<256x128xf32>
    %141 = arith.maximumf %139, %140 : vector<256x128xf32>
    %142 = vector.shape_cast %141 : vector<256x128xf32> to vector<1x16x16x128xf32>
    %c0_146 = arith.constant 0 : index
    %c0_147 = arith.constant 0 : index
    %c0_148 = arith.constant 0 : index
    %c0_149 = arith.constant 0 : index
    %143 = vector.load %arg7[%c0_146, %c0_147, %c0_148, %c0_149] : memref<1x16x16x128xf32, #tpu.memory_space<vmem>>, vector<1x16x16x128xf32>
    tpu.vector_store %arg7[%c0_146, %c0_147, %c0_148, %c0_149], %142 {strides = array<i32>} : memref<1x16x16x128xf32, #tpu.memory_space<vmem>>, vector<1x16x16x128xf32>,
    return
  }
  func.func @transform_0(%arg0: i32) -> (i32, i32, i32, i32) {
    %c0_i32 = arith.constant 0 : i32
    %c0_i32_0 = arith.constant 0 : i32
    %c0_i32_1 = arith.constant 0 : i32
    %c0_i32_2 = arith.constant 0 : i32
    return %arg0, %c0_i32, %c0_i32_0, %c0_i32_1 : i32, i32, i32, i32
  }
  func.func @transform_1(%arg0: i32) -> (i32, i32, i32) {
    %c0_i32 = arith.constant 0 : i32
    %c0_i32_0 = arith.constant 0 : i32
    %c0_i32_1 = arith.constant 0 : i32
    %c0_i32_2 = arith.constant 0 : i32
    return %c0_i32, %c0_i32_0, %c0_i32_1 : i32, i32, i32
  }
  func.func @transform_2(%arg0: i32) -> (i32, i32) {
    %c0_i32 = arith.constant 0 : i32
    %c0_i32_0 = arith.constant 0 : i32
    %c0_i32_1 = arith.constant 0 : i32
    return %c0_i32, %c0_i32_0 : i32, i32
  }
  func.func @transform_3(%arg0: i32) -> (i32, i32, i32) {
    %c0_i32 = arith.constant 0 : i32
    %c0_i32_0 = arith.constant 0 : i32
    %c0_i32_1 = arith.constant 0 : i32
    %c0_i32_2 = arith.constant 0 : i32
    return %c0_i32, %c0_i32_0, %c0_i32_1 : i32, i32, i32
  }
  func.func @transform_4(%arg0: i32) -> (i32, i32) {
    %c0_i32 = arith.constant 0 : i32
    %c0_i32_0 = arith.constant 0 : i32
    %c0_i32_1 = arith.constant 0 : i32
    return %c0_i32, %c0_i32_0 : i32, i32
  }
  func.func @transform_5(%arg0: i32) -> (i32, i32) {
    %c0_i32 = arith.constant 0 : i32
    %c0_i32_0 = arith.constant 0 : i32
    %c0_i32_1 = arith.constant 0 : i32
    return %c0_i32, %c0_i32_0 : i32, i32
  }
  func.func @transform_6(%arg0: i32) -> (i32, i32, i32, i32) {
    %c0_i32 = arith.constant 0 : i32
    %c0_i32_0 = arith.constant 0 : i32
    %c0_i32_1 = arith.constant 0 : i32
    %c0_i32_2 = arith.constant 0 : i32
    return %arg0, %c0_i32, %c0_i32_0, %c0_i32_1 : i32, i32, i32, i32
  }
}

</mosaic_0001>

<llo_original>
// kernel: tpu_custom_call.1
$region0: #{tpu_custom_call.1}
  #allocation0 [shape = 'u32[]', space=smem, size = 0x4, offset = 0x4, fixed_abs, tag = 'smem constant byte address 0x4 - core index']
  #allocation1 [shape = 'u32[144,128]{1,0:T(1,128)}', space=vmem, size = 0x12000, scoped, tag = 'internal scratch']
  #allocation2 [shape = 'f32[18,24,128]{2,1,0:T(8,128)}', space=vmem, size = 0x36000, scoped, tag = 'scratch operand']
  %s0 = inlined_call_operand.vmem [shape: f32[2,20,26,4], index: 0, kind: input, shape index: {}]
  %s1 = inlined_call_operand.vmem [shape: f32[9,4,128], index: 1, kind: input, shape index: {}]
  %s2 = inlined_call_operand.vmem [shape: f32[1,128], index: 2, kind: input, shape index: {}]
  %s3 = inlined_call_operand.vmem [shape: f32[9,128,128], index: 3, kind: input, shape index: {}]
  %s4 = inlined_call_operand.vmem [shape: f32[1,128], index: 4, kind: input, shape index: {}]
  %s5 = inlined_call_operand.vmem [shape: f32[4,128], index: 5, kind: input, shape index: {}]
  %s6 = inlined_call_operand.hbm [shape: f32[2,16,16,128], index: 6, kind: output, shape index: {}]
  %s7 = sld [smem:[#allocation0]]
  $region57: #{tpu_custom_call.1} parent=0
    _
  %s9 = ssub.s32 1, %s7
  %s10 = scalar_select 0, %s9, %s7
  $region1: #{tpu_custom_call.1} parent=0
    #allocation3 [shape = 'u8[262144]{0}', space=vmem, size = 0x40000, scoped, tag = 'output window, operand 0']
    #allocation4 [shape = 's32[2]{0}', space=sflag, size = 0x8, scoped, tag = 'scoped memory for tpu_custom_call.1']
    %11 = vsyncpa [#allocation4], 0
    %s12 = scalar_lea.sflag [#allocation4], 1
    %13 = vsyncpa %s12, 0
    loop: start=0, step=1, limit=4
    $region2: #{tpu_custom_call.1} parent=1 // loop_pre_header
      _
    $region3: #{tpu_custom_call.1} parent=1 // loop_header
      %s15 = sphi 0, %s19
      %p16 = scmp.ge.s32.totalorder %s15, 4
      %s25 = sphi 0, %s27
      %s28 = sphi 0, %s25
      %s29 = sphi 0, %s28
      %s45 = sphi 0, %s29
      %s49 = sphi 0, %s49
      %s51 = sphi 0, %s49
      %s52 = sphi 0, %s51
      %s66 = sphi 0, %s52
      %s70 = sphi 0, %s70
      %s72 = sphi 0, %s70
      %s73 = sphi 0, %s72
      %s87 = sphi 0, %s73
      %s91 = sphi 0, %s91
      %s93 = sphi 0, %s91
      %s94 = sphi 0, %s93
      %s108 = sphi 0, %s94
      %s112 = sphi 0, %s112
      %s114 = sphi 0, %s112
      %s115 = sphi 0, %s114
      %s129 = sphi 0, %s115
      %s133 = sphi 0, %s133
      %s135 = sphi 0, %s133
      %s136 = sphi 0, %s135
      %s150 = sphi 0, %s136
      %s156 = sphi 0, %s158
      %s159 = sphi 0, %s156
      %s160 = sphi 0, %s159
      %s176 = sphi 0, %s160
    $region4: #{tpu_custom_call.1} parent=1 // loop_header_branch
      %18 = sbr.rel (%p16) target = $region8
    $region5: #{tpu_custom_call.1} parent=1 // loop_body
      %s20 = ssub.s32 %s15, 1
      %s21 = ssub.s32 %s15, 2
      %s22 = sadd.s32 %s15, 1
      %s23 = ssub.s32 %s15, %s22
      %p24 = scmp.eq.s32.totalorder %s23, 0
      %s26 = sadd.s32 %s25, 1
      %s27 = scalar_select %p24, %s25, %s26
      %p30 = pneg %p24
      %p31 = scmp.eq.s32.totalorder %s15, 1
      %p32 = por %p30, %p31
      %p33 = scmp.ne.s32.totalorder %s25, %s28
      %p34 = scmp.eq.s32.totalorder %s15, 0
      %p35 = por %p33, %p34
      %p36 = scmp.ne.s32.totalorder %s25, %s28
      %p37 = scmp.eq.s32.totalorder %s20, 1
      %p38 = por %p36, %p37
      %p39 = scmp.ne.s32.totalorder %s28, %s29
      %p40 = scmp.eq.s32.totalorder %s20, 0
      %p41 = por %p39, %p40
      %p42 = scmp.ne.s32.totalorder %s28, %s29
      %p43 = scmp.eq.s32.totalorder %s21, 1
      %p44 = por %p42, %p43
      %p46 = scmp.ne.s32.totalorder %s29, %s45
      %p47 = scmp.eq.s32.totalorder %s21, 0
      %p48 = por %p46, %p47
      %s50 = sadd.s32 %s49, 1
      %p53 = scmp.eq.s32.totalorder %s15, 1
      %p54 = scmp.ne.s32.totalorder %s49, %s51
      %p55 = scmp.eq.s32.totalorder %s15, 0
      %p56 = por %p54, %p55
      %p57 = scmp.ne.s32.totalorder %s49, %s51
      %p58 = scmp.eq.s32.totalorder %s20, 1
      %p59 = por %p57, %p58
      %p60 = scmp.ne.s32.totalorder %s51, %s52
      %p61 = scmp.eq.s32.totalorder %s20, 0
      %p62 = por %p60, %p61
      %p63 = scmp.ne.s32.totalorder %s51, %s52
      %p64 = scmp.eq.s32.totalorder %s21, 1
      %p65 = por %p63, %p64
      %p67 = scmp.ne.s32.totalorder %s52, %s66
      %p68 = scmp.eq.s32.totalorder %s21, 0
      %p69 = por %p67, %p68
      %s71 = sadd.s32 %s70, 1
      %p74 = scmp.eq.s32.totalorder %s15, 1
      %p75 = scmp.ne.s32.totalorder %s70, %s72
      %p76 = scmp.eq.s32.totalorder %s15, 0
      %p77 = por %p75, %p76
      %p78 = scmp.ne.s32.totalorder %s70, %s72
      %p79 = scmp.eq.s32.totalorder %s20, 1
      %p80 = por %p78, %p79
      %p81 = scmp.ne.s32.totalorder %s72, %s73
      %p82 = scmp.eq.s32.totalorder %s20, 0
      %p83 = por %p81, %p82
      %p84 = scmp.ne.s32.totalorder %s72, %s73
      %p85 = scmp.eq.s32.totalorder %s21, 1
      %p86 = por %p84, %p85
      %p88 = scmp.ne.s32.totalorder %s73, %s87
      %p89 = scmp.eq.s32.totalorder %s21, 0
      %p90 = por %p88, %p89
      %s92 = sadd.s32 %s91, 1
      %p95 = scmp.eq.s32.totalorder %s15, 1
      %p96 = scmp.ne.s32.totalorder %s91, %s93
      %p97 = scmp.eq.s32.totalorder %s15, 0
      %p98 = por %p96, %p97
      %p99 = scmp.ne.s32.totalorder %s91, %s93
      %p100 = scmp.eq.s32.totalorder %s20, 1
      %p101 = por %p99, %p100
      %p102 = scmp.ne.s32.totalorder %s93, %s94
      %p103 = scmp.eq.s32.totalorder %s20, 0
      %p104 = por %p102, %p103
      %p105 = scmp.ne.s32.totalorder %s93, %s94
      %p106 = scmp.eq.s32.totalorder %s21, 1
      %p107 = por %p105, %p106
      %p109 = scmp.ne.s32.totalorder %s94, %s108
      %p110 = scmp.eq.s32.totalorder %s21, 0
      %p111 = por %p109, %p110
      %s113 = sadd.s32 %s112, 1
      %p116 = scmp.eq.s32.totalorder %s15, 1
      %p117 = scmp.ne.s32.totalorder %s112, %s114
      %p118 = scmp.eq.s32.totalorder %s15, 0
      %p119 = por %p117, %p118
      %p120 = scmp.ne.s32.totalorder %s112, %s114
      %p121 = scmp.eq.s32.totalorder %s20, 1
      %p122 = por %p120, %p121
      %p123 = scmp.ne.s32.totalorder %s114, %s115
      %p124 = scmp.eq.s32.totalorder %s20, 0
      %p125 = por %p123, %p124
      %p126 = scmp.ne.s32.totalorder %s114, %s115
      %p127 = scmp.eq.s32.totalorder %s21, 1
      %p128 = por %p126, %p127
      %p130 = scmp.ne.s32.totalorder %s115, %s129
      %p131 = scmp.eq.s32.totalorder %s21, 0
      %p132 = por %p130, %p131
      %s134 = sadd.s32 %s133, 1
      %p137 = scmp.eq.s32.totalorder %s15, 1
      %p138 = scmp.ne.s32.totalorder %s133, %s135
      %p139 = scmp.eq.s32.totalorder %s15, 0
      %p140 = por %p138, %p139
      %p141 = scmp.ne.s32.totalorder %s133, %s135
      %p142 = scmp.eq.s32.totalorder %s20, 1
      %p143 = por %p141, %p142
      %p144 = scmp.ne.s32.totalorder %s135, %s136
      %p145 = scmp.eq.s32.totalorder %s20, 0
      %p146 = por %p144, %p145
      %p147 = scmp.ne.s32.totalorder %s135, %s136
      %p148 = scmp.eq.s32.totalorder %s21, 1
      %p149 = por %p147, %p148
      %p151 = scmp.ne.s32.totalorder %s136, %s150
      %p152 = scmp.eq.s32.totalorder %s21, 0
      %p153 = por %p151, %p152
      %s154 = ssub.s32 %s15, %s22
      %p155 = scmp.eq.s32.totalorder %s154, 0
      %s157 = sadd.s32 %s156, 1
      %s158 = scalar_select %p155, %s156, %s157
      %p161 = pneg %p155
      %p162 = scmp.eq.s32.totalorder %s15, 1
      %p163 = por %p161, %p162
      %p164 = scmp.ne.s32.totalorder %s156, %s159
      %p165 = scmp.eq.s32.totalorder %s15, 0
      %p166 = por %p164, %p165
      %p167 = scmp.ne.s32.totalorder %s156, %s159
      %p168 = scmp.eq.s32.totalorder %s20, 1
      %p169 = por %p167, %p168
      %p170 = scmp.ne.s32.totalorder %s159, %s160
      %p171 = scmp.eq.s32.totalorder %s20, 0
      %p172 = por %p170, %p171
      %p173 = scmp.ne.s32.totalorder %s159, %s160
      %p174 = scmp.eq.s32.totalorder %s21, 1
      %p175 = por %p173, %p174
      %p177 = scmp.ne.s32.totalorder %s160, %s176
      %p178 = scmp.eq.s32.totalorder %s21, 0
      %p179 = por %p177, %p178
      %p180 = scmp.le.s32.totalorder 1, %s15
      %p181 = scmp.lt.s32.totalorder %s15, 3
      %p182 = pnand %p180, %p181
      %p183 = pneg %p182
      // Predicated region
      $region9: #{tpu_custom_call.1} parent=5 // pred_check
        _
      $region10: #{tpu_custom_call.1} parent=5 // pred_check_branch
        %185 = sbr.rel (%p182) target = $region12
      $region11: #{tpu_custom_call.1} parent=5 // pred_region
        %s186 = ssub.s32 %s15, 1
        // Predicated region
        $region13: #{tpu_custom_call.1} parent=11 // pred_check
          %p187 = pneg %p62
        $region14: #{tpu_custom_call.1} parent=11 // pred_check_branch
          %189 = sbr.rel (%p187) target = $region16
        $region15: #{tpu_custom_call.1} parent=11 // pred_region
          _
        $region16: #{tpu_custom_call.1} parent=11 // pred_fallthru
          _
        // Predicated region
        $region17: #{tpu_custom_call.1} parent=11 // pred_check
          %p190 = pneg %p83
        $region18: #{tpu_custom_call.1} parent=11 // pred_check_branch
          %192 = sbr.rel (%p190) target = $region20
        $region19: #{tpu_custom_call.1} parent=11 // pred_region
          _
        $region20: #{tpu_custom_call.1} parent=11 // pred_fallthru
          _
        // Predicated region
        $region21: #{tpu_custom_call.1} parent=11 // pred_check
          %p193 = pneg %p104
        $region22: #{tpu_custom_call.1} parent=11 // pred_check_branch
          %195 = sbr.rel (%p193) target = $region24
        $region23: #{tpu_custom_call.1} parent=11 // pred_region
          _
        $region24: #{tpu_custom_call.1} parent=11 // pred_fallthru
          _
        // Predicated region
        $region25: #{tpu_custom_call.1} parent=11 // pred_check
          %p196 = pneg %p125
        $region26: #{tpu_custom_call.1} parent=11 // pred_check_branch
          %198 = sbr.rel (%p196) target = $region28
        $region27: #{tpu_custom_call.1} parent=11 // pred_region
          _
        $region28: #{tpu_custom_call.1} parent=11 // pred_fallthru
          _
        // Predicated region
        $region29: #{tpu_custom_call.1} parent=11 // pred_check
          %p199 = pneg %p146
        $region30: #{tpu_custom_call.1} parent=11 // pred_check_branch
          %201 = sbr.rel (%p199) target = $region32
        $region31: #{tpu_custom_call.1} parent=11 // pred_region
          _
        $region32: #{tpu_custom_call.1} parent=11 // pred_fallthru
          _
      $region12: #{tpu_custom_call.1} parent=5 // pred_fallthru
        _
      %p202 = scmp.lt.s32.totalorder %s15, 2
      // Predicated region
      $region33: #{tpu_custom_call.1} parent=5 // pred_check
        %p203 = pneg %p202
      $region34: #{tpu_custom_call.1} parent=5 // pred_check_branch
        %205 = sbr.rel (%p203) target = $region36
      $region35: #{tpu_custom_call.1} parent=5 // pred_region
        // Predicated region
        $region37: #{tpu_custom_call.1} parent=35 // pred_check
          %p206 = pneg %p35
        $region38: #{tpu_custom_call.1} parent=35 // pred_check_branch
          %208 = sbr.rel (%p206) target = $region40
        $region39: #{tpu_custom_call.1} parent=35 // pred_region
          %p209 = scmp.lt.s32.totalorder %s15, 1
          %s210 = scalar_select %p209, %s15, 1
          %s211 = smul.addr %s210, 80
          %s212 = smul.addr %s211, 8
          %s213 = scalar_lea.vmem %s0, %s212
        $region40: #{tpu_custom_call.1} parent=35 // pred_fallthru
          _
      $region36: #{tpu_custom_call.1} parent=5 // pred_fallthru
        _
      %p214 = scmp.le.s32.totalorder 1, %s15
      %p215 = scmp.lt.s32.totalorder %s15, 3
      %p216 = pnand %p214, %p215
      %p217 = pneg %p216
      // Predicated region
      $region41: #{tpu_custom_call.1} parent=5 // pred_check
        _
      $region42: #{tpu_custom_call.1} parent=5 // pred_check_branch
        %219 = sbr.rel (%p216) target = $region44
      $region43: #{tpu_custom_call.1} parent=5 // pred_region
        %s220 = ssub.s32 %s15, 1
        %p221 = scmp.lt.s32.totalorder %s20, 1
        %s222 = scalar_select %p221, %s20, 1
        %s223 = smul.addr %s222, 80
        %s224 = smul.addr %s223, 8
        %s225 = scalar_lea.vmem %s0, %s224
        %p226 = pneg %p41
        %p227 = pneg %p38
        %p228 = pneg %p62
        %p229 = pneg %p59
        %p230 = pneg %p83
        %p231 = pneg %p80
        %p232 = pneg %p104
        %p233 = pneg %p101
        %p234 = pneg %p125
        %p235 = pneg %p122
        %p236 = pneg %p146
        %p237 = pneg %p143
        %p238 = pneg %p172
        %p239 = pneg %p169
        %s240 = sand.u32 %s159, 1
        %s241 = scalar_lea.sflag [#allocation4], %s240
        %s242 = sand.u32 %s159, 1
        %s243 = smul.addr %s242, 256
        %s244 = scalar_lea.vmem [#allocation3], %s243
        %p245 = scmp.lt.s32.totalorder %s20, 1
        %s246 = scalar_select %p245, %s20, 1
        %s247 = smul.addr %s246, 80
        %s248 = smul.addr %s247, 8
        %s249 = scalar_lea.vmem %s0, %s248
        %v250 = vld [vmem:[%s249] sm:$0xff]
        %v251 = vld [vmem:[%s249 + $0x8] sm:$0xff]
        %v252 = vld [vmem:[%s249 + $0x10] sm:$0xff]
        %v253 = vld [vmem:[%s249 + $0x20] sm:$0xff]
        %v254 = vld [vmem:[%s249 + $0x28] sm:$0xff]
        %v255 = vld [vmem:[%s249 + $0x30] sm:$0xff]
        %v256 = vld [vmem:[%s249 + $0x40] sm:$0xff]
        %v257 = vld [vmem:[%s249 + $0x48] sm:$0xff]
        %v258 = vld [vmem:[%s249 + $0x50] sm:$0xff]
        %v259 = vld [vmem:[%s249 + $0x60] sm:$0xff]
        %v260 = vld [vmem:[%s249 + $0x68] sm:$0xff]
        %v261 = vld [vmem:[%s249 + $0x70] sm:$0xff]
        %v262 = vld [vmem:[%s249 + $0x80] sm:$0xff]
        %v263 = vld [vmem:[%s249 + $0x88] sm:$0xff]
        %v264 = vld [vmem:[%s249 + $0x90] sm:$0xff]
        %v265 = vld [vmem:[%s249 + $0xa0] sm:$0xff]
        %v266 = vld [vmem:[%s249 + $0xa8] sm:$0xff]
        %v267 = vld [vmem:[%s249 + $0xb0] sm:$0xff]
        %v268 = vld [vmem:[%s249 + $0xc0] sm:$0xff]
        %v269 = vld [vmem:[%s249 + $0xc8] sm:$0xff]
        %v270 = vld [vmem:[%s249 + $0xd0] sm:$0xff]
        %v271 = vld [vmem:[%s249 + $0xe0] sm:$0xff]
        %v272 = vld [vmem:[%s249 + $0xe8] sm:$0xff]
        %v273 = vld [vmem:[%s249 + $0xf0] sm:$0xff]
        %v274 = vld [vmem:[%s249 + $0x100] sm:$0xff]
        %v275 = vld [vmem:[%s249 + $0x108] sm:$0xff]
        %v276 = vld [vmem:[%s249 + $0x110] sm:$0xff]
        %v277 = vld [vmem:[%s249 + $0x120] sm:$0xff]
        %v278 = vld [vmem:[%s249 + $0x128] sm:$0xff]
        %v279 = vld [vmem:[%s249 + $0x130] sm:$0xff]
        %v280 = vld [vmem:[%s249 + $0x140] sm:$0xff]
        %v281 = vld [vmem:[%s249 + $0x148] sm:$0xff]
        %v282 = vld [vmem:[%s249 + $0x150] sm:$0xff]
        %v283 = vld [vmem:[%s249 + $0x160] sm:$0xff]
        %v284 = vld [vmem:[%s249 + $0x168] sm:$0xff]
        %v285 = vld [vmem:[%s249 + $0x170] sm:$0xff]
        %v286 = vld [vmem:[%s249 + $0x180] sm:$0xff]
        %v287 = vld [vmem:[%s249 + $0x188] sm:$0xff]
        %v288 = vld [vmem:[%s249 + $0x190] sm:$0xff]
        %v289 = vld [vmem:[%s249 + $0x1a0] sm:$0xff]
        %v290 = vld [vmem:[%s249 + $0x1a8] sm:$0xff]
        %v291 = vld [vmem:[%s249 + $0x1b0] sm:$0xff]
        %v292 = vld [vmem:[%s249 + $0x1c0] sm:$0xff]
        %v293 = vld [vmem:[%s249 + $0x1c8] sm:$0xff]
        %v294 = vld [vmem:[%s249 + $0x1d0] sm:$0xff]
        %v295 = vld [vmem:[%s249 + $0x1e0] sm:$0xff]
        %v296 = vld [vmem:[%s249 + $0x1e8] sm:$0xff]
        %v297 = vld [vmem:[%s249 + $0x1f0] sm:$0xff]
        %v298 = vld [vmem:[%s249 + $0x200] sm:$0xff]
        %v299 = vld [vmem:[%s249 + $0x208] sm:$0xff]
        %v300 = vld [vmem:[%s249 + $0x210] sm:$0xff]
        %v301 = vld [vmem:[%s249 + $0x220] sm:$0xff]
        %v302 = vld [vmem:[%s249 + $0x228] sm:$0xff]
        %v303 = vld [vmem:[%s249 + $0x230] sm:$0xff]
        %v304 = vld [vmem:[%s1] sm:$0xf]
        %v305 = vld [vmem:[%s249 + $0x1] sm:$0xff]
        %v306 = vld [vmem:[%s249 + $0x9] sm:$0xff]
        %v307 = vld [vmem:[%s249 + $0x11] sm:$0xff]
        %v308 = vld [vmem:[%s249 + $0x21] sm:$0xff]
        %v309 = vld [vmem:[%s249 + $0x29] sm:$0xff]
        %v310 = vld [vmem:[%s249 + $0x31] sm:$0xff]
        %v311 = vld [vmem:[%s249 + $0x41] sm:$0xff]
        %v312 = vld [vmem:[%s249 + $0x49] sm:$0xff]
        %v313 = vld [vmem:[%s249 + $0x51] sm:$0xff]
        %v314 = vld [vmem:[%s249 + $0x61] sm:$0xff]
        %v315 = vld [vmem:[%s249 + $0x69] sm:$0xff]
        %v316 = vld [vmem:[%s249 + $0x71] sm:$0xff]
        %v317 = vld [vmem:[%s249 + $0x81] sm:$0xff]
        %v318 = vld [vmem:[%s249 + $0x89] sm:$0xff]
        %v319 = vld [vmem:[%s249 + $0x91] sm:$0xff]
        %v320 = vld [vmem:[%s249 + $0xa1] sm:$0xff]
        %v321 = vld [vmem:[%s249 + $0xa9] sm:$0xff]
        %v322 = vld [vmem:[%s249 + $0xb1] sm:$0xff]
        %v323 = vld [vmem:[%s249 + $0xc1] sm:$0xff]
        %v324 = vld [vmem:[%s249 + $0xc9] sm:$0xff]
        %v325 = vld [vmem:[%s249 + $0xd1] sm:$0xff]
        %v326 = vld [vmem:[%s249 + $0xe1] sm:$0xff]
        %v327 = vld [vmem:[%s249 + $0xe9] sm:$0xff]
        %v328 = vld [vmem:[%s249 + $0xf1] sm:$0xff]
        %v329 = vld [vmem:[%s249 + $0x101] sm:$0xff]
        %v330 = vld [vmem:[%s249 + $0x109] sm:$0xff]
        %v331 = vld [vmem:[%s249 + $0x111] sm:$0xff]
        %v332 = vld [vmem:[%s249 + $0x121] sm:$0xff]
        %v333 = vld [vmem:[%s249 + $0x129] sm:$0xff]
        %v334 = vld [vmem:[%s249 + $0x131] sm:$0xff]
        %v335 = vld [vmem:[%s249 + $0x141] sm:$0xff]
        %v336 = vld [vmem:[%s249 + $0x149] sm:$0xff]
        %v337 = vld [vmem:[%s249 + $0x151] sm:$0xff]
        %v338 = vld [vmem:[%s249 + $0x161] sm:$0xff]
        %v339 = vld [vmem:[%s249 + $0x169] sm:$0xff]
        %v340 = vld [vmem:[%s249 + $0x171] sm:$0xff]
        %v341 = vld [vmem:[%s249 + $0x181] sm:$0xff]
        %v342 = vld [vmem:[%s249 + $0x189] sm:$0xff]
        %v343 = vld [vmem:[%s249 + $0x191] sm:$0xff]
        %v344 = vld [vmem:[%s249 + $0x1a1] sm:$0xff]
        %v345 = vld [vmem:[%s249 + $0x1a9] sm:$0xff]
        %v346 = vld [vmem:[%s249 + $0x1b1] sm:$0xff]
        %v347 = vld [vmem:[%s249 + $0x1c1] sm:$0xff]
        %v348 = vld [vmem:[%s249 + $0x1c9] sm:$0xff]
        %v349 = vld [vmem:[%s249 + $0x1d1] sm:$0xff]
        %v350 = vld [vmem:[%s249 + $0x1e1] sm:$0xff]
        %v351 = vld [vmem:[%s249 + $0x1e9] sm:$0xff]
        %v352 = vld [vmem:[%s249 + $0x1f1] sm:$0xff]
        %v353 = vld [vmem:[%s249 + $0x201] sm:$0xff]
        %v354 = vld [vmem:[%s249 + $0x209] sm:$0xff]
        %v355 = vld [vmem:[%s249 + $0x211] sm:$0xff]
        %v356 = vld [vmem:[%s249 + $0x221] sm:$0xff]
        %v357 = vld [vmem:[%s249 + $0x229] sm:$0xff]
        %v358 = vld [vmem:[%s249 + $0x231] sm:$0xff]
        %s359 = scalar_lea.vmem %s1, 4
        %v360 = vld [vmem:[%s359] sm:$0xf]
        %vm361 = vcmask 31744
        %v363 = vsel %vm361, %v305, 0
        %v366 = vsel %vm361, %v306, 0
        %v369 = vsel %vm361, %v307, 0
        %v372 = vsel %vm361, %v308, 0
        %v375 = vsel %vm361, %v309, 0
        %v378 = vsel %vm361, %v310, 0
        %v381 = vsel %vm361, %v311, 0
        %v384 = vsel %vm361, %v312, 0
        %v387 = vsel %vm361, %v313, 0
        %v390 = vsel %vm361, %v314, 0
        %v393 = vsel %vm361, %v315, 0
        %v396 = vsel %vm361, %v316, 0
        %v399 = vsel %vm361, %v317, 0
        %v402 = vsel %vm361, %v318, 0
        %v405 = vsel %vm361, %v319, 0
        %v408 = vsel %vm361, %v320, 0
        %v411 = vsel %vm361, %v321, 0
        %v414 = vsel %vm361, %v322, 0
        %v417 = vsel %vm361, %v323, 0
        %v420 = vsel %vm361, %v324, 0
        %v423 = vsel %vm361, %v325, 0
        %v426 = vsel %vm361, %v326, 0
        %v429 = vsel %vm361, %v327, 0
        %v432 = vsel %vm361, %v328, 0
        %v435 = vsel %vm361, %v329, 0
        %v438 = vsel %vm361, %v330, 0
        %v441 = vsel %vm361, %v331, 0
        %v444 = vsel %vm361, %v332, 0
        %v447 = vsel %vm361, %v333, 0
        %v450 = vsel %vm361, %v334, 0
        %v453 = vsel %vm361, %v335, 0
        %v456 = vsel %vm361, %v336, 0
        %v459 = vsel %vm361, %v337, 0
        %v462 = vsel %vm361, %v338, 0
        %v465 = vsel %vm361, %v339, 0
        %v468 = vsel %vm361, %v340, 0
        %v471 = vsel %vm361, %v341, 0
        %v474 = vsel %vm361, %v342, 0
        %v477 = vsel %vm361, %v343, 0
        %v480 = vsel %vm361, %v344, 0
        %v483 = vsel %vm361, %v345, 0
        %v486 = vsel %vm361, %v346, 0
        %v489 = vsel %vm361, %v347, 0
        %v492 = vsel %vm361, %v348, 0
        %v495 = vsel %vm361, %v349, 0
        %v498 = vsel %vm361, %v350, 0
        %v501 = vsel %vm361, %v351, 0
        %v504 = vsel %vm361, %v352, 0
        %v507 = vsel %vm361, %v353, 0
        %v510 = vsel %vm361, %v354, 0
        %v513 = vsel %vm361, %v355, 0
        %v516 = vsel %vm361, %v356, 0
        %v519 = vsel %vm361, %v357, 0
        %v522 = vsel %vm361, %v358, 0
        %vm524 = vcmask 1043456
        %v526 = vsel %vm524, %v360, 0
        %528 = vmatprep.subr.mxu0 0.0
        %529 = vmatpush1.msra.mxu0 %v526
        %530 = vmatprep.subr.mxu0 0.0
        %531 = vmatpush1.msra.mxu0 0.0
        %532 = vmatprep.subr.mxu0 0.0
        %533 = vmatpush1.msra.mxu0 0.0
        %534 = vmatprep.subr.mxu0 0.0
        %535 = vmatpush1.msra.mxu0 0.0
        %536 = vmatprep.subr.mxu0 0.0
        %537 = vmatpush1.msra.mxu0 0.0
        %538 = vmatprep.subr.mxu0 0.0
        %539 = vmatpush1.msra.mxu0 0.0
        %540 = vmatprep.subr.mxu0 0.0
        %541 = vmatpush1.msra.mxu0 0.0
        %542 = vmatprep.subr.mxu0 0.0
        %543 = vmatpush1.msra.mxu0 0.0
        %544 = vmatprep.subr.mxu0 0.0
        %545 = vmatpush1.msra.mxu0 0.0
        %546 = vmatprep.subr.mxu0 0.0
        %547 = vmatpush1.msra.mxu0 0.0
        %548 = vmatprep.subr.mxu0 0.0
        %549 = vmatpush1.msra.mxu0 0.0
        %550 = vmatprep.subr.mxu0 0.0
        %551 = vmatpush1.msra.mxu0 0.0
        %552 = vmatprep.subr.mxu0 0.0
        %553 = vmatpush1.msra.mxu0 0.0
        %554 = vmatprep.subr.mxu0 0.0
        %555 = vmatpush1.msra.mxu0 0.0
        %556 = vmatprep.subr.mxu0 0.0
        %557 = vmatpush1.msra.mxu0 0.0
        %558 = vmatprep.subr.mxu0 0.0
        %559 = vmatpush1.msra.mxu0 0.0
        %560 = vmatprep.subr.mxu0 0.0
        %561 = vmatpush1.msra.mxu0 0.0
        %562 = vmatprep.subr.mxu0 0.0
        %563 = vmatpush1.msra.mxu0 0.0
        %564 = vmatprep.subr.mxu0 0.0
        %565 = vmatpush1.msra.mxu0 0.0
        %566 = vmatprep.subr.mxu0 0.0
        %567 = vmatpush1.msra.mxu0 0.0
        %568 = vmatprep.subr.mxu0 0.0
        %569 = vmatpush1.msra.mxu0 0.0
        %570 = vmatprep.subr.mxu0 0.0
        %571 = vmatpush1.msra.mxu0 0.0
        %572 = vmatprep.subr.mxu0 0.0
        %573 = vmatpush1.msra.mxu0 0.0
        %574 = vmatprep.subr.mxu0 0.0
        %575 = vmatpush1.msra.mxu0 0.0
        %576 = vmatprep.subr.mxu0 0.0
        %577 = vmatpush1.msra.mxu0 0.0
        %578 = vmatprep.subr.mxu0 0.0
        %579 = vmatpush1.msra.mxu0 0.0
        %580 = vmatprep.subr.mxu0 0.0
        %581 = vmatpush1.msra.mxu0 0.0
        %582 = vmatprep.subr.mxu0 0.0
        %583 = vmatpush1.msra.mxu0 0.0
        %584 = vmatprep.subr.mxu0 0.0
        %585 = vmatpush1.msra.mxu0 0.0
        %586 = vmatprep.subr.mxu0 0.0
        %587 = vmatpush1.msra.mxu0 0.0
        %588 = vmatprep.subr.mxu0 0.0
        %589 = vmatpush1.msra.mxu0 0.0
        %590 = vmatprep.subr.mxu0 0.0
        %591 = vmatpush1.msra.mxu0 0.0
        %592 = vmatprep.mubr.f32.mxu0 0.0
        %593 = vmatmul.mubr.f32.gmra.mrb[0].mxu0 %v363
        %v594 = vpop.f32.mrb[0].mxu0
        %v595 = vadd.f32 0.0, %v594
        %v596 = vpop.f32.mrb[0].mxu0
        %597 = vmatprep.mubr.f32.mxu0 0.0
        %598 = vmatmul.mubr.f32.gmra.mrb[0].mxu0 %v366
        %v599 = vpop.f32.mrb[0].mxu0
        %v600 = vadd.f32 0.0, %v599
        %v601 = vpop.f32.mrb[0].mxu0
        %602 = vmatprep.mubr.f32.mxu0 0.0
        %603 = vmatmul.mubr.f32.gmra.mrb[0].mxu0 %v369
        %v604 = vpop.f32.mrb[0].mxu0
        %v605 = vadd.f32 0.0, %v604
        %v606 = vpop.f32.mrb[0].mxu0
        %607 = vmatprep.mubr.f32.mxu0 0.0
        %608 = vmatmul.mubr.f32.gmra.mrb[0].mxu0 %v372
        %v609 = vpop.f32.mrb[0].mxu0
        %v610 = vadd.f32 0.0, %v609
        %v611 = vpop.f32.mrb[0].mxu0
        %612 = vmatprep.mubr.f32.mxu0 0.0
        %613 = vmatmul.mubr.f32.gmra.mrb[0].mxu0 %v375
        %v614 = vpop.f32.mrb[0].mxu0
        %v615 = vadd.f32 0.0, %v614
        %v616 = vpop.f32.mrb[0].mxu0
        %617 = vmatprep.mubr.f32.mxu0 0.0
        %618 = vmatmul.mubr.f32.gmra.mrb[0].mxu0 %v378
        %v619 = vpop.f32.mrb[0].mxu0
        %v620 = vadd.f32 0.0, %v619
        %v621 = vpop.f32.mrb[0].mxu0
        %622 = vmatprep.mubr.f32.mxu0 0.0
        %623 = vmatmul.mubr.f32.gmra.mrb[0].mxu0 %v381
        %v624 = vpop.f32.mrb[0].mxu0
        %v625 = vadd.f32 0.0, %v624
        %v626 = vpop.f32.mrb[0].mxu0
        %627 = vmatprep.mubr.f32.mxu0 0.0
        %628 = vmatmul.mubr.f32.gmra.mrb[0].mxu0 %v384
        %v629 = vpop.f32.mrb[0].mxu0
        %v630 = vadd.f32 0.0, %v629
        %v631 = vpop.f32.mrb[0].mxu0
        %632 = vmatprep.mubr.f32.mxu0 0.0
        %633 = vmatmul.mubr.f32.gmra.mrb[0].mxu0 %v387
        %v634 = vpop.f32.mrb[0].mxu0
        %v635 = vadd.f32 0.0, %v634
        %v636 = vpop.f32.mrb[0].mxu0
        %637 = vmatprep.mubr.f32.mxu0 0.0
        %638 = vmatmul.mubr.f32.gmra.mrb[0].mxu0 %v390
        %v639 = vpop.f32.mrb[0].mxu0
        %v640 = vadd.f32 0.0, %v639
        %v641 = vpop.f32.mrb[0].mxu0
        %642 = vmatprep.mubr.f32.mxu0 0.0
        %643 = vmatmul.mubr.f32.gmra.mrb[0].mxu0 %v393
        %v644 = vpop.f32.mrb[0].mxu0
        %v645 = vadd.f32 0.0, %v644
        %v646 = vpop.f32.mrb[0].mxu0
        %647 = vmatprep.mubr.f32.mxu0 0.0
        %648 = vmatmul.mubr.f32.gmra.mrb[0].mxu0 %v396
        %v649 = vpop.f32.mrb[0].mxu0
        %v650 = vadd.f32 0.0, %v649
        %v651 = vpop.f32.mrb[0].mxu0
        %652 = vmatprep.mubr.f32.mxu0 0.0
        %653 = vmatmul.mubr.f32.gmra.mrb[0].mxu0 %v399
        %v654 = vpop.f32.mrb[0].mxu0
        %v655 = vadd.f32 0.0, %v654
        %v656 = vpop.f32.mrb[0].mxu0
        %657 = vmatprep.mubr.f32.mxu0 0.0
        %658 = vmatmul.mubr.f32.gmra.mrb[0].mxu0 %v402
        %v659 = vpop.f32.mrb[0].mxu0
        %v660 = vadd.f32 0.0, %v659
        %v661 = vpop.f32.mrb[0].mxu0
        %662 = vmatprep.mubr.f32.mxu0 0.0
        %663 = vmatmul.mubr.f32.gmra.mrb[0].mxu0 %v405
        %v664 = vpop.f32.mrb[0].mxu0
        %v665 = vadd.f32 0.0, %v664
        %v666 = vpop.f32.mrb[0].mxu0
        %667 = vmatprep.mubr.f32.mxu0 0.0
        %668 = vmatmul.mubr.f32.gmra.mrb[0].mxu0 %v408
        %v669 = vpop.f32.mrb[0].mxu0
        %v670 = vadd.f32 0.0, %v669
        %v671 = vpop.f32.mrb[0].mxu0
        %672 = vmatprep.mubr.f32.mxu0 0.0
        %673 = vmatmul.mubr.f32.gmra.mrb[0].mxu0 %v411
        %v674 = vpop.f32.mrb[0].mxu0
        %v675 = vadd.f32 0.0, %v674
        %v676 = vpop.f32.mrb[0].mxu0
        %677 = vmatprep.mubr.f32.mxu0 0.0
        %678 = vmatmul.mubr.f32.gmra.mrb[0].mxu0 %v414
        %v679 = vpop.f32.mrb[0].mxu0
        %v680 = vadd.f32 0.0, %v679
        %v681 = vpop.f32.mrb[0].mxu0
        %682 = vmatprep.mubr.f32.mxu0 0.0
        %683 = vmatmul.mubr.f32.gmra.mrb[0].mxu0 %v417
        %v684 = vpop.f32.mrb[0].mxu0
        %v685 = vadd.f32 0.0, %v684
        %v686 = vpop.f32.mrb[0].mxu0
        %687 = vmatprep.mubr.f32.mxu0 0.0
        %688 = vmatmul.mubr.f32.gmra.mrb[0].mxu0 %v420
        %v689 = vpop.f32.mrb[0].mxu0
        %v690 = vadd.f32 0.0, %v689
        %v691 = vpop.f32.mrb[0].mxu0
        %692 = vmatprep.mubr.f32.mxu0 0.0
        %693 = vmatmul.mubr.f32.gmra.mrb[0].mxu0 %v423
        %v694 = vpop.f32.mrb[0].mxu0
        %v695 = vadd.f32 0.0, %v694
        %v696 = vpop.f32.mrb[0].mxu0
        %697 = vmatprep.mubr.f32.mxu0 0.0
        %698 = vmatmul.mubr.f32.gmra.mrb[0].mxu0 %v426
        %v699 = vpop.f32.mrb[0].mxu0
        %v700 = vadd.f32 0.0, %v699
        %v701 = vpop.f32.mrb[0].mxu0
        %702 = vmatprep.mubr.f32.mxu0 0.0
        %703 = vmatmul.mubr.f32.gmra.mrb[0].mxu0 %v429
        %v704 = vpop.f32.mrb[0].mxu0
        %v705 = vadd.f32 0.0, %v704
        %v706 = vpop.f32.mrb[0].mxu0
        %707 = vmatprep.mubr.f32.mxu0 0.0
        %708 = vmatmul.mubr.f32.gmra.mrb[0].mxu0 %v432
        %v709 = vpop.f32.mrb[0].mxu0
        %v710 = vadd.f32 0.0, %v709
        %v711 = vpop.f32.mrb[0].mxu0
        %712 = vmatprep.mubr.f32.mxu0 0.0
        %713 = vmatmul.mubr.f32.gmra.mrb[0].mxu0 %v435
        %v714 = vpop.f32.mrb[0].mxu0
        %v715 = vadd.f32 0.0, %v714
        %v716 = vpop.f32.mrb[0].mxu0
        %717 = vmatprep.mubr.f32.mxu0 0.0
        %718 = vmatmul.mubr.f32.gmra.mrb[0].mxu0 %v438
        %v719 = vpop.f32.mrb[0].mxu0
        %v720 = vadd.f32 0.0, %v719
        %v721 = vpop.f32.mrb[0].mxu0
        %722 = vmatprep.mubr.f32.mxu0 0.0
        %723 = vmatmul.mubr.f32.gmra.mrb[0].mxu0 %v441
        %v724 = vpop.f32.mrb[0].mxu0
        %v725 = vadd.f32 0.0, %v724
        %v726 = vpop.f32.mrb[0].mxu0
        %727 = vmatprep.mubr.f32.mxu0 0.0
        %728 = vmatmul.mubr.f32.gmra.mrb[0].mxu0 %v444
        %v729 = vpop.f32.mrb[0].mxu0
        %v730 = vadd.f32 0.0, %v729
        %v731 = vpop.f32.mrb[0].mxu0
        %732 = vmatprep.mubr.f32.mxu0 0.0
        %733 = vmatmul.mubr.f32.gmra.mrb[0].mxu0 %v447
        %v734 = vpop.f32.mrb[0].mxu0
        %v735 = vadd.f32 0.0, %v734
        %v736 = vpop.f32.mrb[0].mxu0
        %737 = vmatprep.mubr.f32.mxu0 0.0
        %738 = vmatmul.mubr.f32.gmra.mrb[0].mxu0 %v450
        %v739 = vpop.f32.mrb[0].mxu0
        %v740 = vadd.f32 0.0, %v739
        %v741 = vpop.f32.mrb[0].mxu0
        %742 = vmatprep.mubr.f32.mxu0 0.0
        %743 = vmatmul.mubr.f32.gmra.mrb[0].mxu0 %v453
        %v744 = vpop.f32.mrb[0].mxu0
        %v745 = vadd.f32 0.0, %v744
        %v746 = vpop.f32.mrb[0].mxu0
        %747 = vmatprep.mubr.f32.mxu0 0.0
        %748 = vmatmul.mubr.f32.gmra.mrb[0].mxu0 %v456
        %v749 = vpop.f32.mrb[0].mxu0
        %v750 = vadd.f32 0.0, %v749
        %v751 = vpop.f32.mrb[0].mxu0
        %752 = vmatprep.mubr.f32.mxu0 0.0
        %753 = vmatmul.mubr.f32.gmra.mrb[0].mxu0 %v459
        %v754 = vpop.f32.mrb[0].mxu0
        %v755 = vadd.f32 0.0, %v754
        %v756 = vpop.f32.mrb[0].mxu0
        %757 = vmatprep.mubr.f32.mxu0 0.0
        %758 = vmatmul.mubr.f32.gmra.mrb[0].mxu0 %v462
        %v759 = vpop.f32.mrb[0].mxu0
        %v760 = vadd.f32 0.0, %v759
        %v761 = vpop.f32.mrb[0].mxu0
        %762 = vmatprep.mubr.f32.mxu0 0.0
        %763 = vmatmul.mubr.f32.gmra.mrb[0].mxu0 %v465
        %v764 = vpop.f32.mrb[0].mxu0
        %v765 = vadd.f32 0.0, %v764
        %v766 = vpop.f32.mrb[0].mxu0
        %767 = vmatprep.mubr.f32.mxu0 0.0
        %768 = vmatmul.mubr.f32.gmra.mrb[0].mxu0 %v468
        %v769 = vpop.f32.mrb[0].mxu0
        %v770 = vadd.f32 0.0, %v769
        %v771 = vpop.f32.mrb[0].mxu0
        %772 = vmatprep.mubr.f32.mxu0 0.0
        %773 = vmatmul.mubr.f32.gmra.mrb[0].mxu0 %v471
        %v774 = vpop.f32.mrb[0].mxu0
        %v775 = vadd.f32 0.0, %v774
        %v776 = vpop.f32.mrb[0].mxu0
        %777 = vmatprep.mubr.f32.mxu0 0.0
        %778 = vmatmul.mubr.f32.gmra.mrb[0].mxu0 %v474
        %v779 = vpop.f32.mrb[0].mxu0
        %v780 = vadd.f32 0.0, %v779
        %v781 = vpop.f32.mrb[0].mxu0
        %782 = vmatprep.mubr.f32.mxu0 0.0
        %783 = vmatmul.mubr.f32.gmra.mrb[0].mxu0 %v477
        %v784 = vpop.f32.mrb[0].mxu0
        %v785 = vadd.f32 0.0, %v784
        %v786 = vpop.f32.mrb[0].mxu0
        %787 = vmatprep.mubr.f32.mxu0 0.0
        %788 = vmatmul.mubr.f32.gmra.mrb[0].mxu0 %v480
        %v789 = vpop.f32.mrb[0].mxu0
        %v790 = vadd.f32 0.0, %v789
        %v791 = vpop.f32.mrb[0].mxu0
        %792 = vmatprep.mubr.f32.mxu0 0.0
        %793 = vmatmul.mubr.f32.gmra.mrb[0].mxu0 %v483
        %v794 = vpop.f32.mrb[0].mxu0
        %v795 = vadd.f32 0.0, %v794
        %v796 = vpop.f32.mrb[0].mxu0
        %797 = vmatprep.mubr.f32.mxu0 0.0
        %798 = vmatmul.mubr.f32.gmra.mrb[0].mxu0 %v486
        %v799 = vpop.f32.mrb[0].mxu0
        %v800 = vadd.f32 0.0, %v799
        %v801 = vpop.f32.mrb[0].mxu0
        %802 = vmatprep.mubr.f32.mxu0 0.0
        %803 = vmatmul.mubr.f32.gmra.mrb[0].mxu0 %v489
        %v804 = vpop.f32.mrb[0].mxu0
        %v805 = vadd.f32 0.0, %v804
        %v806 = vpop.f32.mrb[0].mxu0
        %807 = vmatprep.mubr.f32.mxu0 0.0
        %808 = vmatmul.mubr.f32.gmra.mrb[0].mxu0 %v492
        %v809 = vpop.f32.mrb[0].mxu0
        %v810 = vadd.f32 0.0, %v809
        %v811 = vpop.f32.mrb[0].mxu0
        %812 = vmatprep.mubr.f32.mxu0 0.0
        %813 = vmatmul.mubr.f32.gmra.mrb[0].mxu0 %v495
        %v814 = vpop.f32.mrb[0].mxu0
        %v815 = vadd.f32 0.0, %v814
        %v816 = vpop.f32.mrb[0].mxu0
        %817 = vmatprep.mubr.f32.mxu0 0.0
        %818 = vmatmul.mubr.f32.gmra.mrb[0].mxu0 %v498
        %v819 = vpop.f32.mrb[0].mxu0
        %v820 = vadd.f32 0.0, %v819
        %v821 = vpop.f32.mrb[0].mxu0
        %822 = vmatprep.mubr.f32.mxu0 0.0
        %823 = vmatmul.mubr.f32.gmra.mrb[0].mxu0 %v501
        %v824 = vpop.f32.mrb[0].mxu0
        %v825 = vadd.f32 0.0, %v824
        %v826 = vpop.f32.mrb[0].mxu0
        %827 = vmatprep.mubr.f32.mxu0 0.0
        %828 = vmatmul.mubr.f32.gmra.mrb[0].mxu0 %v504
        %v829 = vpop.f32.mrb[0].mxu0
        %v830 = vadd.f32 0.0, %v829
        %v831 = vpop.f32.mrb[0].mxu0
        %832 = vmatprep.mubr.f32.mxu0 0.0
        %833 = vmatmul.mubr.f32.gmra.mrb[0].mxu0 %v507
        %v834 = vpop.f32.mrb[0].mxu0
        %v835 = vadd.f32 0.0, %v834
        %v836 = vpop.f32.mrb[0].mxu0
        %837 = vmatprep.mubr.f32.mxu0 0.0
        %838 = vmatmul.mubr.f32.gmra.mrb[0].mxu0 %v510
        %v839 = vpop.f32.mrb[0].mxu0
        %v840 = vadd.f32 0.0, %v839
        %v841 = vpop.f32.mrb[0].mxu0
        %842 = vmatprep.mubr.f32.mxu0 0.0
        %843 = vmatmul.mubr.f32.gmra.mrb[0].mxu0 %v513
        %v844 = vpop.f32.mrb[0].mxu0
        %v845 = vadd.f32 0.0, %v844
        %v846 = vpop.f32.mrb[0].mxu0
        %847 = vmatprep.mubr.f32.mxu0 0.0
        %848 = vmatmul.mubr.f32.gmra.mrb[0].mxu0 %v516
        %v849 = vpop.f32.mrb[0].mxu0
        %v850 = vadd.f32 0.0, %v849
        %v851 = vpop.f32.mrb[0].mxu0
        %852 = vmatprep.mubr.f32.mxu0 0.0
        %853 = vmatmul.mubr.f32.gmra.mrb[0].mxu0 %v519
        %v854 = vpop.f32.mrb[0].mxu0
        %v855 = vadd.f32 0.0, %v854
        %v856 = vpop.f32.mrb[0].mxu0
        %857 = vmatprep.mubr.f32.mxu0 0.0
        %858 = vmatmul.mubr.f32.gmra.mrb[0].mxu0 %v522
        %v859 = vpop.f32.mrb[0].mxu0
        %v860 = vadd.f32 0.0, %v859
        %v861 = vpop.f32.mrb[0].mxu0
        %862 = vdwg.mxu0
        %v864 = vsel %vm361, %v250, 0
        %v867 = vsel %vm361, %v251, 0
        %v870 = vsel %vm361, %v252, 0
        %v873 = vsel %vm361, %v253, 0
        %v876 = vsel %vm361, %v254, 0
        %v879 = vsel %vm361, %v255, 0
        %v882 = vsel %vm361, %v256, 0
        %v885 = vsel %vm361, %v257, 0
        %v888 = vsel %vm361, %v258, 0
        %v891 = vsel %vm361, %v259, 0
        %v894 = vsel %vm361, %v260, 0
        %v897 = vsel %vm361, %v261, 0
        %v900 = vsel %vm361, %v262, 0
        %v903 = vsel %vm361, %v263, 0
        %v906 = vsel %vm361, %v264, 0
        %v909 = vsel %vm361, %v265, 0
        %v912 = vsel %vm361, %v266, 0
        %v915 = vsel %vm361, %v267, 0
        %v918 = vsel %vm361, %v268, 0
        %v921 = vsel %vm361, %v269, 0
        %v924 = vsel %vm361, %v270, 0
        %v927 = vsel %vm361, %v271, 0
        %v930 = vsel %vm361, %v272, 0
        %v933 = vsel %vm361, %v273, 0
        %v936 = vsel %vm361, %v274, 0
        %v939 = vsel %vm361, %v275, 0
        %v942 = vsel %vm361, %v276, 0
        %v945 = vsel %vm361, %v277, 0
        %v948 = vsel %vm361, %v278, 0
        %v951 = vsel %vm361, %v279, 0
        %v954 = vsel %vm361, %v280, 0
        %v957 = vsel %vm361, %v281, 0
        %v960 = vsel %vm361, %v282, 0
        %v963 = vsel %vm361, %v283, 0
        %v966 = vsel %vm361, %v284, 0
        %v969 = vsel %vm361, %v285, 0
        %v972 = vsel %vm361, %v286, 0
        %v975 = vsel %vm361, %v287, 0
        %v978 = vsel %vm361, %v288, 0
        %v981 = vsel %vm361, %v289, 0
        %v984 = vsel %vm361, %v290, 0
        %v987 = vsel %vm361, %v291, 0
        %v990 = vsel %vm361, %v292, 0
        %v993 = vsel %vm361, %v293, 0
        %v996 = vsel %vm361, %v294, 0
        %v999 = vsel %vm361, %v295, 0
        %v1002 = vsel %vm361, %v296, 0
        %v1005 = vsel %vm361, %v297, 0
        %v1008 = vsel %vm361, %v298, 0
        %v1011 = vsel %vm361, %v299, 0
        %v1014 = vsel %vm361, %v300, 0
        %v1017 = vsel %vm361, %v301, 0
        %v1020 = vsel %vm361, %v302, 0
        %v1023 = vsel %vm361, %v303, 0
        %v1026 = vsel %vm524, %v304, 0
        %1028 = vmatprep.subr.mxu0 0.0
        %1029 = vmatpush1.msra.mxu0 %v1026
        %1030 = vmatprep.subr.mxu0 0.0
        %1031 = vmatpush1.msra.mxu0 0.0
        %1032 = vmatprep.subr.mxu0 0.0
        %1033 = vmatpush1.msra.mxu0 0.0
        %1034 = vmatprep.subr.mxu0 0.0
        %1035 = vmatpush1.msra.mxu0 0.0
        %1036 = vmatprep.subr.mxu0 0.0
        %1037 = vmatpush1.msra.mxu0 0.0
        %1038 = vmatprep.subr.mxu0 0.0
        %1039 = vmatpush1.msra.mxu0 0.0
        %1040 = vmatprep.subr.mxu0 0.0
        %1041 = vmatpush1.msra.mxu0 0.0
        %1042 = vmatprep.subr.mxu0 0.0
        %1043 = vmatpush1.msra.mxu0 0.0
        %1044 = vmatprep.subr.mxu0 0.0
        %1045 = vmatpush1.msra.mxu0 0.0
        %1046 = vmatprep.subr.mxu0 0.0
        %1047 = vmatpush1.msra.mxu0 0.0
        %1048 = vmatprep.subr.mxu0 0.0
        %1049 = vmatpush1.msra.mxu0 0.0
        %1050 = vmatprep.subr.mxu0 0.0
        %1051 = vmatpush1.msra.mxu0 0.0
        %1052 = vmatprep.subr.mxu0 0.0
        %1053 = vmatpush1.msra.mxu0 0.0
        %1054 = vmatprep.subr.mxu0 0.0
        %1055 = vmatpush1.msra.mxu0 0.0
        %1056 = vmatprep.subr.mxu0 0.0
        %1057 = vmatpush1.msra.mxu0 0.0
        %1058 = vmatprep.subr.mxu0 0.0
        %1059 = vmatpush1.msra.mxu0 0.0
        %1060 = vmatprep.subr.mxu0 0.0
        %1061 = vmatpush1.msra.mxu0 0.0
        %1062 = vmatprep.subr.mxu0 0.0
        %1063 = vmatpush1.msra.mxu0 0.0
        %1064 = vmatprep.subr.mxu0 0.0
        %1065 = vmatpush1.msra.mxu0 0.0
        %1066 = vmatprep.subr.mxu0 0.0
        %1067 = vmatpush1.msra.mxu0 0.0
        %1068 = vmatprep.subr.mxu0 0.0
        %1069 = vmatpush1.msra.mxu0 0.0
        %1070 = vmatprep.subr.mxu0 0.0
        %1071 = vmatpush1.msra.mxu0 0.0
        %1072 = vmatprep.subr.mxu0 0.0
        %1073 = vmatpush1.msra.mxu0 0.0
        %1074 = vmatprep.subr.mxu0 0.0
        %1075 = vmatpush1.msra.mxu0 0.0
        %1076 = vmatprep.subr.mxu0 0.0
        %1077 = vmatpush1.msra.mxu0 0.0
        %1078 = vmatprep.subr.mxu0 0.0
        %1079 = vmatpush1.msra.mxu0 0.0
        %1080 = vmatprep.subr.mxu0 0.0
        %1081 = vmatpush1.msra.mxu0 0.0
        %1082 = vmatprep.subr.mxu0 0.0
        %1083 = vmatpush1.msra.mxu0 0.0
        %1084 = vmatprep.subr.mxu0 0.0
        %1085 = vmatpush1.msra.mxu0 0.0
        %1086 = vmatprep.subr.mxu0 0.0
        %1087 = vmatpush1.msra.mxu0 0.0
        %1088 = vmatprep.subr.mxu0 0.0
        %1089 = vmatpush1.msra.mxu0 0.0
        %1090 = vmatprep.subr.mxu0 0.0
        %1091 = vmatpush1.msra.mxu0 0.0
        %1092 = vmatprep.mubr.f32.mxu0 0.0
        %1093 = vmatmul.mubr.f32.gmra.mrb[0].mxu0 %v864
        %v1094 = vpop.f32.mrb[0].mxu0
        %v1095 = vadd.f32 %v595, %v1094
        %v1096 = vpop.f32.mrb[0].mxu0
        %1097 = vmatprep.mubr.f32.mxu0 0.0
        %1098 = vmatmul.mubr.f32.gmra.mrb[0].mxu0 %v867
        %v1099 = vpop.f32.mrb[0].mxu0
        %v1100 = vadd.f32 %v600, %v1099
        %v1101 = vpop.f32.mrb[0].mxu0
        %1102 = vmatprep.mubr.f32.mxu0 0.0
        %1103 = vmatmul.mubr.f32.gmra.mrb[0].mxu0 %v870
        %v1104 = vpop.f32.mrb[0].mxu0
        %v1105 = vadd.f32 %v605, %v1104
        %v1106 = vpop.f32.mrb[0].mxu0
        %1107 = vmatprep.mubr.f32.mxu0 0.0
        %1108 = vmatmul.mubr.f32.gmra.mrb[0].mxu0 %v873
        %v1109 = vpop.f32.mrb[0].mxu0
        %v1110 = vadd.f32 %v610, %v1109
        %v1111 = vpop.f32.mrb[0].mxu0
        %1112 = vmatprep.mubr.f32.mxu0 0.0
        %1113 = vmatmul.mubr.f32.gmra.mrb[0].mxu0 %v876
        %v1114 = vpop.f32.mrb[0].mxu0
        %v1115 = vadd.f32 %v615, %v1114
        %v1116 = vpop.f32.mrb[0].mxu0
        %1117 = vmatprep.mubr.f32.mxu0 0.0
        %1118 = vmatmul.mubr.f32.gmra.mrb[0].mxu0 %v879
        %v1119 = vpop.f32.mrb[0].mxu0
        %v1120 = vadd.f32 %v620, %v1119
        %v1121 = vpop.f32.mrb[0].mxu0
        %1122 = vmatprep.mubr.f32.mxu0 0.0
        %1123 = vmatmul.mubr.f32.gmra.mrb[0].mxu0 %v882
        %v1124 = vpop.f32.mrb[0].mxu0
        %v1125 = vadd.f32 %v625, %v1124
        %v1126 = vpop.f32.mrb[0].mxu0
        %1127 = vmatprep.mubr.f32.mxu0 0.0
        %1128 = vmatmul.mubr.f32.gmra.mrb[0].mxu0 %v885
        %v1129 = vpop.f32.mrb[0].mxu0
        %v1130 = vadd.f32 %v630, %v1129
        %v1131 = vpop.f32.mrb[0].mxu0
        %1132 = vmatprep.mubr.f32.mxu0 0.0
        %1133 = vmatmul.mubr.f32.gmra.mrb[0].mxu0 %v888
        %v1134 = vpop.f32.mrb[0].mxu0
        %v1135 = vadd.f32 %v635, %v1134
        %v1136 = vpop.f32.mrb[0].mxu0
        %1137 = vmatprep.mubr.f32.mxu0 0.0
        %1138 = vmatmul.mubr.f32.gmra.mrb[0].mxu0 %v891
        %v1139 = vpop.f32.mrb[0].mxu0
        %v1140 = vadd.f32 %v640, %v1139
        %v1141 = vpop.f32.mrb[0].mxu0
        %1142 = vmatprep.mubr.f32.mxu0 0.0
        %1143 = vmatmul.mubr.f32.gmra.mrb[0].mxu0 %v894
        %v1144 = vpop.f32.mrb[0].mxu0
        %v1145 = vadd.f32 %v645, %v1144
        %v1146 = vpop.f32.mrb[0].mxu0
        %1147 = vmatprep.mubr.f32.mxu0 0.0
        %1148 = vmatmul.mubr.f32.gmra.mrb[0].mxu0 %v897
        %v1149 = vpop.f32.mrb[0].mxu0
        %v1150 = vadd.f32 %v650, %v1149
        %v1151 = vpop.f32.mrb[0].mxu0
        %1152 = vmatprep.mubr.f32.mxu0 0.0
        %1153 = vmatmul.mubr.f32.gmra.mrb[0].mxu0 %v900
        %v1154 = vpop.f32.mrb[0].mxu0
        %v1155 = vadd.f32 %v655, %v1154
        %v1156 = vpop.f32.mrb[0].mxu0
        %1157 = vmatprep.mubr.f32.mxu0 0.0
        %1158 = vmatmul.mubr.f32.gmra.mrb[0].mxu0 %v903
        %v1159 = vpop.f32.mrb[0].mxu0
        %v1160 = vadd.f32 %v660, %v1159
        %v1161 = vpop.f32.mrb[0].mxu0
        %1162 = vmatprep.mubr.f32.mxu0 0.0
        %1163 = vmatmul.mubr.f32.gmra.mrb[0].mxu0 %v906
        %v1164 = vpop.f32.mrb[0].mxu0
        %v1165 = vadd.f32 %v665, %v1164
        %v1166 = vpop.f32.mrb[0].mxu0
        %1167 = vmatprep.mubr.f32.mxu0 0.0
        %1168 = vmatmul.mubr.f32.gmra.mrb[0].mxu0 %v909
        %v1169 = vpop.f32.mrb[0].mxu0
        %v1170 = vadd.f32 %v670, %v1169
        %v1171 = vpop.f32.mrb[0].mxu0
        %1172 = vmatprep.mubr.f32.mxu0 0.0
        %1173 = vmatmul.mubr.f32.gmra.mrb[0].mxu0 %v912
        %v1174 = vpop.f32.mrb[0].mxu0
        %v1175 = vadd.f32 %v675, %v1174
        %v1176 = vpop.f32.mrb[0].mxu0
        %1177 = vmatprep.mubr.f32.mxu0 0.0
        %1178 = vmatmul.mubr.f32.gmra.mrb[0].mxu0 %v915
        %v1179 = vpop.f32.mrb[0].mxu0
        %v1180 = vadd.f32 %v680, %v1179
        %v1181 = vpop.f32.mrb[0].mxu0
        %1182 = vmatprep.mubr.f32.mxu0 0.0
        %1183 = vmatmul.mubr.f32.gmra.mrb[0].mxu0 %v918
        %v1184 = vpop.f32.mrb[0].mxu0
        %v1185 = vadd.f32 %v685, %v1184
        %v1186 = vpop.f32.mrb[0].mxu0
        %1187 = vmatprep.mubr.f32.mxu0 0.0
        %1188 = vmatmul.mubr.f32.gmra.mrb[0].mxu0 %v921
        %v1189 = vpop.f32.mrb[0].mxu0
        %v1190 = vadd.f32 %v690, %v1189
        %v1191 = vpop.f32.mrb[0].mxu0
        %1192 = vmatprep.mubr.f32.mxu0 0.0
        %1193 = vmatmul.mubr.f32.gmra.mrb[0].mxu0 %v924
        %v1194 = vpop.f32.mrb[0].mxu0
        %v1195 = vadd.f32 %v695, %v1194
        %v1196 = vpop.f32.mrb[0].mxu0
        %1197 = vmatprep.mubr.f32.mxu0 0.0
        %1198 = vmatmul.mubr.f32.gmra.mrb[0].mxu0 %v927
        %v1199 = vpop.f32.mrb[0].mxu0
        %v1200 = vadd.f32 %v700, %v1199
        %v1201 = vpop.f32.mrb[0].mxu0
        %1202 = vmatprep.mubr.f32.mxu0 0.0
        %1203 = vmatmul.mubr.f32.gmra.mrb[0].mxu0 %v930
        %v1204 = vpop.f32.mrb[0].mxu0
        %v1205 = vadd.f32 %v705, %v1204
        %v1206 = vpop.f32.mrb[0].mxu0
        %1207 = vmatprep.mubr.f32.mxu0 0.0
        %1208 = vmatmul.mubr.f32.gmra.mrb[0].mxu0 %v933
        %v1209 = vpop.f32.mrb[0].mxu0
        %v1210 = vadd.f32 %v710, %v1209
        %v1211 = vpop.f32.mrb[0].mxu0
        %1212 = vmatprep.mubr.f32.mxu0 0.0
        %1213 = vmatmul.mubr.f32.gmra.mrb[0].mxu0 %v936
        %v1214 = vpop.f32.mrb[0].mxu0
        %v1215 = vadd.f32 %v715, %v1214
        %v1216 = vpop.f32.mrb[0].mxu0
        %1217 = vmatprep.mubr.f32.mxu0 0.0
        %1218 = vmatmul.mubr.f32.gmra.mrb[0].mxu0 %v939
        %v1219 = vpop.f32.mrb[0].mxu0
        %v1220 = vadd.f32 %v720, %v1219
        %v1221 = vpop.f32.mrb[0].mxu0
        %1222 = vmatprep.mubr.f32.mxu0 0.0
        %1223 = vmatmul.mubr.f32.gmra.mrb[0].mxu0 %v942
        %v1224 = vpop.f32.mrb[0].mxu0
        %v1225 = vadd.f32 %v725, %v1224
        %v1226 = vpop.f32.mrb[0].mxu0
        %1227 = vmatprep.mubr.f32.mxu0 0.0
        %1228 = vmatmul.mubr.f32.gmra.mrb[0].mxu0 %v945
        %v1229 = vpop.f32.mrb[0].mxu0
        %v1230 = vadd.f32 %v730, %v1229
        %v1231 = vpop.f32.mrb[0].mxu0
        %1232 = vmatprep.mubr.f32.mxu0 0.0
        %1233 = vmatmul.mubr.f32.gmra.mrb[0].mxu0 %v948
        %v1234 = vpop.f32.mrb[0].mxu0
        %v1235 = vadd.f32 %v735, %v1234
        %v1236 = vpop.f32.mrb[0].mxu0
        %1237 = vmatprep.mubr.f32.mxu0 0.0
        %1238 = vmatmul.mubr.f32.gmra.mrb[0].mxu0 %v951
        %v1239 = vpop.f32.mrb[0].mxu0
        %v1240 = vadd.f32 %v740, %v1239
        %v1241 = vpop.f32.mrb[0].mxu0
        %1242 = vmatprep.mubr.f32.mxu0 0.0
        %1243 = vmatmul.mubr.f32.gmra.mrb[0].mxu0 %v954
        %v1244 = vpop.f32.mrb[0].mxu0
        %v1245 = vadd.f32 %v745, %v1244
        %v1246 = vpop.f32.mrb[0].mxu0
        %1247 = vmatprep.mubr.f32.mxu0 0.0
        %1248 = vmatmul.mubr.f32.gmra.mrb[0].mxu0 %v957
        %v1249 = vpop.f32.mrb[0].mxu0
        %v1250 = vadd.f32 %v750, %v1249
        %v1251 = vpop.f32.mrb[0].mxu0
        %1252 = vmatprep.mubr.f32.mxu0 0.0
        %1253 = vmatmul.mubr.f32.gmra.mrb[0].mxu0 %v960
        %v1254 = vpop.f32.mrb[0].mxu0
        %v1255 = vadd.f32 %v755, %v1254
        %v1256 = vpop.f32.mrb[0].mxu0
        %1257 = vmatprep.mubr.f32.mxu0 0.0
        %1258 = vmatmul.mubr.f32.gmra.mrb[0].mxu0 %v963
        %v1259 = vpop.f32.mrb[0].mxu0
        %v1260 = vadd.f32 %v760, %v1259
        %v1261 = vpop.f32.mrb[0].mxu0
        %1262 = vmatprep.mubr.f32.mxu0 0.0
        %1263 = vmatmul.mubr.f32.gmra.mrb[0].mxu0 %v966
        %v1264 = vpop.f32.mrb[0].mxu0
        %v1265 = vadd.f32 %v765, %v1264
        %v1266 = vpop.f32.mrb[0].mxu0
        %1267 = vmatprep.mubr.f32.mxu0 0.0
        %1268 = vmatmul.mubr.f32.gmra.mrb[0].mxu0 %v969
        %v1269 = vpop.f32.mrb[0].mxu0
        %v1270 = vadd.f32 %v770, %v1269
        %v1271 = vpop.f32.mrb[0].mxu0
        %1272 = vmatprep.mubr.f32.mxu0 0.0
        %1273 = vmatmul.mubr.f32.gmra.mrb[0].mxu0 %v972
        %v1274 = vpop.f32.mrb[0].mxu0
        %v1275 = vadd.f32 %v775, %v1274
        %v1276 = vpop.f32.mrb[0].mxu0
        %1277 = vmatprep.mubr.f32.mxu0 0.0
        %1278 = vmatmul.mubr.f32.gmra.mrb[0].mxu0 %v975
        %v1279 = vpop.f32.mrb[0].mxu0
        %v1280 = vadd.f32 %v780, %v1279
        %v1281 = vpop.f32.mrb[0].mxu0
        %1282 = vmatprep.mubr.f32.mxu0 0.0
        %1283 = vmatmul.mubr.f32.gmra.mrb[0].mxu0 %v978
        %v1284 = vpop.f32.mrb[0].mxu0
        %v1285 = vadd.f32 %v785, %v1284
        %v1286 = vpop.f32.mrb[0].mxu0
        %1287 = vmatprep.mubr.f32.mxu0 0.0
        %1288 = vmatmul.mubr.f32.gmra.mrb[0].mxu0 %v981
        %v1289 = vpop.f32.mrb[0].mxu0
        %v1290 = vadd.f32 %v790, %v1289
        %v1291 = vpop.f32.mrb[0].mxu0
        %1292 = vmatprep.mubr.f32.mxu0 0.0
        %1293 = vmatmul.mubr.f32.gmra.mrb[0].mxu0 %v984
        %v1294 = vpop.f32.mrb[0].mxu0
        %v1295 = vadd.f32 %v795, %v1294
        %v1296 = vpop.f32.mrb[0].mxu0
        %1297 = vmatprep.mubr.f32.mxu0 0.0
        %1298 = vmatmul.mubr.f32.gmra.mrb[0].mxu0 %v987
        %v1299 = vpop.f32.mrb[0].mxu0
        %v1300 = vadd.f32 %v800, %v1299
        %v1301 = vpop.f32.mrb[0].mxu0
        %1302 = vmatprep.mubr.f32.mxu0 0.0
        %1303 = vmatmul.mubr.f32.gmra.mrb[0].mxu0 %v990
        %v1304 = vpop.f32.mrb[0].mxu0
        %v1305 = vadd.f32 %v805, %v1304
        %v1306 = vpop.f32.mrb[0].mxu0
        %1307 = vmatprep.mubr.f32.mxu0 0.0
        %1308 = vmatmul.mubr.f32.gmra.mrb[0].mxu0 %v993
        %v1309 = vpop.f32.mrb[0].mxu0
        %v1310 = vadd.f32 %v810, %v1309
        %v1311 = vpop.f32.mrb[0].mxu0
        %1312 = vmatprep.mubr.f32.mxu0 0.0
        %1313 = vmatmul.mubr.f32.gmra.mrb[0].mxu0 %v996
        %v1314 = vpop.f32.mrb[0].mxu0
        %v1315 = vadd.f32 %v815, %v1314
        %v1316 = vpop.f32.mrb[0].mxu0
        %1317 = vmatprep.mubr.f32.mxu0 0.0
        %1318 = vmatmul.mubr.f32.gmra.mrb[0].mxu0 %v999
        %v1319 = vpop.f32.mrb[0].mxu0
        %v1320 = vadd.f32 %v820, %v1319
        %v1321 = vpop.f32.mrb[0].mxu0
        %1322 = vmatprep.mubr.f32.mxu0 0.0
        %1323 = vmatmul.mubr.f32.gmra.mrb[0].mxu0 %v1002
        %v1324 = vpop.f32.mrb[0].mxu0
        %v1325 = vadd.f32 %v825, %v1324
        %v1326 = vpop.f32.mrb[0].mxu0
        %1327 = vmatprep.mubr.f32.mxu0 0.0
        %1328 = vmatmul.mubr.f32.gmra.mrb[0].mxu0 %v1005
        %v1329 = vpop.f32.mrb[0].mxu0
        %v1330 = vadd.f32 %v830, %v1329
        %v1331 = vpop.f32.mrb[0].mxu0
        %1332 = vmatprep.mubr.f32.mxu0 0.0
        %1333 = vmatmul.mubr.f32.gmra.mrb[0].mxu0 %v1008
        %v1334 = vpop.f32.mrb[0].mxu0
        %v1335 = vadd.f32 %v835, %v1334
        %v1336 = vpop.f32.mrb[0].mxu0
        %1337 = vmatprep.mubr.f32.mxu0 0.0
        %1338 = vmatmul.mubr.f32.gmra.mrb[0].mxu0 %v1011
        %v1339 = vpop.f32.mrb[0].mxu0
        %v1340 = vadd.f32 %v840, %v1339
        %v1341 = vpop.f32.mrb[0].mxu0
        %1342 = vmatprep.mubr.f32.mxu0 0.0
        %1343 = vmatmul.mubr.f32.gmra.mrb[0].mxu0 %v1014
        %v1344 = vpop.f32.mrb[0].mxu0
        %v1345 = vadd.f32 %v845, %v1344
        %v1346 = vpop.f32.mrb[0].mxu0
        %1347 = vmatprep.mubr.f32.mxu0 0.0
        %1348 = vmatmul.mubr.f32.gmra.mrb[0].mxu0 %v1017
        %v1349 = vpop.f32.mrb[0].mxu0
        %v1350 = vadd.f32 %v850, %v1349
        %v1351 = vpop.f32.mrb[0].mxu0
        %1352 = vmatprep.mubr.f32.mxu0 0.0
        %1353 = vmatmul.mubr.f32.gmra.mrb[0].mxu0 %v1020
        %v1354 = vpop.f32.mrb[0].mxu0
        %v1355 = vadd.f32 %v855, %v1354
        %v1356 = vpop.f32.mrb[0].mxu0
        %1357 = vmatprep.mubr.f32.mxu0 0.0
        %1358 = vmatmul.mubr.f32.gmra.mrb[0].mxu0 %v1023
        %v1359 = vpop.f32.mrb[0].mxu0
        %v1360 = vadd.f32 %v860, %v1359
        %v1361 = vpop.f32.mrb[0].mxu0
        %1362 = vdwg.mxu0
        %v1363 = vld [vmem:[%s249 + $0x2] sm:$0xff]
        %v1364 = vld [vmem:[%s249 + $0xa] sm:$0xff]
        %v1365 = vld [vmem:[%s249 + $0x12] sm:$0xff]
        %v1366 = vld [vmem:[%s249 + $0x22] sm:$0xff]
        %v1367 = vld [vmem:[%s249 + $0x2a] sm:$0xff]
        %v1368 = vld [vmem:[%s249 + $0x32] sm:$0xff]
        %v1369 = vld [vmem:[%s249 + $0x42] sm:$0xff]
        %v1370 = vld [vmem:[%s249 + $0x4a] sm:$0xff]
        %v1371 = vld [vmem:[%s249 + $0x52] sm:$0xff]
        %v1372 = vld [vmem:[%s249 + $0x62] sm:$0xff]
        %v1373 = vld [vmem:[%s249 + $0x6a] sm:$0xff]
        %v1374 = vld [vmem:[%s249 + $0x72] sm:$0xff]
        %v1375 = vld [vmem:[%s249 + $0x82] sm:$0xff]
        %v1376 = vld [vmem:[%s249 + $0x8a] sm:$0xff]
        %v1377 = vld [vmem:[%s249 + $0x92] sm:$0xff]
        %v1378 = vld [vmem:[%s249 + $0xa2] sm:$0xff]
        %v1379 = vld [vmem:[%s249 + $0xaa] sm:$0xff]
        %v1380 = vld [vmem:[%s249 + $0xb2] sm:$0xff]
        %v1381 = vld [vmem:[%s249 + $0xc2] sm:$0xff]
        %v1382 = vld [vmem:[%s249 + $0xca] sm:$0xff]
        %v1383 = vld [vmem:[%s249 + $0xd2] sm:$0xff]
        %v1384 = vld [vmem:[%s249 + $0xe2] sm:$0xff]
        %v1385 = vld [vmem:[%s249 + $0xea] sm:$0xff]
        %v1386 = vld [vmem:[%s249 + $0xf2] sm:$0xff]
        %v1387 = vld [vmem:[%s249 + $0x102] sm:$0xff]
        %v1388 = vld [vmem:[%s249 + $0x10a] sm:$0xff]
        %v1389 = vld [vmem:[%s249 + $0x112] sm:$0xff]
        %v1390 = vld [vmem:[%s249 + $0x122] sm:$0xff]
        %v1391 = vld [vmem:[%s249 + $0x12a] sm:$0xff]
        %v1392 = vld [vmem:[%s249 + $0x132] sm:$0xff]
        %v1393 = vld [vmem:[%s249 + $0x142] sm:$0xff]
        %v1394 = vld [vmem:[%s249 + $0x14a] sm:$0xff]
        %v1395 = vld [vmem:[%s249 + $0x152] sm:$0xff]
        %v1396 = vld [vmem:[%s249 + $0x162] sm:$0xff]
        %v1397 = vld [vmem:[%s249 + $0x16a] sm:$0xff]
        %v1398 = vld [vmem:[%s249 + $0x172] sm:$0xff]
        %v1399 = vld [vmem:[%s249 + $0x182] sm:$0xff]
        %v1400 = vld [vmem:[%s249 + $0x18a] sm:$0xff]
        %v1401 = vld [vmem:[%s249 + $0x192] sm:$0xff]
        %v1402 = vld [vmem:[%s249 + $0x1a2] sm:$0xff]
        %v1403 = vld [vmem:[%s249 + $0x1aa] sm:$0xff]
        %v1404 = vld [vmem:[%s249 + $0x1b2] sm:$0xff]
        %v1405 = vld [vmem:[%s249 + $0x1c2] sm:$0xff]
        %v1406 = vld [vmem:[%s249 + $0x1ca] sm:$0xff]
        %v1407 = vld [vmem:[%s249 + $0x1d2] sm:$0xff]
        %v1408 = vld [vmem:[%s249 + $0x1e2] sm:$0xff]
        %v1409 = vld [vmem:[%s249 + $0x1ea] sm:$0xff]
        %v1410 = vld [vmem:[%s249 + $0x1f2] sm:$0xff]
        %v1411 = vld [vmem:[%s249 + $0x202] sm:$0xff]
        %v1412 = vld [vmem:[%s249 + $0x20a] sm:$0xff]
        %v1413 = vld [vmem:[%s249 + $0x212] sm:$0xff]
        %v1414 = vld [vmem:[%s249 + $0x222] sm:$0xff]
        %v1415 = vld [vmem:[%s249 + $0x22a] sm:$0xff]
        %v1416 = vld [vmem:[%s249 + $0x232] sm:$0xff]
        %s1417 = scalar_lea.vmem %s1, 8
        %v1418 = vld [vmem:[%s1417] sm:$0xf]
        %v1420 = vsel %vm361, %v1363, 0
        %v1423 = vsel %vm361, %v1364, 0
        %v1426 = vsel %vm361, %v1365, 0
        %v1429 = vsel %vm361, %v1366, 0
        %v1432 = vsel %vm361, %v1367, 0
        %v1435 = vsel %vm361, %v1368, 0
        %v1438 = vsel %vm361, %v1369, 0
        %v1441 = vsel %vm361, %v1370, 0
        %v1444 = vsel %vm361, %v1371, 0
        %v1447 = vsel %vm361, %v1372, 0
        %v1450 = vsel %vm361, %v1373, 0
        %v1453 = vsel %vm361, %v1374, 0
        %v1456 = vsel %vm361, %v1375, 0
        %v1459 = vsel %vm361, %v1376, 0
        %v1462 = vsel %vm361, %v1377, 0
        %v1465 = vsel %vm361, %v1378, 0
        %v1468 = vsel %vm361, %v1379, 0
        %v1471 = vsel %vm361, %v1380, 0
        %v1474 = vsel %vm361, %v1381, 0
        %v1477 = vsel %vm361, %v1382, 0
        %v1480 = vsel %vm361, %v1383, 0
        %v1483 = vsel %vm361, %v1384, 0
        %v1486 = vsel %vm361, %v1385, 0
        %v1489 = vsel %vm361, %v1386, 0
        %v1492 = vsel %vm361, %v1387, 0
        %v1495 = vsel %vm361, %v1388, 0
        %v1498 = vsel %vm361, %v1389, 0
        %v1501 = vsel %vm361, %v1390, 0
        %v1504 = vsel %vm361, %v1391, 0
        %v1507 = vsel %vm361, %v1392, 0
        %v1510 = vsel %vm361, %v1393, 0
        %v1513 = vsel %vm361, %v1394, 0
        %v1516 = vsel %vm361, %v1395, 0
        %v1519 = vsel %vm361, %v1396, 0
        %v1522 = vsel %vm361, %v1397, 0
        %v1525 = vsel %vm361, %v1398, 0
        %v1528 = vsel %vm361, %v1399, 0
        %v1531 = vsel %vm361, %v1400, 0
        %v1534 = vsel %vm361, %v1401, 0
        %v1537 = vsel %vm361, %v1402, 0
        %v1540 = vsel %vm361, %v1403, 0
        %v1543 = vsel %vm361, %v1404, 0
        %v1546 = vsel %vm361, %v1405, 0
        %v1549 = vsel %vm361, %v1406, 0
        %v1552 = vsel %vm361, %v1407, 0
        %v1555 = vsel %vm361, %v1408, 0
        %v1558 = vsel %vm361, %v1409, 0
        %v1561 = vsel %vm361, %v1410, 0
        %v1564 = vsel %vm361, %v1411, 0
        %v1567 = vsel %vm361, %v1412, 0
        %v1570 = vsel %vm361, %v1413, 0
        %v1573 = vsel %vm361, %v1414, 0
        %v1576 = vsel %vm361, %v1415, 0
        %v1579 = vsel %vm361, %v1416, 0
        %v1582 = vsel %vm524, %v1418, 0
        %1584 = vmatprep.subr.mxu0 0.0
        %1585 = vmatpush1.msra.mxu0 %v1582
        %1586 = vmatprep.subr.mxu0 0.0
        %1587 = vmatpush1.msra.mxu0 0.0
        %1588 = vmatprep.subr.mxu0 0.0
        %1589 = vmatpush1.msra.mxu0 0.0
        %1590 = vmatprep.subr.mxu0 0.0
        %1591 = vmatpush1.msra.mxu0 0.0
        %1592 = vmatprep.subr.mxu0 0.0
        %1593 = vmatpush1.msra.mxu0 0.0
        %1594 = vmatprep.subr.mxu0 0.0
        %1595 = vmatpush1.msra.mxu0 0.0
        %1596 = vmatprep.subr.mxu0 0.0
        %1597 = vmatpush1.msra.mxu0 0.0
        %1598 = vmatprep.subr.mxu0 0.0
        %1599 = vmatpush1.msra.mxu0 0.0
        %1600 = vmatprep.subr.mxu0 0.0
        %1601 = vmatpush1.msra.mxu0 0.0
        %1602 = vmatprep.subr.mxu0 0.0
        %1603 = vmatpush1.msra.mxu0 0.0
        %1604 = vmatprep.subr.mxu0 0.0
        %1605 = vmatpush1.msra.mxu0 0.0
        %1606 = vmatprep.subr.mxu0 0.0
        %1607 = vmatpush1.msra.mxu0 0.0
        %1608 = vmatprep.subr.mxu0 0.0
        %1609 = vmatpush1.msra.mxu0 0.0
        %1610 = vmatprep.subr.mxu0 0.0
        %1611 = vmatpush1.msra.mxu0 0.0
        %1612 = vmatprep.subr.mxu0 0.0
        %1613 = vmatpush1.msra.mxu0 0.0
        %1614 = vmatprep.subr.mxu0 0.0
        %1615 = vmatpush1.msra.mxu0 0.0
        %1616 = vmatprep.subr.mxu0 0.0
        %1617 = vmatpush1.msra.mxu0 0.0
        %1618 = vmatprep.subr.mxu0 0.0
        %1619 = vmatpush1.msra.mxu0 0.0
        %1620 = vmatprep.subr.mxu0 0.0
        %1621 = vmatpush1.msra.mxu0 0.0
        %1622 = vmatprep.subr.mxu0 0.0
        %1623 = vmatpush1.msra.mxu0 0.0
        %1624 = vmatprep.subr.mxu0 0.0
        %1625 = vmatpush1.msra.mxu0 0.0
        %1626 = vmatprep.subr.mxu0 0.0
        %1627 = vmatpush1.msra.mxu0 0.0
        %1628 = vmatprep.subr.mxu0 0.0
        %1629 = vmatpush1.msra.mxu0 0.0
        %1630 = vmatprep.subr.mxu0 0.0
        %1631 = vmatpush1.msra.mxu0 0.0
        %1632 = vmatprep.subr.mxu0 0.0
        %1633 = vmatpush1.msra.mxu0 0.0
        %1634 = vmatprep.subr.mxu0 0.0
        %1635 = vmatpush1.msra.mxu0 0.0
        %1636 = vmatprep.subr.mxu0 0.0
        %1637 = vmatpush1.msra.mxu0 0.0
        %1638 = vmatprep.subr.mxu0 0.0
        %1639 = vmatpush1.msra.mxu0 0.0
        %1640 = vmatprep.subr.mxu0 0.0
        %1641 = vmatpush1.msra.mxu0 0.0
        %1642 = vmatprep.subr.mxu0 0.0
        %1643 = vmatpush1.msra.mxu0 0.0
        %1644 = vmatprep.subr.mxu0 0.0
        %1645 = vmatpush1.msra.mxu0 0.0
        %1646 = vmatprep.subr.mxu0 0.0
        %1647 = vmatpush1.msra.mxu0 0.0
        %1648 = vmatprep.mubr.f32.mxu0 0.0
        %1649 = vmatmul.mubr.f32.gmra.mrb[0].mxu0 %v1420
        %v1650 = vpop.f32.mrb[0].mxu0
        %v1651 = vadd.f32 0.0, %v1650
        %v1652 = vpop.f32.mrb[0].mxu0
        %1653 = vmatprep.mubr.f32.mxu0 0.0
        %1654 = vmatmul.mubr.f32.gmra.mrb[0].mxu0 %v1423
        %v1655 = vpop.f32.mrb[0].mxu0
        %v1656 = vadd.f32 0.0, %v1655
        %v1657 = vpop.f32.mrb[0].mxu0
        %1658 = vmatprep.mubr.f32.mxu0 0.0
        %1659 = vmatmul.mubr.f32.gmra.mrb[0].mxu0 %v1426
        %v1660 = vpop.f32.mrb[0].mxu0
        %v1661 = vadd.f32 0.0, %v1660
        %v1662 = vpop.f32.mrb[0].mxu0
        %1663 = vmatprep.mubr.f32.mxu0 0.0
        %1664 = vmatmul.mubr.f32.gmra.mrb[0].mxu0 %v1429
        %v1665 = vpop.f32.mrb[0].mxu0
        %v1666 = vadd.f32 0.0, %v1665
        %v1667 = vpop.f32.mrb[0].mxu0
        %1668 = vmatprep.mubr.f32.mxu0 0.0
        %1669 = vmatmul.mubr.f32.gmra.mrb[0].mxu0 %v1432
        %v1670 = vpop.f32.mrb[0].mxu0
        %v1671 = vadd.f32 0.0, %v1670
        %v1672 = vpop.f32.mrb[0].mxu0
        %1673 = vmatprep.mubr.f32.mxu0 0.0
        %1674 = vmatmul.mubr.f32.gmra.mrb[0].mxu0 %v1435
        %v1675 = vpop.f32.mrb[0].mxu0
        %v1676 = vadd.f32 0.0, %v1675
        %v1677 = vpop.f32.mrb[0].mxu0
        %1678 = vmatprep.mubr.f32.mxu0 0.0
        %1679 = vmatmul.mubr.f32.gmra.mrb[0].mxu0 %v1438
        %v1680 = vpop.f32.mrb[0].mxu0
        %v1681 = vadd.f32 0.0, %v1680
        %v1682 = vpop.f32.mrb[0].mxu0
        %1683 = vmatprep.mubr.f32.mxu0 0.0
        %1684 = vmatmul.mubr.f32.gmra.mrb[0].mxu0 %v1441
        %v1685 = vpop.f32.mrb[0].mxu0
        %v1686 = vadd.f32 0.0, %v1685
        %v1687 = vpop.f32.mrb[0].mxu0
        %1688 = vmatprep.mubr.f32.mxu0 0.0
        %1689 = vmatmul.mubr.f32.gmra.mrb[0].mxu0 %v1444
        %v1690 = vpop.f32.mrb[0].mxu0
        %v1691 = vadd.f32 0.0, %v1690
        %v1692 = vpop.f32.mrb[0].mxu0
        %1693 = vmatprep.mubr.f32.mxu0 0.0
        %1694 = vmatmul.mubr.f32.gmra.mrb[0].mxu0 %v1447
        %v1695 = vpop.f32.mrb[0].mxu0
        %v1696 = vadd.f32 0.0, %v1695
        %v1697 = vpop.f32.mrb[0].mxu0
        %1698 = vmatprep.mubr.f32.mxu0 0.0
        %1699 = vmatmul.mubr.f32.gmra.mrb[0].mxu0 %v1450
        %v1700 = vpop.f32.mrb[0].mxu0
        %v1701 = vadd.f32 0.0, %v1700
        %v1702 = vpop.f32.mrb[0].mxu0
        %1703 = vmatprep.mubr.f32.mxu0 0.0
        %1704 = vmatmul.mubr.f32.gmra.mrb[0].mxu0 %v1453
        %v1705 = vpop.f32.mrb[0].mxu0
        %v1706 = vadd.f32 0.0, %v1705
        %v1707 = vpop.f32.mrb[0].mxu0
        %1708 = vmatprep.mubr.f32.mxu0 0.0
        %1709 = vmatmul.mubr.f32.gmra.mrb[0].mxu0 %v1456
        %v1710 = vpop.f32.mrb[0].mxu0
        %v1711 = vadd.f32 0.0, %v1710
        %v1712 = vpop.f32.mrb[0].mxu0
        %1713 = vmatprep.mubr.f32.mxu0 0.0
        %1714 = vmatmul.mubr.f32.gmra.mrb[0].mxu0 %v1459
        %v1715 = vpop.f32.mrb[0].mxu0
        %v1716 = vadd.f32 0.0, %v1715
        %v1717 = vpop.f32.mrb[0].mxu0
        %1718 = vmatprep.mubr.f32.mxu0 0.0
        %1719 = vmatmul.mubr.f32.gmra.mrb[0].mxu0 %v1462
        %v1720 = vpop.f32.mrb[0].mxu0
        %v1721 = vadd.f32 0.0, %v1720
        %v1722 = vpop.f32.mrb[0].mxu0
        %1723 = vmatprep.mubr.f32.mxu0 0.0
        %1724 = vmatmul.mubr.f32.gmra.mrb[0].mxu0 %v1465
        %v1725 = vpop.f32.mrb[0].mxu0
        %v1726 = vadd.f32 0.0, %v1725
        %v1727 = vpop.f32.mrb[0].mxu0
        %1728 = vmatprep.mubr.f32.mxu0 0.0
        %1729 = vmatmul.mubr.f32.gmra.mrb[0].mxu0 %v1468
        %v1730 = vpop.f32.mrb[0].mxu0
        %v1731 = vadd.f32 0.0, %v1730
        %v1732 = vpop.f32.mrb[0].mxu0
        %1733 = vmatprep.mubr.f32.mxu0 0.0
        %1734 = vmatmul.mubr.f32.gmra.mrb[0].mxu0 %v1471
        %v1735 = vpop.f32.mrb[0].mxu0
        %v1736 = vadd.f32 0.0, %v1735
        %v1737 = vpop.f32.mrb[0].mxu0
        %1738 = vmatprep.mubr.f32.mxu0 0.0
        %1739 = vmatmul.mubr.f32.gmra.mrb[0].mxu0 %v1474
        %v1740 = vpop.f32.mrb[0].mxu0
        %v1741 = vadd.f32 0.0, %v1740
        %v1742 = vpop.f32.mrb[0].mxu0
        %1743 = vmatprep.mubr.f32.mxu0 0.0
        %1744 = vmatmul.mubr.f32.gmra.mrb[0].mxu0 %v1477
        %v1745 = vpop.f32.mrb[0].mxu0
        %v1746 = vadd.f32 0.0, %v1745
        %v1747 = vpop.f32.mrb[0].mxu0
        %1748 = vmatprep.mubr.f32.mxu0 0.0
        %1749 = vmatmul.mubr.f32.gmra.mrb[0].mxu0 %v1480
        %v1750 = vpop.f32.mrb[0].mxu0
        %v1751 = vadd.f32 0.0, %v1750
        %v1752 = vpop.f32.mrb[0].mxu0
        %1753 = vmatprep.mubr.f32.mxu0 0.0
        %1754 = vmatmul.mubr.f32.gmra.mrb[0].mxu0 %v1483
        %v1755 = vpop.f32.mrb[0].mxu0
        %v1756 = vadd.f32 0.0, %v1755
        %v1757 = vpop.f32.mrb[0].mxu0
        %1758 = vmatprep.mubr.f32.mxu0 0.0
        %1759 = vmatmul.mubr.f32.gmra.mrb[0].mxu0 %v1486
        %v1760 = vpop.f32.mrb[0].mxu0
        %v1761 = vadd.f32 0.0, %v1760
        %v1762 = vpop.f32.mrb[0].mxu0
        %1763 = vmatprep.mubr.f32.mxu0 0.0
        %1764 = vmatmul.mubr.f32.gmra.mrb[0].mxu0 %v1489
        %v1765 = vpop.f32.mrb[0].mxu0
        %v1766 = vadd.f32 0.0, %v1765
        %v1767 = vpop.f32.mrb[0].mxu0
        %1768 = vmatprep.mubr.f32.mxu0 0.0
        %1769 = vmatmul.mubr.f32.gmra.mrb[0].mxu0 %v1492
        %v1770 = vpop.f32.mrb[0].mxu0
        %v1771 = vadd.f32 0.0, %v1770
        %v1772 = vpop.f32.mrb[0].mxu0
        %1773 = vmatprep.mubr.f32.mxu0 0.0
        %1774 = vmatmul.mubr.f32.gmra.mrb[0].mxu0 %v1495
        %v1775 = vpop.f32.mrb[0].mxu0
        %v1776 = vadd.f32 0.0, %v1775
        %v1777 = vpop.f32.mrb[0].mxu0
        %1778 = vmatprep.mubr.f32.mxu0 0.0
        %1779 = vmatmul.mubr.f32.gmra.mrb[0].mxu0 %v1498
        %v1780 = vpop.f32.mrb[0].mxu0
        %v1781 = vadd.f32 0.0, %v1780
        %v1782 = vpop.f32.mrb[0].mxu0
        %1783 = vmatprep.mubr.f32.mxu0 0.0
        %1784 = vmatmul.mubr.f32.gmra.mrb[0].mxu0 %v1501
        %v1785 = vpop.f32.mrb[0].mxu0
        %v1786 = vadd.f32 0.0, %v1785
        %v1787 = vpop.f32.mrb[0].mxu0
        %1788 = vmatprep.mubr.f32.mxu0 0.0
        %1789 = vmatmul.mubr.f32.gmra.mrb[0].mxu0 %v1504
        %v1790 = vpop.f32.mrb[0].mxu0
        %v1791 = vadd.f32 0.0, %v1790
        %v1792 = vpop.f32.mrb[0].mxu0
        %1793 = vmatprep.mubr.f32.mxu0 0.0
        %1794 = vmatmul.mubr.f32.gmra.mrb[0].mxu0 %v1507
        %v1795 = vpop.f32.mrb[0].mxu0
        %v1796 = vadd.f32 0.0, %v1795
        %v1797 = vpop.f32.mrb[0].mxu0
        %1798 = vmatprep.mubr.f32.mxu0 0.0
        %1799 = vmatmul.mubr.f32.gmra.mrb[0].mxu0 %v1510
        %v1800 = vpop.f32.mrb[0].mxu0
        %v1801 = vadd.f32 0.0, %v1800
        %v1802 = vpop.f32.mrb[0].mxu0
        %1803 = vmatprep.mubr.f32.mxu0 0.0
        %1804 = vmatmul.mubr.f32.gmra.mrb[0].mxu0 %v1513
        %v1805 = vpop.f32.mrb[0].mxu0
        %v1806 = vadd.f32 0.0, %v1805
        %v1807 = vpop.f32.mrb[0].mxu0
        %1808 = vmatprep.mubr.f32.mxu0 0.0
        %1809 = vmatmul.mubr.f32.gmra.mrb[0].mxu0 %v1516
        %v1810 = vpop.f32.mrb[0].mxu0
        %v1811 = vadd.f32 0.0, %v1810
        %v1812 = vpop.f32.mrb[0].mxu0
        %1813 = vmatprep.mubr.f32.mxu0 0.0
        %1814 = vmatmul.mubr.f32.gmra.mrb[0].mxu0 %v1519
        %v1815 = vpop.f32.mrb[0].mxu0
        %v1816 = vadd.f32 0.0, %v1815
        %v1817 = vpop.f32.mrb[0].mxu0
        %1818 = vmatprep.mubr.f32.mxu0 0.0
        %1819 = vmatmul.mubr.f32.gmra.mrb[0].mxu0 %v1522
        %v1820 = vpop.f32.mrb[0].mxu0
        %v1821 = vadd.f32 0.0, %v1820
        %v1822 = vpop.f32.mrb[0].mxu0
        %1823 = vmatprep.mubr.f32.mxu0 0.0
        %1824 = vmatmul.mubr.f32.gmra.mrb[0].mxu0 %v1525
        %v1825 = vpop.f32.mrb[0].mxu0
        %v1826 = vadd.f32 0.0, %v1825
        %v1827 = vpop.f32.mrb[0].mxu0
        %1828 = vmatprep.mubr.f32.mxu0 0.0
        %1829 = vmatmul.mubr.f32.gmra.mrb[0].mxu0 %v1528
        %v1830 = vpop.f32.mrb[0].mxu0
        %v1831 = vadd.f32 0.0, %v1830
        %v1832 = vpop.f32.mrb[0].mxu0
        %1833 = vmatprep.mubr.f32.mxu0 0.0
        %1834 = vmatmul.mubr.f32.gmra.mrb[0].mxu0 %v1531
        %v1835 = vpop.f32.mrb[0].mxu0
        %v1836 = vadd.f32 0.0, %v1835
        %v1837 = vpop.f32.mrb[0].mxu0
        %1838 = vmatprep.mubr.f32.mxu0 0.0
        %1839 = vmatmul.mubr.f32.gmra.mrb[0].mxu0 %v1534
        %v1840 = vpop.f32.mrb[0].mxu0
        %v1841 = vadd.f32 0.0, %v1840
        %v1842 = vpop.f32.mrb[0].mxu0
        %1843 = vmatprep.mubr.f32.mxu0 0.0
        %1844 = vmatmul.mubr.f32.gmra.mrb[0].mxu0 %v1537
        %v1845 = vpop.f32.mrb[0].mxu0
        %v1846 = vadd.f32 0.0, %v1845
        %v1847 = vpop.f32.mrb[0].mxu0
        %1848 = vmatprep.mubr.f32.mxu0 0.0
        %1849 = vmatmul.mubr.f32.gmra.mrb[0].mxu0 %v1540
        %v1850 = vpop.f32.mrb[0].mxu0
        %v1851 = vadd.f32 0.0, %v1850
        %v1852 = vpop.f32.mrb[0].mxu0
        %1853 = vmatprep.mubr.f32.mxu0 0.0
        %1854 = vmatmul.mubr.f32.gmra.mrb[0].mxu0 %v1543
        %v1855 = vpop.f32.mrb[0].mxu0
        %v1856 = vadd.f32 0.0, %v1855
        %v1857 = vpop.f32.mrb[0].mxu0
        %1858 = vmatprep.mubr.f32.mxu0 0.0
        %1859 = vmatmul.mubr.f32.gmra.mrb[0].mxu0 %v1546
        %v1860 = vpop.f32.mrb[0].mxu0
        %v1861 = vadd.f32 0.0, %v1860
        %v1862 = vpop.f32.mrb[0].mxu0
        %1863 = vmatprep.mubr.f32.mxu0 0.0
        %1864 = vmatmul.mubr.f32.gmra.mrb[0].mxu0 %v1549
        %v1865 = vpop.f32.mrb[0].mxu0
        %v1866 = vadd.f32 0.0, %v1865
        %v1867 = vpop.f32.mrb[0].mxu0
        %1868 = vmatprep.mubr.f32.mxu0 0.0
        %1869 = vmatmul.mubr.f32.gmra.mrb[0].mxu0 %v1552
        %v1870 = vpop.f32.mrb[0].mxu0
        %v1871 = vadd.f32 0.0, %v1870
        %v1872 = vpop.f32.mrb[0].mxu0
        %1873 = vmatprep.mubr.f32.mxu0 0.0
        %1874 = vmatmul.mubr.f32.gmra.mrb[0].mxu0 %v1555
        %v1875 = vpop.f32.mrb[0].mxu0
        %v1876 = vadd.f32 0.0, %v1875
        %v1877 = vpop.f32.mrb[0].mxu0
        %1878 = vmatprep.mubr.f32.mxu0 0.0
        %1879 = vmatmul.mubr.f32.gmra.mrb[0].mxu0 %v1558
        %v1880 = vpop.f32.mrb[0].mxu0
        %v1881 = vadd.f32 0.0, %v1880
        %v1882 = vpop.f32.mrb[0].mxu0
        %1883 = vmatprep.mubr.f32.mxu0 0.0
        %1884 = vmatmul.mubr.f32.gmra.mrb[0].mxu0 %v1561
        %v1885 = vpop.f32.mrb[0].mxu0
        %v1886 = vadd.f32 0.0, %v1885
        %v1887 = vpop.f32.mrb[0].mxu0
        %1888 = vmatprep.mubr.f32.mxu0 0.0
        %1889 = vmatmul.mubr.f32.gmra.mrb[0].mxu0 %v1564
        %v1890 = vpop.f32.mrb[0].mxu0
        %v1891 = vadd.f32 0.0, %v1890
        %v1892 = vpop.f32.mrb[0].mxu0
        %1893 = vmatprep.mubr.f32.mxu0 0.0
        %1894 = vmatmul.mubr.f32.gmra.mrb[0].mxu0 %v1567
        %v1895 = vpop.f32.mrb[0].mxu0
        %v1896 = vadd.f32 0.0, %v1895
        %v1897 = vpop.f32.mrb[0].mxu0
        %1898 = vmatprep.mubr.f32.mxu0 0.0
        %1899 = vmatmul.mubr.f32.gmra.mrb[0].mxu0 %v1570
        %v1900 = vpop.f32.mrb[0].mxu0
        %v1901 = vadd.f32 0.0, %v1900
        %v1902 = vpop.f32.mrb[0].mxu0
        %1903 = vmatprep.mubr.f32.mxu0 0.0
        %1904 = vmatmul.mubr.f32.gmra.mrb[0].mxu0 %v1573
        %v1905 = vpop.f32.mrb[0].mxu0
        %v1906 = vadd.f32 0.0, %v1905
        %v1907 = vpop.f32.mrb[0].mxu0
        %1908 = vmatprep.mubr.f32.mxu0 0.0
        %1909 = vmatmul.mubr.f32.gmra.mrb[0].mxu0 %v1576
        %v1910 = vpop.f32.mrb[0].mxu0
        %v1911 = vadd.f32 0.0, %v1910
        %v1912 = vpop.f32.mrb[0].mxu0
        %1913 = vmatprep.mubr.f32.mxu0 0.0
        %1914 = vmatmul.mubr.f32.gmra.mrb[0].mxu0 %v1579
        %v1915 = vpop.f32.mrb[0].mxu0
        %v1916 = vadd.f32 0.0, %v1915
        %v1917 = vpop.f32.mrb[0].mxu0
        %1918 = vdwg.mxu0
        %v1919 = vadd.f32 %v1095, %v1651
        %v1920 = vadd.f32 %v1100, %v1656
        %v1921 = vadd.f32 %v1105, %v1661
        %v1922 = vadd.f32 %v1110, %v1666
        %v1923 = vadd.f32 %v1115, %v1671
        %v1924 = vadd.f32 %v1120, %v1676
        %v1925 = vadd.f32 %v1125, %v1681
        %v1926 = vadd.f32 %v1130, %v1686
        %v1927 = vadd.f32 %v1135, %v1691
        %v1928 = vadd.f32 %v1140, %v1696
        %v1929 = vadd.f32 %v1145, %v1701
        %v1930 = vadd.f32 %v1150, %v1706
        %v1931 = vadd.f32 %v1155, %v1711
        %v1932 = vadd.f32 %v1160, %v1716
        %v1933 = vadd.f32 %v1165, %v1721
        %v1934 = vadd.f32 %v1170, %v1726
        %v1935 = vadd.f32 %v1175, %v1731
        %v1936 = vadd.f32 %v1180, %v1736
        %v1937 = vadd.f32 %v1185, %v1741
        %v1938 = vadd.f32 %v1190, %v1746
        %v1939 = vadd.f32 %v1195, %v1751
        %v1940 = vadd.f32 %v1200, %v1756
        %v1941 = vadd.f32 %v1205, %v1761
        %v1942 = vadd.f32 %v1210, %v1766
        %v1943 = vadd.f32 %v1215, %v1771
        %v1944 = vadd.f32 %v1220, %v1776
        %v1945 = vadd.f32 %v1225, %v1781
        %v1946 = vadd.f32 %v1230, %v1786
        %v1947 = vadd.f32 %v1235, %v1791
        %v1948 = vadd.f32 %v1240, %v1796
        %v1949 = vadd.f32 %v1245, %v1801
        %v1950 = vadd.f32 %v1250, %v1806
        %v1951 = vadd.f32 %v1255, %v1811
        %v1952 = vadd.f32 %v1260, %v1816
        %v1953 = vadd.f32 %v1265, %v1821
        %v1954 = vadd.f32 %v1270, %v1826
        %v1955 = vadd.f32 %v1275, %v1831
        %v1956 = vadd.f32 %v1280, %v1836
        %v1957 = vadd.f32 %v1285, %v1841
        %v1958 = vadd.f32 %v1290, %v1846
        %v1959 = vadd.f32 %v1295, %v1851
        %v1960 = vadd.f32 %v1300, %v1856
        %v1961 = vadd.f32 %v1305, %v1861
        %v1962 = vadd.f32 %v1310, %v1866
        %v1963 = vadd.f32 %v1315, %v1871
        %v1964 = vadd.f32 %v1320, %v1876
        %v1965 = vadd.f32 %v1325, %v1881
        %v1966 = vadd.f32 %v1330, %v1886
        %v1967 = vadd.f32 %v1335, %v1891
        %v1968 = vadd.f32 %v1340, %v1896
        %v1969 = vadd.f32 %v1345, %v1901
        %v1970 = vadd.f32 %v1350, %v1906
        %v1971 = vadd.f32 %v1355, %v1911
        %v1972 = vadd.f32 %v1360, %v1916
        %s1973 = scalar_lea.vmem %s249, 32
        %v1974 = vld [vmem:[%s1973] sm:$0xff]
        %v1975 = vld [vmem:[%s1973 + $0x8] sm:$0xff]
        %v1976 = vld [vmem:[%s1973 + $0x10] sm:$0xff]
        %v1977 = vld [vmem:[%s1973 + $0x20] sm:$0xff]
        %v1978 = vld [vmem:[%s1973 + $0x28] sm:$0xff]
        %v1979 = vld [vmem:[%s1973 + $0x30] sm:$0xff]
        %v1980 = vld [vmem:[%s1973 + $0x40] sm:$0xff]
        %v1981 = vld [vmem:[%s1973 + $0x48] sm:$0xff]
        %v1982 = vld [vmem:[%s1973 + $0x50] sm:$0xff]
        %v1983 = vld [vmem:[%s1973 + $0x60] sm:$0xff]
        %v1984 = vld [vmem:[%s1973 + $0x68] sm:$0xff]
        %v1985 = vld [vmem:[%s1973 + $0x70] sm:$0xff]
        %v1986 = vld [vmem:[%s1973 + $0x80] sm:$0xff]
        %v1987 = vld [vmem:[%s1973 + $0x88] sm:$0xff]
        %v1988 = vld [vmem:[%s1973 + $0x90] sm:$0xff]
        %v1989 = vld [vmem:[%s1973 + $0xa0] sm:$0xff]
        %v1990 = vld [vmem:[%s1973 + $0xa8] sm:$0xff]
        %v1991 = vld [vmem:[%s1973 + $0xb0] sm:$0xff]
        %v1992 = vld [vmem:[%s1973 + $0xc0] sm:$0xff]
        %v1993 = vld [vmem:[%s1973 + $0xc8] sm:$0xff]
        %v1994 = vld [vmem:[%s1973 + $0xd0] sm:$0xff]
        %v1995 = vld [vmem:[%s1973 + $0xe0] sm:$0xff]
        %v1996 = vld [vmem:[%s1973 + $0xe8] sm:$0xff]
        %v1997 = vld [vmem:[%s1973 + $0xf0] sm:$0xff]
        %v1998 = vld [vmem:[%s1973 + $0x100] sm:$0xff]
        %v1999 = vld [vmem:[%s1973 + $0x108] sm:$0xff]
        %v2000 = vld [vmem:[%s1973 + $0x110] sm:$0xff]
        %v2001 = vld [vmem:[%s1973 + $0x120] sm:$0xff]
        %v2002 = vld [vmem:[%s1973 + $0x128] sm:$0xff]
        %v2003 = vld [vmem:[%s1973 + $0x130] sm:$0xff]
        %v2004 = vld [vmem:[%s1973 + $0x140] sm:$0xff]
        %v2005 = vld [vmem:[%s1973 + $0x148] sm:$0xff]
        %v2006 = vld [vmem:[%s1973 + $0x150] sm:$0xff]
        %v2007 = vld [vmem:[%s1973 + $0x160] sm:$0xff]
        %v2008 = vld [vmem:[%s1973 + $0x168] sm:$0xff]
        %v2009 = vld [vmem:[%s1973 + $0x170] sm:$0xff]
        %v2010 = vld [vmem:[%s1973 + $0x180] sm:$0xff]
        %v2011 = vld [vmem:[%s1973 + $0x188] sm:$0xff]
        %v2012 = vld [vmem:[%s1973 + $0x190] sm:$0xff]
        %v2013 = vld [vmem:[%s1973 + $0x1a0] sm:$0xff]
        %v2014 = vld [vmem:[%s1973 + $0x1a8] sm:$0xff]
        %v2015 = vld [vmem:[%s1973 + $0x1b0] sm:$0xff]
        %v2016 = vld [vmem:[%s1973 + $0x1c0] sm:$0xff]
        %v2017 = vld [vmem:[%s1973 + $0x1c8] sm:$0xff]
        %v2018 = vld [vmem:[%s1973 + $0x1d0] sm:$0xff]
        %v2019 = vld [vmem:[%s1973 + $0x1e0] sm:$0xff]
        %v2020 = vld [vmem:[%s1973 + $0x1e8] sm:$0xff]
        %v2021 = vld [vmem:[%s1973 + $0x1f0] sm:$0xff]
        %v2022 = vld [vmem:[%s1973 + $0x200] sm:$0xff]
        %v2023 = vld [vmem:[%s1973 + $0x208] sm:$0xff]
        %v2024 = vld [vmem:[%s1973 + $0x210] sm:$0xff]
        %v2025 = vld [vmem:[%s1973 + $0x220] sm:$0xff]
        %v2026 = vld [vmem:[%s1973 + $0x228] sm:$0xff]
        %v2027 = vld [vmem:[%s1973 + $0x230] sm:$0xff]
        %s2028 = scalar_lea.vmem %s1, 12
        %v2029 = vld [vmem:[%s2028] sm:$0xf]
        %v2031 = vsel %vm361, %v1974, 0
        %v2034 = vsel %vm361, %v1975, 0
        %v2037 = vsel %vm361, %v1976, 0
        %v2040 = vsel %vm361, %v1977, 0
        %v2043 = vsel %vm361, %v1978, 0
        %v2046 = vsel %vm361, %v1979, 0
        %v2049 = vsel %vm361, %v1980, 0
        %v2052 = vsel %vm361, %v1981, 0
        %v2055 = vsel %vm361, %v1982, 0
        %v2058 = vsel %vm361, %v1983, 0
        %v2061 = vsel %vm361, %v1984, 0
        %v2064 = vsel %vm361, %v1985, 0
        %v2067 = vsel %vm361, %v1986, 0
        %v2070 = vsel %vm361, %v1987, 0
        %v2073 = vsel %vm361, %v1988, 0
        %v2076 = vsel %vm361, %v1989, 0
        %v2079 = vsel %vm361, %v1990, 0
        %v2082 = vsel %vm361, %v1991, 0
        %v2085 = vsel %vm361, %v1992, 0
        %v2088 = vsel %vm361, %v1993, 0
        %v2091 = vsel %vm361, %v1994, 0
        %v2094 = vsel %vm361, %v1995, 0
        %v2097 = vsel %vm361, %v1996, 0
        %v2100 = vsel %vm361, %v1997, 0
        %v2103 = vsel %vm361, %v1998, 0
        %v2106 = vsel %vm361, %v1999, 0
        %v2109 = vsel %vm361, %v2000, 0
        %v2112 = vsel %vm361, %v2001, 0
        %v2115 = vsel %vm361, %v2002, 0
        %v2118 = vsel %vm361, %v2003, 0
        %v2121 = vsel %vm361, %v2004, 0
        %v2124 = vsel %vm361, %v2005, 0
        %v2127 = vsel %vm361, %v2006, 0
        %v2130 = vsel %vm361, %v2007, 0
        %v2133 = vsel %vm361, %v2008, 0
        %v2136 = vsel %vm361, %v2009, 0
        %v2139 = vsel %vm361, %v2010, 0
        %v2142 = vsel %vm361, %v2011, 0
        %v2145 = vsel %vm361, %v2012, 0
        %v2148 = vsel %vm361, %v2013, 0
        %v2151 = vsel %vm361, %v2014, 0
        %v2154 = vsel %vm361, %v2015, 0
        %v2157 = vsel %vm361, %v2016, 0
        %v2160 = vsel %vm361, %v2017, 0
        %v2163 = vsel %vm361, %v2018, 0
        %v2166 = vsel %vm361, %v2019, 0
        %v2169 = vsel %vm361, %v2020, 0
        %v2172 = vsel %vm361, %v2021, 0
        %v2175 = vsel %vm361, %v2022, 0
        %v2178 = vsel %vm361, %v2023, 0
        %v2181 = vsel %vm361, %v2024, 0
        %v2184 = vsel %vm361, %v2025, 0
        %v2187 = vsel %vm361, %v2026, 0
        %v2190 = vsel %vm361, %v2027, 0
        %v2193 = vsel %vm524, %v2029, 0
        %2195 = vmatprep.subr.mxu0 0.0
        %2196 = vmatpush1.msra.mxu0 %v2193
        %2197 = vmatprep.subr.mxu0 0.0
        %2198 = vmatpush1.msra.mxu0 0.0
        %2199 = vmatprep.subr.mxu0 0.0
        %2200 = vmatpush1.msra.mxu0 0.0
        %2201 = vmatprep.subr.mxu0 0.0
        %2202 = vmatpush1.msra.mxu0 0.0
        %2203 = vmatprep.subr.mxu0 0.0
        %2204 = vmatpush1.msra.mxu0 0.0
        %2205 = vmatprep.subr.mxu0 0.0
        %2206 = vmatpush1.msra.mxu0 0.0
        %2207 = vmatprep.subr.mxu0 0.0
        %2208 = vmatpush1.msra.mxu0 0.0
        %2209 = vmatprep.subr.mxu0 0.0
        %2210 = vmatpush1.msra.mxu0 0.0
        %2211 = vmatprep.subr.mxu0 0.0
        %2212 = vmatpush1.msra.mxu0 0.0
        %2213 = vmatprep.subr.mxu0 0.0
        %2214 = vmatpush1.msra.mxu0 0.0
        %2215 = vmatprep.subr.mxu0 0.0
        %2216 = vmatpush1.msra.mxu0 0.0
        %2217 = vmatprep.subr.mxu0 0.0
        %2218 = vmatpush1.msra.mxu0 0.0
        %2219 = vmatprep.subr.mxu0 0.0
        %2220 = vmatpush1.msra.mxu0 0.0
        %2221 = vmatprep.subr.mxu0 0.0
        %2222 = vmatpush1.msra.mxu0 0.0
        %2223 = vmatprep.subr.mxu0 0.0
        %2224 = vmatpush1.msra.mxu0 0.0
        %2225 = vmatprep.subr.mxu0 0.0
        %2226 = vmatpush1.msra.mxu0 0.0
        %2227 = vmatprep.subr.mxu0 0.0
        %2228 = vmatpush1.msra.mxu0 0.0
        %2229 = vmatprep.subr.mxu0 0.0
        %2230 = vmatpush1.msra.mxu0 0.0
        %2231 = vmatprep.subr.mxu0 0.0
        %2232 = vmatpush1.msra.mxu0 0.0
        %2233 = vmatprep.subr.mxu0 0.0
        %2234 = vmatpush1.msra.mxu0 0.0
        %2235 = vmatprep.subr.mxu0 0.0
        %2236 = vmatpush1.msra.mxu0 0.0
        %2237 = vmatprep.subr.mxu0 0.0
        %2238 = vmatpush1.msra.mxu0 0.0
        %2239 = vmatprep.subr.mxu0 0.0
        %2240 = vmatpush1.msra.mxu0 0.0
        %2241 = vmatprep.subr.mxu0 0.0
        %2242 = vmatpush1.msra.mxu0 0.0
        %2243 = vmatprep.subr.mxu0 0.0
        %2244 = vmatpush1.msra.mxu0 0.0
        %2245 = vmatprep.subr.mxu0 0.0
        %2246 = vmatpush1.msra.mxu0 0.0
        %2247 = vmatprep.subr.mxu0 0.0
        %2248 = vmatpush1.msra.mxu0 0.0
        %2249 = vmatprep.subr.mxu0 0.0
        %2250 = vmatpush1.msra.mxu0 0.0
        %2251 = vmatprep.subr.mxu0 0.0
        %2252 = vmatpush1.msra.mxu0 0.0
        %2253 = vmatprep.subr.mxu0 0.0
        %2254 = vmatpush1.msra.mxu0 0.0
        %2255 = vmatprep.subr.mxu0 0.0
        %2256 = vmatpush1.msra.mxu0 0.0
        %2257 = vmatprep.subr.mxu0 0.0
        %2258 = vmatpush1.msra.mxu0 0.0
        %2259 = vmatprep.mubr.f32.mxu0 0.0
        %2260 = vmatmul.mubr.f32.gmra.mrb[0].mxu0 %v2031
        %v2261 = vpop.f32.mrb[0].mxu0
        %v2262 = vadd.f32 0.0, %v2261
        %v2263 = vpop.f32.mrb[0].mxu0
        %2264 = vmatprep.mubr.f32.mxu0 0.0
        %2265 = vmatmul.mubr.f32.gmra.mrb[0].mxu0 %v2034
        %v2266 = vpop.f32.mrb[0].mxu0
        %v2267 = vadd.f32 0.0, %v2266
        %v2268 = vpop.f32.mrb[0].mxu0
        %2269 = vmatprep.mubr.f32.mxu0 0.0
        %2270 = vmatmul.mubr.f32.gmra.mrb[0].mxu0 %v2037
        %v2271 = vpop.f32.mrb[0].mxu0
        %v2272 = vadd.f32 0.0, %v2271
        %v2273 = vpop.f32.mrb[0].mxu0
        %2274 = vmatprep.mubr.f32.mxu0 0.0
        %2275 = vmatmul.mubr.f32.gmra.mrb[0].mxu0 %v2040
        %v2276 = vpop.f32.mrb[0].mxu0
        %v2277 = vadd.f32 0.0, %v2276
        %v2278 = vpop.f32.mrb[0].mxu0
        %2279 = vmatprep.mubr.f32.mxu0 0.0
        %2280 = vmatmul.mubr.f32.gmra.mrb[0].mxu0 %v2043
        %v2281 = vpop.f32.mrb[0].mxu0
        %v2282 = vadd.f32 0.0, %v2281
        %v2283 = vpop.f32.mrb[0].mxu0
        %2284 = vmatprep.mubr.f32.mxu0 0.0
        %2285 = vmatmul.mubr.f32.gmra.mrb[0].mxu0 %v2046
        %v2286 = vpop.f32.mrb[0].mxu0
        %v2287 = vadd.f32 0.0, %v2286
        %v2288 = vpop.f32.mrb[0].mxu0
        %2289 = vmatprep.mubr.f32.mxu0 0.0
        %2290 = vmatmul.mubr.f32.gmra.mrb[0].mxu0 %v2049
        %v2291 = vpop.f32.mrb[0].mxu0
        %v2292 = vadd.f32 0.0, %v2291
        %v2293 = vpop.f32.mrb[0].mxu0
        %2294 = vmatprep.mubr.f32.mxu0 0.0
        %2295 = vmatmul.mubr.f32.gmra.mrb[0].mxu0 %v2052
        %v2296 = vpop.f32.mrb[0].mxu0
        %v2297 = vadd.f32 0.0, %v2296
        %v2298 = vpop.f32.mrb[0].mxu0
        %2299 = vmatprep.mubr.f32.mxu0 0.0
        %2300 = vmatmul.mubr.f32.gmra.mrb[0].mxu0 %v2055
        %v2301 = vpop.f32.mrb[0].mxu0
        %v2302 = vadd.f32 0.0, %v2301
        %v2303 = vpop.f32.mrb[0].mxu0
        %2304 = vmatprep.mubr.f32.mxu0 0.0
        %2305 = vmatmul.mubr.f32.gmra.mrb[0].mxu0 %v2058
        %v2306 = vpop.f32.mrb[0].mxu0
        %v2307 = vadd.f32 0.0, %v2306
        %v2308 = vpop.f32.mrb[0].mxu0
        %2309 = vmatprep.mubr.f32.mxu0 0.0
        %2310 = vmatmul.mubr.f32.gmra.mrb[0].mxu0 %v2061
        %v2311 = vpop.f32.mrb[0].mxu0
        %v2312 = vadd.f32 0.0, %v2311
        %v2313 = vpop.f32.mrb[0].mxu0
        %2314 = vmatprep.mubr.f32.mxu0 0.0
        %2315 = vmatmul.mubr.f32.gmra.mrb[0].mxu0 %v2064
        %v2316 = vpop.f32.mrb[0].mxu0
        %v2317 = vadd.f32 0.0, %v2316
        %v2318 = vpop.f32.mrb[0].mxu0
        %2319 = vmatprep.mubr.f32.mxu0 0.0
        %2320 = vmatmul.mubr.f32.gmra.mrb[0].mxu0 %v2067
        %v2321 = vpop.f32.mrb[0].mxu0
        %v2322 = vadd.f32 0.0, %v2321
        %v2323 = vpop.f32.mrb[0].mxu0
        %2324 = vmatprep.mubr.f32.mxu0 0.0
        %2325 = vmatmul.mubr.f32.gmra.mrb[0].mxu0 %v2070
        %v2326 = vpop.f32.mrb[0].mxu0
        %v2327 = vadd.f32 0.0, %v2326
        %v2328 = vpop.f32.mrb[0].mxu0
        %2329 = vmatprep.mubr.f32.mxu0 0.0
        %2330 = vmatmul.mubr.f32.gmra.mrb[0].mxu0 %v2073
        %v2331 = vpop.f32.mrb[0].mxu0
        %v2332 = vadd.f32 0.0, %v2331
        %v2333 = vpop.f32.mrb[0].mxu0
        %2334 = vmatprep.mubr.f32.mxu0 0.0
        %2335 = vmatmul.mubr.f32.gmra.mrb[0].mxu0 %v2076
        %v2336 = vpop.f32.mrb[0].mxu0
        %v2337 = vadd.f32 0.0, %v2336
        %v2338 = vpop.f32.mrb[0].mxu0
        %2339 = vmatprep.mubr.f32.mxu0 0.0
        %2340 = vmatmul.mubr.f32.gmra.mrb[0].mxu0 %v2079
        %v2341 = vpop.f32.mrb[0].mxu0
        %v2342 = vadd.f32 0.0, %v2341
        %v2343 = vpop.f32.mrb[0].mxu0
        %2344 = vmatprep.mubr.f32.mxu0 0.0
        %2345 = vmatmul.mubr.f32.gmra.mrb[0].mxu0 %v2082
        %v2346 = vpop.f32.mrb[0].mxu0
        %v2347 = vadd.f32 0.0, %v2346
        %v2348 = vpop.f32.mrb[0].mxu0
        %2349 = vmatprep.mubr.f32.mxu0 0.0
        %2350 = vmatmul.mubr.f32.gmra.mrb[0].mxu0 %v2085
        %v2351 = vpop.f32.mrb[0].mxu0
        %v2352 = vadd.f32 0.0, %v2351
        %v2353 = vpop.f32.mrb[0].mxu0
        %2354 = vmatprep.mubr.f32.mxu0 0.0
        %2355 = vmatmul.mubr.f32.gmra.mrb[0].mxu0 %v2088
        %v2356 = vpop.f32.mrb[0].mxu0
        %v2357 = vadd.f32 0.0, %v2356
        %v2358 = vpop.f32.mrb[0].mxu0
        %2359 = vmatprep.mubr.f32.mxu0 0.0
        %2360 = vmatmul.mubr.f32.gmra.mrb[0].mxu0 %v2091
        %v2361 = vpop.f32.mrb[0].mxu0
        %v2362 = vadd.f32 0.0, %v2361
        %v2363 = vpop.f32.mrb[0].mxu0
        %2364 = vmatprep.mubr.f32.mxu0 0.0
        %2365 = vmatmul.mubr.f32.gmra.mrb[0].mxu0 %v2094
        %v2366 = vpop.f32.mrb[0].mxu0
        %v2367 = vadd.f32 0.0, %v2366
        %v2368 = vpop.f32.mrb[0].mxu0
        %2369 = vmatprep.mubr.f32.mxu0 0.0
        %2370 = vmatmul.mubr.f32.gmra.mrb[0].mxu0 %v2097
        %v2371 = vpop.f32.mrb[0].mxu0
        %v2372 = vadd.f32 0.0, %v2371
        %v2373 = vpop.f32.mrb[0].mxu0
        %2374 = vmatprep.mubr.f32.mxu0 0.0
        %2375 = vmatmul.mubr.f32.gmra.mrb[0].mxu0 %v2100
        %v2376 = vpop.f32.mrb[0].mxu0
        %v2377 = vadd.f32 0.0, %v2376
        %v2378 = vpop.f32.mrb[0].mxu0
        %2379 = vmatprep.mubr.f32.mxu0 0.0
        %2380 = vmatmul.mubr.f32.gmra.mrb[0].mxu0 %v2103
        %v2381 = vpop.f32.mrb[0].mxu0
        %v2382 = vadd.f32 0.0, %v2381
        %v2383 = vpop.f32.mrb[0].mxu0
        %2384 = vmatprep.mubr.f32.mxu0 0.0
        %2385 = vmatmul.mubr.f32.gmra.mrb[0].mxu0 %v2106
        %v2386 = vpop.f32.mrb[0].mxu0
        %v2387 = vadd.f32 0.0, %v2386
        %v2388 = vpop.f32.mrb[0].mxu0
        %2389 = vmatprep.mubr.f32.mxu0 0.0
        %2390 = vmatmul.mubr.f32.gmra.mrb[0].mxu0 %v2109
        %v2391 = vpop.f32.mrb[0].mxu0
        %v2392 = vadd.f32 0.0, %v2391
        %v2393 = vpop.f32.mrb[0].mxu0
        %2394 = vmatprep.mubr.f32.mxu0 0.0
        %2395 = vmatmul.mubr.f32.gmra.mrb[0].mxu0 %v2112
        %v2396 = vpop.f32.mrb[0].mxu0
        %v2397 = vadd.f32 0.0, %v2396
        %v2398 = vpop.f32.mrb[0].mxu0
        %2399 = vmatprep.mubr.f32.mxu0 0.0
        %2400 = vmatmul.mubr.f32.gmra.mrb[0].mxu0 %v2115
        %v2401 = vpop.f32.mrb[0].mxu0
        %v2402 = vadd.f32 0.0, %v2401
        %v2403 = vpop.f32.mrb[0].mxu0
        %2404 = vmatprep.mubr.f32.mxu0 0.0
        %2405 = vmatmul.mubr.f32.gmra.mrb[0].mxu0 %v2118
        %v2406 = vpop.f32.mrb[0].mxu0
        %v2407 = vadd.f32 0.0, %v2406
        %v2408 = vpop.f32.mrb[0].mxu0
        %2409 = vmatprep.mubr.f32.mxu0 0.0
        %2410 = vmatmul.mubr.f32.gmra.mrb[0].mxu0 %v2121
        %v2411 = vpop.f32.mrb[0].mxu0
        %v2412 = vadd.f32 0.0, %v2411
        %v2413 = vpop.f32.mrb[0].mxu0
        %2414 = vmatprep.mubr.f32.mxu0 0.0
        %2415 = vmatmul.mubr.f32.gmra.mrb[0].mxu0 %v2124
        %v2416 = vpop.f32.mrb[0].mxu0
        %v2417 = vadd.f32 0.0, %v2416
        %v2418 = vpop.f32.mrb[0].mxu0
        %2419 = vmatprep.mubr.f32.mxu0 0.0
        %2420 = vmatmul.mubr.f32.gmra.mrb[0].mxu0 %v2127
        %v2421 = vpop.f32.mrb[0].mxu0
        %v2422 = vadd.f32 0.0, %v2421
        %v2423 = vpop.f32.mrb[0].mxu0
        %2424 = vmatprep.mubr.f32.mxu0 0.0
        %2425 = vmatmul.mubr.f32.gmra.mrb[0].mxu0 %v2130
        %v2426 = vpop.f32.mrb[0].mxu0
        %v2427 = vadd.f32 0.0, %v2426
        %v2428 = vpop.f32.mrb[0].mxu0
        %2429 = vmatprep.mubr.f32.mxu0 0.0
        %2430 = vmatmul.mubr.f32.gmra.mrb[0].mxu0 %v2133
        %v2431 = vpop.f32.mrb[0].mxu0
        %v2432 = vadd.f32 0.0, %v2431
        %v2433 = vpop.f32.mrb[0].mxu0
        %2434 = vmatprep.mubr.f32.mxu0 0.0
        %2435 = vmatmul.mubr.f32.gmra.mrb[0].mxu0 %v2136
        %v2436 = vpop.f32.mrb[0].mxu0
        %v2437 = vadd.f32 0.0, %v2436
        %v2438 = vpop.f32.mrb[0].mxu0
        %2439 = vmatprep.mubr.f32.mxu0 0.0
        %2440 = vmatmul.mubr.f32.gmra.mrb[0].mxu0 %v2139
        %v2441 = vpop.f32.mrb[0].mxu0
        %v2442 = vadd.f32 0.0, %v2441
        %v2443 = vpop.f32.mrb[0].mxu0
        %2444 = vmatprep.mubr.f32.mxu0 0.0
        %2445 = vmatmul.mubr.f32.gmra.mrb[0].mxu0 %v2142
        %v2446 = vpop.f32.mrb[0].mxu0
        %v2447 = vadd.f32 0.0, %v2446
        %v2448 = vpop.f32.mrb[0].mxu0
        %2449 = vmatprep.mubr.f32.mxu0 0.0
        %2450 = vmatmul.mubr.f32.gmra.mrb[0].mxu0 %v2145
        %v2451 = vpop.f32.mrb[0].mxu0
        %v2452 = vadd.f32 0.0, %v2451
        %v2453 = vpop.f32.mrb[0].mxu0
        %2454 = vmatprep.mubr.f32.mxu0 0.0
        %2455 = vmatmul.mubr.f32.gmra.mrb[0].mxu0 %v2148
        %v2456 = vpop.f32.mrb[0].mxu0
        %v2457 = vadd.f32 0.0, %v2456
        %v2458 = vpop.f32.mrb[0].mxu0
        %2459 = vmatprep.mubr.f32.mxu0 0.0
        %2460 = vmatmul.mubr.f32.gmra.mrb[0].mxu0 %v2151
        %v2461 = vpop.f32.mrb[0].mxu0
        %v2462 = vadd.f32 0.0, %v2461
        %v2463 = vpop.f32.mrb[0].mxu0
        %2464 = vmatprep.mubr.f32.mxu0 0.0
        %2465 = vmatmul.mubr.f32.gmra.mrb[0].mxu0 %v2154
        %v2466 = vpop.f32.mrb[0].mxu0
        %v2467 = vadd.f32 0.0, %v2466
        %v2468 = vpop.f32.mrb[0].mxu0
        %2469 = vmatprep.mubr.f32.mxu0 0.0
        %2470 = vmatmul.mubr.f32.gmra.mrb[0].mxu0 %v2157
        %v2471 = vpop.f32.mrb[0].mxu0
        %v2472 = vadd.f32 0.0, %v2471
        %v2473 = vpop.f32.mrb[0].mxu0
        %2474 = vmatprep.mubr.f32.mxu0 0.0
        %2475 = vmatmul.mubr.f32.gmra.mrb[0].mxu0 %v2160
        %v2476 = vpop.f32.mrb[0].mxu0
        %v2477 = vadd.f32 0.0, %v2476
        %v2478 = vpop.f32.mrb[0].mxu0
        %2479 = vmatprep.mubr.f32.mxu0 0.0
        %2480 = vmatmul.mubr.f32.gmra.mrb[0].mxu0 %v2163
        %v2481 = vpop.f32.mrb[0].mxu0
        %v2482 = vadd.f32 0.0, %v2481
        %v2483 = vpop.f32.mrb[0].mxu0
        %2484 = vmatprep.mubr.f32.mxu0 0.0
        %2485 = vmatmul.mubr.f32.gmra.mrb[0].mxu0 %v2166
        %v2486 = vpop.f32.mrb[0].mxu0
        %v2487 = vadd.f32 0.0, %v2486
        %v2488 = vpop.f32.mrb[0].mxu0
        %2489 = vmatprep.mubr.f32.mxu0 0.0
        %2490 = vmatmul.mubr.f32.gmra.mrb[0].mxu0 %v2169
        %v2491 = vpop.f32.mrb[0].mxu0
        %v2492 = vadd.f32 0.0, %v2491
        %v2493 = vpop.f32.mrb[0].mxu0
        %2494 = vmatprep.mubr.f32.mxu0 0.0
        %2495 = vmatmul.mubr.f32.gmra.mrb[0].mxu0 %v2172
        %v2496 = vpop.f32.mrb[0].mxu0
        %v2497 = vadd.f32 0.0, %v2496
        %v2498 = vpop.f32.mrb[0].mxu0
        %2499 = vmatprep.mubr.f32.mxu0 0.0
        %2500 = vmatmul.mubr.f32.gmra.mrb[0].mxu0 %v2175
        %v2501 = vpop.f32.mrb[0].mxu0
        %v2502 = vadd.f32 0.0, %v2501
        %v2503 = vpop.f32.mrb[0].mxu0
        %2504 = vmatprep.mubr.f32.mxu0 0.0
        %2505 = vmatmul.mubr.f32.gmra.mrb[0].mxu0 %v2178
        %v2506 = vpop.f32.mrb[0].mxu0
        %v2507 = vadd.f32 0.0, %v2506
        %v2508 = vpop.f32.mrb[0].mxu0
        %2509 = vmatprep.mubr.f32.mxu0 0.0
        %2510 = vmatmul.mubr.f32.gmra.mrb[0].mxu0 %v2181
        %v2511 = vpop.f32.mrb[0].mxu0
        %v2512 = vadd.f32 0.0, %v2511
        %v2513 = vpop.f32.mrb[0].mxu0
        %2514 = vmatprep.mubr.f32.mxu0 0.0
        %2515 = vmatmul.mubr.f32.gmra.mrb[0].mxu0 %v2184
        %v2516 = vpop.f32.mrb[0].mxu0
        %v2517 = vadd.f32 0.0, %v2516
        %v2518 = vpop.f32.mrb[0].mxu0
        %2519 = vmatprep.mubr.f32.mxu0 0.0
        %2520 = vmatmul.mubr.f32.gmra.mrb[0].mxu0 %v2187
        %v2521 = vpop.f32.mrb[0].mxu0
        %v2522 = vadd.f32 0.0, %v2521
        %v2523 = vpop.f32.mrb[0].mxu0
        %2524 = vmatprep.mubr.f32.mxu0 0.0
        %2525 = vmatmul.mubr.f32.gmra.mrb[0].mxu0 %v2190
        %v2526 = vpop.f32.mrb[0].mxu0
        %v2527 = vadd.f32 0.0, %v2526
        %v2528 = vpop.f32.mrb[0].mxu0
        %2529 = vdwg.mxu0
        %v2530 = vadd.f32 %v1919, %v2262
        %v2531 = vadd.f32 %v1920, %v2267
        %v2532 = vadd.f32 %v1921, %v2272
        %v2533 = vadd.f32 %v1922, %v2277
        %v2534 = vadd.f32 %v1923, %v2282
        %v2535 = vadd.f32 %v1924, %v2287
        %v2536 = vadd.f32 %v1925, %v2292
        %v2537 = vadd.f32 %v1926, %v2297
        %v2538 = vadd.f32 %v1927, %v2302
        %v2539 = vadd.f32 %v1928, %v2307
        %v2540 = vadd.f32 %v1929, %v2312
        %v2541 = vadd.f32 %v1930, %v2317
        %v2542 = vadd.f32 %v1931, %v2322
        %v2543 = vadd.f32 %v1932, %v2327
        %v2544 = vadd.f32 %v1933, %v2332
        %v2545 = vadd.f32 %v1934, %v2337
        %v2546 = vadd.f32 %v1935, %v2342
        %v2547 = vadd.f32 %v1936, %v2347
        %v2548 = vadd.f32 %v1937, %v2352
        %v2549 = vadd.f32 %v1938, %v2357
        %v2550 = vadd.f32 %v1939, %v2362
        %v2551 = vadd.f32 %v1940, %v2367
        %v2552 = vadd.f32 %v1941, %v2372
        %v2553 = vadd.f32 %v1942, %v2377
        %v2554 = vadd.f32 %v1943, %v2382
        %v2555 = vadd.f32 %v1944, %v2387
        %v2556 = vadd.f32 %v1945, %v2392
        %v2557 = vadd.f32 %v1946, %v2397
        %v2558 = vadd.f32 %v1947, %v2402
        %v2559 = vadd.f32 %v1948, %v2407
        %v2560 = vadd.f32 %v1949, %v2412
        %v2561 = vadd.f32 %v1950, %v2417
        %v2562 = vadd.f32 %v1951, %v2422
        %v2563 = vadd.f32 %v1952, %v2427
        %v2564 = vadd.f32 %v1953, %v2432
        %v2565 = vadd.f32 %v1954, %v2437
        %v2566 = vadd.f32 %v1955, %v2442
        %v2567 = vadd.f32 %v1956, %v2447
        %v2568 = vadd.f32 %v1957, %v2452
        %v2569 = vadd.f32 %v1958, %v2457
        %v2570 = vadd.f32 %v1959, %v2462
        %v2571 = vadd.f32 %v1960, %v2467
        %v2572 = vadd.f32 %v1961, %v2472
        %v2573 = vadd.f32 %v1962, %v2477
        %v2574 = vadd.f32 %v1963, %v2482
        %v2575 = vadd.f32 %v1964, %v2487
        %v2576 = vadd.f32 %v1965, %v2492
        %v2577 = vadd.f32 %v1966, %v2497
        %v2578 = vadd.f32 %v1967, %v2502
        %v2579 = vadd.f32 %v1968, %v2507
        %v2580 = vadd.f32 %v1969, %v2512
        %v2581 = vadd.f32 %v1970, %v2517
        %v2582 = vadd.f32 %v1971, %v2522
        %v2583 = vadd.f32 %v1972, %v2527
        %v2584 = vld [vmem:[%s1973 + $0x1] sm:$0xff]
        %v2585 = vld [vmem:[%s1973 + $0x9] sm:$0xff]
        %v2586 = vld [vmem:[%s1973 + $0x11] sm:$0xff]
        %v2587 = vld [vmem:[%s1973 + $0x21] sm:$0xff]
        %v2588 = vld [vmem:[%s1973 + $0x29] sm:$0xff]
        %v2589 = vld [vmem:[%s1973 + $0x31] sm:$0xff]
        %v2590 = vld [vmem:[%s1973 + $0x41] sm:$0xff]
        %v2591 = vld [vmem:[%s1973 + $0x49] sm:$0xff]
        %v2592 = vld [vmem:[%s1973 + $0x51] sm:$0xff]
        %v2593 = vld [vmem:[%s1973 + $0x61] sm:$0xff]
        %v2594 = vld [vmem:[%s1973 + $0x69] sm:$0xff]
        %v2595 = vld [vmem:[%s1973 + $0x71] sm:$0xff]
        %v2596 = vld [vmem:[%s1973 + $0x81] sm:$0xff]
        %v2597 = vld [vmem:[%s1973 + $0x89] sm:$0xff]
        %v2598 = vld [vmem:[%s1973 + $0x91] sm:$0xff]
        %v2599 = vld [vmem:[%s1973 + $0xa1] sm:$0xff]
        %v2600 = vld [vmem:[%s1973 + $0xa9] sm:$0xff]
        %v2601 = vld [vmem:[%s1973 + $0xb1] sm:$0xff]
        %v2602 = vld [vmem:[%s1973 + $0xc1] sm:$0xff]
        %v2603 = vld [vmem:[%s1973 + $0xc9] sm:$0xff]
        %v2604 = vld [vmem:[%s1973 + $0xd1] sm:$0xff]
        %v2605 = vld [vmem:[%s1973 + $0xe1] sm:$0xff]
        %v2606 = vld [vmem:[%s1973 + $0xe9] sm:$0xff]
        %v2607 = vld [vmem:[%s1973 + $0xf1] sm:$0xff]
        %v2608 = vld [vmem:[%s1973 + $0x101] sm:$0xff]
        %v2609 = vld [vmem:[%s1973 + $0x109] sm:$0xff]
        %v2610 = vld [vmem:[%s1973 + $0x111] sm:$0xff]
        %v2611 = vld [vmem:[%s1973 + $0x121] sm:$0xff]
        %v2612 = vld [vmem:[%s1973 + $0x129] sm:$0xff]
        %v2613 = vld [vmem:[%s1973 + $0x131] sm:$0xff]
        %v2614 = vld [vmem:[%s1973 + $0x141] sm:$0xff]
        %v2615 = vld [vmem:[%s1973 + $0x149] sm:$0xff]
        %v2616 = vld [vmem:[%s1973 + $0x151] sm:$0xff]
        %v2617 = vld [vmem:[%s1973 + $0x161] sm:$0xff]
        %v2618 = vld [vmem:[%s1973 + $0x169] sm:$0xff]
        %v2619 = vld [vmem:[%s1973 + $0x171] sm:$0xff]
        %v2620 = vld [vmem:[%s1973 + $0x181] sm:$0xff]
        %v2621 = vld [vmem:[%s1973 + $0x189] sm:$0xff]
        %v2622 = vld [vmem:[%s1973 + $0x191] sm:$0xff]
        %v2623 = vld [vmem:[%s1973 + $0x1a1] sm:$0xff]
        %v2624 = vld [vmem:[%s1973 + $0x1a9] sm:$0xff]
        %v2625 = vld [vmem:[%s1973 + $0x1b1] sm:$0xff]
        %v2626 = vld [vmem:[%s1973 + $0x1c1] sm:$0xff]
        %v2627 = vld [vmem:[%s1973 + $0x1c9] sm:$0xff]
        %v2628 = vld [vmem:[%s1973 + $0x1d1] sm:$0xff]
        %v2629 = vld [vmem:[%s1973 + $0x1e1] sm:$0xff]
        %v2630 = vld [vmem:[%s1973 + $0x1e9] sm:$0xff]
        %v2631 = vld [vmem:[%s1973 + $0x1f1] sm:$0xff]
        %v2632 = vld [vmem:[%s1973 + $0x201] sm:$0xff]
        %v2633 = vld [vmem:[%s1973 + $0x209] sm:$0xff]
        %v2634 = vld [vmem:[%s1973 + $0x211] sm:$0xff]
        %v2635 = vld [vmem:[%s1973 + $0x221] sm:$0xff]
        %v2636 = vld [vmem:[%s1973 + $0x229] sm:$0xff]
        %v2637 = vld [vmem:[%s1973 + $0x231] sm:$0xff]
        %s2638 = scalar_lea.vmem %s1, 16
        %v2639 = vld [vmem:[%s2638] sm:$0xf]
        %v2641 = vsel %vm361, %v2584, 0
        %v2644 = vsel %vm361, %v2585, 0
        %v2647 = vsel %vm361, %v2586, 0
        %v2650 = vsel %vm361, %v2587, 0
        %v2653 = vsel %vm361, %v2588, 0
        %v2656 = vsel %vm361, %v2589, 0
        %v2659 = vsel %vm361, %v2590, 0
        %v2662 = vsel %vm361, %v2591, 0
        %v2665 = vsel %vm361, %v2592, 0
        %v2668 = vsel %vm361, %v2593, 0
        %v2671 = vsel %vm361, %v2594, 0
        %v2674 = vsel %vm361, %v2595, 0
        %v2677 = vsel %vm361, %v2596, 0
        %v2680 = vsel %vm361, %v2597, 0
        %v2683 = vsel %vm361, %v2598, 0
        %v2686 = vsel %vm361, %v2599, 0
        %v2689 = vsel %vm361, %v2600, 0
        %v2692 = vsel %vm361, %v2601, 0
        %v2695 = vsel %vm361, %v2602, 0
        %v2698 = vsel %vm361, %v2603, 0
        %v2701 = vsel %vm361, %v2604, 0
        %v2704 = vsel %vm361, %v2605, 0
        %v2707 = vsel %vm361, %v2606, 0
        %v2710 = vsel %vm361, %v2607, 0
        %v2713 = vsel %vm361, %v2608, 0
        %v2716 = vsel %vm361, %v2609, 0
        %v2719 = vsel %vm361, %v2610, 0
        %v2722 = vsel %vm361, %v2611, 0
        %v2725 = vsel %vm361, %v2612, 0
        %v2728 = vsel %vm361, %v2613, 0
        %v2731 = vsel %vm361, %v2614, 0
        %v2734 = vsel %vm361, %v2615, 0
        %v2737 = vsel %vm361, %v2616, 0
        %v2740 = vsel %vm361, %v2617, 0
        %v2743 = vsel %vm361, %v2618, 0
        %v2746 = vsel %vm361, %v2619, 0
        %v2749 = vsel %vm361, %v2620, 0
        %v2752 = vsel %vm361, %v2621, 0
        %v2755 = vsel %vm361, %v2622, 0
        %v2758 = vsel %vm361, %v2623, 0
        %v2761 = vsel %vm361, %v2624, 0
        %v2764 = vsel %vm361, %v2625, 0
        %v2767 = vsel %vm361, %v2626, 0
        %v2770 = vsel %vm361, %v2627, 0
        %v2773 = vsel %vm361, %v2628, 0
        %v2776 = vsel %vm361, %v2629, 0
        %v2779 = vsel %vm361, %v2630, 0
        %v2782 = vsel %vm361, %v2631, 0
        %v2785 = vsel %vm361, %v2632, 0
        %v2788 = vsel %vm361, %v2633, 0
        %v2791 = vsel %vm361, %v2634, 0
        %v2794 = vsel %vm361, %v2635, 0
        %v2797 = vsel %vm361, %v2636, 0
        %v2800 = vsel %vm361, %v2637, 0
        %v2803 = vsel %vm524, %v2639, 0
        %2805 = vmatprep.subr.mxu0 0.0
        %2806 = vmatpush1.msra.mxu0 %v2803
        %2807 = vmatprep.subr.mxu0 0.0
        %2808 = vmatpush1.msra.mxu0 0.0
        %2809 = vmatprep.subr.mxu0 0.0
        %2810 = vmatpush1.msra.mxu0 0.0
        %2811 = vmatprep.subr.mxu0 0.0
        %2812 = vmatpush1.msra.mxu0 0.0
        %2813 = vmatprep.subr.mxu0 0.0
        %2814 = vmatpush1.msra.mxu0 0.0
        %2815 = vmatprep.subr.mxu0 0.0
        %2816 = vmatpush1.msra.mxu0 0.0
        %2817 = vmatprep.subr.mxu0 0.0
        %2818 = vmatpush1.msra.mxu0 0.0
        %2819 = vmatprep.subr.mxu0 0.0
        %2820 = vmatpush1.msra.mxu0 0.0
        %2821 = vmatprep.subr.mxu0 0.0
        %2822 = vmatpush1.msra.mxu0 0.0
        %2823 = vmatprep.subr.mxu0 0.0
        %2824 = vmatpush1.msra.mxu0 0.0
        %2825 = vmatprep.subr.mxu0 0.0
        %2826 = vmatpush1.msra.mxu0 0.0
        %2827 = vmatprep.subr.mxu0 0.0
        %2828 = vmatpush1.msra.mxu0 0.0
        %2829 = vmatprep.subr.mxu0 0.0
        %2830 = vmatpush1.msra.mxu0 0.0
        %2831 = vmatprep.subr.mxu0 0.0
        %2832 = vmatpush1.msra.mxu0 0.0
        %2833 = vmatprep.subr.mxu0 0.0
        %2834 = vmatpush1.msra.mxu0 0.0
        %2835 = vmatprep.subr.mxu0 0.0
        %2836 = vmatpush1.msra.mxu0 0.0
        %2837 = vmatprep.subr.mxu0 0.0
        %2838 = vmatpush1.msra.mxu0 0.0
        %2839 = vmatprep.subr.mxu0 0.0
        %2840 = vmatpush1.msra.mxu0 0.0
        %2841 = vmatprep.subr.mxu0 0.0
        %2842 = vmatpush1.msra.mxu0 0.0
        %2843 = vmatprep.subr.mxu0 0.0
        %2844 = vmatpush1.msra.mxu0 0.0
        %2845 = vmatprep.subr.mxu0 0.0
        %2846 = vmatpush1.msra.mxu0 0.0
        %2847 = vmatprep.subr.mxu0 0.0
        %2848 = vmatpush1.msra.mxu0 0.0
        %2849 = vmatprep.subr.mxu0 0.0
        %2850 = vmatpush1.msra.mxu0 0.0
        %2851 = vmatprep.subr.mxu0 0.0
        %2852 = vmatpush1.msra.mxu0 0.0
        %2853 = vmatprep.subr.mxu0 0.0
        %2854 = vmatpush1.msra.mxu0 0.0
        %2855 = vmatprep.subr.mxu0 0.0
        %2856 = vmatpush1.msra.mxu0 0.0
        %2857 = vmatprep.subr.mxu0 0.0
        %2858 = vmatpush1.msra.mxu0 0.0
        %2859 = vmatprep.subr.mxu0 0.0
        %2860 = vmatpush1.msra.mxu0 0.0
        %2861 = vmatprep.subr.mxu0 0.0
        %2862 = vmatpush1.msra.mxu0 0.0
        %2863 = vmatprep.subr.mxu0 0.0
        %2864 = vmatpush1.msra.mxu0 0.0
        %2865 = vmatprep.subr.mxu0 0.0
        %2866 = vmatpush1.msra.mxu0 0.0
        %2867 = vmatprep.subr.mxu0 0.0
        %2868 = vmatpush1.msra.mxu0 0.0
        %2869 = vmatprep.mubr.f32.mxu0 0.0
        %2870 = vmatmul.mubr.f32.gmra.mrb[0].mxu0 %v2641
        %v2871 = vpop.f32.mrb[0].mxu0
        %v2872 = vadd.f32 0.0, %v2871
        %v2873 = vpop.f32.mrb[0].mxu0
        %2874 = vmatprep.mubr.f32.mxu0 0.0
        %2875 = vmatmul.mubr.f32.gmra.mrb[0].mxu0 %v2644
        %v2876 = vpop.f32.mrb[0].mxu0
        %v2877 = vadd.f32 0.0, %v2876
        %v2878 = vpop.f32.mrb[0].mxu0
        %2879 = vmatprep.mubr.f32.mxu0 0.0
        %2880 = vmatmul.mubr.f32.gmra.mrb[0].mxu0 %v2647
        %v2881 = vpop.f32.mrb[0].mxu0
        %v2882 = vadd.f32 0.0, %v2881
        %v2883 = vpop.f32.mrb[0].mxu0
        %2884 = vmatprep.mubr.f32.mxu0 0.0
        %2885 = vmatmul.mubr.f32.gmra.mrb[0].mxu0 %v2650
        %v2886 = vpop.f32.mrb[0].mxu0
        %v2887 = vadd.f32 0.0, %v2886
        %v2888 = vpop.f32.mrb[0].mxu0
        %2889 = vmatprep.mubr.f32.mxu0 0.0
        %2890 = vmatmul.mubr.f32.gmra.mrb[0].mxu0 %v2653
        %v2891 = vpop.f32.mrb[0].mxu0
        %v2892 = vadd.f32 0.0, %v2891
        %v2893 = vpop.f32.mrb[0].mxu0
        %2894 = vmatprep.mubr.f32.mxu0 0.0
        %2895 = vmatmul.mubr.f32.gmra.mrb[0].mxu0 %v2656
        %v2896 = vpop.f32.mrb[0].mxu0
        %v2897 = vadd.f32 0.0, %v2896
        %v2898 = vpop.f32.mrb[0].mxu0
        %2899 = vmatprep.mubr.f32.mxu0 0.0
        %2900 = vmatmul.mubr.f32.gmra.mrb[0].mxu0 %v2659
        %v2901 = vpop.f32.mrb[0].mxu0
        %v2902 = vadd.f32 0.0, %v2901
        %v2903 = vpop.f32.mrb[0].mxu0
        %2904 = vmatprep.mubr.f32.mxu0 0.0
        %2905 = vmatmul.mubr.f32.gmra.mrb[0].mxu0 %v2662
        %v2906 = vpop.f32.mrb[0].mxu0
        %v2907 = vadd.f32 0.0, %v2906
        %v2908 = vpop.f32.mrb[0].mxu0
        %2909 = vmatprep.mubr.f32.mxu0 0.0
        %2910 = vmatmul.mubr.f32.gmra.mrb[0].mxu0 %v2665
        %v2911 = vpop.f32.mrb[0].mxu0
        %v2912 = vadd.f32 0.0, %v2911
        %v2913 = vpop.f32.mrb[0].mxu0
        %2914 = vmatprep.mubr.f32.mxu0 0.0
        %2915 = vmatmul.mubr.f32.gmra.mrb[0].mxu0 %v2668
        %v2916 = vpop.f32.mrb[0].mxu0
        %v2917 = vadd.f32 0.0, %v2916
        %v2918 = vpop.f32.mrb[0].mxu0
        %2919 = vmatprep.mubr.f32.mxu0 0.0
        %2920 = vmatmul.mubr.f32.gmra.mrb[0].mxu0 %v2671
        %v2921 = vpop.f32.mrb[0].mxu0
        %v2922 = vadd.f32 0.0, %v2921
        %v2923 = vpop.f32.mrb[0].mxu0
        %2924 = vmatprep.mubr.f32.mxu0 0.0
        %2925 = vmatmul.mubr.f32.gmra.mrb[0].mxu0 %v2674
        %v2926 = vpop.f32.mrb[0].mxu0
        %v2927 = vadd.f32 0.0, %v2926
        %v2928 = vpop.f32.mrb[0].mxu0
        %2929 = vmatprep.mubr.f32.mxu0 0.0
        %2930 = vmatmul.mubr.f32.gmra.mrb[0].mxu0 %v2677
        %v2931 = vpop.f32.mrb[0].mxu0
        %v2932 = vadd.f32 0.0, %v2931
        %v2933 = vpop.f32.mrb[0].mxu0
        %2934 = vmatprep.mubr.f32.mxu0 0.0
        %2935 = vmatmul.mubr.f32.gmra.mrb[0].mxu0 %v2680
        %v2936 = vpop.f32.mrb[0].mxu0
        %v2937 = vadd.f32 0.0, %v2936
        %v2938 = vpop.f32.mrb[0].mxu0
        %2939 = vmatprep.mubr.f32.mxu0 0.0
        %2940 = vmatmul.mubr.f32.gmra.mrb[0].mxu0 %v2683
        %v2941 = vpop.f32.mrb[0].mxu0
        %v2942 = vadd.f32 0.0, %v2941
        %v2943 = vpop.f32.mrb[0].mxu0
        %2944 = vmatprep.mubr.f32.mxu0 0.0
        %2945 = vmatmul.mubr.f32.gmra.mrb[0].mxu0 %v2686
        %v2946 = vpop.f32.mrb[0].mxu0
        %v2947 = vadd.f32 0.0, %v2946
        %v2948 = vpop.f32.mrb[0].mxu0
        %2949 = vmatprep.mubr.f32.mxu0 0.0
        %2950 = vmatmul.mubr.f32.gmra.mrb[0].mxu0 %v2689
        %v2951 = vpop.f32.mrb[0].mxu0
        %v2952 = vadd.f32 0.0, %v2951
        %v2953 = vpop.f32.mrb[0].mxu0
        %2954 = vmatprep.mubr.f32.mxu0 0.0
        %2955 = vmatmul.mubr.f32.gmra.mrb[0].mxu0 %v2692
        %v2956 = vpop.f32.mrb[0].mxu0
        %v2957 = vadd.f32 0.0, %v2956
        %v2958 = vpop.f32.mrb[0].mxu0
        %2959 = vmatprep.mubr.f32.mxu0 0.0
        %2960 = vmatmul.mubr.f32.gmra.mrb[0].mxu0 %v2695
        %v2961 = vpop.f32.mrb[0].mxu0
        %v2962 = vadd.f32 0.0, %v2961
        %v2963 = vpop.f32.mrb[0].mxu0
        %2964 = vmatprep.mubr.f32.mxu0 0.0
        %2965 = vmatmul.mubr.f32.gmra.mrb[0].mxu0 %v2698
        %v2966 = vpop.f32.mrb[0].mxu0
        %v2967 = vadd.f32 0.0, %v2966
        %v2968 = vpop.f32.mrb[0].mxu0
        %2969 = vmatprep.mubr.f32.mxu0 0.0
        %2970 = vmatmul.mubr.f32.gmra.mrb[0].mxu0 %v2701
        %v2971 = vpop.f32.mrb[0].mxu0
        %v2972 = vadd.f32 0.0, %v2971
        %v2973 = vpop.f32.mrb[0].mxu0
        %2974 = vmatprep.mubr.f32.mxu0 0.0
        %2975 = vmatmul.mubr.f32.gmra.mrb[0].mxu0 %v2704
        %v2976 = vpop.f32.mrb[0].mxu0
        %v2977 = vadd.f32 0.0, %v2976
        %v2978 = vpop.f32.mrb[0].mxu0
        %2979 = vmatprep.mubr.f32.mxu0 0.0
        %2980 = vmatmul.mubr.f32.gmra.mrb[0].mxu0 %v2707
        %v2981 = vpop.f32.mrb[0].mxu0
        %v2982 = vadd.f32 0.0, %v2981
        %v2983 = vpop.f32.mrb[0].mxu0
        %2984 = vmatprep.mubr.f32.mxu0 0.0
        %2985 = vmatmul.mubr.f32.gmra.mrb[0].mxu0 %v2710
        %v2986 = vpop.f32.mrb[0].mxu0
        %v2987 = vadd.f32 0.0, %v2986
        %v2988 = vpop.f32.mrb[0].mxu0
        %2989 = vmatprep.mubr.f32.mxu0 0.0
        %2990 = vmatmul.mubr.f32.gmra.mrb[0].mxu0 %v2713
        %v2991 = vpop.f32.mrb[0].mxu0
        %v2992 = vadd.f32 0.0, %v2991
        %v2993 = vpop.f32.mrb[0].mxu0
        %2994 = vmatprep.mubr.f32.mxu0 0.0
        %2995 = vmatmul.mubr.f32.gmra.mrb[0].mxu0 %v2716
        %v2996 = vpop.f32.mrb[0].mxu0
        %v2997 = vadd.f32 0.0, %v2996
        %v2998 = vpop.f32.mrb[0].mxu0
        %2999 = vmatprep.mubr.f32.mxu0 0.0
        %3000 = vmatmul.mubr.f32.gmra.mrb[0].mxu0 %v2719
        %v3001 = vpop.f32.mrb[0].mxu0
        %v3002 = vadd.f32 0.0, %v3001
        %v3003 = vpop.f32.mrb[0].mxu0
        %3004 = vmatprep.mubr.f32.mxu0 0.0
        %3005 = vmatmul.mubr.f32.gmra.mrb[0].mxu0 %v2722
        %v3006 = vpop.f32.mrb[0].mxu0
        %v3007 = vadd.f32 0.0, %v3006
        %v3008 = vpop.f32.mrb[0].mxu0
        %3009 = vmatprep.mubr.f32.mxu0 0.0
        %3010 = vmatmul.mubr.f32.gmra.mrb[0].mxu0 %v2725
        %v3011 = vpop.f32.mrb[0].mxu0
        %v3012 = vadd.f32 0.0, %v3011
        %v3013 = vpop.f32.mrb[0].mxu0
        %3014 = vmatprep.mubr.f32.mxu0 0.0
        %3015 = vmatmul.mubr.f32.gmra.mrb[0].mxu0 %v2728
        %v3016 = vpop.f32.mrb[0].mxu0
        %v3017 = vadd.f32 0.0, %v3016
        %v3018 = vpop.f32.mrb[0].mxu0
        %3019 = vmatprep.mubr.f32.mxu0 0.0
        %3020 = vmatmul.mubr.f32.gmra.mrb[0].mxu0 %v2731
        %v3021 = vpop.f32.mrb[0].mxu0
        %v3022 = vadd.f32 0.0, %v3021
        %v3023 = vpop.f32.mrb[0].mxu0
        %3024 = vmatprep.mubr.f32.mxu0 0.0
        %3025 = vmatmul.mubr.f32.gmra.mrb[0].mxu0 %v2734
        %v3026 = vpop.f32.mrb[0].mxu0
        %v3027 = vadd.f32 0.0, %v3026
        %v3028 = vpop.f32.mrb[0].mxu0
        %3029 = vmatprep.mubr.f32.mxu0 0.0
        %3030 = vmatmul.mubr.f32.gmra.mrb[0].mxu0 %v2737
        %v3031 = vpop.f32.mrb[0].mxu0
        %v3032 = vadd.f32 0.0, %v3031
        %v3033 = vpop.f32.mrb[0].mxu0
        %3034 = vmatprep.mubr.f32.mxu0 0.0
        %3035 = vmatmul.mubr.f32.gmra.mrb[0].mxu0 %v2740
        %v3036 = vpop.f32.mrb[0].mxu0
        %v3037 = vadd.f32 0.0, %v3036
        %v3038 = vpop.f32.mrb[0].mxu0
        %3039 = vmatprep.mubr.f32.mxu0 0.0
        %3040 = vmatmul.mubr.f32.gmra.mrb[0].mxu0 %v2743
        %v3041 = vpop.f32.mrb[0].mxu0
        %v3042 = vadd.f32 0.0, %v3041
        %v3043 = vpop.f32.mrb[0].mxu0
        %3044 = vmatprep.mubr.f32.mxu0 0.0
        %3045 = vmatmul.mubr.f32.gmra.mrb[0].mxu0 %v2746
        %v3046 = vpop.f32.mrb[0].mxu0
        %v3047 = vadd.f32 0.0, %v3046
        %v3048 = vpop.f32.mrb[0].mxu0
        %3049 = vmatprep.mubr.f32.mxu0 0.0
        %3050 = vmatmul.mubr.f32.gmra.mrb[0].mxu0 %v2749
        %v3051 = vpop.f32.mrb[0].mxu0
        %v3052 = vadd.f32 0.0, %v3051
        %v3053 = vpop.f32.mrb[0].mxu0
        %3054 = vmatprep.mubr.f32.mxu0 0.0
        %3055 = vmatmul.mubr.f32.gmra.mrb[0].mxu0 %v2752
        %v3056 = vpop.f32.mrb[0].mxu0
        %v3057 = vadd.f32 0.0, %v3056
        %v3058 = vpop.f32.mrb[0].mxu0
        %3059 = vmatprep.mubr.f32.mxu0 0.0
        %3060 = vmatmul.mubr.f32.gmra.mrb[0].mxu0 %v2755
        %v3061 = vpop.f32.mrb[0].mxu0
        %v3062 = vadd.f32 0.0, %v3061
        %v3063 = vpop.f32.mrb[0].mxu0
        %3064 = vmatprep.mubr.f32.mxu0 0.0
        %3065 = vmatmul.mubr.f32.gmra.mrb[0].mxu0 %v2758
        %v3066 = vpop.f32.mrb[0].mxu0
        %v3067 = vadd.f32 0.0, %v3066
        %v3068 = vpop.f32.mrb[0].mxu0
        %3069 = vmatprep.mubr.f32.mxu0 0.0
        %3070 = vmatmul.mubr.f32.gmra.mrb[0].mxu0 %v2761
        %v3071 = vpop.f32.mrb[0].mxu0
        %v3072 = vadd.f32 0.0, %v3071
        %v3073 = vpop.f32.mrb[0].mxu0
        %3074 = vmatprep.mubr.f32.mxu0 0.0
        %3075 = vmatmul.mubr.f32.gmra.mrb[0].mxu0 %v2764
        %v3076 = vpop.f32.mrb[0].mxu0
        %v3077 = vadd.f32 0.0, %v3076
        %v3078 = vpop.f32.mrb[0].mxu0
        %3079 = vmatprep.mubr.f32.mxu0 0.0
        %3080 = vmatmul.mubr.f32.gmra.mrb[0].mxu0 %v2767
        %v3081 = vpop.f32.mrb[0].mxu0
        %v3082 = vadd.f32 0.0, %v3081
        %v3083 = vpop.f32.mrb[0].mxu0
        %3084 = vmatprep.mubr.f32.mxu0 0.0
        %3085 = vmatmul.mubr.f32.gmra.mrb[0].mxu0 %v2770
        %v3086 = vpop.f32.mrb[0].mxu0
        %v3087 = vadd.f32 0.0, %v3086
        %v3088 = vpop.f32.mrb[0].mxu0
        %3089 = vmatprep.mubr.f32.mxu0 0.0
        %3090 = vmatmul.mubr.f32.gmra.mrb[0].mxu0 %v2773
        %v3091 = vpop.f32.mrb[0].mxu0
        %v3092 = vadd.f32 0.0, %v3091
        %v3093 = vpop.f32.mrb[0].mxu0
        %3094 = vmatprep.mubr.f32.mxu0 0.0
        %3095 = vmatmul.mubr.f32.gmra.mrb[0].mxu0 %v2776
        %v3096 = vpop.f32.mrb[0].mxu0
        %v3097 = vadd.f32 0.0, %v3096
        %v3098 = vpop.f32.mrb[0].mxu0
        %3099 = vmatprep.mubr.f32.mxu0 0.0
        %3100 = vmatmul.mubr.f32.gmra.mrb[0].mxu0 %v2779
        %v3101 = vpop.f32.mrb[0].mxu0
        %v3102 = vadd.f32 0.0, %v3101
        %v3103 = vpop.f32.mrb[0].mxu0
        %3104 = vmatprep.mubr.f32.mxu0 0.0
        %3105 = vmatmul.mubr.f32.gmra.mrb[0].mxu0 %v2782
        %v3106 = vpop.f32.mrb[0].mxu0
        %v3107 = vadd.f32 0.0, %v3106
        %v3108 = vpop.f32.mrb[0].mxu0
        %3109 = vmatprep.mubr.f32.mxu0 0.0
        %3110 = vmatmul.mubr.f32.gmra.mrb[0].mxu0 %v2785
        %v3111 = vpop.f32.mrb[0].mxu0
        %v3112 = vadd.f32 0.0, %v3111
        %v3113 = vpop.f32.mrb[0].mxu0
        %3114 = vmatprep.mubr.f32.mxu0 0.0
        %3115 = vmatmul.mubr.f32.gmra.mrb[0].mxu0 %v2788
        %v3116 = vpop.f32.mrb[0].mxu0
        %v3117 = vadd.f32 0.0, %v3116
        %v3118 = vpop.f32.mrb[0].mxu0
        %3119 = vmatprep.mubr.f32.mxu0 0.0
        %3120 = vmatmul.mubr.f32.gmra.mrb[0].mxu0 %v2791
        %v3121 = vpop.f32.mrb[0].mxu0
        %v3122 = vadd.f32 0.0, %v3121
        %v3123 = vpop.f32.mrb[0].mxu0
        %3124 = vmatprep.mubr.f32.mxu0 0.0
        %3125 = vmatmul.mubr.f32.gmra.mrb[0].mxu0 %v2794
        %v3126 = vpop.f32.mrb[0].mxu0
        %v3127 = vadd.f32 0.0, %v3126
        %v3128 = vpop.f32.mrb[0].mxu0
        %3129 = vmatprep.mubr.f32.mxu0 0.0
        %3130 = vmatmul.mubr.f32.gmra.mrb[0].mxu0 %v2797
        %v3131 = vpop.f32.mrb[0].mxu0
        %v3132 = vadd.f32 0.0, %v3131
        %v3133 = vpop.f32.mrb[0].mxu0
        %3134 = vmatprep.mubr.f32.mxu0 0.0
        %3135 = vmatmul.mubr.f32.gmra.mrb[0].mxu0 %v2800
        %v3136 = vpop.f32.mrb[0].mxu0
        %v3137 = vadd.f32 0.0, %v3136
        %v3138 = vpop.f32.mrb[0].mxu0
        %3139 = vdwg.mxu0
        %v3140 = vadd.f32 %v2530, %v2872
        %v3141 = vadd.f32 %v2531, %v2877
        %v3142 = vadd.f32 %v2532, %v2882
        %v3143 = vadd.f32 %v2533, %v2887
        %v3144 = vadd.f32 %v2534, %v2892
        %v3145 = vadd.f32 %v2535, %v2897
        %v3146 = vadd.f32 %v2536, %v2902
        %v3147 = vadd.f32 %v2537, %v2907
        %v3148 = vadd.f32 %v2538, %v2912
        %v3149 = vadd.f32 %v2539, %v2917
        %v3150 = vadd.f32 %v2540, %v2922
        %v3151 = vadd.f32 %v2541, %v2927
        %v3152 = vadd.f32 %v2542, %v2932
        %v3153 = vadd.f32 %v2543, %v2937
        %v3154 = vadd.f32 %v2544, %v2942
        %v3155 = vadd.f32 %v2545, %v2947
        %v3156 = vadd.f32 %v2546, %v2952
        %v3157 = vadd.f32 %v2547, %v2957
        %v3158 = vadd.f32 %v2548, %v2962
        %v3159 = vadd.f32 %v2549, %v2967
        %v3160 = vadd.f32 %v2550, %v2972
        %v3161 = vadd.f32 %v2551, %v2977
        %v3162 = vadd.f32 %v2552, %v2982
        %v3163 = vadd.f32 %v2553, %v2987
        %v3164 = vadd.f32 %v2554, %v2992
        %v3165 = vadd.f32 %v2555, %v2997
        %v3166 = vadd.f32 %v2556, %v3002
        %v3167 = vadd.f32 %v2557, %v3007
        %v3168 = vadd.f32 %v2558, %v3012
        %v3169 = vadd.f32 %v2559, %v3017
        %v3170 = vadd.f32 %v2560, %v3022
        %v3171 = vadd.f32 %v2561, %v3027
        %v3172 = vadd.f32 %v2562, %v3032
        %v3173 = vadd.f32 %v2563, %v3037
        %v3174 = vadd.f32 %v2564, %v3042
        %v3175 = vadd.f32 %v2565, %v3047
        %v3176 = vadd.f32 %v2566, %v3052
        %v3177 = vadd.f32 %v2567, %v3057
        %v3178 = vadd.f32 %v2568, %v3062
        %v3179 = vadd.f32 %v2569, %v3067
        %v3180 = vadd.f32 %v2570, %v3072
        %v3181 = vadd.f32 %v2571, %v3077
        %v3182 = vadd.f32 %v2572, %v3082
        %v3183 = vadd.f32 %v2573, %v3087
        %v3184 = vadd.f32 %v2574, %v3092
        %v3185 = vadd.f32 %v2575, %v3097
        %v3186 = vadd.f32 %v2576, %v3102
        %v3187 = vadd.f32 %v2577, %v3107
        %v3188 = vadd.f32 %v2578, %v3112
        %v3189 = vadd.f32 %v2579, %v3117
        %v3190 = vadd.f32 %v2580, %v3122
        %v3191 = vadd.f32 %v2581, %v3127
        %v3192 = vadd.f32 %v2582, %v3132
        %v3193 = vadd.f32 %v2583, %v3137
        %v3194 = vld [vmem:[%s1973 + $0x2] sm:$0xff]
        %v3195 = vld [vmem:[%s1973 + $0xa] sm:$0xff]
        %v3196 = vld [vmem:[%s1973 + $0x12] sm:$0xff]
        %v3197 = vld [vmem:[%s1973 + $0x22] sm:$0xff]
        %v3198 = vld [vmem:[%s1973 + $0x2a] sm:$0xff]
        %v3199 = vld [vmem:[%s1973 + $0x32] sm:$0xff]
        %v3200 = vld [vmem:[%s1973 + $0x42] sm:$0xff]
        %v3201 = vld [vmem:[%s1973 + $0x4a] sm:$0xff]
        %v3202 = vld [vmem:[%s1973 + $0x52] sm:$0xff]
        %v3203 = vld [vmem:[%s1973 + $0x62] sm:$0xff]
        %v3204 = vld [vmem:[%s1973 + $0x6a] sm:$0xff]
        %v3205 = vld [vmem:[%s1973 + $0x72] sm:$0xff]
        %v3206 = vld [vmem:[%s1973 + $0x82] sm:$0xff]
        %v3207 = vld [vmem:[%s1973 + $0x8a] sm:$0xff]
        %v3208 = vld [vmem:[%s1973 + $0x92] sm:$0xff]
        %v3209 = vld [vmem:[%s1973 + $0xa2] sm:$0xff]
        %v3210 = vld [vmem:[%s1973 + $0xaa] sm:$0xff]
        %v3211 = vld [vmem:[%s1973 + $0xb2] sm:$0xff]
        %v3212 = vld [vmem:[%s1973 + $0xc2] sm:$0xff]
        %v3213 = vld [vmem:[%s1973 + $0xca] sm:$0xff]
        %v3214 = vld [vmem:[%s1973 + $0xd2] sm:$0xff]
        %v3215 = vld [vmem:[%s1973 + $0xe2] sm:$0xff]
        %v3216 = vld [vmem:[%s1973 + $0xea] sm:$0xff]
        %v3217 = vld [vmem:[%s1973 + $0xf2] sm:$0xff]
        %v3218 = vld [vmem:[%s1973 + $0x102] sm:$0xff]
        %v3219 = vld [vmem:[%s1973 + $0x10a] sm:$0xff]
        %v3220 = vld [vmem:[%s1973 + $0x112] sm:$0xff]
        %v3221 = vld [vmem:[%s1973 + $0x122] sm:$0xff]
        %v3222 = vld [vmem:[%s1973 + $0x12a] sm:$0xff]
        %v3223 = vld [vmem:[%s1973 + $0x132] sm:$0xff]
        %v3224 = vld [vmem:[%s1973 + $0x142] sm:$0xff]
        %v3225 = vld [vmem:[%s1973 + $0x14a] sm:$0xff]
        %v3226 = vld [vmem:[%s1973 + $0x152] sm:$0xff]
        %v3227 = vld [vmem:[%s1973 + $0x162] sm:$0xff]
        %v3228 = vld [vmem:[%s1973 + $0x16a] sm:$0xff]
        %v3229 = vld [vmem:[%s1973 + $0x172] sm:$0xff]
        %v3230 = vld [vmem:[%s1973 + $0x182] sm:$0xff]
        %v3231 = vld [vmem:[%s1973 + $0x18a] sm:$0xff]
        %v3232 = vld [vmem:[%s1973 + $0x192] sm:$0xff]
        %v3233 = vld [vmem:[%s1973 + $0x1a2] sm:$0xff]
        %v3234 = vld [vmem:[%s1973 + $0x1aa] sm:$0xff]
        %v3235 = vld [vmem:[%s1973 + $0x1b2] sm:$0xff]
        %v3236 = vld [vmem:[%s1973 + $0x1c2] sm:$0xff]
        %v3237 = vld [vmem:[%s1973 + $0x1ca] sm:$0xff]
        %v3238 = vld [vmem:[%s1973 + $0x1d2] sm:$0xff]
        %v3239 = vld [vmem:[%s1973 + $0x1e2] sm:$0xff]
        %v3240 = vld [vmem:[%s1973 + $0x1ea] sm:$0xff]
        %v3241 = vld [vmem:[%s1973 + $0x1f2] sm:$0xff]
        %v3242 = vld [vmem:[%s1973 + $0x202] sm:$0xff]
        %v3243 = vld [vmem:[%s1973 + $0x20a] sm:$0xff]
        %v3244 = vld [vmem:[%s1973 + $0x212] sm:$0xff]
        %v3245 = vld [vmem:[%s1973 + $0x222] sm:$0xff]
        %v3246 = vld [vmem:[%s1973 + $0x22a] sm:$0xff]
        %v3247 = vld [vmem:[%s1973 + $0x232] sm:$0xff]
        %s3248 = scalar_lea.vmem %s1, 20
        %v3249 = vld [vmem:[%s3248] sm:$0xf]
        %v3251 = vsel %vm361, %v3194, 0
        %v3254 = vsel %vm361, %v3195, 0
        %v3257 = vsel %vm361, %v3196, 0
        %v3260 = vsel %vm361, %v3197, 0
        %v3263 = vsel %vm361, %v3198, 0
        %v3266 = vsel %vm361, %v3199, 0
        %v3269 = vsel %vm361, %v3200, 0
        %v3272 = vsel %vm361, %v3201, 0
        %v3275 = vsel %vm361, %v3202, 0
        %v3278 = vsel %vm361, %v3203, 0
        %v3281 = vsel %vm361, %v3204, 0
        %v3284 = vsel %vm361, %v3205, 0
        %v3287 = vsel %vm361, %v3206, 0
        %v3290 = vsel %vm361, %v3207, 0
        %v3293 = vsel %vm361, %v3208, 0
        %v3296 = vsel %vm361, %v3209, 0
        %v3299 = vsel %vm361, %v3210, 0
        %v3302 = vsel %vm361, %v3211, 0
        %v3305 = vsel %vm361, %v3212, 0
        %v3308 = vsel %vm361, %v3213, 0
        %v3311 = vsel %vm361, %v3214, 0
        %v3314 = vsel %vm361, %v3215, 0
        %v3317 = vsel %vm361, %v3216, 0
        %v3320 = vsel %vm361, %v3217, 0
        %v3323 = vsel %vm361, %v3218, 0
        %v3326 = vsel %vm361, %v3219, 0
        %v3329 = vsel %vm361, %v3220, 0
        %v3332 = vsel %vm361, %v3221, 0
        %v3335 = vsel %vm361, %v3222, 0
        %v3338 = vsel %vm361, %v3223, 0
        %v3341 = vsel %vm361, %v3224, 0
        %v3344 = vsel %vm361, %v3225, 0
        %v3347 = vsel %vm361, %v3226, 0
        %v3350 = vsel %vm361, %v3227, 0
        %v3353 = vsel %vm361, %v3228, 0
        %v3356 = vsel %vm361, %v3229, 0
        %v3359 = vsel %vm361, %v3230, 0
        %v3362 = vsel %vm361, %v3231, 0
        %v3365 = vsel %vm361, %v3232, 0
        %v3368 = vsel %vm361, %v3233, 0
        %v3371 = vsel %vm361, %v3234, 0
        %v3374 = vsel %vm361, %v3235, 0
        %v3377 = vsel %vm361, %v3236, 0
        %v3380 = vsel %vm361, %v3237, 0
        %v3383 = vsel %vm361, %v3238, 0
        %v3386 = vsel %vm361, %v3239, 0
        %v3389 = vsel %vm361, %v3240, 0
        %v3392 = vsel %vm361, %v3241, 0
        %v3395 = vsel %vm361, %v3242, 0
        %v3398 = vsel %vm361, %v3243, 0
        %v3401 = vsel %vm361, %v3244, 0
        %v3404 = vsel %vm361, %v3245, 0
        %v3407 = vsel %vm361, %v3246, 0
        %v3410 = vsel %vm361, %v3247, 0
        %v3413 = vsel %vm524, %v3249, 0
        %3415 = vmatprep.subr.mxu0 0.0
        %3416 = vmatpush1.msra.mxu0 %v3413
        %3417 = vmatprep.subr.mxu0 0.0
        %3418 = vmatpush1.msra.mxu0 0.0
        %3419 = vmatprep.subr.mxu0 0.0
        %3420 = vmatpush1.msra.mxu0 0.0
        %3421 = vmatprep.subr.mxu0 0.0
        %3422 = vmatpush1.msra.mxu0 0.0
        %3423 = vmatprep.subr.mxu0 0.0
        %3424 = vmatpush1.msra.mxu0 0.0
        %3425 = vmatprep.subr.mxu0 0.0
        %3426 = vmatpush1.msra.mxu0 0.0
        %3427 = vmatprep.subr.mxu0 0.0
        %3428 = vmatpush1.msra.mxu0 0.0
        %3429 = vmatprep.subr.mxu0 0.0
        %3430 = vmatpush1.msra.mxu0 0.0
        %3431 = vmatprep.subr.mxu0 0.0
        %3432 = vmatpush1.msra.mxu0 0.0
        %3433 = vmatprep.subr.mxu0 0.0
        %3434 = vmatpush1.msra.mxu0 0.0
        %3435 = vmatprep.subr.mxu0 0.0
        %3436 = vmatpush1.msra.mxu0 0.0
        %3437 = vmatprep.subr.mxu0 0.0
        %3438 = vmatpush1.msra.mxu0 0.0
        %3439 = vmatprep.subr.mxu0 0.0
        %3440 = vmatpush1.msra.mxu0 0.0
        %3441 = vmatprep.subr.mxu0 0.0
        %3442 = vmatpush1.msra.mxu0 0.0
        %3443 = vmatprep.subr.mxu0 0.0
        %3444 = vmatpush1.msra.mxu0 0.0
        %3445 = vmatprep.subr.mxu0 0.0
        %3446 = vmatpush1.msra.mxu0 0.0
        %3447 = vmatprep.subr.mxu0 0.0
        %3448 = vmatpush1.msra.mxu0 0.0
        %3449 = vmatprep.subr.mxu0 0.0
        %3450 = vmatpush1.msra.mxu0 0.0
        %3451 = vmatprep.subr.mxu0 0.0
        %3452 = vmatpush1.msra.mxu0 0.0
        %3453 = vmatprep.subr.mxu0 0.0
        %3454 = vmatpush1.msra.mxu0 0.0
        %3455 = vmatprep.subr.mxu0 0.0
        %3456 = vmatpush1.msra.mxu0 0.0
        %3457 = vmatprep.subr.mxu0 0.0
        %3458 = vmatpush1.msra.mxu0 0.0
        %3459 = vmatprep.subr.mxu0 0.0
        %3460 = vmatpush1.msra.mxu0 0.0
        %3461 = vmatprep.subr.mxu0 0.0
        %3462 = vmatpush1.msra.mxu0 0.0
        %3463 = vmatprep.subr.mxu0 0.0
        %3464 = vmatpush1.msra.mxu0 0.0
        %3465 = vmatprep.subr.mxu0 0.0
        %3466 = vmatpush1.msra.mxu0 0.0
        %3467 = vmatprep.subr.mxu0 0.0
        %3468 = vmatpush1.msra.mxu0 0.0
        %3469 = vmatprep.subr.mxu0 0.0
        %3470 = vmatpush1.msra.mxu0 0.0
        %3471 = vmatprep.subr.mxu0 0.0
        %3472 = vmatpush1.msra.mxu0 0.0
        %3473 = vmatprep.subr.mxu0 0.0
        %3474 = vmatpush1.msra.mxu0 0.0
        %3475 = vmatprep.subr.mxu0 0.0
        %3476 = vmatpush1.msra.mxu0 0.0
        %3477 = vmatprep.subr.mxu0 0.0
        %3478 = vmatpush1.msra.mxu0 0.0
        %3479 = vmatprep.mubr.f32.mxu0 0.0
        %3480 = vmatmul.mubr.f32.gmra.mrb[0].mxu0 %v3251
        %v3481 = vpop.f32.mrb[0].mxu0
        %v3482 = vadd.f32 0.0, %v3481
        %v3483 = vpop.f32.mrb[0].mxu0
        %3484 = vmatprep.mubr.f32.mxu0 0.0
        %3485 = vmatmul.mubr.f32.gmra.mrb[0].mxu0 %v3254
        %v3486 = vpop.f32.mrb[0].mxu0
        %v3487 = vadd.f32 0.0, %v3486
        %v3488 = vpop.f32.mrb[0].mxu0
        %3489 = vmatprep.mubr.f32.mxu0 0.0
        %3490 = vmatmul.mubr.f32.gmra.mrb[0].mxu0 %v3257
        %v3491 = vpop.f32.mrb[0].mxu0
        %v3492 = vadd.f32 0.0, %v3491
        %v3493 = vpop.f32.mrb[0].mxu0
        %3494 = vmatprep.mubr.f32.mxu0 0.0
        %3495 = vmatmul.mubr.f32.gmra.mrb[0].mxu0 %v3260
        %v3496 = vpop.f32.mrb[0].mxu0
        %v3497 = vadd.f32 0.0, %v3496
        %v3498 = vpop.f32.mrb[0].mxu0
        %3499 = vmatprep.mubr.f32.mxu0 0.0
        %3500 = vmatmul.mubr.f32.gmra.mrb[0].mxu0 %v3263
        %v3501 = vpop.f32.mrb[0].mxu0
        %v3502 = vadd.f32 0.0, %v3501
        %v3503 = vpop.f32.mrb[0].mxu0
        %3504 = vmatprep.mubr.f32.mxu0 0.0
        %3505 = vmatmul.mubr.f32.gmra.mrb[0].mxu0 %v3266
        %v3506 = vpop.f32.mrb[0].mxu0
        %v3507 = vadd.f32 0.0, %v3506
        %v3508 = vpop.f32.mrb[0].mxu0
        %3509 = vmatprep.mubr.f32.mxu0 0.0
        %3510 = vmatmul.mubr.f32.gmra.mrb[0].mxu0 %v3269
        %v3511 = vpop.f32.mrb[0].mxu0
        %v3512 = vadd.f32 0.0, %v3511
        %v3513 = vpop.f32.mrb[0].mxu0
        %3514 = vmatprep.mubr.f32.mxu0 0.0
        %3515 = vmatmul.mubr.f32.gmra.mrb[0].mxu0 %v3272
        %v3516 = vpop.f32.mrb[0].mxu0
        %v3517 = vadd.f32 0.0, %v3516
        %v3518 = vpop.f32.mrb[0].mxu0
        %3519 = vmatprep.mubr.f32.mxu0 0.0
        %3520 = vmatmul.mubr.f32.gmra.mrb[0].mxu0 %v3275
        %v3521 = vpop.f32.mrb[0].mxu0
        %v3522 = vadd.f32 0.0, %v3521
        %v3523 = vpop.f32.mrb[0].mxu0
        %3524 = vmatprep.mubr.f32.mxu0 0.0
        %3525 = vmatmul.mubr.f32.gmra.mrb[0].mxu0 %v3278
        %v3526 = vpop.f32.mrb[0].mxu0
        %v3527 = vadd.f32 0.0, %v3526
        %v3528 = vpop.f32.mrb[0].mxu0
        %3529 = vmatprep.mubr.f32.mxu0 0.0
        %3530 = vmatmul.mubr.f32.gmra.mrb[0].mxu0 %v3281
        %v3531 = vpop.f32.mrb[0].mxu0
        %v3532 = vadd.f32 0.0, %v3531
        %v3533 = vpop.f32.mrb[0].mxu0
        %3534 = vmatprep.mubr.f32.mxu0 0.0
        %3535 = vmatmul.mubr.f32.gmra.mrb[0].mxu0 %v3284
        %v3536 = vpop.f32.mrb[0].mxu0
        %v3537 = vadd.f32 0.0, %v3536
        %v3538 = vpop.f32.mrb[0].mxu0
        %3539 = vmatprep.mubr.f32.mxu0 0.0
        %3540 = vmatmul.mubr.f32.gmra.mrb[0].mxu0 %v3287
        %v3541 = vpop.f32.mrb[0].mxu0
        %v3542 = vadd.f32 0.0, %v3541
        %v3543 = vpop.f32.mrb[0].mxu0
        %3544 = vmatprep.mubr.f32.mxu0 0.0
        %3545 = vmatmul.mubr.f32.gmra.mrb[0].mxu0 %v3290
        %v3546 = vpop.f32.mrb[0].mxu0
        %v3547 = vadd.f32 0.0, %v3546
        %v3548 = vpop.f32.mrb[0].mxu0
        %3549 = vmatprep.mubr.f32.mxu0 0.0
        %3550 = vmatmul.mubr.f32.gmra.mrb[0].mxu0 %v3293
        %v3551 = vpop.f32.mrb[0].mxu0
        %v3552 = vadd.f32 0.0, %v3551
        %v3553 = vpop.f32.mrb[0].mxu0
        %3554 = vmatprep.mubr.f32.mxu0 0.0
        %3555 = vmatmul.mubr.f32.gmra.mrb[0].mxu0 %v3296
        %v3556 = vpop.f32.mrb[0].mxu0
        %v3557 = vadd.f32 0.0, %v3556
        %v3558 = vpop.f32.mrb[0].mxu0
        %3559 = vmatprep.mubr.f32.mxu0 0.0
        %3560 = vmatmul.mubr.f32.gmra.mrb[0].mxu0 %v3299
        %v3561 = vpop.f32.mrb[0].mxu0
        %v3562 = vadd.f32 0.0, %v3561
        %v3563 = vpop.f32.mrb[0].mxu0
        %3564 = vmatprep.mubr.f32.mxu0 0.0
        %3565 = vmatmul.mubr.f32.gmra.mrb[0].mxu0 %v3302
        %v3566 = vpop.f32.mrb[0].mxu0
        %v3567 = vadd.f32 0.0, %v3566
        %v3568 = vpop.f32.mrb[0].mxu0
        %3569 = vmatprep.mubr.f32.mxu0 0.0
        %3570 = vmatmul.mubr.f32.gmra.mrb[0].mxu0 %v3305
        %v3571 = vpop.f32.mrb[0].mxu0
        %v3572 = vadd.f32 0.0, %v3571
        %v3573 = vpop.f32.mrb[0].mxu0
        %3574 = vmatprep.mubr.f32.mxu0 0.0
        %3575 = vmatmul.mubr.f32.gmra.mrb[0].mxu0 %v3308
        %v3576 = vpop.f32.mrb[0].mxu0
        %v3577 = vadd.f32 0.0, %v3576
        %v3578 = vpop.f32.mrb[0].mxu0
        %3579 = vmatprep.mubr.f32.mxu0 0.0
        %3580 = vmatmul.mubr.f32.gmra.mrb[0].mxu0 %v3311
        %v3581 = vpop.f32.mrb[0].mxu0
        %v3582 = vadd.f32 0.0, %v3581
        %v3583 = vpop.f32.mrb[0].mxu0
        %3584 = vmatprep.mubr.f32.mxu0 0.0
        %3585 = vmatmul.mubr.f32.gmra.mrb[0].mxu0 %v3314
        %v3586 = vpop.f32.mrb[0].mxu0
        %v3587 = vadd.f32 0.0, %v3586
        %v3588 = vpop.f32.mrb[0].mxu0
        %3589 = vmatprep.mubr.f32.mxu0 0.0
        %3590 = vmatmul.mubr.f32.gmra.mrb[0].mxu0 %v3317
        %v3591 = vpop.f32.mrb[0].mxu0
        %v3592 = vadd.f32 0.0, %v3591
        %v3593 = vpop.f32.mrb[0].mxu0
        %3594 = vmatprep.mubr.f32.mxu0 0.0
        %3595 = vmatmul.mubr.f32.gmra.mrb[0].mxu0 %v3320
        %v3596 = vpop.f32.mrb[0].mxu0
        %v3597 = vadd.f32 0.0, %v3596
        %v3598 = vpop.f32.mrb[0].mxu0
        %3599 = vmatprep.mubr.f32.mxu0 0.0
        %3600 = vmatmul.mubr.f32.gmra.mrb[0].mxu0 %v3323
        %v3601 = vpop.f32.mrb[0].mxu0
        %v3602 = vadd.f32 0.0, %v3601
        %v3603 = vpop.f32.mrb[0].mxu0
        %3604 = vmatprep.mubr.f32.mxu0 0.0
        %3605 = vmatmul.mubr.f32.gmra.mrb[0].mxu0 %v3326
        %v3606 = vpop.f32.mrb[0].mxu0
        %v3607 = vadd.f32 0.0, %v3606
        %v3608 = vpop.f32.mrb[0].mxu0
        %3609 = vmatprep.mubr.f32.mxu0 0.0
        %3610 = vmatmul.mubr.f32.gmra.mrb[0].mxu0 %v3329
        %v3611 = vpop.f32.mrb[0].mxu0
        %v3612 = vadd.f32 0.0, %v3611
        %v3613 = vpop.f32.mrb[0].mxu0
        %3614 = vmatprep.mubr.f32.mxu0 0.0
        %3615 = vmatmul.mubr.f32.gmra.mrb[0].mxu0 %v3332
        %v3616 = vpop.f32.mrb[0].mxu0
        %v3617 = vadd.f32 0.0, %v3616
        %v3618 = vpop.f32.mrb[0].mxu0
        %3619 = vmatprep.mubr.f32.mxu0 0.0
        %3620 = vmatmul.mubr.f32.gmra.mrb[0].mxu0 %v3335
        %v3621 = vpop.f32.mrb[0].mxu0
        %v3622 = vadd.f32 0.0, %v3621
        %v3623 = vpop.f32.mrb[0].mxu0
        %3624 = vmatprep.mubr.f32.mxu0 0.0
        %3625 = vmatmul.mubr.f32.gmra.mrb[0].mxu0 %v3338
        %v3626 = vpop.f32.mrb[0].mxu0
        %v3627 = vadd.f32 0.0, %v3626
        %v3628 = vpop.f32.mrb[0].mxu0
        %3629 = vmatprep.mubr.f32.mxu0 0.0
        %3630 = vmatmul.mubr.f32.gmra.mrb[0].mxu0 %v3341
        %v3631 = vpop.f32.mrb[0].mxu0
        %v3632 = vadd.f32 0.0, %v3631
        %v3633 = vpop.f32.mrb[0].mxu0
        %3634 = vmatprep.mubr.f32.mxu0 0.0
        %3635 = vmatmul.mubr.f32.gmra.mrb[0].mxu0 %v3344
        %v3636 = vpop.f32.mrb[0].mxu0
        %v3637 = vadd.f32 0.0, %v3636
        %v3638 = vpop.f32.mrb[0].mxu0
        %3639 = vmatprep.mubr.f32.mxu0 0.0
        %3640 = vmatmul.mubr.f32.gmra.mrb[0].mxu0 %v3347
        %v3641 = vpop.f32.mrb[0].mxu0
        %v3642 = vadd.f32 0.0, %v3641
        %v3643 = vpop.f32.mrb[0].mxu0
        %3644 = vmatprep.mubr.f32.mxu0 0.0
        %3645 = vmatmul.mubr.f32.gmra.mrb[0].mxu0 %v3350
        %v3646 = vpop.f32.mrb[0].mxu0
        %v3647 = vadd.f32 0.0, %v3646
        %v3648 = vpop.f32.mrb[0].mxu0
        %3649 = vmatprep.mubr.f32.mxu0 0.0
        %3650 = vmatmul.mubr.f32.gmra.mrb[0].mxu0 %v3353
        %v3651 = vpop.f32.mrb[0].mxu0
        %v3652 = vadd.f32 0.0, %v3651
        %v3653 = vpop.f32.mrb[0].mxu0
        %3654 = vmatprep.mubr.f32.mxu0 0.0
        %3655 = vmatmul.mubr.f32.gmra.mrb[0].mxu0 %v3356
        %v3656 = vpop.f32.mrb[0].mxu0
        %v3657 = vadd.f32 0.0, %v3656
        %v3658 = vpop.f32.mrb[0].mxu0
        %3659 = vmatprep.mubr.f32.mxu0 0.0
        %3660 = vmatmul.mubr.f32.gmra.mrb[0].mxu0 %v3359
        %v3661 = vpop.f32.mrb[0].mxu0
        %v3662 = vadd.f32 0.0, %v3661
        %v3663 = vpop.f32.mrb[0].mxu0
        %3664 = vmatprep.mubr.f32.mxu0 0.0
        %3665 = vmatmul.mubr.f32.gmra.mrb[0].mxu0 %v3362
        %v3666 = vpop.f32.mrb[0].mxu0
        %v3667 = vadd.f32 0.0, %v3666
        %v3668 = vpop.f32.mrb[0].mxu0
        %3669 = vmatprep.mubr.f32.mxu0 0.0
        %3670 = vmatmul.mubr.f32.gmra.mrb[0].mxu0 %v3365
        %v3671 = vpop.f32.mrb[0].mxu0
        %v3672 = vadd.f32 0.0, %v3671
        %v3673 = vpop.f32.mrb[0].mxu0
        %3674 = vmatprep.mubr.f32.mxu0 0.0
        %3675 = vmatmul.mubr.f32.gmra.mrb[0].mxu0 %v3368
        %v3676 = vpop.f32.mrb[0].mxu0
        %v3677 = vadd.f32 0.0, %v3676
        %v3678 = vpop.f32.mrb[0].mxu0
        %3679 = vmatprep.mubr.f32.mxu0 0.0
        %3680 = vmatmul.mubr.f32.gmra.mrb[0].mxu0 %v3371
        %v3681 = vpop.f32.mrb[0].mxu0
        %v3682 = vadd.f32 0.0, %v3681
        %v3683 = vpop.f32.mrb[0].mxu0
        %3684 = vmatprep.mubr.f32.mxu0 0.0
        %3685 = vmatmul.mubr.f32.gmra.mrb[0].mxu0 %v3374
        %v3686 = vpop.f32.mrb[0].mxu0
        %v3687 = vadd.f32 0.0, %v3686
        %v3688 = vpop.f32.mrb[0].mxu0
        %3689 = vmatprep.mubr.f32.mxu0 0.0
        %3690 = vmatmul.mubr.f32.gmra.mrb[0].mxu0 %v3377
        %v3691 = vpop.f32.mrb[0].mxu0
        %v3692 = vadd.f32 0.0, %v3691
        %v3693 = vpop.f32.mrb[0].mxu0
        %3694 = vmatprep.mubr.f32.mxu0 0.0
        %3695 = vmatmul.mubr.f32.gmra.mrb[0].mxu0 %v3380
        %v3696 = vpop.f32.mrb[0].mxu0
        %v3697 = vadd.f32 0.0, %v3696
        %v3698 = vpop.f32.mrb[0].mxu0
        %3699 = vmatprep.mubr.f32.mxu0 0.0
        %3700 = vmatmul.mubr.f32.gmra.mrb[0].mxu0 %v3383
        %v3701 = vpop.f32.mrb[0].mxu0
        %v3702 = vadd.f32 0.0, %v3701
        %v3703 = vpop.f32.mrb[0].mxu0
        %3704 = vmatprep.mubr.f32.mxu0 0.0
        %3705 = vmatmul.mubr.f32.gmra.mrb[0].mxu0 %v3386
        %v3706 = vpop.f32.mrb[0].mxu0
        %v3707 = vadd.f32 0.0, %v3706
        %v3708 = vpop.f32.mrb[0].mxu0
        %3709 = vmatprep.mubr.f32.mxu0 0.0
        %3710 = vmatmul.mubr.f32.gmra.mrb[0].mxu0 %v3389
        %v3711 = vpop.f32.mrb[0].mxu0
        %v3712 = vadd.f32 0.0, %v3711
        %v3713 = vpop.f32.mrb[0].mxu0
        %3714 = vmatprep.mubr.f32.mxu0 0.0
        %3715 = vmatmul.mubr.f32.gmra.mrb[0].mxu0 %v3392
        %v3716 = vpop.f32.mrb[0].mxu0
        %v3717 = vadd.f32 0.0, %v3716
        %v3718 = vpop.f32.mrb[0].mxu0
        %3719 = vmatprep.mubr.f32.mxu0 0.0
        %3720 = vmatmul.mubr.f32.gmra.mrb[0].mxu0 %v3395
        %v3721 = vpop.f32.mrb[0].mxu0
        %v3722 = vadd.f32 0.0, %v3721
        %v3723 = vpop.f32.mrb[0].mxu0
        %3724 = vmatprep.mubr.f32.mxu0 0.0
        %3725 = vmatmul.mubr.f32.gmra.mrb[0].mxu0 %v3398
        %v3726 = vpop.f32.mrb[0].mxu0
        %v3727 = vadd.f32 0.0, %v3726
        %v3728 = vpop.f32.mrb[0].mxu0
        %3729 = vmatprep.mubr.f32.mxu0 0.0
        %3730 = vmatmul.mubr.f32.gmra.mrb[0].mxu0 %v3401
        %v3731 = vpop.f32.mrb[0].mxu0
        %v3732 = vadd.f32 0.0, %v3731
        %v3733 = vpop.f32.mrb[0].mxu0
        %3734 = vmatprep.mubr.f32.mxu0 0.0
        %3735 = vmatmul.mubr.f32.gmra.mrb[0].mxu0 %v3404
        %v3736 = vpop.f32.mrb[0].mxu0
        %v3737 = vadd.f32 0.0, %v3736
        %v3738 = vpop.f32.mrb[0].mxu0
        %3739 = vmatprep.mubr.f32.mxu0 0.0
        %3740 = vmatmul.mubr.f32.gmra.mrb[0].mxu0 %v3407
        %v3741 = vpop.f32.mrb[0].mxu0
        %v3742 = vadd.f32 0.0, %v3741
        %v3743 = vpop.f32.mrb[0].mxu0
        %3744 = vmatprep.mubr.f32.mxu0 0.0
        %3745 = vmatmul.mubr.f32.gmra.mrb[0].mxu0 %v3410
        %v3746 = vpop.f32.mrb[0].mxu0
        %v3747 = vadd.f32 0.0, %v3746
        %v3748 = vpop.f32.mrb[0].mxu0
        %3749 = vdwg.mxu0
        %v3750 = vadd.f32 %v3140, %v3482
        %v3751 = vadd.f32 %v3141, %v3487
        %v3752 = vadd.f32 %v3142, %v3492
        %v3753 = vadd.f32 %v3143, %v3497
        %v3754 = vadd.f32 %v3144, %v3502
        %v3755 = vadd.f32 %v3145, %v3507
        %v3756 = vadd.f32 %v3146, %v3512
        %v3757 = vadd.f32 %v3147, %v3517
        %v3758 = vadd.f32 %v3148, %v3522
        %v3759 = vadd.f32 %v3149, %v3527
        %v3760 = vadd.f32 %v3150, %v3532
        %v3761 = vadd.f32 %v3151, %v3537
        %v3762 = vadd.f32 %v3152, %v3542
        %v3763 = vadd.f32 %v3153, %v3547
        %v3764 = vadd.f32 %v3154, %v3552
        %v3765 = vadd.f32 %v3155, %v3557
        %v3766 = vadd.f32 %v3156, %v3562
        %v3767 = vadd.f32 %v3157, %v3567
        %v3768 = vadd.f32 %v3158, %v3572
        %v3769 = vadd.f32 %v3159, %v3577
        %v3770 = vadd.f32 %v3160, %v3582
        %v3771 = vadd.f32 %v3161, %v3587
        %v3772 = vadd.f32 %v3162, %v3592
        %v3773 = vadd.f32 %v3163, %v3597
        %v3774 = vadd.f32 %v3164, %v3602
        %v3775 = vadd.f32 %v3165, %v3607
        %v3776 = vadd.f32 %v3166, %v3612
        %v3777 = vadd.f32 %v3167, %v3617
        %v3778 = vadd.f32 %v3168, %v3622
        %v3779 = vadd.f32 %v3169, %v3627
        %v3780 = vadd.f32 %v3170, %v3632
        %v3781 = vadd.f32 %v3171, %v3637
        %v3782 = vadd.f32 %v3172, %v3642
        %v3783 = vadd.f32 %v3173, %v3647
        %v3784 = vadd.f32 %v3174, %v3652
        %v3785 = vadd.f32 %v3175, %v3657
        %v3786 = vadd.f32 %v3176, %v3662
        %v3787 = vadd.f32 %v3177, %v3667
        %v3788 = vadd.f32 %v3178, %v3672
        %v3789 = vadd.f32 %v3179, %v3677
        %v3790 = vadd.f32 %v3180, %v3682
        %v3791 = vadd.f32 %v3181, %v3687
        %v3792 = vadd.f32 %v3182, %v3692
        %v3793 = vadd.f32 %v3183, %v3697
        %v3794 = vadd.f32 %v3184, %v3702
        %v3795 = vadd.f32 %v3185, %v3707
        %v3796 = vadd.f32 %v3186, %v3712
        %v3797 = vadd.f32 %v3187, %v3717
        %v3798 = vadd.f32 %v3188, %v3722
        %v3799 = vadd.f32 %v3189, %v3727
        %v3800 = vadd.f32 %v3190, %v3732
        %v3801 = vadd.f32 %v3191, %v3737
        %v3802 = vadd.f32 %v3192, %v3742
        %v3803 = vadd.f32 %v3193, %v3747
        %s3804 = scalar_lea.vmem %s249, 64
        %v3805 = vld [vmem:[%s3804] sm:$0xff]
        %v3806 = vld [vmem:[%s3804 + $0x8] sm:$0xff]
        %v3807 = vld [vmem:[%s3804 + $0x10] sm:$0xff]
        %v3808 = vld [vmem:[%s3804 + $0x20] sm:$0xff]
        %v3809 = vld [vmem:[%s3804 + $0x28] sm:$0xff]
        %v3810 = vld [vmem:[%s3804 + $0x30] sm:$0xff]
        %v3811 = vld [vmem:[%s3804 + $0x40] sm:$0xff]
        %v3812 = vld [vmem:[%s3804 + $0x48] sm:$0xff]
        %v3813 = vld [vmem:[%s3804 + $0x50] sm:$0xff]
        %v3814 = vld [vmem:[%s3804 + $0x60] sm:$0xff]
        %v3815 = vld [vmem:[%s3804 + $0x68] sm:$0xff]
        %v3816 = vld [vmem:[%s3804 + $0x70] sm:$0xff]
        %v3817 = vld [vmem:[%s3804 + $0x80] sm:$0xff]
        %v3818 = vld [vmem:[%s3804 + $0x88] sm:$0xff]
        %v3819 = vld [vmem:[%s3804 + $0x90] sm:$0xff]
        %v3820 = vld [vmem:[%s3804 + $0xa0] sm:$0xff]
        %v3821 = vld [vmem:[%s3804 + $0xa8] sm:$0xff]
        %v3822 = vld [vmem:[%s3804 + $0xb0] sm:$0xff]
        %v3823 = vld [vmem:[%s3804 + $0xc0] sm:$0xff]
        %v3824 = vld [vmem:[%s3804 + $0xc8] sm:$0xff]
        %v3825 = vld [vmem:[%s3804 + $0xd0] sm:$0xff]
        %v3826 = vld [vmem:[%s3804 + $0xe0] sm:$0xff]
        %v3827 = vld [vmem:[%s3804 + $0xe8] sm:$0xff]
        %v3828 = vld [vmem:[%s3804 + $0xf0] sm:$0xff]
        %v3829 = vld [vmem:[%s3804 + $0x100] sm:$0xff]
        %v3830 = vld [vmem:[%s3804 + $0x108] sm:$0xff]
        %v3831 = vld [vmem:[%s3804 + $0x110] sm:$0xff]
        %v3832 = vld [vmem:[%s3804 + $0x120] sm:$0xff]
        %v3833 = vld [vmem:[%s3804 + $0x128] sm:$0xff]
        %v3834 = vld [vmem:[%s3804 + $0x130] sm:$0xff]
        %v3835 = vld [vmem:[%s3804 + $0x140] sm:$0xff]
        %v3836 = vld [vmem:[%s3804 + $0x148] sm:$0xff]
        %v3837 = vld [vmem:[%s3804 + $0x150] sm:$0xff]
        %v3838 = vld [vmem:[%s3804 + $0x160] sm:$0xff]
        %v3839 = vld [vmem:[%s3804 + $0x168] sm:$0xff]
        %v3840 = vld [vmem:[%s3804 + $0x170] sm:$0xff]
        %v3841 = vld [vmem:[%s3804 + $0x180] sm:$0xff]
        %v3842 = vld [vmem:[%s3804 + $0x188] sm:$0xff]
        %v3843 = vld [vmem:[%s3804 + $0x190] sm:$0xff]
        %v3844 = vld [vmem:[%s3804 + $0x1a0] sm:$0xff]
        %v3845 = vld [vmem:[%s3804 + $0x1a8] sm:$0xff]
        %v3846 = vld [vmem:[%s3804 + $0x1b0] sm:$0xff]
        %v3847 = vld [vmem:[%s3804 + $0x1c0] sm:$0xff]
        %v3848 = vld [vmem:[%s3804 + $0x1c8] sm:$0xff]
        %v3849 = vld [vmem:[%s3804 + $0x1d0] sm:$0xff]
        %v3850 = vld [vmem:[%s3804 + $0x1e0] sm:$0xff]
        %v3851 = vld [vmem:[%s3804 + $0x1e8] sm:$0xff]
        %v3852 = vld [vmem:[%s3804 + $0x1f0] sm:$0xff]
        %v3853 = vld [vmem:[%s3804 + $0x200] sm:$0xff]
        %v3854 = vld [vmem:[%s3804 + $0x208] sm:$0xff]
        %v3855 = vld [vmem:[%s3804 + $0x210] sm:$0xff]
        %v3856 = vld [vmem:[%s3804 + $0x220] sm:$0xff]
        %v3857 = vld [vmem:[%s3804 + $0x228] sm:$0xff]
        %v3858 = vld [vmem:[%s3804 + $0x230] sm:$0xff]
        %s3859 = scalar_lea.vmem %s1, 24
        %v3860 = vld [vmem:[%s3859] sm:$0xf]
        %v3862 = vsel %vm361, %v3805, 0
        %v3865 = vsel %vm361, %v3806, 0
        %v3868 = vsel %vm361, %v3807, 0
        %v3871 = vsel %vm361, %v3808, 0
        %v3874 = vsel %vm361, %v3809, 0
        %v3877 = vsel %vm361, %v3810, 0
        %v3880 = vsel %vm361, %v3811, 0
        %v3883 = vsel %vm361, %v3812, 0
        %v3886 = vsel %vm361, %v3813, 0
        %v3889 = vsel %vm361, %v3814, 0
        %v3892 = vsel %vm361, %v3815, 0
        %v3895 = vsel %vm361, %v3816, 0
        %v3898 = vsel %vm361, %v3817, 0
        %v3901 = vsel %vm361, %v3818, 0
        %v3904 = vsel %vm361, %v3819, 0
        %v3907 = vsel %vm361, %v3820, 0
        %v3910 = vsel %vm361, %v3821, 0
        %v3913 = vsel %vm361, %v3822, 0
        %v3916 = vsel %vm361, %v3823, 0
        %v3919 = vsel %vm361, %v3824, 0
        %v3922 = vsel %vm361, %v3825, 0
        %v3925 = vsel %vm361, %v3826, 0
        %v3928 = vsel %vm361, %v3827, 0
        %v3931 = vsel %vm361, %v3828, 0
        %v3934 = vsel %vm361, %v3829, 0
        %v3937 = vsel %vm361, %v3830, 0
        %v3940 = vsel %vm361, %v3831, 0
        %v3943 = vsel %vm361, %v3832, 0
        %v3946 = vsel %vm361, %v3833, 0
        %v3949 = vsel %vm361, %v3834, 0
        %v3952 = vsel %vm361, %v3835, 0
        %v3955 = vsel %vm361, %v3836, 0
        %v3958 = vsel %vm361, %v3837, 0
        %v3961 = vsel %vm361, %v3838, 0
        %v3964 = vsel %vm361, %v3839, 0
        %v3967 = vsel %vm361, %v3840, 0
        %v3970 = vsel %vm361, %v3841, 0
        %v3973 = vsel %vm361, %v3842, 0
        %v3976 = vsel %vm361, %v3843, 0
        %v3979 = vsel %vm361, %v3844, 0
        %v3982 = vsel %vm361, %v3845, 0
        %v3985 = vsel %vm361, %v3846, 0
        %v3988 = vsel %vm361, %v3847, 0
        %v3991 = vsel %vm361, %v3848, 0
        %v3994 = vsel %vm361, %v3849, 0
        %v3997 = vsel %vm361, %v3850, 0
        %v4000 = vsel %vm361, %v3851, 0
        %v4003 = vsel %vm361, %v3852, 0
        %v4006 = vsel %vm361, %v3853, 0
        %v4009 = vsel %vm361, %v3854, 0
        %v4012 = vsel %vm361, %v3855, 0
        %v4015 = vsel %vm361, %v3856, 0
        %v4018 = vsel %vm361, %v3857, 0
        %v4021 = vsel %vm361, %v3858, 0
        %v4024 = vsel %vm524, %v3860, 0
        %4026 = vmatprep.subr.mxu0 0.0
        %4027 = vmatpush1.msra.mxu0 %v4024
        %4028 = vmatprep.subr.mxu0 0.0
        %4029 = vmatpush1.msra.mxu0 0.0
        %4030 = vmatprep.subr.mxu0 0.0
        %4031 = vmatpush1.msra.mxu0 0.0
        %4032 = vmatprep.subr.mxu0 0.0
        %4033 = vmatpush1.msra.mxu0 0.0
        %4034 = vmatprep.subr.mxu0 0.0
        %4035 = vmatpush1.msra.mxu0 0.0
        %4036 = vmatprep.subr.mxu0 0.0
        %4037 = vmatpush1.msra.mxu0 0.0
        %4038 = vmatprep.subr.mxu0 0.0
        %4039 = vmatpush1.msra.mxu0 0.0
        %4040 = vmatprep.subr.mxu0 0.0
        %4041 = vmatpush1.msra.mxu0 0.0
        %4042 = vmatprep.subr.mxu0 0.0
        %4043 = vmatpush1.msra.mxu0 0.0
        %4044 = vmatprep.subr.mxu0 0.0
        %4045 = vmatpush1.msra.mxu0 0.0
        %4046 = vmatprep.subr.mxu0 0.0
        %4047 = vmatpush1.msra.mxu0 0.0
        %4048 = vmatprep.subr.mxu0 0.0
        %4049 = vmatpush1.msra.mxu0 0.0
        %4050 = vmatprep.subr.mxu0 0.0
        %4051 = vmatpush1.msra.mxu0 0.0
        %4052 = vmatprep.subr.mxu0 0.0
        %4053 = vmatpush1.msra.mxu0 0.0
        %4054 = vmatprep.subr.mxu0 0.0
        %4055 = vmatpush1.msra.mxu0 0.0
        %4056 = vmatprep.subr.mxu0 0.0
        %4057 = vmatpush1.msra.mxu0 0.0
        %4058 = vmatprep.subr.mxu0 0.0
        %4059 = vmatpush1.msra.mxu0 0.0
        %4060 = vmatprep.subr.mxu0 0.0
        %4061 = vmatpush1.msra.mxu0 0.0
        %4062 = vmatprep.subr.mxu0 0.0
        %4063 = vmatpush1.msra.mxu0 0.0
        %4064 = vmatprep.subr.mxu0 0.0
        %4065 = vmatpush1.msra.mxu0 0.0
        %4066 = vmatprep.subr.mxu0 0.0
        %4067 = vmatpush1.msra.mxu0 0.0
        %4068 = vmatprep.subr.mxu0 0.0
        %4069 = vmatpush1.msra.mxu0 0.0
        %4070 = vmatprep.subr.mxu0 0.0
        %4071 = vmatpush1.msra.mxu0 0.0
        %4072 = vmatprep.subr.mxu0 0.0
        %4073 = vmatpush1.msra.mxu0 0.0
        %4074 = vmatprep.subr.mxu0 0.0
        %4075 = vmatpush1.msra.mxu0 0.0
        %4076 = vmatprep.subr.mxu0 0.0
        %4077 = vmatpush1.msra.mxu0 0.0
        %4078 = vmatprep.subr.mxu0 0.0
        %4079 = vmatpush1.msra.mxu0 0.0
        %4080 = vmatprep.subr.mxu0 0.0
        %4081 = vmatpush1.msra.mxu0 0.0
        %4082 = vmatprep.subr.mxu0 0.0
        %4083 = vmatpush1.msra.mxu0 0.0
        %4084 = vmatprep.subr.mxu0 0.0
        %4085 = vmatpush1.msra.mxu0 0.0
        %4086 = vmatprep.subr.mxu0 0.0
        %4087 = vmatpush1.msra.mxu0 0.0
        %4088 = vmatprep.subr.mxu0 0.0
        %4089 = vmatpush1.msra.mxu0 0.0
        %4090 = vmatprep.mubr.f32.mxu0 0.0
        %4091 = vmatmul.mubr.f32.gmra.mrb[0].mxu0 %v3862
        %v4092 = vpop.f32.mrb[0].mxu0
        %v4093 = vadd.f32 0.0, %v4092
        %v4094 = vpop.f32.mrb[0].mxu0
        %4095 = vmatprep.mubr.f32.mxu0 0.0
        %4096 = vmatmul.mubr.f32.gmra.mrb[0].mxu0 %v3865
        %v4097 = vpop.f32.mrb[0].mxu0
        %v4098 = vadd.f32 0.0, %v4097
        %v4099 = vpop.f32.mrb[0].mxu0
        %4100 = vmatprep.mubr.f32.mxu0 0.0
        %4101 = vmatmul.mubr.f32.gmra.mrb[0].mxu0 %v3868
        %v4102 = vpop.f32.mrb[0].mxu0
        %v4103 = vadd.f32 0.0, %v4102
        %v4104 = vpop.f32.mrb[0].mxu0
        %4105 = vmatprep.mubr.f32.mxu0 0.0
        %4106 = vmatmul.mubr.f32.gmra.mrb[0].mxu0 %v3871
        %v4107 = vpop.f32.mrb[0].mxu0
        %v4108 = vadd.f32 0.0, %v4107
        %v4109 = vpop.f32.mrb[0].mxu0
        %4110 = vmatprep.mubr.f32.mxu0 0.0
        %4111 = vmatmul.mubr.f32.gmra.mrb[0].mxu0 %v3874
        %v4112 = vpop.f32.mrb[0].mxu0
        %v4113 = vadd.f32 0.0, %v4112
        %v4114 = vpop.f32.mrb[0].mxu0
        %4115 = vmatprep.mubr.f32.mxu0 0.0
        %4116 = vmatmul.mubr.f32.gmra.mrb[0].mxu0 %v3877
        %v4117 = vpop.f32.mrb[0].mxu0
        %v4118 = vadd.f32 0.0, %v4117
        %v4119 = vpop.f32.mrb[0].mxu0
        %4120 = vmatprep.mubr.f32.mxu0 0.0
        %4121 = vmatmul.mubr.f32.gmra.mrb[0].mxu0 %v3880
        %v4122 = vpop.f32.mrb[0].mxu0
        %v4123 = vadd.f32 0.0, %v4122
        %v4124 = vpop.f32.mrb[0].mxu0
        %4125 = vmatprep.mubr.f32.mxu0 0.0
        %4126 = vmatmul.mubr.f32.gmra.mrb[0].mxu0 %v3883
        %v4127 = vpop.f32.mrb[0].mxu0
        %v4128 = vadd.f32 0.0, %v4127
        %v4129 = vpop.f32.mrb[0].mxu0
        %4130 = vmatprep.mubr.f32.mxu0 0.0
        %4131 = vmatmul.mubr.f32.gmra.mrb[0].mxu0 %v3886
        %v4132 = vpop.f32.mrb[0].mxu0
        %v4133 = vadd.f32 0.0, %v4132
        %v4134 = vpop.f32.mrb[0].mxu0
        %4135 = vmatprep.mubr.f32.mxu0 0.0
        %4136 = vmatmul.mubr.f32.gmra.mrb[0].mxu0 %v3889
        %v4137 = vpop.f32.mrb[0].mxu0
        %v4138 = vadd.f32 0.0, %v4137
        %v4139 = vpop.f32.mrb[0].mxu0
        %4140 = vmatprep.mubr.f32.mxu0 0.0
        %4141 = vmatmul.mubr.f32.gmra.mrb[0].mxu0 %v3892
        %v4142 = vpop.f32.mrb[0].mxu0
        %v4143 = vadd.f32 0.0, %v4142
        %v4144 = vpop.f32.mrb[0].mxu0
        %4145 = vmatprep.mubr.f32.mxu0 0.0
        %4146 = vmatmul.mubr.f32.gmra.mrb[0].mxu0 %v3895
        %v4147 = vpop.f32.mrb[0].mxu0
        %v4148 = vadd.f32 0.0, %v4147
        %v4149 = vpop.f32.mrb[0].mxu0
        %4150 = vmatprep.mubr.f32.mxu0 0.0
        %4151 = vmatmul.mubr.f32.gmra.mrb[0].mxu0 %v3898
        %v4152 = vpop.f32.mrb[0].mxu0
        %v4153 = vadd.f32 0.0, %v4152
        %v4154 = vpop.f32.mrb[0].mxu0
        %4155 = vmatprep.mubr.f32.mxu0 0.0
        %4156 = vmatmul.mubr.f32.gmra.mrb[0].mxu0 %v3901
        %v4157 = vpop.f32.mrb[0].mxu0
        %v4158 = vadd.f32 0.0, %v4157
        %v4159 = vpop.f32.mrb[0].mxu0
        %4160 = vmatprep.mubr.f32.mxu0 0.0
        %4161 = vmatmul.mubr.f32.gmra.mrb[0].mxu0 %v3904
        %v4162 = vpop.f32.mrb[0].mxu0
        %v4163 = vadd.f32 0.0, %v4162
        %v4164 = vpop.f32.mrb[0].mxu0
        %4165 = vmatprep.mubr.f32.mxu0 0.0
        %4166 = vmatmul.mubr.f32.gmra.mrb[0].mxu0 %v3907
        %v4167 = vpop.f32.mrb[0].mxu0
        %v4168 = vadd.f32 0.0, %v4167
        %v4169 = vpop.f32.mrb[0].mxu0
        %4170 = vmatprep.mubr.f32.mxu0 0.0
        %4171 = vmatmul.mubr.f32.gmra.mrb[0].mxu0 %v3910
        %v4172 = vpop.f32.mrb[0].mxu0
        %v4173 = vadd.f32 0.0, %v4172
        %v4174 = vpop.f32.mrb[0].mxu0
        %4175 = vmatprep.mubr.f32.mxu0 0.0
        %4176 = vmatmul.mubr.f32.gmra.mrb[0].mxu0 %v3913
        %v4177 = vpop.f32.mrb[0].mxu0
        %v4178 = vadd.f32 0.0, %v4177
        %v4179 = vpop.f32.mrb[0].mxu0
        %4180 = vmatprep.mubr.f32.mxu0 0.0
        %4181 = vmatmul.mubr.f32.gmra.mrb[0].mxu0 %v3916
        %v4182 = vpop.f32.mrb[0].mxu0
        %v4183 = vadd.f32 0.0, %v4182
        %v4184 = vpop.f32.mrb[0].mxu0
        %4185 = vmatprep.mubr.f32.mxu0 0.0
        %4186 = vmatmul.mubr.f32.gmra.mrb[0].mxu0 %v3919
        %v4187 = vpop.f32.mrb[0].mxu0
        %v4188 = vadd.f32 0.0, %v4187
        %v4189 = vpop.f32.mrb[0].mxu0
        %4190 = vmatprep.mubr.f32.mxu0 0.0
        %4191 = vmatmul.mubr.f32.gmra.mrb[0].mxu0 %v3922
        %v4192 = vpop.f32.mrb[0].mxu0
        %v4193 = vadd.f32 0.0, %v4192
        %v4194 = vpop.f32.mrb[0].mxu0
        %4195 = vmatprep.mubr.f32.mxu0 0.0
        %4196 = vmatmul.mubr.f32.gmra.mrb[0].mxu0 %v3925
        %v4197 = vpop.f32.mrb[0].mxu0
        %v4198 = vadd.f32 0.0, %v4197
        %v4199 = vpop.f32.mrb[0].mxu0
        %4200 = vmatprep.mubr.f32.mxu0 0.0
        %4201 = vmatmul.mubr.f32.gmra.mrb[0].mxu0 %v3928
        %v4202 = vpop.f32.mrb[0].mxu0
        %v4203 = vadd.f32 0.0, %v4202
        %v4204 = vpop.f32.mrb[0].mxu0
        %4205 = vmatprep.mubr.f32.mxu0 0.0
        %4206 = vmatmul.mubr.f32.gmra.mrb[0].mxu0 %v3931
        %v4207 = vpop.f32.mrb[0].mxu0
        %v4208 = vadd.f32 0.0, %v4207
        %v4209 = vpop.f32.mrb[0].mxu0
        %4210 = vmatprep.mubr.f32.mxu0 0.0
        %4211 = vmatmul.mubr.f32.gmra.mrb[0].mxu0 %v3934
        %v4212 = vpop.f32.mrb[0].mxu0
        %v4213 = vadd.f32 0.0, %v4212
        %v4214 = vpop.f32.mrb[0].mxu0
        %4215 = vmatprep.mubr.f32.mxu0 0.0
        %4216 = vmatmul.mubr.f32.gmra.mrb[0].mxu0 %v3937
        %v4217 = vpop.f32.mrb[0].mxu0
        %v4218 = vadd.f32 0.0, %v4217
        %v4219 = vpop.f32.mrb[0].mxu0
        %4220 = vmatprep.mubr.f32.mxu0 0.0
        %4221 = vmatmul.mubr.f32.gmra.mrb[0].mxu0 %v3940
        %v4222 = vpop.f32.mrb[0].mxu0
        %v4223 = vadd.f32 0.0, %v4222
        %v4224 = vpop.f32.mrb[0].mxu0
        %4225 = vmatprep.mubr.f32.mxu0 0.0
        %4226 = vmatmul.mubr.f32.gmra.mrb[0].mxu0 %v3943
        %v4227 = vpop.f32.mrb[0].mxu0
        %v4228 = vadd.f32 0.0, %v4227
        %v4229 = vpop.f32.mrb[0].mxu0
        %4230 = vmatprep.mubr.f32.mxu0 0.0
        %4231 = vmatmul.mubr.f32.gmra.mrb[0].mxu0 %v3946
        %v4232 = vpop.f32.mrb[0].mxu0
        %v4233 = vadd.f32 0.0, %v4232
        %v4234 = vpop.f32.mrb[0].mxu0
        %4235 = vmatprep.mubr.f32.mxu0 0.0
        %4236 = vmatmul.mubr.f32.gmra.mrb[0].mxu0 %v3949
        %v4237 = vpop.f32.mrb[0].mxu0
        %v4238 = vadd.f32 0.0, %v4237
        %v4239 = vpop.f32.mrb[0].mxu0
        %4240 = vmatprep.mubr.f32.mxu0 0.0
        %4241 = vmatmul.mubr.f32.gmra.mrb[0].mxu0 %v3952
        %v4242 = vpop.f32.mrb[0].mxu0
        %v4243 = vadd.f32 0.0, %v4242
        %v4244 = vpop.f32.mrb[0].mxu0
        %4245 = vmatprep.mubr.f32.mxu0 0.0
        %4246 = vmatmul.mubr.f32.gmra.mrb[0].mxu0 %v3955
        %v4247 = vpop.f32.mrb[0].mxu0
        %v4248 = vadd.f32 0.0, %v4247
        %v4249 = vpop.f32.mrb[0].mxu0
        %4250 = vmatprep.mubr.f32.mxu0 0.0
        %4251 = vmatmul.mubr.f32.gmra.mrb[0].mxu0 %v3958
        %v4252 = vpop.f32.mrb[0].mxu0
        %v4253 = vadd.f32 0.0, %v4252
        %v4254 = vpop.f32.mrb[0].mxu0
        %4255 = vmatprep.mubr.f32.mxu0 0.0
        %4256 = vmatmul.mubr.f32.gmra.mrb[0].mxu0 %v3961
        %v4257 = vpop.f32.mrb[0].mxu0
        %v4258 = vadd.f32 0.0, %v4257
        %v4259 = vpop.f32.mrb[0].mxu0
        %4260 = vmatprep.mubr.f32.mxu0 0.0
        %4261 = vmatmul.mubr.f32.gmra.mrb[0].mxu0 %v3964
        %v4262 = vpop.f32.mrb[0].mxu0
        %v4263 = vadd.f32 0.0, %v4262
        %v4264 = vpop.f32.mrb[0].mxu0
        %4265 = vmatprep.mubr.f32.mxu0 0.0
        %4266 = vmatmul.mubr.f32.gmra.mrb[0].mxu0 %v3967
        %v4267 = vpop.f32.mrb[0].mxu0
        %v4268 = vadd.f32 0.0, %v4267
        %v4269 = vpop.f32.mrb[0].mxu0
        %4270 = vmatprep.mubr.f32.mxu0 0.0
        %4271 = vmatmul.mubr.f32.gmra.mrb[0].mxu0 %v3970
        %v4272 = vpop.f32.mrb[0].mxu0
        %v4273 = vadd.f32 0.0, %v4272
        %v4274 = vpop.f32.mrb[0].mxu0
        %4275 = vmatprep.mubr.f32.mxu0 0.0
        %4276 = vmatmul.mubr.f32.gmra.mrb[0].mxu0 %v3973
        %v4277 = vpop.f32.mrb[0].mxu0
        %v4278 = vadd.f32 0.0, %v4277
        %v4279 = vpop.f32.mrb[0].mxu0
        %4280 = vmatprep.mubr.f32.mxu0 0.0
        %4281 = vmatmul.mubr.f32.gmra.mrb[0].mxu0 %v3976
        %v4282 = vpop.f32.mrb[0].mxu0
        %v4283 = vadd.f32 0.0, %v4282
        %v4284 = vpop.f32.mrb[0].mxu0
        %4285 = vmatprep.mubr.f32.mxu0 0.0
        %4286 = vmatmul.mubr.f32.gmra.mrb[0].mxu0 %v3979
        %v4287 = vpop.f32.mrb[0].mxu0
        %v4288 = vadd.f32 0.0, %v4287
        %v4289 = vpop.f32.mrb[0].mxu0
        %4290 = vmatprep.mubr.f32.mxu0 0.0
        %4291 = vmatmul.mubr.f32.gmra.mrb[0].mxu0 %v3982
        %v4292 = vpop.f32.mrb[0].mxu0
        %v4293 = vadd.f32 0.0, %v4292
        %v4294 = vpop.f32.mrb[0].mxu0
        %4295 = vmatprep.mubr.f32.mxu0 0.0
        %4296 = vmatmul.mubr.f32.gmra.mrb[0].mxu0 %v3985
        %v4297 = vpop.f32.mrb[0].mxu0
        %v4298 = vadd.f32 0.0, %v4297
        %v4299 = vpop.f32.mrb[0].mxu0
        %4300 = vmatprep.mubr.f32.mxu0 0.0
        %4301 = vmatmul.mubr.f32.gmra.mrb[0].mxu0 %v3988
        %v4302 = vpop.f32.mrb[0].mxu0
        %v4303 = vadd.f32 0.0, %v4302
        %v4304 = vpop.f32.mrb[0].mxu0
        %4305 = vmatprep.mubr.f32.mxu0 0.0
        %4306 = vmatmul.mubr.f32.gmra.mrb[0].mxu0 %v3991
        %v4307 = vpop.f32.mrb[0].mxu0
        %v4308 = vadd.f32 0.0, %v4307
        %v4309 = vpop.f32.mrb[0].mxu0
        %4310 = vmatprep.mubr.f32.mxu0 0.0
        %4311 = vmatmul.mubr.f32.gmra.mrb[0].mxu0 %v3994
        %v4312 = vpop.f32.mrb[0].mxu0
        %v4313 = vadd.f32 0.0, %v4312
        %v4314 = vpop.f32.mrb[0].mxu0
        %4315 = vmatprep.mubr.f32.mxu0 0.0
        %4316 = vmatmul.mubr.f32.gmra.mrb[0].mxu0 %v3997
        %v4317 = vpop.f32.mrb[0].mxu0
        %v4318 = vadd.f32 0.0, %v4317
        %v4319 = vpop.f32.mrb[0].mxu0
        %4320 = vmatprep.mubr.f32.mxu0 0.0
        %4321 = vmatmul.mubr.f32.gmra.mrb[0].mxu0 %v4000
        %v4322 = vpop.f32.mrb[0].mxu0
        %v4323 = vadd.f32 0.0, %v4322
        %v4324 = vpop.f32.mrb[0].mxu0
        %4325 = vmatprep.mubr.f32.mxu0 0.0
        %4326 = vmatmul.mubr.f32.gmra.mrb[0].mxu0 %v4003
        %v4327 = vpop.f32.mrb[0].mxu0
        %v4328 = vadd.f32 0.0, %v4327
        %v4329 = vpop.f32.mrb[0].mxu0
        %4330 = vmatprep.mubr.f32.mxu0 0.0
        %4331 = vmatmul.mubr.f32.gmra.mrb[0].mxu0 %v4006
        %v4332 = vpop.f32.mrb[0].mxu0
        %v4333 = vadd.f32 0.0, %v4332
        %v4334 = vpop.f32.mrb[0].mxu0
        %4335 = vmatprep.mubr.f32.mxu0 0.0
        %4336 = vmatmul.mubr.f32.gmra.mrb[0].mxu0 %v4009
        %v4337 = vpop.f32.mrb[0].mxu0
        %v4338 = vadd.f32 0.0, %v4337
        %v4339 = vpop.f32.mrb[0].mxu0
        %4340 = vmatprep.mubr.f32.mxu0 0.0
        %4341 = vmatmul.mubr.f32.gmra.mrb[0].mxu0 %v4012
        %v4342 = vpop.f32.mrb[0].mxu0
        %v4343 = vadd.f32 0.0, %v4342
        %v4344 = vpop.f32.mrb[0].mxu0
        %4345 = vmatprep.mubr.f32.mxu0 0.0
        %4346 = vmatmul.mubr.f32.gmra.mrb[0].mxu0 %v4015
        %v4347 = vpop.f32.mrb[0].mxu0
        %v4348 = vadd.f32 0.0, %v4347
        %v4349 = vpop.f32.mrb[0].mxu0
        %4350 = vmatprep.mubr.f32.mxu0 0.0
        %4351 = vmatmul.mubr.f32.gmra.mrb[0].mxu0 %v4018
        %v4352 = vpop.f32.mrb[0].mxu0
        %v4353 = vadd.f32 0.0, %v4352
        %v4354 = vpop.f32.mrb[0].mxu0
        %4355 = vmatprep.mubr.f32.mxu0 0.0
        %4356 = vmatmul.mubr.f32.gmra.mrb[0].mxu0 %v4021
        %v4357 = vpop.f32.mrb[0].mxu0
        %v4358 = vadd.f32 0.0, %v4357
        %v4359 = vpop.f32.mrb[0].mxu0
        %4360 = vdwg.mxu0
        %v4361 = vadd.f32 %v3750, %v4093
        %v4362 = vadd.f32 %v3751, %v4098
        %v4363 = vadd.f32 %v3752, %v4103
        %v4364 = vadd.f32 %v3753, %v4108
        %v4365 = vadd.f32 %v3754, %v4113
        %v4366 = vadd.f32 %v3755, %v4118
        %v4367 = vadd.f32 %v3756, %v4123
        %v4368 = vadd.f32 %v3757, %v4128
        %v4369 = vadd.f32 %v3758, %v4133
        %v4370 = vadd.f32 %v3759, %v4138
        %v4371 = vadd.f32 %v3760, %v4143
        %v4372 = vadd.f32 %v3761, %v4148
        %v4373 = vadd.f32 %v3762, %v4153
        %v4374 = vadd.f32 %v3763, %v4158
        %v4375 = vadd.f32 %v3764, %v4163
        %v4376 = vadd.f32 %v3765, %v4168
        %v4377 = vadd.f32 %v3766, %v4173
        %v4378 = vadd.f32 %v3767, %v4178
        %v4379 = vadd.f32 %v3768, %v4183
        %v4380 = vadd.f32 %v3769, %v4188
        %v4381 = vadd.f32 %v3770, %v4193
        %v4382 = vadd.f32 %v3771, %v4198
        %v4383 = vadd.f32 %v3772, %v4203
        %v4384 = vadd.f32 %v3773, %v4208
        %v4385 = vadd.f32 %v3774, %v4213
        %v4386 = vadd.f32 %v3775, %v4218
        %v4387 = vadd.f32 %v3776, %v4223
        %v4388 = vadd.f32 %v3777, %v4228
        %v4389 = vadd.f32 %v3778, %v4233
        %v4390 = vadd.f32 %v3779, %v4238
        %v4391 = vadd.f32 %v3780, %v4243
        %v4392 = vadd.f32 %v3781, %v4248
        %v4393 = vadd.f32 %v3782, %v4253
        %v4394 = vadd.f32 %v3783, %v4258
        %v4395 = vadd.f32 %v3784, %v4263
        %v4396 = vadd.f32 %v3785, %v4268
        %v4397 = vadd.f32 %v3786, %v4273
        %v4398 = vadd.f32 %v3787, %v4278
        %v4399 = vadd.f32 %v3788, %v4283
        %v4400 = vadd.f32 %v3789, %v4288
        %v4401 = vadd.f32 %v3790, %v4293
        %v4402 = vadd.f32 %v3791, %v4298
        %v4403 = vadd.f32 %v3792, %v4303
        %v4404 = vadd.f32 %v3793, %v4308
        %v4405 = vadd.f32 %v3794, %v4313
        %v4406 = vadd.f32 %v3795, %v4318
        %v4407 = vadd.f32 %v3796, %v4323
        %v4408 = vadd.f32 %v3797, %v4328
        %v4409 = vadd.f32 %v3798, %v4333
        %v4410 = vadd.f32 %v3799, %v4338
        %v4411 = vadd.f32 %v3800, %v4343
        %v4412 = vadd.f32 %v3801, %v4348
        %v4413 = vadd.f32 %v3802, %v4353
        %v4414 = vadd.f32 %v3803, %v4358
        %v4415 = vld [vmem:[%s3804 + $0x1] sm:$0xff]
        %v4416 = vld [vmem:[%s3804 + $0x9] sm:$0xff]
        %v4417 = vld [vmem:[%s3804 + $0x11] sm:$0xff]
        %v4418 = vld [vmem:[%s3804 + $0x21] sm:$0xff]
        %v4419 = vld [vmem:[%s3804 + $0x29] sm:$0xff]
        %v4420 = vld [vmem:[%s3804 + $0x31] sm:$0xff]
        %v4421 = vld [vmem:[%s3804 + $0x41] sm:$0xff]
        %v4422 = vld [vmem:[%s3804 + $0x49] sm:$0xff]
        %v4423 = vld [vmem:[%s3804 + $0x51] sm:$0xff]
        %v4424 = vld [vmem:[%s3804 + $0x61] sm:$0xff]
        %v4425 = vld [vmem:[%s3804 + $0x69] sm:$0xff]
        %v4426 = vld [vmem:[%s3804 + $0x71] sm:$0xff]
        %v4427 = vld [vmem:[%s3804 + $0x81] sm:$0xff]
        %v4428 = vld [vmem:[%s3804 + $0x89] sm:$0xff]
        %v4429 = vld [vmem:[%s3804 + $0x91] sm:$0xff]
        %v4430 = vld [vmem:[%s3804 + $0xa1] sm:$0xff]
        %v4431 = vld [vmem:[%s3804 + $0xa9] sm:$0xff]
        %v4432 = vld [vmem:[%s3804 + $0xb1] sm:$0xff]
        %v4433 = vld [vmem:[%s3804 + $0xc1] sm:$0xff]
        %v4434 = vld [vmem:[%s3804 + $0xc9] sm:$0xff]
        %v4435 = vld [vmem:[%s3804 + $0xd1] sm:$0xff]
        %v4436 = vld [vmem:[%s3804 + $0xe1] sm:$0xff]
        %v4437 = vld [vmem:[%s3804 + $0xe9] sm:$0xff]
        %v4438 = vld [vmem:[%s3804 + $0xf1] sm:$0xff]
        %v4439 = vld [vmem:[%s3804 + $0x101] sm:$0xff]
        %v4440 = vld [vmem:[%s3804 + $0x109] sm:$0xff]
        %v4441 = vld [vmem:[%s3804 + $0x111] sm:$0xff]
        %v4442 = vld [vmem:[%s3804 + $0x121] sm:$0xff]
        %v4443 = vld [vmem:[%s3804 + $0x129] sm:$0xff]
        %v4444 = vld [vmem:[%s3804 + $0x131] sm:$0xff]
        %v4445 = vld [vmem:[%s3804 + $0x141] sm:$0xff]
        %v4446 = vld [vmem:[%s3804 + $0x149] sm:$0xff]
        %v4447 = vld [vmem:[%s3804 + $0x151] sm:$0xff]
        %v4448 = vld [vmem:[%s3804 + $0x161] sm:$0xff]
        %v4449 = vld [vmem:[%s3804 + $0x169] sm:$0xff]
        %v4450 = vld [vmem:[%s3804 + $0x171] sm:$0xff]
        %v4451 = vld [vmem:[%s3804 + $0x181] sm:$0xff]
        %v4452 = vld [vmem:[%s3804 + $0x189] sm:$0xff]
        %v4453 = vld [vmem:[%s3804 + $0x191] sm:$0xff]
        %v4454 = vld [vmem:[%s3804 + $0x1a1] sm:$0xff]
        %v4455 = vld [vmem:[%s3804 + $0x1a9] sm:$0xff]
        %v4456 = vld [vmem:[%s3804 + $0x1b1] sm:$0xff]
        %v4457 = vld [vmem:[%s3804 + $0x1c1] sm:$0xff]
        %v4458 = vld [vmem:[%s3804 + $0x1c9] sm:$0xff]
        %v4459 = vld [vmem:[%s3804 + $0x1d1] sm:$0xff]
        %v4460 = vld [vmem:[%s3804 + $0x1e1] sm:$0xff]
        %v4461 = vld [vmem:[%s3804 + $0x1e9] sm:$0xff]
        %v4462 = vld [vmem:[%s3804 + $0x1f1] sm:$0xff]
        %v4463 = vld [vmem:[%s3804 + $0x201] sm:$0xff]
        %v4464 = vld [vmem:[%s3804 + $0x209] sm:$0xff]
        %v4465 = vld [vmem:[%s3804 + $0x211] sm:$0xff]
        %v4466 = vld [vmem:[%s3804 + $0x221] sm:$0xff]
        %v4467 = vld [vmem:[%s3804 + $0x229] sm:$0xff]
        %v4468 = vld [vmem:[%s3804 + $0x231] sm:$0xff]
        %s4469 = scalar_lea.vmem %s1, 28
        %v4470 = vld [vmem:[%s4469] sm:$0xf]
        %v4472 = vsel %vm361, %v4415, 0
        %v4475 = vsel %vm361, %v4416, 0
        %v4478 = vsel %vm361, %v4417, 0
        %v4481 = vsel %vm361, %v4418, 0
        %v4484 = vsel %vm361, %v4419, 0
        %v4487 = vsel %vm361, %v4420, 0
        %v4490 = vsel %vm361, %v4421, 0
        %v4493 = vsel %vm361, %v4422, 0
        %v4496 = vsel %vm361, %v4423, 0
        %v4499 = vsel %vm361, %v4424, 0
        %v4502 = vsel %vm361, %v4425, 0
        %v4505 = vsel %vm361, %v4426, 0
        %v4508 = vsel %vm361, %v4427, 0
        %v4511 = vsel %vm361, %v4428, 0
        %v4514 = vsel %vm361, %v4429, 0
        %v4517 = vsel %vm361, %v4430, 0
        %v4520 = vsel %vm361, %v4431, 0
        %v4523 = vsel %vm361, %v4432, 0
        %v4526 = vsel %vm361, %v4433, 0
        %v4529 = vsel %vm361, %v4434, 0
        %v4532 = vsel %vm361, %v4435, 0
        %v4535 = vsel %vm361, %v4436, 0
        %v4538 = vsel %vm361, %v4437, 0
        %v4541 = vsel %vm361, %v4438, 0
        %v4544 = vsel %vm361, %v4439, 0
        %v4547 = vsel %vm361, %v4440, 0
        %v4550 = vsel %vm361, %v4441, 0
        %v4553 = vsel %vm361, %v4442, 0
        %v4556 = vsel %vm361, %v4443, 0
        %v4559 = vsel %vm361, %v4444, 0
        %v4562 = vsel %vm361, %v4445, 0
        %v4565 = vsel %vm361, %v4446, 0
        %v4568 = vsel %vm361, %v4447, 0
        %v4571 = vsel %vm361, %v4448, 0
        %v4574 = vsel %vm361, %v4449, 0
        %v4577 = vsel %vm361, %v4450, 0
        %v4580 = vsel %vm361, %v4451, 0
        %v4583 = vsel %vm361, %v4452, 0
        %v4586 = vsel %vm361, %v4453, 0
        %v4589 = vsel %vm361, %v4454, 0
        %v4592 = vsel %vm361, %v4455, 0
        %v4595 = vsel %vm361, %v4456, 0
        %v4598 = vsel %vm361, %v4457, 0
        %v4601 = vsel %vm361, %v4458, 0
        %v4604 = vsel %vm361, %v4459, 0
        %v4607 = vsel %vm361, %v4460, 0
        %v4610 = vsel %vm361, %v4461, 0
        %v4613 = vsel %vm361, %v4462, 0
        %v4616 = vsel %vm361, %v4463, 0
        %v4619 = vsel %vm361, %v4464, 0
        %v4622 = vsel %vm361, %v4465, 0
        %v4625 = vsel %vm361, %v4466, 0
        %v4628 = vsel %vm361, %v4467, 0
        %v4631 = vsel %vm361, %v4468, 0
        %v4634 = vsel %vm524, %v4470, 0
        %4636 = vmatprep.subr.mxu0 0.0
        %4637 = vmatpush1.msra.mxu0 %v4634
        %4638 = vmatprep.subr.mxu0 0.0
        %4639 = vmatpush1.msra.mxu0 0.0
        %4640 = vmatprep.subr.mxu0 0.0
        %4641 = vmatpush1.msra.mxu0 0.0
        %4642 = vmatprep.subr.mxu0 0.0
        %4643 = vmatpush1.msra.mxu0 0.0
        %4644 = vmatprep.subr.mxu0 0.0
        %4645 = vmatpush1.msra.mxu0 0.0
        %4646 = vmatprep.subr.mxu0 0.0
        %4647 = vmatpush1.msra.mxu0 0.0
        %4648 = vmatprep.subr.mxu0 0.0
        %4649 = vmatpush1.msra.mxu0 0.0
        %4650 = vmatprep.subr.mxu0 0.0
        %4651 = vmatpush1.msra.mxu0 0.0
        %4652 = vmatprep.subr.mxu0 0.0
        %4653 = vmatpush1.msra.mxu0 0.0
        %4654 = vmatprep.subr.mxu0 0.0
        %4655 = vmatpush1.msra.mxu0 0.0
        %4656 = vmatprep.subr.mxu0 0.0
        %4657 = vmatpush1.msra.mxu0 0.0
        %4658 = vmatprep.subr.mxu0 0.0
        %4659 = vmatpush1.msra.mxu0 0.0
        %4660 = vmatprep.subr.mxu0 0.0
        %4661 = vmatpush1.msra.mxu0 0.0
        %4662 = vmatprep.subr.mxu0 0.0
        %4663 = vmatpush1.msra.mxu0 0.0
        %4664 = vmatprep.subr.mxu0 0.0
        %4665 = vmatpush1.msra.mxu0 0.0
        %4666 = vmatprep.subr.mxu0 0.0
        %4667 = vmatpush1.msra.mxu0 0.0
        %4668 = vmatprep.subr.mxu0 0.0
        %4669 = vmatpush1.msra.mxu0 0.0
        %4670 = vmatprep.subr.mxu0 0.0
        %4671 = vmatpush1.msra.mxu0 0.0
        %4672 = vmatprep.subr.mxu0 0.0
        %4673 = vmatpush1.msra.mxu0 0.0
        %4674 = vmatprep.subr.mxu0 0.0
        %4675 = vmatpush1.msra.mxu0 0.0
        %4676 = vmatprep.subr.mxu0 0.0
        %4677 = vmatpush1.msra.mxu0 0.0
        %4678 = vmatprep.subr.mxu0 0.0
        %4679 = vmatpush1.msra.mxu0 0.0
        %4680 = vmatprep.subr.mxu0 0.0
        %4681 = vmatpush1.msra.mxu0 0.0
        %4682 = vmatprep.subr.mxu0 0.0
        %4683 = vmatpush1.msra.mxu0 0.0
        %4684 = vmatprep.subr.mxu0 0.0
        %4685 = vmatpush1.msra.mxu0 0.0
        %4686 = vmatprep.subr.mxu0 0.0
        %4687 = vmatpush1.msra.mxu0 0.0
        %4688 = vmatprep.subr.mxu0 0.0
        %4689 = vmatpush1.msra.mxu0 0.0
        %4690 = vmatprep.subr.mxu0 0.0
        %4691 = vmatpush1.msra.mxu0 0.0
        %4692 = vmatprep.subr.mxu0 0.0
        %4693 = vmatpush1.msra.mxu0 0.0
        %4694 = vmatprep.subr.mxu0 0.0
        %4695 = vmatpush1.msra.mxu0 0.0
        %4696 = vmatprep.subr.mxu0 0.0
        %4697 = vmatpush1.msra.mxu0 0.0
        %4698 = vmatprep.subr.mxu0 0.0
        %4699 = vmatpush1.msra.mxu0 0.0
        %4700 = vmatprep.mubr.f32.mxu0 0.0
        %4701 = vmatmul.mubr.f32.gmra.mrb[0].mxu0 %v4472
        %v4702 = vpop.f32.mrb[0].mxu0
        %v4703 = vadd.f32 0.0, %v4702
        %v4704 = vpop.f32.mrb[0].mxu0
        %4705 = vmatprep.mubr.f32.mxu0 0.0
        %4706 = vmatmul.mubr.f32.gmra.mrb[0].mxu0 %v4475
        %v4707 = vpop.f32.mrb[0].mxu0
        %v4708 = vadd.f32 0.0, %v4707
        %v4709 = vpop.f32.mrb[0].mxu0
        %4710 = vmatprep.mubr.f32.mxu0 0.0
        %4711 = vmatmul.mubr.f32.gmra.mrb[0].mxu0 %v4478
        %v4712 = vpop.f32.mrb[0].mxu0
        %v4713 = vadd.f32 0.0, %v4712
        %v4714 = vpop.f32.mrb[0].mxu0
        %4715 = vmatprep.mubr.f32.mxu0 0.0
        %4716 = vmatmul.mubr.f32.gmra.mrb[0].mxu0 %v4481
        %v4717 = vpop.f32.mrb[0].mxu0
        %v4718 = vadd.f32 0.0, %v4717
        %v4719 = vpop.f32.mrb[0].mxu0
        %4720 = vmatprep.mubr.f32.mxu0 0.0
        %4721 = vmatmul.mubr.f32.gmra.mrb[0].mxu0 %v4484
        %v4722 = vpop.f32.mrb[0].mxu0
        %v4723 = vadd.f32 0.0, %v4722
        %v4724 = vpop.f32.mrb[0].mxu0
        %4725 = vmatprep.mubr.f32.mxu0 0.0
        %4726 = vmatmul.mubr.f32.gmra.mrb[0].mxu0 %v4487
        %v4727 = vpop.f32.mrb[0].mxu0
        %v4728 = vadd.f32 0.0, %v4727
        %v4729 = vpop.f32.mrb[0].mxu0
        %4730 = vmatprep.mubr.f32.mxu0 0.0
        %4731 = vmatmul.mubr.f32.gmra.mrb[0].mxu0 %v4490
        %v4732 = vpop.f32.mrb[0].mxu0
        %v4733 = vadd.f32 0.0, %v4732
        %v4734 = vpop.f32.mrb[0].mxu0
        %4735 = vmatprep.mubr.f32.mxu0 0.0
        %4736 = vmatmul.mubr.f32.gmra.mrb[0].mxu0 %v4493
        %v4737 = vpop.f32.mrb[0].mxu0
        %v4738 = vadd.f32 0.0, %v4737
        %v4739 = vpop.f32.mrb[0].mxu0
        %4740 = vmatprep.mubr.f32.mxu0 0.0
        %4741 = vmatmul.mubr.f32.gmra.mrb[0].mxu0 %v4496
        %v4742 = vpop.f32.mrb[0].mxu0
        %v4743 = vadd.f32 0.0, %v4742
        %v4744 = vpop.f32.mrb[0].mxu0
        %4745 = vmatprep.mubr.f32.mxu0 0.0
        %4746 = vmatmul.mubr.f32.gmra.mrb[0].mxu0 %v4499
        %v4747 = vpop.f32.mrb[0].mxu0
        %v4748 = vadd.f32 0.0, %v4747
        %v4749 = vpop.f32.mrb[0].mxu0
        %4750 = vmatprep.mubr.f32.mxu0 0.0
        %4751 = vmatmul.mubr.f32.gmra.mrb[0].mxu0 %v4502
        %v4752 = vpop.f32.mrb[0].mxu0
        %v4753 = vadd.f32 0.0, %v4752
        %v4754 = vpop.f32.mrb[0].mxu0
        %4755 = vmatprep.mubr.f32.mxu0 0.0
        %4756 = vmatmul.mubr.f32.gmra.mrb[0].mxu0 %v4505
        %v4757 = vpop.f32.mrb[0].mxu0
        %v4758 = vadd.f32 0.0, %v4757
        %v4759 = vpop.f32.mrb[0].mxu0
        %4760 = vmatprep.mubr.f32.mxu0 0.0
        %4761 = vmatmul.mubr.f32.gmra.mrb[0].mxu0 %v4508
        %v4762 = vpop.f32.mrb[0].mxu0
        %v4763 = vadd.f32 0.0, %v4762
        %v4764 = vpop.f32.mrb[0].mxu0
        %4765 = vmatprep.mubr.f32.mxu0 0.0
        %4766 = vmatmul.mubr.f32.gmra.mrb[0].mxu0 %v4511
        %v4767 = vpop.f32.mrb[0].mxu0
        %v4768 = vadd.f32 0.0, %v4767
        %v4769 = vpop.f32.mrb[0].mxu0
        %4770 = vmatprep.mubr.f32.mxu0 0.0
        %4771 = vmatmul.mubr.f32.gmra.mrb[0].mxu0 %v4514
        %v4772 = vpop.f32.mrb[0].mxu0
        %v4773 = vadd.f32 0.0, %v4772
        %v4774 = vpop.f32.mrb[0].mxu0
        %4775 = vmatprep.mubr.f32.mxu0 0.0
        %4776 = vmatmul.mubr.f32.gmra.mrb[0].mxu0 %v4517
        %v4777 = vpop.f32.mrb[0].mxu0
        %v4778 = vadd.f32 0.0, %v4777
        %v4779 = vpop.f32.mrb[0].mxu0
        %4780 = vmatprep.mubr.f32.mxu0 0.0
        %4781 = vmatmul.mubr.f32.gmra.mrb[0].mxu0 %v4520
        %v4782 = vpop.f32.mrb[0].mxu0
        %v4783 = vadd.f32 0.0, %v4782
        %v4784 = vpop.f32.mrb[0].mxu0
        %4785 = vmatprep.mubr.f32.mxu0 0.0
        %4786 = vmatmul.mubr.f32.gmra.mrb[0].mxu0 %v4523
        %v4787 = vpop.f32.mrb[0].mxu0
        %v4788 = vadd.f32 0.0, %v4787
        %v4789 = vpop.f32.mrb[0].mxu0
        %4790 = vmatprep.mubr.f32.mxu0 0.0
        %4791 = vmatmul.mubr.f32.gmra.mrb[0].mxu0 %v4526
        %v4792 = vpop.f32.mrb[0].mxu0
        %v4793 = vadd.f32 0.0, %v4792
        %v4794 = vpop.f32.mrb[0].mxu0
        %4795 = vmatprep.mubr.f32.mxu0 0.0
        %4796 = vmatmul.mubr.f32.gmra.mrb[0].mxu0 %v4529
        %v4797 = vpop.f32.mrb[0].mxu0
        %v4798 = vadd.f32 0.0, %v4797
        %v4799 = vpop.f32.mrb[0].mxu0
        %4800 = vmatprep.mubr.f32.mxu0 0.0
        %4801 = vmatmul.mubr.f32.gmra.mrb[0].mxu0 %v4532
        %v4802 = vpop.f32.mrb[0].mxu0
        %v4803 = vadd.f32 0.0, %v4802
        %v4804 = vpop.f32.mrb[0].mxu0
        %4805 = vmatprep.mubr.f32.mxu0 0.0
        %4806 = vmatmul.mubr.f32.gmra.mrb[0].mxu0 %v4535
        %v4807 = vpop.f32.mrb[0].mxu0
        %v4808 = vadd.f32 0.0, %v4807
        %v4809 = vpop.f32.mrb[0].mxu0
        %4810 = vmatprep.mubr.f32.mxu0 0.0
        %4811 = vmatmul.mubr.f32.gmra.mrb[0].mxu0 %v4538
        %v4812 = vpop.f32.mrb[0].mxu0
        %v4813 = vadd.f32 0.0, %v4812
        %v4814 = vpop.f32.mrb[0].mxu0
        %4815 = vmatprep.mubr.f32.mxu0 0.0
        %4816 = vmatmul.mubr.f32.gmra.mrb[0].mxu0 %v4541
        %v4817 = vpop.f32.mrb[0].mxu0
        %v4818 = vadd.f32 0.0, %v4817
        %v4819 = vpop.f32.mrb[0].mxu0
        %4820 = vmatprep.mubr.f32.mxu0 0.0
        %4821 = vmatmul.mubr.f32.gmra.mrb[0].mxu0 %v4544
        %v4822 = vpop.f32.mrb[0].mxu0
        %v4823 = vadd.f32 0.0, %v4822
        %v4824 = vpop.f32.mrb[0].mxu0
        %4825 = vmatprep.mubr.f32.mxu0 0.0
        %4826 = vmatmul.mubr.f32.gmra.mrb[0].mxu0 %v4547
        %v4827 = vpop.f32.mrb[0].mxu0
        %v4828 = vadd.f32 0.0, %v4827
        %v4829 = vpop.f32.mrb[0].mxu0
        %4830 = vmatprep.mubr.f32.mxu0 0.0
        %4831 = vmatmul.mubr.f32.gmra.mrb[0].mxu0 %v4550
        %v4832 = vpop.f32.mrb[0].mxu0
        %v4833 = vadd.f32 0.0, %v4832
        %v4834 = vpop.f32.mrb[0].mxu0
        %4835 = vmatprep.mubr.f32.mxu0 0.0
        %4836 = vmatmul.mubr.f32.gmra.mrb[0].mxu0 %v4553
        %v4837 = vpop.f32.mrb[0].mxu0
        %v4838 = vadd.f32 0.0, %v4837
        %v4839 = vpop.f32.mrb[0].mxu0
        %4840 = vmatprep.mubr.f32.mxu0 0.0
        %4841 = vmatmul.mubr.f32.gmra.mrb[0].mxu0 %v4556
        %v4842 = vpop.f32.mrb[0].mxu0
        %v4843 = vadd.f32 0.0, %v4842
        %v4844 = vpop.f32.mrb[0].mxu0
        %4845 = vmatprep.mubr.f32.mxu0 0.0
        %4846 = vmatmul.mubr.f32.gmra.mrb[0].mxu0 %v4559
        %v4847 = vpop.f32.mrb[0].mxu0
        %v4848 = vadd.f32 0.0, %v4847
        %v4849 = vpop.f32.mrb[0].mxu0
        %4850 = vmatprep.mubr.f32.mxu0 0.0
        %4851 = vmatmul.mubr.f32.gmra.mrb[0].mxu0 %v4562
        %v4852 = vpop.f32.mrb[0].mxu0
        %v4853 = vadd.f32 0.0, %v4852
        %v4854 = vpop.f32.mrb[0].mxu0
        %4855 = vmatprep.mubr.f32.mxu0 0.0
        %4856 = vmatmul.mubr.f32.gmra.mrb[0].mxu0 %v4565
        %v4857 = vpop.f32.mrb[0].mxu0
        %v4858 = vadd.f32 0.0, %v4857
        %v4859 = vpop.f32.mrb[0].mxu0
        %4860 = vmatprep.mubr.f32.mxu0 0.0
        %4861 = vmatmul.mubr.f32.gmra.mrb[0].mxu0 %v4568
        %v4862 = vpop.f32.mrb[0].mxu0
        %v4863 = vadd.f32 0.0, %v4862
        %v4864 = vpop.f32.mrb[0].mxu0
        %4865 = vmatprep.mubr.f32.mxu0 0.0
        %4866 = vmatmul.mubr.f32.gmra.mrb[0].mxu0 %v4571
        %v4867 = vpop.f32.mrb[0].mxu0
        %v4868 = vadd.f32 0.0, %v4867
        %v4869 = vpop.f32.mrb[0].mxu0
        %4870 = vmatprep.mubr.f32.mxu0 0.0
        %4871 = vmatmul.mubr.f32.gmra.mrb[0].mxu0 %v4574
        %v4872 = vpop.f32.mrb[0].mxu0
        %v4873 = vadd.f32 0.0, %v4872
        %v4874 = vpop.f32.mrb[0].mxu0
        %4875 = vmatprep.mubr.f32.mxu0 0.0
        %4876 = vmatmul.mubr.f32.gmra.mrb[0].mxu0 %v4577
        %v4877 = vpop.f32.mrb[0].mxu0
        %v4878 = vadd.f32 0.0, %v4877
        %v4879 = vpop.f32.mrb[0].mxu0
        %4880 = vmatprep.mubr.f32.mxu0 0.0
        %4881 = vmatmul.mubr.f32.gmra.mrb[0].mxu0 %v4580
        %v4882 = vpop.f32.mrb[0].mxu0
        %v4883 = vadd.f32 0.0, %v4882
        %v4884 = vpop.f32.mrb[0].mxu0
        %4885 = vmatprep.mubr.f32.mxu0 0.0
        %4886 = vmatmul.mubr.f32.gmra.mrb[0].mxu0 %v4583
        %v4887 = vpop.f32.mrb[0].mxu0
        %v4888 = vadd.f32 0.0, %v4887
        %v4889 = vpop.f32.mrb[0].mxu0
        %4890 = vmatprep.mubr.f32.mxu0 0.0
        %4891 = vmatmul.mubr.f32.gmra.mrb[0].mxu0 %v4586
        %v4892 = vpop.f32.mrb[0].mxu0
        %v4893 = vadd.f32 0.0, %v4892
        %v4894 = vpop.f32.mrb[0].mxu0
        %4895 = vmatprep.mubr.f32.mxu0 0.0
        %4896 = vmatmul.mubr.f32.gmra.mrb[0].mxu0 %v4589
        %v4897 = vpop.f32.mrb[0].mxu0
        %v4898 = vadd.f32 0.0, %v4897
        %v4899 = vpop.f32.mrb[0].mxu0
        %4900 = vmatprep.mubr.f32.mxu0 0.0
        %4901 = vmatmul.mubr.f32.gmra.mrb[0].mxu0 %v4592
        %v4902 = vpop.f32.mrb[0].mxu0
        %v4903 = vadd.f32 0.0, %v4902
        %v4904 = vpop.f32.mrb[0].mxu0
        %4905 = vmatprep.mubr.f32.mxu0 0.0
        %4906 = vmatmul.mubr.f32.gmra.mrb[0].mxu0 %v4595
        %v4907 = vpop.f32.mrb[0].mxu0
        %v4908 = vadd.f32 0.0, %v4907
        %v4909 = vpop.f32.mrb[0].mxu0
        %4910 = vmatprep.mubr.f32.mxu0 0.0
        %4911 = vmatmul.mubr.f32.gmra.mrb[0].mxu0 %v4598
        %v4912 = vpop.f32.mrb[0].mxu0
        %v4913 = vadd.f32 0.0, %v4912
        %v4914 = vpop.f32.mrb[0].mxu0
        %4915 = vmatprep.mubr.f32.mxu0 0.0
        %4916 = vmatmul.mubr.f32.gmra.mrb[0].mxu0 %v4601
        %v4917 = vpop.f32.mrb[0].mxu0
        %v4918 = vadd.f32 0.0, %v4917
        %v4919 = vpop.f32.mrb[0].mxu0
        %4920 = vmatprep.mubr.f32.mxu0 0.0
        %4921 = vmatmul.mubr.f32.gmra.mrb[0].mxu0 %v4604
        %v4922 = vpop.f32.mrb[0].mxu0
        %v4923 = vadd.f32 0.0, %v4922
        %v4924 = vpop.f32.mrb[0].mxu0
        %4925 = vmatprep.mubr.f32.mxu0 0.0
        %4926 = vmatmul.mubr.f32.gmra.mrb[0].mxu0 %v4607
        %v4927 = vpop.f32.mrb[0].mxu0
        %v4928 = vadd.f32 0.0, %v4927
        %v4929 = vpop.f32.mrb[0].mxu0
        %4930 = vmatprep.mubr.f32.mxu0 0.0
        %4931 = vmatmul.mubr.f32.gmra.mrb[0].mxu0 %v4610
        %v4932 = vpop.f32.mrb[0].mxu0
        %v4933 = vadd.f32 0.0, %v4932
        %v4934 = vpop.f32.mrb[0].mxu0
        %4935 = vmatprep.mubr.f32.mxu0 0.0
        %4936 = vmatmul.mubr.f32.gmra.mrb[0].mxu0 %v4613
        %v4937 = vpop.f32.mrb[0].mxu0
        %v4938 = vadd.f32 0.0, %v4937
        %v4939 = vpop.f32.mrb[0].mxu0
        %4940 = vmatprep.mubr.f32.mxu0 0.0
        %4941 = vmatmul.mubr.f32.gmra.mrb[0].mxu0 %v4616
        %v4942 = vpop.f32.mrb[0].mxu0
        %v4943 = vadd.f32 0.0, %v4942
        %v4944 = vpop.f32.mrb[0].mxu0
        %4945 = vmatprep.mubr.f32.mxu0 0.0
        %4946 = vmatmul.mubr.f32.gmra.mrb[0].mxu0 %v4619
        %v4947 = vpop.f32.mrb[0].mxu0
        %v4948 = vadd.f32 0.0, %v4947
        %v4949 = vpop.f32.mrb[0].mxu0
        %4950 = vmatprep.mubr.f32.mxu0 0.0
        %4951 = vmatmul.mubr.f32.gmra.mrb[0].mxu0 %v4622
        %v4952 = vpop.f32.mrb[0].mxu0
        %v4953 = vadd.f32 0.0, %v4952
        %v4954 = vpop.f32.mrb[0].mxu0
        %4955 = vmatprep.mubr.f32.mxu0 0.0
        %4956 = vmatmul.mubr.f32.gmra.mrb[0].mxu0 %v4625
        %v4957 = vpop.f32.mrb[0].mxu0
        %v4958 = vadd.f32 0.0, %v4957
        %v4959 = vpop.f32.mrb[0].mxu0
        %4960 = vmatprep.mubr.f32.mxu0 0.0
        %4961 = vmatmul.mubr.f32.gmra.mrb[0].mxu0 %v4628
        %v4962 = vpop.f32.mrb[0].mxu0
        %v4963 = vadd.f32 0.0, %v4962
        %v4964 = vpop.f32.mrb[0].mxu0
        %4965 = vmatprep.mubr.f32.mxu0 0.0
        %4966 = vmatmul.mubr.f32.gmra.mrb[0].mxu0 %v4631
        %v4967 = vpop.f32.mrb[0].mxu0
        %v4968 = vadd.f32 0.0, %v4967
        %v4969 = vpop.f32.mrb[0].mxu0
        %4970 = vdwg.mxu0
        %v4971 = vadd.f32 %v4361, %v4703
        %v4972 = vadd.f32 %v4362, %v4708
        %v4973 = vadd.f32 %v4363, %v4713
        %v4974 = vadd.f32 %v4364, %v4718
        %v4975 = vadd.f32 %v4365, %v4723
        %v4976 = vadd.f32 %v4366, %v4728
        %v4977 = vadd.f32 %v4367, %v4733
        %v4978 = vadd.f32 %v4368, %v4738
        %v4979 = vadd.f32 %v4369, %v4743
        %v4980 = vadd.f32 %v4370, %v4748
        %v4981 = vadd.f32 %v4371, %v4753
        %v4982 = vadd.f32 %v4372, %v4758
        %v4983 = vadd.f32 %v4373, %v4763
        %v4984 = vadd.f32 %v4374, %v4768
        %v4985 = vadd.f32 %v4375, %v4773
        %v4986 = vadd.f32 %v4376, %v4778
        %v4987 = vadd.f32 %v4377, %v4783
        %v4988 = vadd.f32 %v4378, %v4788
        %v4989 = vadd.f32 %v4379, %v4793
        %v4990 = vadd.f32 %v4380, %v4798
        %v4991 = vadd.f32 %v4381, %v4803
        %v4992 = vadd.f32 %v4382, %v4808
        %v4993 = vadd.f32 %v4383, %v4813
        %v4994 = vadd.f32 %v4384, %v4818
        %v4995 = vadd.f32 %v4385, %v4823
        %v4996 = vadd.f32 %v4386, %v4828
        %v4997 = vadd.f32 %v4387, %v4833
        %v4998 = vadd.f32 %v4388, %v4838
        %v4999 = vadd.f32 %v4389, %v4843
        %v5000 = vadd.f32 %v4390, %v4848
        %v5001 = vadd.f32 %v4391, %v4853
        %v5002 = vadd.f32 %v4392, %v4858
        %v5003 = vadd.f32 %v4393, %v4863
        %v5004 = vadd.f32 %v4394, %v4868
        %v5005 = vadd.f32 %v4395, %v4873
        %v5006 = vadd.f32 %v4396, %v4878
        %v5007 = vadd.f32 %v4397, %v4883
        %v5008 = vadd.f32 %v4398, %v4888
        %v5009 = vadd.f32 %v4399, %v4893
        %v5010 = vadd.f32 %v4400, %v4898
        %v5011 = vadd.f32 %v4401, %v4903
        %v5012 = vadd.f32 %v4402, %v4908
        %v5013 = vadd.f32 %v4403, %v4913
        %v5014 = vadd.f32 %v4404, %v4918
        %v5015 = vadd.f32 %v4405, %v4923
        %v5016 = vadd.f32 %v4406, %v4928
        %v5017 = vadd.f32 %v4407, %v4933
        %v5018 = vadd.f32 %v4408, %v4938
        %v5019 = vadd.f32 %v4409, %v4943
        %v5020 = vadd.f32 %v4410, %v4948
        %v5021 = vadd.f32 %v4411, %v4953
        %v5022 = vadd.f32 %v4412, %v4958
        %v5023 = vadd.f32 %v4413, %v4963
        %v5024 = vadd.f32 %v4414, %v4968
        %v5025 = vld [vmem:[%s3804 + $0x2] sm:$0xff]
        %v5026 = vld [vmem:[%s3804 + $0xa] sm:$0xff]
        %v5027 = vld [vmem:[%s3804 + $0x12] sm:$0xff]
        %v5028 = vld [vmem:[%s3804 + $0x22] sm:$0xff]
        %v5029 = vld [vmem:[%s3804 + $0x2a] sm:$0xff]
        %v5030 = vld [vmem:[%s3804 + $0x32] sm:$0xff]
        %v5031 = vld [vmem:[%s3804 + $0x42] sm:$0xff]
        %v5032 = vld [vmem:[%s3804 + $0x4a] sm:$0xff]
        %v5033 = vld [vmem:[%s3804 + $0x52] sm:$0xff]
        %v5034 = vld [vmem:[%s3804 + $0x62] sm:$0xff]
        %v5035 = vld [vmem:[%s3804 + $0x6a] sm:$0xff]
        %v5036 = vld [vmem:[%s3804 + $0x72] sm:$0xff]
        %v5037 = vld [vmem:[%s3804 + $0x82] sm:$0xff]
        %v5038 = vld [vmem:[%s3804 + $0x8a] sm:$0xff]
        %v5039 = vld [vmem:[%s3804 + $0x92] sm:$0xff]
        %v5040 = vld [vmem:[%s3804 + $0xa2] sm:$0xff]
        %v5041 = vld [vmem:[%s3804 + $0xaa] sm:$0xff]
        %v5042 = vld [vmem:[%s3804 + $0xb2] sm:$0xff]
        %v5043 = vld [vmem:[%s3804 + $0xc2] sm:$0xff]
        %v5044 = vld [vmem:[%s3804 + $0xca] sm:$0xff]
        %v5045 = vld [vmem:[%s3804 + $0xd2] sm:$0xff]
        %v5046 = vld [vmem:[%s3804 + $0xe2] sm:$0xff]
        %v5047 = vld [vmem:[%s3804 + $0xea] sm:$0xff]
        %v5048 = vld [vmem:[%s3804 + $0xf2] sm:$0xff]
        %v5049 = vld [vmem:[%s3804 + $0x102] sm:$0xff]
        %v5050 = vld [vmem:[%s3804 + $0x10a] sm:$0xff]
        %v5051 = vld [vmem:[%s3804 + $0x112] sm:$0xff]
        %v5052 = vld [vmem:[%s3804 + $0x122] sm:$0xff]
        %v5053 = vld [vmem:[%s3804 + $0x12a] sm:$0xff]
        %v5054 = vld [vmem:[%s3804 + $0x132] sm:$0xff]
        %v5055 = vld [vmem:[%s3804 + $0x142] sm:$0xff]
        %v5056 = vld [vmem:[%s3804 + $0x14a] sm:$0xff]
        %v5057 = vld [vmem:[%s3804 + $0x152] sm:$0xff]
        %v5058 = vld [vmem:[%s3804 + $0x162] sm:$0xff]
        %v5059 = vld [vmem:[%s3804 + $0x16a] sm:$0xff]
        %v5060 = vld [vmem:[%s3804 + $0x172] sm:$0xff]
        %v5061 = vld [vmem:[%s3804 + $0x182] sm:$0xff]
        %v5062 = vld [vmem:[%s3804 + $0x18a] sm:$0xff]
        %v5063 = vld [vmem:[%s3804 + $0x192] sm:$0xff]
        %v5064 = vld [vmem:[%s3804 + $0x1a2] sm:$0xff]
        %v5065 = vld [vmem:[%s3804 + $0x1aa] sm:$0xff]
        %v5066 = vld [vmem:[%s3804 + $0x1b2] sm:$0xff]
        %v5067 = vld [vmem:[%s3804 + $0x1c2] sm:$0xff]
        %v5068 = vld [vmem:[%s3804 + $0x1ca] sm:$0xff]
        %v5069 = vld [vmem:[%s3804 + $0x1d2] sm:$0xff]
        %v5070 = vld [vmem:[%s3804 + $0x1e2] sm:$0xff]
        %v5071 = vld [vmem:[%s3804 + $0x1ea] sm:$0xff]
        %v5072 = vld [vmem:[%s3804 + $0x1f2] sm:$0xff]
        %v5073 = vld [vmem:[%s3804 + $0x202] sm:$0xff]
        %v5074 = vld [vmem:[%s3804 + $0x20a] sm:$0xff]
        %v5075 = vld [vmem:[%s3804 + $0x212] sm:$0xff]
        %v5076 = vld [vmem:[%s3804 + $0x222] sm:$0xff]
        %v5077 = vld [vmem:[%s3804 + $0x22a] sm:$0xff]
        %v5078 = vld [vmem:[%s3804 + $0x232] sm:$0xff]
        %s5079 = scalar_lea.vmem %s1, 32
        %v5080 = vld [vmem:[%s5079] sm:$0xf]
        %v5082 = vsel %vm361, %v5025, 0
        %v5085 = vsel %vm361, %v5026, 0
        %v5088 = vsel %vm361, %v5027, 0
        %v5091 = vsel %vm361, %v5028, 0
        %v5094 = vsel %vm361, %v5029, 0
        %v5097 = vsel %vm361, %v5030, 0
        %v5100 = vsel %vm361, %v5031, 0
        %v5103 = vsel %vm361, %v5032, 0
        %v5106 = vsel %vm361, %v5033, 0
        %v5109 = vsel %vm361, %v5034, 0
        %v5112 = vsel %vm361, %v5035, 0
        %v5115 = vsel %vm361, %v5036, 0
        %v5118 = vsel %vm361, %v5037, 0
        %v5121 = vsel %vm361, %v5038, 0
        %v5124 = vsel %vm361, %v5039, 0
        %v5127 = vsel %vm361, %v5040, 0
        %v5130 = vsel %vm361, %v5041, 0
        %v5133 = vsel %vm361, %v5042, 0
        %v5136 = vsel %vm361, %v5043, 0
        %v5139 = vsel %vm361, %v5044, 0
        %v5142 = vsel %vm361, %v5045, 0
        %v5145 = vsel %vm361, %v5046, 0
        %v5148 = vsel %vm361, %v5047, 0
        %v5151 = vsel %vm361, %v5048, 0
        %v5154 = vsel %vm361, %v5049, 0
        %v5157 = vsel %vm361, %v5050, 0
        %v5160 = vsel %vm361, %v5051, 0
        %v5163 = vsel %vm361, %v5052, 0
        %v5166 = vsel %vm361, %v5053, 0
        %v5169 = vsel %vm361, %v5054, 0
        %v5172 = vsel %vm361, %v5055, 0
        %v5175 = vsel %vm361, %v5056, 0
        %v5178 = vsel %vm361, %v5057, 0
        %v5181 = vsel %vm361, %v5058, 0
        %v5184 = vsel %vm361, %v5059, 0
        %v5187 = vsel %vm361, %v5060, 0
        %v5190 = vsel %vm361, %v5061, 0
        %v5193 = vsel %vm361, %v5062, 0
        %v5196 = vsel %vm361, %v5063, 0
        %v5199 = vsel %vm361, %v5064, 0
        %v5202 = vsel %vm361, %v5065, 0
        %v5205 = vsel %vm361, %v5066, 0
        %v5208 = vsel %vm361, %v5067, 0
        %v5211 = vsel %vm361, %v5068, 0
        %v5214 = vsel %vm361, %v5069, 0
        %v5217 = vsel %vm361, %v5070, 0
        %v5220 = vsel %vm361, %v5071, 0
        %v5223 = vsel %vm361, %v5072, 0
        %v5226 = vsel %vm361, %v5073, 0
        %v5229 = vsel %vm361, %v5074, 0
        %v5232 = vsel %vm361, %v5075, 0
        %v5235 = vsel %vm361, %v5076, 0
        %v5238 = vsel %vm361, %v5077, 0
        %v5241 = vsel %vm361, %v5078, 0
        %v5244 = vsel %vm524, %v5080, 0
        %5246 = vmatprep.subr.mxu0 0.0
        %5247 = vmatpush1.msra.mxu0 %v5244
        %5248 = vmatprep.subr.mxu0 0.0
        %5249 = vmatpush1.msra.mxu0 0.0
        %5250 = vmatprep.subr.mxu0 0.0
        %5251 = vmatpush1.msra.mxu0 0.0
        %5252 = vmatprep.subr.mxu0 0.0
        %5253 = vmatpush1.msra.mxu0 0.0
        %5254 = vmatprep.subr.mxu0 0.0
        %5255 = vmatpush1.msra.mxu0 0.0
        %5256 = vmatprep.subr.mxu0 0.0
        %5257 = vmatpush1.msra.mxu0 0.0
        %5258 = vmatprep.subr.mxu0 0.0
        %5259 = vmatpush1.msra.mxu0 0.0
        %5260 = vmatprep.subr.mxu0 0.0
        %5261 = vmatpush1.msra.mxu0 0.0
        %5262 = vmatprep.subr.mxu0 0.0
        %5263 = vmatpush1.msra.mxu0 0.0
        %5264 = vmatprep.subr.mxu0 0.0
        %5265 = vmatpush1.msra.mxu0 0.0
        %5266 = vmatprep.subr.mxu0 0.0
        %5267 = vmatpush1.msra.mxu0 0.0
        %5268 = vmatprep.subr.mxu0 0.0
        %5269 = vmatpush1.msra.mxu0 0.0
        %5270 = vmatprep.subr.mxu0 0.0
        %5271 = vmatpush1.msra.mxu0 0.0
        %5272 = vmatprep.subr.mxu0 0.0
        %5273 = vmatpush1.msra.mxu0 0.0
        %5274 = vmatprep.subr.mxu0 0.0
        %5275 = vmatpush1.msra.mxu0 0.0
        %5276 = vmatprep.subr.mxu0 0.0
        %5277 = vmatpush1.msra.mxu0 0.0
        %5278 = vmatprep.subr.mxu0 0.0
        %5279 = vmatpush1.msra.mxu0 0.0
        %5280 = vmatprep.subr.mxu0 0.0
        %5281 = vmatpush1.msra.mxu0 0.0
        %5282 = vmatprep.subr.mxu0 0.0
        %5283 = vmatpush1.msra.mxu0 0.0
        %5284 = vmatprep.subr.mxu0 0.0
        %5285 = vmatpush1.msra.mxu0 0.0
        %5286 = vmatprep.subr.mxu0 0.0
        %5287 = vmatpush1.msra.mxu0 0.0
        %5288 = vmatprep.subr.mxu0 0.0
        %5289 = vmatpush1.msra.mxu0 0.0
        %5290 = vmatprep.subr.mxu0 0.0
        %5291 = vmatpush1.msra.mxu0 0.0
        %5292 = vmatprep.subr.mxu0 0.0
        %5293 = vmatpush1.msra.mxu0 0.0
        %5294 = vmatprep.subr.mxu0 0.0
        %5295 = vmatpush1.msra.mxu0 0.0
        %5296 = vmatprep.subr.mxu0 0.0
        %5297 = vmatpush1.msra.mxu0 0.0
        %5298 = vmatprep.subr.mxu0 0.0
        %5299 = vmatpush1.msra.mxu0 0.0
        %5300 = vmatprep.subr.mxu0 0.0
        %5301 = vmatpush1.msra.mxu0 0.0
        %5302 = vmatprep.subr.mxu0 0.0
        %5303 = vmatpush1.msra.mxu0 0.0
        %5304 = vmatprep.subr.mxu0 0.0
        %5305 = vmatpush1.msra.mxu0 0.0
        %5306 = vmatprep.subr.mxu0 0.0
        %5307 = vmatpush1.msra.mxu0 0.0
        %5308 = vmatprep.subr.mxu0 0.0
        %5309 = vmatpush1.msra.mxu0 0.0
        %5310 = vmatprep.mubr.f32.mxu0 0.0
        %5311 = vmatmul.mubr.f32.gmra.mrb[0].mxu0 %v5082
        %v5312 = vpop.f32.mrb[0].mxu0
        %v5313 = vadd.f32 0.0, %v5312
        %v5314 = vpop.f32.mrb[0].mxu0
        %5315 = vmatprep.mubr.f32.mxu0 0.0
        %5316 = vmatmul.mubr.f32.gmra.mrb[0].mxu0 %v5085
        %v5317 = vpop.f32.mrb[0].mxu0
        %v5318 = vadd.f32 0.0, %v5317
        %v5319 = vpop.f32.mrb[0].mxu0
        %5320 = vmatprep.mubr.f32.mxu0 0.0
        %5321 = vmatmul.mubr.f32.gmra.mrb[0].mxu0 %v5088
        %v5322 = vpop.f32.mrb[0].mxu0
        %v5323 = vadd.f32 0.0, %v5322
        %v5324 = vpop.f32.mrb[0].mxu0
        %5325 = vmatprep.mubr.f32.mxu0 0.0
        %5326 = vmatmul.mubr.f32.gmra.mrb[0].mxu0 %v5091
        %v5327 = vpop.f32.mrb[0].mxu0
        %v5328 = vadd.f32 0.0, %v5327
        %v5329 = vpop.f32.mrb[0].mxu0
        %5330 = vmatprep.mubr.f32.mxu0 0.0
        %5331 = vmatmul.mubr.f32.gmra.mrb[0].mxu0 %v5094
        %v5332 = vpop.f32.mrb[0].mxu0
        %v5333 = vadd.f32 0.0, %v5332
        %v5334 = vpop.f32.mrb[0].mxu0
        %5335 = vmatprep.mubr.f32.mxu0 0.0
        %5336 = vmatmul.mubr.f32.gmra.mrb[0].mxu0 %v5097
        %v5337 = vpop.f32.mrb[0].mxu0
        %v5338 = vadd.f32 0.0, %v5337
        %v5339 = vpop.f32.mrb[0].mxu0
        %5340 = vmatprep.mubr.f32.mxu0 0.0
        %5341 = vmatmul.mubr.f32.gmra.mrb[0].mxu0 %v5100
        %v5342 = vpop.f32.mrb[0].mxu0
        %v5343 = vadd.f32 0.0, %v5342
        %v5344 = vpop.f32.mrb[0].mxu0
        %5345 = vmatprep.mubr.f32.mxu0 0.0
        %5346 = vmatmul.mubr.f32.gmra.mrb[0].mxu0 %v5103
        %v5347 = vpop.f32.mrb[0].mxu0
        %v5348 = vadd.f32 0.0, %v5347
        %v5349 = vpop.f32.mrb[0].mxu0
        %5350 = vmatprep.mubr.f32.mxu0 0.0
        %5351 = vmatmul.mubr.f32.gmra.mrb[0].mxu0 %v5106
        %v5352 = vpop.f32.mrb[0].mxu0
        %v5353 = vadd.f32 0.0, %v5352
        %v5354 = vpop.f32.mrb[0].mxu0
        %5355 = vmatprep.mubr.f32.mxu0 0.0
        %5356 = vmatmul.mubr.f32.gmra.mrb[0].mxu0 %v5109
        %v5357 = vpop.f32.mrb[0].mxu0
        %v5358 = vadd.f32 0.0, %v5357
        %v5359 = vpop.f32.mrb[0].mxu0
        %5360 = vmatprep.mubr.f32.mxu0 0.0
        %5361 = vmatmul.mubr.f32.gmra.mrb[0].mxu0 %v5112
        %v5362 = vpop.f32.mrb[0].mxu0
        %v5363 = vadd.f32 0.0, %v5362
        %v5364 = vpop.f32.mrb[0].mxu0
        %5365 = vmatprep.mubr.f32.mxu0 0.0
        %5366 = vmatmul.mubr.f32.gmra.mrb[0].mxu0 %v5115
        %v5367 = vpop.f32.mrb[0].mxu0
        %v5368 = vadd.f32 0.0, %v5367
        %v5369 = vpop.f32.mrb[0].mxu0
        %5370 = vmatprep.mubr.f32.mxu0 0.0
        %5371 = vmatmul.mubr.f32.gmra.mrb[0].mxu0 %v5118
        %v5372 = vpop.f32.mrb[0].mxu0
        %v5373 = vadd.f32 0.0, %v5372
        %v5374 = vpop.f32.mrb[0].mxu0
        %5375 = vmatprep.mubr.f32.mxu0 0.0
        %5376 = vmatmul.mubr.f32.gmra.mrb[0].mxu0 %v5121
        %v5377 = vpop.f32.mrb[0].mxu0
        %v5378 = vadd.f32 0.0, %v5377
        %v5379 = vpop.f32.mrb[0].mxu0
        %5380 = vmatprep.mubr.f32.mxu0 0.0
        %5381 = vmatmul.mubr.f32.gmra.mrb[0].mxu0 %v5124
        %v5382 = vpop.f32.mrb[0].mxu0
        %v5383 = vadd.f32 0.0, %v5382
        %v5384 = vpop.f32.mrb[0].mxu0
        %5385 = vmatprep.mubr.f32.mxu0 0.0
        %5386 = vmatmul.mubr.f32.gmra.mrb[0].mxu0 %v5127
        %v5387 = vpop.f32.mrb[0].mxu0
        %v5388 = vadd.f32 0.0, %v5387
        %v5389 = vpop.f32.mrb[0].mxu0
        %5390 = vmatprep.mubr.f32.mxu0 0.0
        %5391 = vmatmul.mubr.f32.gmra.mrb[0].mxu0 %v5130
        %v5392 = vpop.f32.mrb[0].mxu0
        %v5393 = vadd.f32 0.0, %v5392
        %v5394 = vpop.f32.mrb[0].mxu0
        %5395 = vmatprep.mubr.f32.mxu0 0.0
        %5396 = vmatmul.mubr.f32.gmra.mrb[0].mxu0 %v5133
        %v5397 = vpop.f32.mrb[0].mxu0
        %v5398 = vadd.f32 0.0, %v5397
        %v5399 = vpop.f32.mrb[0].mxu0
        %5400 = vmatprep.mubr.f32.mxu0 0.0
        %5401 = vmatmul.mubr.f32.gmra.mrb[0].mxu0 %v5136
        %v5402 = vpop.f32.mrb[0].mxu0
        %v5403 = vadd.f32 0.0, %v5402
        %v5404 = vpop.f32.mrb[0].mxu0
        %5405 = vmatprep.mubr.f32.mxu0 0.0
        %5406 = vmatmul.mubr.f32.gmra.mrb[0].mxu0 %v5139
        %v5407 = vpop.f32.mrb[0].mxu0
        %v5408 = vadd.f32 0.0, %v5407
        %v5409 = vpop.f32.mrb[0].mxu0
        %5410 = vmatprep.mubr.f32.mxu0 0.0
        %5411 = vmatmul.mubr.f32.gmra.mrb[0].mxu0 %v5142
        %v5412 = vpop.f32.mrb[0].mxu0
        %v5413 = vadd.f32 0.0, %v5412
        %v5414 = vpop.f32.mrb[0].mxu0
        %5415 = vmatprep.mubr.f32.mxu0 0.0
        %5416 = vmatmul.mubr.f32.gmra.mrb[0].mxu0 %v5145
        %v5417 = vpop.f32.mrb[0].mxu0
        %v5418 = vadd.f32 0.0, %v5417
        %v5419 = vpop.f32.mrb[0].mxu0
        %5420 = vmatprep.mubr.f32.mxu0 0.0
        %5421 = vmatmul.mubr.f32.gmra.mrb[0].mxu0 %v5148
        %v5422 = vpop.f32.mrb[0].mxu0
        %v5423 = vadd.f32 0.0, %v5422
        %v5424 = vpop.f32.mrb[0].mxu0
        %5425 = vmatprep.mubr.f32.mxu0 0.0
        %5426 = vmatmul.mubr.f32.gmra.mrb[0].mxu0 %v5151
        %v5427 = vpop.f32.mrb[0].mxu0
        %v5428 = vadd.f32 0.0, %v5427
        %v5429 = vpop.f32.mrb[0].mxu0
        %5430 = vmatprep.mubr.f32.mxu0 0.0
        %5431 = vmatmul.mubr.f32.gmra.mrb[0].mxu0 %v5154
        %v5432 = vpop.f32.mrb[0].mxu0
        %v5433 = vadd.f32 0.0, %v5432
        %v5434 = vpop.f32.mrb[0].mxu0
        %5435 = vmatprep.mubr.f32.mxu0 0.0
        %5436 = vmatmul.mubr.f32.gmra.mrb[0].mxu0 %v5157
        %v5437 = vpop.f32.mrb[0].mxu0
        %v5438 = vadd.f32 0.0, %v5437
        %v5439 = vpop.f32.mrb[0].mxu0
        %5440 = vmatprep.mubr.f32.mxu0 0.0
        %5441 = vmatmul.mubr.f32.gmra.mrb[0].mxu0 %v5160
        %v5442 = vpop.f32.mrb[0].mxu0
        %v5443 = vadd.f32 0.0, %v5442
        %v5444 = vpop.f32.mrb[0].mxu0
        %5445 = vmatprep.mubr.f32.mxu0 0.0
        %5446 = vmatmul.mubr.f32.gmra.mrb[0].mxu0 %v5163
        %v5447 = vpop.f32.mrb[0].mxu0
        %v5448 = vadd.f32 0.0, %v5447
        %v5449 = vpop.f32.mrb[0].mxu0
        %5450 = vmatprep.mubr.f32.mxu0 0.0
        %5451 = vmatmul.mubr.f32.gmra.mrb[0].mxu0 %v5166
        %v5452 = vpop.f32.mrb[0].mxu0
        %v5453 = vadd.f32 0.0, %v5452
        %v5454 = vpop.f32.mrb[0].mxu0
        %5455 = vmatprep.mubr.f32.mxu0 0.0
        %5456 = vmatmul.mubr.f32.gmra.mrb[0].mxu0 %v5169
        %v5457 = vpop.f32.mrb[0].mxu0
        %v5458 = vadd.f32 0.0, %v5457
        %v5459 = vpop.f32.mrb[0].mxu0
        %5460 = vmatprep.mubr.f32.mxu0 0.0
        %5461 = vmatmul.mubr.f32.gmra.mrb[0].mxu0 %v5172
        %v5462 = vpop.f32.mrb[0].mxu0
        %v5463 = vadd.f32 0.0, %v5462
        %v5464 = vpop.f32.mrb[0].mxu0
        %5465 = vmatprep.mubr.f32.mxu0 0.0
        %5466 = vmatmul.mubr.f32.gmra.mrb[0].mxu0 %v5175
        %v5467 = vpop.f32.mrb[0].mxu0
        %v5468 = vadd.f32 0.0, %v5467
        %v5469 = vpop.f32.mrb[0].mxu0
        %5470 = vmatprep.mubr.f32.mxu0 0.0
        %5471 = vmatmul.mubr.f32.gmra.mrb[0].mxu0 %v5178
        %v5472 = vpop.f32.mrb[0].mxu0
        %v5473 = vadd.f32 0.0, %v5472
        %v5474 = vpop.f32.mrb[0].mxu0
        %5475 = vmatprep.mubr.f32.mxu0 0.0
        %5476 = vmatmul.mubr.f32.gmra.mrb[0].mxu0 %v5181
        %v5477 = vpop.f32.mrb[0].mxu0
        %v5478 = vadd.f32 0.0, %v5477
        %v5479 = vpop.f32.mrb[0].mxu0
        %5480 = vmatprep.mubr.f32.mxu0 0.0
        %5481 = vmatmul.mubr.f32.gmra.mrb[0].mxu0 %v5184
        %v5482 = vpop.f32.mrb[0].mxu0
        %v5483 = vadd.f32 0.0, %v5482
        %v5484 = vpop.f32.mrb[0].mxu0
        %5485 = vmatprep.mubr.f32.mxu0 0.0
        %5486 = vmatmul.mubr.f32.gmra.mrb[0].mxu0 %v5187
        %v5487 = vpop.f32.mrb[0].mxu0
        %v5488 = vadd.f32 0.0, %v5487
        %v5489 = vpop.f32.mrb[0].mxu0
        %5490 = vmatprep.mubr.f32.mxu0 0.0
        %5491 = vmatmul.mubr.f32.gmra.mrb[0].mxu0 %v5190
        %v5492 = vpop.f32.mrb[0].mxu0
        %v5493 = vadd.f32 0.0, %v5492
        %v5494 = vpop.f32.mrb[0].mxu0
        %5495 = vmatprep.mubr.f32.mxu0 0.0
        %5496 = vmatmul.mubr.f32.gmra.mrb[0].mxu0 %v5193
        %v5497 = vpop.f32.mrb[0].mxu0
        %v5498 = vadd.f32 0.0, %v5497
        %v5499 = vpop.f32.mrb[0].mxu0
        %5500 = vmatprep.mubr.f32.mxu0 0.0
        %5501 = vmatmul.mubr.f32.gmra.mrb[0].mxu0 %v5196
        %v5502 = vpop.f32.mrb[0].mxu0
        %v5503 = vadd.f32 0.0, %v5502
        %v5504 = vpop.f32.mrb[0].mxu0
        %5505 = vmatprep.mubr.f32.mxu0 0.0
        %5506 = vmatmul.mubr.f32.gmra.mrb[0].mxu0 %v5199
        %v5507 = vpop.f32.mrb[0].mxu0
        %v5508 = vadd.f32 0.0, %v5507
        %v5509 = vpop.f32.mrb[0].mxu0
        %5510 = vmatprep.mubr.f32.mxu0 0.0
        %5511 = vmatmul.mubr.f32.gmra.mrb[0].mxu0 %v5202
        %v5512 = vpop.f32.mrb[0].mxu0
        %v5513 = vadd.f32 0.0, %v5512
        %v5514 = vpop.f32.mrb[0].mxu0
        %5515 = vmatprep.mubr.f32.mxu0 0.0
        %5516 = vmatmul.mubr.f32.gmra.mrb[0].mxu0 %v5205
        %v5517 = vpop.f32.mrb[0].mxu0
        %v5518 = vadd.f32 0.0, %v5517
        %v5519 = vpop.f32.mrb[0].mxu0
        %5520 = vmatprep.mubr.f32.mxu0 0.0
        %5521 = vmatmul.mubr.f32.gmra.mrb[0].mxu0 %v5208
        %v5522 = vpop.f32.mrb[0].mxu0
        %v5523 = vadd.f32 0.0, %v5522
        %v5524 = vpop.f32.mrb[0].mxu0
        %5525 = vmatprep.mubr.f32.mxu0 0.0
        %5526 = vmatmul.mubr.f32.gmra.mrb[0].mxu0 %v5211
        %v5527 = vpop.f32.mrb[0].mxu0
        %v5528 = vadd.f32 0.0, %v5527
        %v5529 = vpop.f32.mrb[0].mxu0
        %5530 = vmatprep.mubr.f32.mxu0 0.0
        %5531 = vmatmul.mubr.f32.gmra.mrb[0].mxu0 %v5214
        %v5532 = vpop.f32.mrb[0].mxu0
        %v5533 = vadd.f32 0.0, %v5532
        %v5534 = vpop.f32.mrb[0].mxu0
        %5535 = vmatprep.mubr.f32.mxu0 0.0
        %5536 = vmatmul.mubr.f32.gmra.mrb[0].mxu0 %v5217
        %v5537 = vpop.f32.mrb[0].mxu0
        %v5538 = vadd.f32 0.0, %v5537
        %v5539 = vpop.f32.mrb[0].mxu0
        %5540 = vmatprep.mubr.f32.mxu0 0.0
        %5541 = vmatmul.mubr.f32.gmra.mrb[0].mxu0 %v5220
        %v5542 = vpop.f32.mrb[0].mxu0
        %v5543 = vadd.f32 0.0, %v5542
        %v5544 = vpop.f32.mrb[0].mxu0
        %5545 = vmatprep.mubr.f32.mxu0 0.0
        %5546 = vmatmul.mubr.f32.gmra.mrb[0].mxu0 %v5223
        %v5547 = vpop.f32.mrb[0].mxu0
        %v5548 = vadd.f32 0.0, %v5547
        %v5549 = vpop.f32.mrb[0].mxu0
        %5550 = vmatprep.mubr.f32.mxu0 0.0
        %5551 = vmatmul.mubr.f32.gmra.mrb[0].mxu0 %v5226
        %v5552 = vpop.f32.mrb[0].mxu0
        %v5553 = vadd.f32 0.0, %v5552
        %v5554 = vpop.f32.mrb[0].mxu0
        %5555 = vmatprep.mubr.f32.mxu0 0.0
        %5556 = vmatmul.mubr.f32.gmra.mrb[0].mxu0 %v5229
        %v5557 = vpop.f32.mrb[0].mxu0
        %v5558 = vadd.f32 0.0, %v5557
        %v5559 = vpop.f32.mrb[0].mxu0
        %5560 = vmatprep.mubr.f32.mxu0 0.0
        %5561 = vmatmul.mubr.f32.gmra.mrb[0].mxu0 %v5232
        %v5562 = vpop.f32.mrb[0].mxu0
        %v5563 = vadd.f32 0.0, %v5562
        %v5564 = vpop.f32.mrb[0].mxu0
        %5565 = vmatprep.mubr.f32.mxu0 0.0
        %5566 = vmatmul.mubr.f32.gmra.mrb[0].mxu0 %v5235
        %v5567 = vpop.f32.mrb[0].mxu0
        %v5568 = vadd.f32 0.0, %v5567
        %v5569 = vpop.f32.mrb[0].mxu0
        %5570 = vmatprep.mubr.f32.mxu0 0.0
        %5571 = vmatmul.mubr.f32.gmra.mrb[0].mxu0 %v5238
        %v5572 = vpop.f32.mrb[0].mxu0
        %v5573 = vadd.f32 0.0, %v5572
        %v5574 = vpop.f32.mrb[0].mxu0
        %5575 = vmatprep.mubr.f32.mxu0 0.0
        %5576 = vmatmul.mubr.f32.gmra.mrb[0].mxu0 %v5241
        %v5577 = vpop.f32.mrb[0].mxu0
        %v5578 = vadd.f32 0.0, %v5577
        %v5579 = vpop.f32.mrb[0].mxu0
        %5580 = vdwg.mxu0
        %v5581 = vadd.f32 %v4971, %v5313
        %v5582 = vadd.f32 %v4972, %v5318
        %v5583 = vadd.f32 %v4973, %v5323
        %v5584 = vadd.f32 %v4974, %v5328
        %v5585 = vadd.f32 %v4975, %v5333
        %v5586 = vadd.f32 %v4976, %v5338
        %v5587 = vadd.f32 %v4977, %v5343
        %v5588 = vadd.f32 %v4978, %v5348
        %v5589 = vadd.f32 %v4979, %v5353
        %v5590 = vadd.f32 %v4980, %v5358
        %v5591 = vadd.f32 %v4981, %v5363
        %v5592 = vadd.f32 %v4982, %v5368
        %v5593 = vadd.f32 %v4983, %v5373
        %v5594 = vadd.f32 %v4984, %v5378
        %v5595 = vadd.f32 %v4985, %v5383
        %v5596 = vadd.f32 %v4986, %v5388
        %v5597 = vadd.f32 %v4987, %v5393
        %v5598 = vadd.f32 %v4988, %v5398
        %v5599 = vadd.f32 %v4989, %v5403
        %v5600 = vadd.f32 %v4990, %v5408
        %v5601 = vadd.f32 %v4991, %v5413
        %v5602 = vadd.f32 %v4992, %v5418
        %v5603 = vadd.f32 %v4993, %v5423
        %v5604 = vadd.f32 %v4994, %v5428
        %v5605 = vadd.f32 %v4995, %v5433
        %v5606 = vadd.f32 %v4996, %v5438
        %v5607 = vadd.f32 %v4997, %v5443
        %v5608 = vadd.f32 %v4998, %v5448
        %v5609 = vadd.f32 %v4999, %v5453
        %v5610 = vadd.f32 %v5000, %v5458
        %v5611 = vadd.f32 %v5001, %v5463
        %v5612 = vadd.f32 %v5002, %v5468
        %v5613 = vadd.f32 %v5003, %v5473
        %v5614 = vadd.f32 %v5004, %v5478
        %v5615 = vadd.f32 %v5005, %v5483
        %v5616 = vadd.f32 %v5006, %v5488
        %v5617 = vadd.f32 %v5007, %v5493
        %v5618 = vadd.f32 %v5008, %v5498
        %v5619 = vadd.f32 %v5009, %v5503
        %v5620 = vadd.f32 %v5010, %v5508
        %v5621 = vadd.f32 %v5011, %v5513
        %v5622 = vadd.f32 %v5012, %v5518
        %v5623 = vadd.f32 %v5013, %v5523
        %v5624 = vadd.f32 %v5014, %v5528
        %v5625 = vadd.f32 %v5015, %v5533
        %v5626 = vadd.f32 %v5016, %v5538
        %v5627 = vadd.f32 %v5017, %v5543
        %v5628 = vadd.f32 %v5018, %v5548
        %v5629 = vadd.f32 %v5019, %v5553
        %v5630 = vadd.f32 %v5020, %v5558
        %v5631 = vadd.f32 %v5021, %v5563
        %v5632 = vadd.f32 %v5022, %v5568
        %v5633 = vadd.f32 %v5023, %v5573
        %v5634 = vadd.f32 %v5024, %v5578
        %v5635 = vld [vmem:[%s2] sm:$0x1]
        %v5637 = vlaneseq
        %v5638 = vshrl.u32 %v5637, 7
        %v5639 = vsub.s32 0, %v5638
        %v5640 = vrot.slane %v5635, %v5639
        %v5642 = vadd.f32 %v5581, %v5640
        %v5643 = vadd.f32 %v5582, %v5640
        %v5644 = vadd.f32 %v5583, %v5640
        %v5645 = vadd.f32 %v5584, %v5640
        %v5646 = vadd.f32 %v5585, %v5640
        %v5647 = vadd.f32 %v5586, %v5640
        %v5648 = vadd.f32 %v5587, %v5640
        %v5649 = vadd.f32 %v5588, %v5640
        %v5650 = vadd.f32 %v5589, %v5640
        %v5651 = vadd.f32 %v5590, %v5640
        %v5652 = vadd.f32 %v5591, %v5640
        %v5653 = vadd.f32 %v5592, %v5640
        %v5654 = vadd.f32 %v5593, %v5640
        %v5655 = vadd.f32 %v5594, %v5640
        %v5656 = vadd.f32 %v5595, %v5640
        %v5657 = vadd.f32 %v5596, %v5640
        %v5658 = vadd.f32 %v5597, %v5640
        %v5659 = vadd.f32 %v5598, %v5640
        %v5660 = vadd.f32 %v5599, %v5640
        %v5661 = vadd.f32 %v5600, %v5640
        %v5662 = vadd.f32 %v5601, %v5640
        %v5663 = vadd.f32 %v5602, %v5640
        %v5664 = vadd.f32 %v5603, %v5640
        %v5665 = vadd.f32 %v5604, %v5640
        %v5666 = vadd.f32 %v5605, %v5640
        %v5667 = vadd.f32 %v5606, %v5640
        %v5668 = vadd.f32 %v5607, %v5640
        %v5669 = vadd.f32 %v5608, %v5640
        %v5670 = vadd.f32 %v5609, %v5640
        %v5671 = vadd.f32 %v5610, %v5640
        %v5672 = vadd.f32 %v5611, %v5640
        %v5673 = vadd.f32 %v5612, %v5640
        %v5674 = vadd.f32 %v5613, %v5640
        %v5675 = vadd.f32 %v5614, %v5640
        %v5676 = vadd.f32 %v5615, %v5640
        %v5677 = vadd.f32 %v5616, %v5640
        %v5678 = vadd.f32 %v5617, %v5640
        %v5679 = vadd.f32 %v5618, %v5640
        %v5680 = vadd.f32 %v5619, %v5640
        %v5681 = vadd.f32 %v5620, %v5640
        %v5682 = vadd.f32 %v5621, %v5640
        %v5683 = vadd.f32 %v5622, %v5640
        %v5684 = vadd.f32 %v5623, %v5640
        %v5685 = vadd.f32 %v5624, %v5640
        %v5686 = vadd.f32 %v5625, %v5640
        %v5687 = vadd.f32 %v5626, %v5640
        %v5688 = vadd.f32 %v5627, %v5640
        %v5689 = vadd.f32 %v5628, %v5640
        %v5690 = vadd.f32 %v5629, %v5640
        %v5691 = vadd.f32 %v5630, %v5640
        %v5692 = vadd.f32 %v5631, %v5640
        %v5693 = vadd.f32 %v5632, %v5640
        %v5694 = vadd.f32 %v5633, %v5640
        %v5695 = vadd.f32 %v5634, %v5640
        %v5696 = vmax.f32 %v5642, 0.0
        %v5697 = vmax.f32 %v5643, 0.0
        %v5698 = vmax.f32 %v5644, 0.0
        %v5699 = vmax.f32 %v5645, 0.0
        %v5700 = vmax.f32 %v5646, 0.0
        %v5701 = vmax.f32 %v5647, 0.0
        %v5702 = vmax.f32 %v5648, 0.0
        %v5703 = vmax.f32 %v5649, 0.0
        %v5704 = vmax.f32 %v5650, 0.0
        %v5705 = vmax.f32 %v5651, 0.0
        %v5706 = vmax.f32 %v5652, 0.0
        %v5707 = vmax.f32 %v5653, 0.0
        %v5708 = vmax.f32 %v5654, 0.0
        %v5709 = vmax.f32 %v5655, 0.0
        %v5710 = vmax.f32 %v5656, 0.0
        %v5711 = vmax.f32 %v5657, 0.0
        %v5712 = vmax.f32 %v5658, 0.0
        %v5713 = vmax.f32 %v5659, 0.0
        %v5714 = vmax.f32 %v5660, 0.0
        %v5715 = vmax.f32 %v5661, 0.0
        %v5716 = vmax.f32 %v5662, 0.0
        %v5717 = vmax.f32 %v5663, 0.0
        %v5718 = vmax.f32 %v5664, 0.0
        %v5719 = vmax.f32 %v5665, 0.0
        %v5720 = vmax.f32 %v5666, 0.0
        %v5721 = vmax.f32 %v5667, 0.0
        %v5722 = vmax.f32 %v5668, 0.0
        %v5723 = vmax.f32 %v5669, 0.0
        %v5724 = vmax.f32 %v5670, 0.0
        %v5725 = vmax.f32 %v5671, 0.0
        %v5726 = vmax.f32 %v5672, 0.0
        %v5727 = vmax.f32 %v5673, 0.0
        %v5728 = vmax.f32 %v5674, 0.0
        %v5729 = vmax.f32 %v5675, 0.0
        %v5730 = vmax.f32 %v5676, 0.0
        %v5731 = vmax.f32 %v5677, 0.0
        %v5732 = vmax.f32 %v5678, 0.0
        %v5733 = vmax.f32 %v5679, 0.0
        %v5734 = vmax.f32 %v5680, 0.0
        %v5735 = vmax.f32 %v5681, 0.0
        %v5736 = vmax.f32 %v5682, 0.0
        %v5737 = vmax.f32 %v5683, 0.0
        %v5738 = vmax.f32 %v5684, 0.0
        %v5739 = vmax.f32 %v5685, 0.0
        %v5740 = vmax.f32 %v5686, 0.0
        %v5741 = vmax.f32 %v5687, 0.0
        %v5742 = vmax.f32 %v5688, 0.0
        %v5743 = vmax.f32 %v5689, 0.0
        %v5744 = vmax.f32 %v5690, 0.0
        %v5745 = vmax.f32 %v5691, 0.0
        %v5746 = vmax.f32 %v5692, 0.0
        %v5747 = vmax.f32 %v5693, 0.0
        %v5748 = vmax.f32 %v5694, 0.0
        %v5749 = vmax.f32 %v5695, 0.0
        %v5750 = vlaneseq
        %v5751 = vshrl.u32 %v5750, 7
        %v5752 = vadd.s32 %v5751, 8
        %v5753 = vadd.s32 %v5751, 16
        %vm5754 = vcmp.ge.s32.totalorder %v5751, 1
        %vm5755 = vcmp.ge.s32.totalorder %v5752, 1
        %vm5756 = vcmp.ge.s32.totalorder %v5753, 1
        %vm5757 = vmand 0, %vm5754
        %vm5758 = vmand 0, %vm5755
        %vm5759 = vmand 0, %vm5756
        %vm5760 = vmand 1, %vm5754
        %vm5761 = vmand 1, %vm5755
        %vm5762 = vmand 1, %vm5756
        %vm5763 = vcmp.le.s32.totalorder %v5751, 16
        %vm5764 = vcmp.le.s32.totalorder %v5752, 16
        %vm5765 = vcmp.le.s32.totalorder %v5753, 16
        %vm5766 = vmand %vm5757, %vm5763
        %vm5767 = vmand %vm5758, %vm5764
        %vm5768 = vmand %vm5759, %vm5765
        %vm5769 = vmand %vm5760, %vm5763
        %vm5770 = vmand %vm5761, %vm5764
        %vm5771 = vmand %vm5762, %vm5765
        %v5772 = vsel %vm5766, %v5696, 0.0
        %v5773 = vsel %vm5767, %v5697, 0.0
        %v5774 = vsel %vm5768, %v5698, 0.0
        %v5775 = vsel %vm5769, %v5699, 0.0
        %v5776 = vsel %vm5770, %v5700, 0.0
        %v5777 = vsel %vm5771, %v5701, 0.0
        %v5778 = vsel %vm5769, %v5702, 0.0
        %v5779 = vsel %vm5770, %v5703, 0.0
        %v5780 = vsel %vm5771, %v5704, 0.0
        %v5781 = vsel %vm5769, %v5705, 0.0
        %v5782 = vsel %vm5770, %v5706, 0.0
        %v5783 = vsel %vm5771, %v5707, 0.0
        %v5784 = vsel %vm5769, %v5708, 0.0
        %v5785 = vsel %vm5770, %v5709, 0.0
        %v5786 = vsel %vm5771, %v5710, 0.0
        %v5787 = vsel %vm5769, %v5711, 0.0
        %v5788 = vsel %vm5770, %v5712, 0.0
        %v5789 = vsel %vm5771, %v5713, 0.0
        %v5790 = vsel %vm5769, %v5714, 0.0
        %v5791 = vsel %vm5770, %v5715, 0.0
        %v5792 = vsel %vm5771, %v5716, 0.0
        %v5793 = vsel %vm5769, %v5717, 0.0
        %v5794 = vsel %vm5770, %v5718, 0.0
        %v5795 = vsel %vm5771, %v5719, 0.0
        %v5796 = vsel %vm5769, %v5720, 0.0
        %v5797 = vsel %vm5770, %v5721, 0.0
        %v5798 = vsel %vm5771, %v5722, 0.0
        %v5799 = vsel %vm5769, %v5723, 0.0
        %v5800 = vsel %vm5770, %v5724, 0.0
        %v5801 = vsel %vm5771, %v5725, 0.0
        %v5802 = vsel %vm5769, %v5726, 0.0
        %v5803 = vsel %vm5770, %v5727, 0.0
        %v5804 = vsel %vm5771, %v5728, 0.0
        %v5805 = vsel %vm5769, %v5729, 0.0
        %v5806 = vsel %vm5770, %v5730, 0.0
        %v5807 = vsel %vm5771, %v5731, 0.0
        %v5808 = vsel %vm5769, %v5732, 0.0
        %v5809 = vsel %vm5770, %v5733, 0.0
        %v5810 = vsel %vm5771, %v5734, 0.0
        %v5811 = vsel %vm5769, %v5735, 0.0
        %v5812 = vsel %vm5770, %v5736, 0.0
        %v5813 = vsel %vm5771, %v5737, 0.0
        %v5814 = vsel %vm5769, %v5738, 0.0
        %v5815 = vsel %vm5770, %v5739, 0.0
        %v5816 = vsel %vm5771, %v5740, 0.0
        %v5817 = vsel %vm5769, %v5741, 0.0
        %v5818 = vsel %vm5770, %v5742, 0.0
        %v5819 = vsel %vm5771, %v5743, 0.0
        %v5820 = vsel %vm5769, %v5744, 0.0
        %v5821 = vsel %vm5770, %v5745, 0.0
        %v5822 = vsel %vm5771, %v5746, 0.0
        %v5823 = vsel %vm5766, %v5747, 0.0
        %v5824 = vsel %vm5767, %v5748, 0.0
        %v5825 = vsel %vm5768, %v5749, 0.0
        %5826 = vst [vmem:[#allocation2] sm:$0xff] %v5772
        %5827 = vst [vmem:[#allocation2 + $0x8] sm:$0xff] %v5773
        %5828 = vst [vmem:[#allocation2 + $0x10] sm:$0xff] %v5774
        %5829 = vst [vmem:[#allocation2 + $0x18] sm:$0xff] %v5775
        %5830 = vst [vmem:[#allocation2 + $0x20] sm:$0xff] %v5776
        %5831 = vst [vmem:[#allocation2 + $0x28] sm:$0xff] %v5777
        %5832 = vst [vmem:[#allocation2 + $0x30] sm:$0xff] %v5778
        %5833 = vst [vmem:[#allocation2 + $0x38] sm:$0xff] %v5779
        %5834 = vst [vmem:[#allocation2 + $0x40] sm:$0xff] %v5780
        %5835 = vst [vmem:[#allocation2 + $0x48] sm:$0xff] %v5781
        %5836 = vst [vmem:[#allocation2 + $0x50] sm:$0xff] %v5782
        %5837 = vst [vmem:[#allocation2 + $0x58] sm:$0xff] %v5783
        %5838 = vst [vmem:[#allocation2 + $0x60] sm:$0xff] %v5784
        %5839 = vst [vmem:[#allocation2 + $0x68] sm:$0xff] %v5785
        %5840 = vst [vmem:[#allocation2 + $0x70] sm:$0xff] %v5786
        %5841 = vst [vmem:[#allocation2 + $0x78] sm:$0xff] %v5787
        %5842 = vst [vmem:[#allocation2 + $0x80] sm:$0xff] %v5788
        %5843 = vst [vmem:[#allocation2 + $0x88] sm:$0xff] %v5789
        %5844 = vst [vmem:[#allocation2 + $0x90] sm:$0xff] %v5790
        %5845 = vst [vmem:[#allocation2 + $0x98] sm:$0xff] %v5791
        %5846 = vst [vmem:[#allocation2 + $0xa0] sm:$0xff] %v5792
        %5847 = vst [vmem:[#allocation2 + $0xa8] sm:$0xff] %v5793
        %5848 = vst [vmem:[#allocation2 + $0xb0] sm:$0xff] %v5794
        %5849 = vst [vmem:[#allocation2 + $0xb8] sm:$0xff] %v5795
        %5850 = vst [vmem:[#allocation2 + $0xc0] sm:$0xff] %v5796
        %5851 = vst [vmem:[#allocation2 + $0xc8] sm:$0xff] %v5797
        %5852 = vst [vmem:[#allocation2 + $0xd0] sm:$0xff] %v5798
        %5853 = vst [vmem:[#allocation2 + $0xd8] sm:$0xff] %v5799
        %5854 = vst [vmem:[#allocation2 + $0xe0] sm:$0xff] %v5800
        %5855 = vst [vmem:[#allocation2 + $0xe8] sm:$0xff] %v5801
        %5856 = vst [vmem:[#allocation2 + $0xf0] sm:$0xff] %v5802
        %5857 = vst [vmem:[#allocation2 + $0xf8] sm:$0xff] %v5803
        %5858 = vst [vmem:[#allocation2 + $0x100] sm:$0xff] %v5804
        %5859 = vst [vmem:[#allocation2 + $0x108] sm:$0xff] %v5805
        %5860 = vst [vmem:[#allocation2 + $0x110] sm:$0xff] %v5806
        %5861 = vst [vmem:[#allocation2 + $0x118] sm:$0xff] %v5807
        %5862 = vst [vmem:[#allocation2 + $0x120] sm:$0xff] %v5808
        %5863 = vst [vmem:[#allocation2 + $0x128] sm:$0xff] %v5809
        %5864 = vst [vmem:[#allocation2 + $0x130] sm:$0xff] %v5810
        %5865 = vst [vmem:[#allocation2 + $0x138] sm:$0xff] %v5811
        %5866 = vst [vmem:[#allocation2 + $0x140] sm:$0xff] %v5812
        %5867 = vst [vmem:[#allocation2 + $0x148] sm:$0xff] %v5813
        %5868 = vst [vmem:[#allocation2 + $0x150] sm:$0xff] %v5814
        %5869 = vst [vmem:[#allocation2 + $0x158] sm:$0xff] %v5815
        %5870 = vst [vmem:[#allocation2 + $0x160] sm:$0xff] %v5816
        %5871 = vst [vmem:[#allocation2 + $0x168] sm:$0xff] %v5817
        %5872 = vst [vmem:[#allocation2 + $0x170] sm:$0xff] %v5818
        %5873 = vst [vmem:[#allocation2 + $0x178] sm:$0xff] %v5819
        %5874 = vst [vmem:[#allocation2 + $0x180] sm:$0xff] %v5820
        %5875 = vst [vmem:[#allocation2 + $0x188] sm:$0xff] %v5821
        %5876 = vst [vmem:[#allocation2 + $0x190] sm:$0xff] %v5822
        %5877 = vst [vmem:[#allocation2 + $0x198] sm:$0xff] %v5823
        %5878 = vst [vmem:[#allocation2 + $0x1a0] sm:$0xff] %v5824
        %5879 = vst [vmem:[#allocation2 + $0x1a8] sm:$0xff] %v5825
        %v5880 = vld [vmem:[#allocation2] sm:$0xff]
        %v5881 = vld [vmem:[#allocation2 + $0x8] sm:$0xff]
        %v5882 = vld [vmem:[#allocation2 + $0x18] sm:$0xff]
        %v5883 = vld [vmem:[#allocation2 + $0x20] sm:$0xff]
        %v5884 = vld [vmem:[#allocation2 + $0x30] sm:$0xff]
        %v5885 = vld [vmem:[#allocation2 + $0x38] sm:$0xff]
        %v5886 = vld [vmem:[#allocation2 + $0x48] sm:$0xff]
        %v5887 = vld [vmem:[#allocation2 + $0x50] sm:$0xff]
        %v5888 = vld [vmem:[#allocation2 + $0x60] sm:$0xff]
        %v5889 = vld [vmem:[#allocation2 + $0x68] sm:$0xff]
        %v5890 = vld [vmem:[#allocation2 + $0x78] sm:$0xff]
        %v5891 = vld [vmem:[#allocation2 + $0x80] sm:$0xff]
        %v5892 = vld [vmem:[#allocation2 + $0x90] sm:$0xff]
        %v5893 = vld [vmem:[#allocation2 + $0x98] sm:$0xff]
        %v5894 = vld [vmem:[#allocation2 + $0xa8] sm:$0xff]
        %v5895 = vld [vmem:[#allocation2 + $0xb0] sm:$0xff]
        %v5896 = vld [vmem:[#allocation2 + $0xc0] sm:$0xff]
        %v5897 = vld [vmem:[#allocation2 + $0xc8] sm:$0xff]
        %v5898 = vld [vmem:[#allocation2 + $0xd8] sm:$0xff]
        %v5899 = vld [vmem:[#allocation2 + $0xe0] sm:$0xff]
        %v5900 = vld [vmem:[#allocation2 + $0xf0] sm:$0xff]
        %v5901 = vld [vmem:[#allocation2 + $0xf8] sm:$0xff]
        %v5902 = vld [vmem:[#allocation2 + $0x108] sm:$0xff]
        %v5903 = vld [vmem:[#allocation2 + $0x110] sm:$0xff]
        %v5904 = vld [vmem:[#allocation2 + $0x120] sm:$0xff]
        %v5905 = vld [vmem:[#allocation2 + $0x128] sm:$0xff]
        %v5906 = vld [vmem:[#allocation2 + $0x138] sm:$0xff]
        %v5907 = vld [vmem:[#allocation2 + $0x140] sm:$0xff]
        %v5908 = vld [vmem:[#allocation2 + $0x150] sm:$0xff]
        %v5909 = vld [vmem:[#allocation2 + $0x158] sm:$0xff]
        %v5910 = vld [vmem:[#allocation2 + $0x168] sm:$0xff]
        %v5911 = vld [vmem:[#allocation2 + $0x170] sm:$0xff]
        %v5912 = vld [vmem:[%s3] sm:$0xff]
        %v5913 = vld [vmem:[%s3 + $0x8] sm:$0xff]
        %v5914 = vld [vmem:[%s3 + $0x10] sm:$0xff]
        %v5915 = vld [vmem:[%s3 + $0x18] sm:$0xff]
        %v5916 = vld [vmem:[%s3 + $0x20] sm:$0xff]
        %v5917 = vld [vmem:[%s3 + $0x28] sm:$0xff]
        %v5918 = vld [vmem:[%s3 + $0x30] sm:$0xff]
        %v5919 = vld [vmem:[%s3 + $0x38] sm:$0xff]
        %v5920 = vld [vmem:[%s3 + $0x40] sm:$0xff]
        %v5921 = vld [vmem:[%s3 + $0x48] sm:$0xff]
        %v5922 = vld [vmem:[%s3 + $0x50] sm:$0xff]
        %v5923 = vld [vmem:[%s3 + $0x58] sm:$0xff]
        %v5924 = vld [vmem:[%s3 + $0x60] sm:$0xff]
        %v5925 = vld [vmem:[%s3 + $0x68] sm:$0xff]
        %v5926 = vld [vmem:[%s3 + $0x70] sm:$0xff]
        %v5927 = vld [vmem:[%s3 + $0x78] sm:$0xff]
        %v5928 = vld [vmem:[#allocation2 + $0x1] sm:$0xff]
        %v5929 = vld [vmem:[#allocation2 + $0x9] sm:$0xff]
        %v5930 = vld [vmem:[#allocation2 + $0x19] sm:$0xff]
        %v5931 = vld [vmem:[#allocation2 + $0x21] sm:$0xff]
        %v5932 = vld [vmem:[#allocation2 + $0x31] sm:$0xff]
        %v5933 = vld [vmem:[#allocation2 + $0x39] sm:$0xff]
        %v5934 = vld [vmem:[#allocation2 + $0x49] sm:$0xff]
        %v5935 = vld [vmem:[#allocation2 + $0x51] sm:$0xff]
        %v5936 = vld [vmem:[#allocation2 + $0x61] sm:$0xff]
        %v5937 = vld [vmem:[#allocation2 + $0x69] sm:$0xff]
        %v5938 = vld [vmem:[#allocation2 + $0x79] sm:$0xff]
        %v5939 = vld [vmem:[#allocation2 + $0x81] sm:$0xff]
        %v5940 = vld [vmem:[#allocation2 + $0x91] sm:$0xff]
        %v5941 = vld [vmem:[#allocation2 + $0x99] sm:$0xff]
        %v5942 = vld [vmem:[#allocation2 + $0xa9] sm:$0xff]
        %v5943 = vld [vmem:[#allocation2 + $0xb1] sm:$0xff]
        %v5944 = vld [vmem:[#allocation2 + $0xc1] sm:$0xff]
        %v5945 = vld [vmem:[#allocation2 + $0xc9] sm:$0xff]
        %v5946 = vld [vmem:[#allocation2 + $0xd9] sm:$0xff]
        %v5947 = vld [vmem:[#allocation2 + $0xe1] sm:$0xff]
        %v5948 = vld [vmem:[#allocation2 + $0xf1] sm:$0xff]
        %v5949 = vld [vmem:[#allocation2 + $0xf9] sm:$0xff]
        %v5950 = vld [vmem:[#allocation2 + $0x109] sm:$0xff]
        %v5951 = vld [vmem:[#allocation2 + $0x111] sm:$0xff]
        %v5952 = vld [vmem:[#allocation2 + $0x121] sm:$0xff]
        %v5953 = vld [vmem:[#allocation2 + $0x129] sm:$0xff]
        %v5954 = vld [vmem:[#allocation2 + $0x139] sm:$0xff]
        %v5955 = vld [vmem:[#allocation2 + $0x141] sm:$0xff]
        %v5956 = vld [vmem:[#allocation2 + $0x151] sm:$0xff]
        %v5957 = vld [vmem:[#allocation2 + $0x159] sm:$0xff]
        %v5958 = vld [vmem:[#allocation2 + $0x169] sm:$0xff]
        %v5959 = vld [vmem:[#allocation2 + $0x171] sm:$0xff]
        %s5960 = scalar_lea.vmem %s3, 128
        %v5961 = vld [vmem:[%s5960] sm:$0xff]
        %v5962 = vld [vmem:[%s5960 + $0x8] sm:$0xff]
        %v5963 = vld [vmem:[%s5960 + $0x10] sm:$0xff]
        %v5964 = vld [vmem:[%s5960 + $0x18] sm:$0xff]
        %v5965 = vld [vmem:[%s5960 + $0x20] sm:$0xff]
        %v5966 = vld [vmem:[%s5960 + $0x28] sm:$0xff]
        %v5967 = vld [vmem:[%s5960 + $0x30] sm:$0xff]
        %v5968 = vld [vmem:[%s5960 + $0x38] sm:$0xff]
        %v5969 = vld [vmem:[%s5960 + $0x40] sm:$0xff]
        %v5970 = vld [vmem:[%s5960 + $0x48] sm:$0xff]
        %v5971 = vld [vmem:[%s5960 + $0x50] sm:$0xff]
        %v5972 = vld [vmem:[%s5960 + $0x58] sm:$0xff]
        %v5973 = vld [vmem:[%s5960 + $0x60] sm:$0xff]
        %v5974 = vld [vmem:[%s5960 + $0x68] sm:$0xff]
        %v5975 = vld [vmem:[%s5960 + $0x70] sm:$0xff]
        %v5976 = vld [vmem:[%s5960 + $0x78] sm:$0xff]
        %5977 = vmatprep.subr.mxu0 0.0
        %5978 = vmatpush1.msra.mxu0 %v5961
        %5979 = vmatprep.subr.mxu0 0.0
        %5980 = vmatpush1.msra.mxu0 %v5962
        %5981 = vmatprep.subr.mxu0 0.0
        %5982 = vmatpush1.msra.mxu0 %v5963
        %5983 = vmatprep.subr.mxu0 0.0
        %5984 = vmatpush1.msra.mxu0 %v5964
        %5985 = vmatprep.subr.mxu0 0.0
        %5986 = vmatpush1.msra.mxu0 %v5965
        %5987 = vmatprep.subr.mxu0 0.0
        %5988 = vmatpush1.msra.mxu0 %v5966
        %5989 = vmatprep.subr.mxu0 0.0
        %5990 = vmatpush1.msra.mxu0 %v5967
        %5991 = vmatprep.subr.mxu0 0.0
        %5992 = vmatpush1.msra.mxu0 %v5968
        %5993 = vmatprep.subr.mxu0 0.0
        %5994 = vmatpush1.msra.mxu0 %v5969
        %5995 = vmatprep.subr.mxu0 0.0
        %5996 = vmatpush1.msra.mxu0 %v5970
        %5997 = vmatprep.subr.mxu0 0.0
        %5998 = vmatpush1.msra.mxu0 %v5971
        %5999 = vmatprep.subr.mxu0 0.0
        %6000 = vmatpush1.msra.mxu0 %v5972
        %6001 = vmatprep.subr.mxu0 0.0
        %6002 = vmatpush1.msra.mxu0 %v5973
        %6003 = vmatprep.subr.mxu0 0.0
        %6004 = vmatpush1.msra.mxu0 %v5974
        %6005 = vmatprep.subr.mxu0 0.0
        %6006 = vmatpush1.msra.mxu0 %v5975
        %6007 = vmatprep.subr.mxu0 0.0
        %6008 = vmatpush1.msra.mxu0 %v5976
        %6009 = vmatprep.subr.mxu0 0.0
        %6010 = vmatpush1.msra.mxu0 0.0
        %6011 = vmatprep.subr.mxu0 0.0
        %6012 = vmatpush1.msra.mxu0 0.0
        %6013 = vmatprep.subr.mxu0 0.0
        %6014 = vmatpush1.msra.mxu0 0.0
        %6015 = vmatprep.subr.mxu0 0.0
        %6016 = vmatpush1.msra.mxu0 0.0
        %6017 = vmatprep.subr.mxu0 0.0
        %6018 = vmatpush1.msra.mxu0 0.0
        %6019 = vmatprep.subr.mxu0 0.0
        %6020 = vmatpush1.msra.mxu0 0.0
        %6021 = vmatprep.subr.mxu0 0.0
        %6022 = vmatpush1.msra.mxu0 0.0
        %6023 = vmatprep.subr.mxu0 0.0
        %6024 = vmatpush1.msra.mxu0 0.0
        %6025 = vmatprep.subr.mxu0 0.0
        %6026 = vmatpush1.msra.mxu0 0.0
        %6027 = vmatprep.subr.mxu0 0.0
        %6028 = vmatpush1.msra.mxu0 0.0
        %6029 = vmatprep.subr.mxu0 0.0
        %6030 = vmatpush1.msra.mxu0 0.0
        %6031 = vmatprep.subr.mxu0 0.0
        %6032 = vmatpush1.msra.mxu0 0.0
        %6033 = vmatprep.subr.mxu0 0.0
        %6034 = vmatpush1.msra.mxu0 0.0
        %6035 = vmatprep.subr.mxu0 0.0
        %6036 = vmatpush1.msra.mxu0 0.0
        %6037 = vmatprep.subr.mxu0 0.0
        %6038 = vmatpush1.msra.mxu0 0.0
        %6039 = vmatprep.subr.mxu0 0.0
        %6040 = vmatpush1.msra.mxu0 0.0
        %6041 = vmatprep.mubr.f32.mxu0 0.0
        %6042 = vmatmul.mubr.f32.gmra.mrb[0].mxu0 %v5928
        %v6043 = vpop.f32.mrb[0].mxu0
        %v6044 = vadd.f32 0.0, %v6043
        %v6045 = vpop.f32.mrb[0].mxu0
        %6046 = vmatprep.mubr.f32.mxu0 0.0
        %6047 = vmatmul.mubr.f32.gmra.mrb[0].mxu0 %v5929
        %v6048 = vpop.f32.mrb[0].mxu0
        %v6049 = vadd.f32 0.0, %v6048
        %v6050 = vpop.f32.mrb[0].mxu0
        %6051 = vmatprep.mubr.f32.mxu0 0.0
        %6052 = vmatmul.mubr.f32.gmra.mrb[0].mxu0 %v5930
        %v6053 = vpop.f32.mrb[0].mxu0
        %v6054 = vadd.f32 0.0, %v6053
        %v6055 = vpop.f32.mrb[0].mxu0
        %6056 = vmatprep.mubr.f32.mxu0 0.0
        %6057 = vmatmul.mubr.f32.gmra.mrb[0].mxu0 %v5931
        %v6058 = vpop.f32.mrb[0].mxu0
        %v6059 = vadd.f32 0.0, %v6058
        %v6060 = vpop.f32.mrb[0].mxu0
        %6061 = vmatprep.mubr.f32.mxu0 0.0
        %6062 = vmatmul.mubr.f32.gmra.mrb[0].mxu0 %v5932
        %v6063 = vpop.f32.mrb[0].mxu0
        %v6064 = vadd.f32 0.0, %v6063
        %v6065 = vpop.f32.mrb[0].mxu0
        %6066 = vmatprep.mubr.f32.mxu0 0.0
        %6067 = vmatmul.mubr.f32.gmra.mrb[0].mxu0 %v5933
        %v6068 = vpop.f32.mrb[0].mxu0
        %v6069 = vadd.f32 0.0, %v6068
        %v6070 = vpop.f32.mrb[0].mxu0
        %6071 = vmatprep.mubr.f32.mxu0 0.0
        %6072 = vmatmul.mubr.f32.gmra.mrb[0].mxu0 %v5934
        %v6073 = vpop.f32.mrb[0].mxu0
        %v6074 = vadd.f32 0.0, %v6073
        %v6075 = vpop.f32.mrb[0].mxu0
        %6076 = vmatprep.mubr.f32.mxu0 0.0
        %6077 = vmatmul.mubr.f32.gmra.mrb[0].mxu0 %v5935
        %v6078 = vpop.f32.mrb[0].mxu0
        %v6079 = vadd.f32 0.0, %v6078
        %v6080 = vpop.f32.mrb[0].mxu0
        %6081 = vmatprep.mubr.f32.mxu0 0.0
        %6082 = vmatmul.mubr.f32.gmra.mrb[0].mxu0 %v5936
        %v6083 = vpop.f32.mrb[0].mxu0
        %v6084 = vadd.f32 0.0, %v6083
        %v6085 = vpop.f32.mrb[0].mxu0
        %6086 = vmatprep.mubr.f32.mxu0 0.0
        %6087 = vmatmul.mubr.f32.gmra.mrb[0].mxu0 %v5937
        %v6088 = vpop.f32.mrb[0].mxu0
        %v6089 = vadd.f32 0.0, %v6088
        %v6090 = vpop.f32.mrb[0].mxu0
        %6091 = vmatprep.mubr.f32.mxu0 0.0
        %6092 = vmatmul.mubr.f32.gmra.mrb[0].mxu0 %v5938
        %v6093 = vpop.f32.mrb[0].mxu0
        %v6094 = vadd.f32 0.0, %v6093
        %v6095 = vpop.f32.mrb[0].mxu0
        %6096 = vmatprep.mubr.f32.mxu0 0.0
        %6097 = vmatmul.mubr.f32.gmra.mrb[0].mxu0 %v5939
        %v6098 = vpop.f32.mrb[0].mxu0
        %v6099 = vadd.f32 0.0, %v6098
        %v6100 = vpop.f32.mrb[0].mxu0
        %6101 = vmatprep.mubr.f32.mxu0 0.0
        %6102 = vmatmul.mubr.f32.gmra.mrb[0].mxu0 %v5940
        %v6103 = vpop.f32.mrb[0].mxu0
        %v6104 = vadd.f32 0.0, %v6103
        %v6105 = vpop.f32.mrb[0].mxu0
        %6106 = vmatprep.mubr.f32.mxu0 0.0
        %6107 = vmatmul.mubr.f32.gmra.mrb[0].mxu0 %v5941
        %v6108 = vpop.f32.mrb[0].mxu0
        %v6109 = vadd.f32 0.0, %v6108
        %v6110 = vpop.f32.mrb[0].mxu0
        %6111 = vmatprep.mubr.f32.mxu0 0.0
        %6112 = vmatmul.mubr.f32.gmra.mrb[0].mxu0 %v5942
        %v6113 = vpop.f32.mrb[0].mxu0
        %v6114 = vadd.f32 0.0, %v6113
        %v6115 = vpop.f32.mrb[0].mxu0
        %6116 = vmatprep.mubr.f32.mxu0 0.0
        %6117 = vmatmul.mubr.f32.gmra.mrb[0].mxu0 %v5943
        %v6118 = vpop.f32.mrb[0].mxu0
        %v6119 = vadd.f32 0.0, %v6118
        %v6120 = vpop.f32.mrb[0].mxu0
        %6121 = vmatprep.mubr.f32.mxu0 0.0
        %6122 = vmatmul.mubr.f32.gmra.mrb[0].mxu0 %v5944
        %v6123 = vpop.f32.mrb[0].mxu0
        %v6124 = vadd.f32 0.0, %v6123
        %v6125 = vpop.f32.mrb[0].mxu0
        %6126 = vmatprep.mubr.f32.mxu0 0.0
        %6127 = vmatmul.mubr.f32.gmra.mrb[0].mxu0 %v5945
        %v6128 = vpop.f32.mrb[0].mxu0
        %v6129 = vadd.f32 0.0, %v6128
        %v6130 = vpop.f32.mrb[0].mxu0
        %6131 = vmatprep.mubr.f32.mxu0 0.0
        %6132 = vmatmul.mubr.f32.gmra.mrb[0].mxu0 %v5946
        %v6133 = vpop.f32.mrb[0].mxu0
        %v6134 = vadd.f32 0.0, %v6133
        %v6135 = vpop.f32.mrb[0].mxu0
        %6136 = vmatprep.mubr.f32.mxu0 0.0
        %6137 = vmatmul.mubr.f32.gmra.mrb[0].mxu0 %v5947
        %v6138 = vpop.f32.mrb[0].mxu0
        %v6139 = vadd.f32 0.0, %v6138
        %v6140 = vpop.f32.mrb[0].mxu0
        %6141 = vmatprep.mubr.f32.mxu0 0.0
        %6142 = vmatmul.mubr.f32.gmra.mrb[0].mxu0 %v5948
        %v6143 = vpop.f32.mrb[0].mxu0
        %v6144 = vadd.f32 0.0, %v6143
        %v6145 = vpop.f32.mrb[0].mxu0
        %6146 = vmatprep.mubr.f32.mxu0 0.0
        %6147 = vmatmul.mubr.f32.gmra.mrb[0].mxu0 %v5949
        %v6148 = vpop.f32.mrb[0].mxu0
        %v6149 = vadd.f32 0.0, %v6148
        %v6150 = vpop.f32.mrb[0].mxu0
        %6151 = vmatprep.mubr.f32.mxu0 0.0
        %6152 = vmatmul.mubr.f32.gmra.mrb[0].mxu0 %v5950
        %v6153 = vpop.f32.mrb[0].mxu0
        %v6154 = vadd.f32 0.0, %v6153
        %v6155 = vpop.f32.mrb[0].mxu0
        %6156 = vmatprep.mubr.f32.mxu0 0.0
        %6157 = vmatmul.mubr.f32.gmra.mrb[0].mxu0 %v5951
        %v6158 = vpop.f32.mrb[0].mxu0
        %v6159 = vadd.f32 0.0, %v6158
        %v6160 = vpop.f32.mrb[0].mxu0
        %6161 = vmatprep.mubr.f32.mxu0 0.0
        %6162 = vmatmul.mubr.f32.gmra.mrb[0].mxu0 %v5952
        %v6163 = vpop.f32.mrb[0].mxu0
        %v6164 = vadd.f32 0.0, %v6163
        %v6165 = vpop.f32.mrb[0].mxu0
        %6166 = vmatprep.mubr.f32.mxu0 0.0
        %6167 = vmatmul.mubr.f32.gmra.mrb[0].mxu0 %v5953
        %v6168 = vpop.f32.mrb[0].mxu0
        %v6169 = vadd.f32 0.0, %v6168
        %v6170 = vpop.f32.mrb[0].mxu0
        %6171 = vmatprep.mubr.f32.mxu0 0.0
        %6172 = vmatmul.mubr.f32.gmra.mrb[0].mxu0 %v5954
        %v6173 = vpop.f32.mrb[0].mxu0
        %v6174 = vadd.f32 0.0, %v6173
        %v6175 = vpop.f32.mrb[0].mxu0
        %6176 = vmatprep.mubr.f32.mxu0 0.0
        %6177 = vmatmul.mubr.f32.gmra.mrb[0].mxu0 %v5955
        %v6178 = vpop.f32.mrb[0].mxu0
        %v6179 = vadd.f32 0.0, %v6178
        %v6180 = vpop.f32.mrb[0].mxu0
        %6181 = vmatprep.mubr.f32.mxu0 0.0
        %6182 = vmatmul.mubr.f32.gmra.mrb[0].mxu0 %v5956
        %v6183 = vpop.f32.mrb[0].mxu0
        %v6184 = vadd.f32 0.0, %v6183
        %v6185 = vpop.f32.mrb[0].mxu0
        %6186 = vmatprep.mubr.f32.mxu0 0.0
        %6187 = vmatmul.mubr.f32.gmra.mrb[0].mxu0 %v5957
        %v6188 = vpop.f32.mrb[0].mxu0
        %v6189 = vadd.f32 0.0, %v6188
        %v6190 = vpop.f32.mrb[0].mxu0
        %6191 = vmatprep.mubr.f32.mxu0 0.0
        %6192 = vmatmul.mubr.f32.gmra.mrb[0].mxu0 %v5958
        %v6193 = vpop.f32.mrb[0].mxu0
        %v6194 = vadd.f32 0.0, %v6193
        %v6195 = vpop.f32.mrb[0].mxu0
        %6196 = vmatprep.mubr.f32.mxu0 0.0
        %6197 = vmatmul.mubr.f32.gmra.mrb[0].mxu0 %v5959
        %v6198 = vpop.f32.mrb[0].mxu0
        %v6199 = vadd.f32 0.0, %v6198
        %v6200 = vpop.f32.mrb[0].mxu0
        %6201 = vdwg.mxu0
        %6202 = vmatprep.subr.mxu0 0.0
        %6203 = vmatpush1.msra.mxu0 %v5912
        %6204 = vmatprep.subr.mxu0 0.0
        %6205 = vmatpush1.msra.mxu0 %v5913
        %6206 = vmatprep.subr.mxu0 0.0
        %6207 = vmatpush1.msra.mxu0 %v5914
        %6208 = vmatprep.subr.mxu0 0.0
        %6209 = vmatpush1.msra.mxu0 %v5915
        %6210 = vmatprep.subr.mxu0 0.0
        %6211 = vmatpush1.msra.mxu0 %v5916
        %6212 = vmatprep.subr.mxu0 0.0
        %6213 = vmatpush1.msra.mxu0 %v5917
        %6214 = vmatprep.subr.mxu0 0.0
        %6215 = vmatpush1.msra.mxu0 %v5918
        %6216 = vmatprep.subr.mxu0 0.0
        %6217 = vmatpush1.msra.mxu0 %v5919
        %6218 = vmatprep.subr.mxu0 0.0
        %6219 = vmatpush1.msra.mxu0 %v5920
        %6220 = vmatprep.subr.mxu0 0.0
        %6221 = vmatpush1.msra.mxu0 %v5921
        %6222 = vmatprep.subr.mxu0 0.0
        %6223 = vmatpush1.msra.mxu0 %v5922
        %6224 = vmatprep.subr.mxu0 0.0
        %6225 = vmatpush1.msra.mxu0 %v5923
        %6226 = vmatprep.subr.mxu0 0.0
        %6227 = vmatpush1.msra.mxu0 %v5924
        %6228 = vmatprep.subr.mxu0 0.0
        %6229 = vmatpush1.msra.mxu0 %v5925
        %6230 = vmatprep.subr.mxu0 0.0
        %6231 = vmatpush1.msra.mxu0 %v5926
        %6232 = vmatprep.subr.mxu0 0.0
        %6233 = vmatpush1.msra.mxu0 %v5927
        %6234 = vmatprep.subr.mxu0 0.0
        %6235 = vmatpush1.msra.mxu0 0.0
        %6236 = vmatprep.subr.mxu0 0.0
        %6237 = vmatpush1.msra.mxu0 0.0
        %6238 = vmatprep.subr.mxu0 0.0
        %6239 = vmatpush1.msra.mxu0 0.0
        %6240 = vmatprep.subr.mxu0 0.0
        %6241 = vmatpush1.msra.mxu0 0.0
        %6242 = vmatprep.subr.mxu0 0.0
        %6243 = vmatpush1.msra.mxu0 0.0
        %6244 = vmatprep.subr.mxu0 0.0
        %6245 = vmatpush1.msra.mxu0 0.0
        %6246 = vmatprep.subr.mxu0 0.0
        %6247 = vmatpush1.msra.mxu0 0.0
        %6248 = vmatprep.subr.mxu0 0.0
        %6249 = vmatpush1.msra.mxu0 0.0
        %6250 = vmatprep.subr.mxu0 0.0
        %6251 = vmatpush1.msra.mxu0 0.0
        %6252 = vmatprep.subr.mxu0 0.0
        %6253 = vmatpush1.msra.mxu0 0.0
        %6254 = vmatprep.subr.mxu0 0.0
        %6255 = vmatpush1.msra.mxu0 0.0
        %6256 = vmatprep.subr.mxu0 0.0
        %6257 = vmatpush1.msra.mxu0 0.0
        %6258 = vmatprep.subr.mxu0 0.0
        %6259 = vmatpush1.msra.mxu0 0.0
        %6260 = vmatprep.subr.mxu0 0.0
        %6261 = vmatpush1.msra.mxu0 0.0
        %6262 = vmatprep.subr.mxu0 0.0
        %6263 = vmatpush1.msra.mxu0 0.0
        %6264 = vmatprep.subr.mxu0 0.0
        %6265 = vmatpush1.msra.mxu0 0.0
        %6266 = vmatprep.mubr.f32.mxu0 0.0
        %6267 = vmatmul.mubr.f32.gmra.mrb[0].mxu0 %v5880
        %v6268 = vpop.f32.mrb[0].mxu0
        %v6269 = vadd.f32 %v6044, %v6268
        %v6270 = vpop.f32.mrb[0].mxu0
        %6271 = vmatprep.mubr.f32.mxu0 0.0
        %6272 = vmatmul.mubr.f32.gmra.mrb[0].mxu0 %v5881
        %v6273 = vpop.f32.mrb[0].mxu0
        %v6274 = vadd.f32 %v6049, %v6273
        %v6275 = vpop.f32.mrb[0].mxu0
        %6276 = vmatprep.mubr.f32.mxu0 0.0
        %6277 = vmatmul.mubr.f32.gmra.mrb[0].mxu0 %v5882
        %v6278 = vpop.f32.mrb[0].mxu0
        %v6279 = vadd.f32 %v6054, %v6278
        %v6280 = vpop.f32.mrb[0].mxu0
        %6281 = vmatprep.mubr.f32.mxu0 0.0
        %6282 = vmatmul.mubr.f32.gmra.mrb[0].mxu0 %v5883
        %v6283 = vpop.f32.mrb[0].mxu0
        %v6284 = vadd.f32 %v6059, %v6283
        %v6285 = vpop.f32.mrb[0].mxu0
        %6286 = vmatprep.mubr.f32.mxu0 0.0
        %6287 = vmatmul.mubr.f32.gmra.mrb[0].mxu0 %v5884
        %v6288 = vpop.f32.mrb[0].mxu0
        %v6289 = vadd.f32 %v6064, %v6288
        %v6290 = vpop.f32.mrb[0].mxu0
        %6291 = vmatprep.mubr.f32.mxu0 0.0
        %6292 = vmatmul.mubr.f32.gmra.mrb[0].mxu0 %v5885
        %v6293 = vpop.f32.mrb[0].mxu0
        %v6294 = vadd.f32 %v6069, %v6293
        %v6295 = vpop.f32.mrb[0].mxu0
        %6296 = vmatprep.mubr.f32.mxu0 0.0
        %6297 = vmatmul.mubr.f32.gmra.mrb[0].mxu0 %v5886
        %v6298 = vpop.f32.mrb[0].mxu0
        %v6299 = vadd.f32 %v6074, %v6298
        %v6300 = vpop.f32.mrb[0].mxu0
        %6301 = vmatprep.mubr.f32.mxu0 0.0
        %6302 = vmatmul.mubr.f32.gmra.mrb[0].mxu0 %v5887
        %v6303 = vpop.f32.mrb[0].mxu0
        %v6304 = vadd.f32 %v6079, %v6303
        %v6305 = vpop.f32.mrb[0].mxu0
        %6306 = vmatprep.mubr.f32.mxu0 0.0
        %6307 = vmatmul.mubr.f32.gmra.mrb[0].mxu0 %v5888
        %v6308 = vpop.f32.mrb[0].mxu0
        %v6309 = vadd.f32 %v6084, %v6308
        %v6310 = vpop.f32.mrb[0].mxu0
        %6311 = vmatprep.mubr.f32.mxu0 0.0
        %6312 = vmatmul.mubr.f32.gmra.mrb[0].mxu0 %v5889
        %v6313 = vpop.f32.mrb[0].mxu0
        %v6314 = vadd.f32 %v6089, %v6313
        %v6315 = vpop.f32.mrb[0].mxu0
        %6316 = vmatprep.mubr.f32.mxu0 0.0
        %6317 = vmatmul.mubr.f32.gmra.mrb[0].mxu0 %v5890
        %v6318 = vpop.f32.mrb[0].mxu0
        %v6319 = vadd.f32 %v6094, %v6318
        %v6320 = vpop.f32.mrb[0].mxu0
        %6321 = vmatprep.mubr.f32.mxu0 0.0
        %6322 = vmatmul.mubr.f32.gmra.mrb[0].mxu0 %v5891
        %v6323 = vpop.f32.mrb[0].mxu0
        %v6324 = vadd.f32 %v6099, %v6323
        %v6325 = vpop.f32.mrb[0].mxu0
        %6326 = vmatprep.mubr.f32.mxu0 0.0
        %6327 = vmatmul.mubr.f32.gmra.mrb[0].mxu0 %v5892
        %v6328 = vpop.f32.mrb[0].mxu0
        %v6329 = vadd.f32 %v6104, %v6328
        %v6330 = vpop.f32.mrb[0].mxu0
        %6331 = vmatprep.mubr.f32.mxu0 0.0
        %6332 = vmatmul.mubr.f32.gmra.mrb[0].mxu0 %v5893
        %v6333 = vpop.f32.mrb[0].mxu0
        %v6334 = vadd.f32 %v6109, %v6333
        %v6335 = vpop.f32.mrb[0].mxu0
        %6336 = vmatprep.mubr.f32.mxu0 0.0
        %6337 = vmatmul.mubr.f32.gmra.mrb[0].mxu0 %v5894
        %v6338 = vpop.f32.mrb[0].mxu0
        %v6339 = vadd.f32 %v6114, %v6338
        %v6340 = vpop.f32.mrb[0].mxu0
        %6341 = vmatprep.mubr.f32.mxu0 0.0
        %6342 = vmatmul.mubr.f32.gmra.mrb[0].mxu0 %v5895
        %v6343 = vpop.f32.mrb[0].mxu0
        %v6344 = vadd.f32 %v6119, %v6343
        %v6345 = vpop.f32.mrb[0].mxu0
        %6346 = vmatprep.mubr.f32.mxu0 0.0
        %6347 = vmatmul.mubr.f32.gmra.mrb[0].mxu0 %v5896
        %v6348 = vpop.f32.mrb[0].mxu0
        %v6349 = vadd.f32 %v6124, %v6348
        %v6350 = vpop.f32.mrb[0].mxu0
        %6351 = vmatprep.mubr.f32.mxu0 0.0
        %6352 = vmatmul.mubr.f32.gmra.mrb[0].mxu0 %v5897
        %v6353 = vpop.f32.mrb[0].mxu0
        %v6354 = vadd.f32 %v6129, %v6353
        %v6355 = vpop.f32.mrb[0].mxu0
        %6356 = vmatprep.mubr.f32.mxu0 0.0
        %6357 = vmatmul.mubr.f32.gmra.mrb[0].mxu0 %v5898
        %v6358 = vpop.f32.mrb[0].mxu0
        %v6359 = vadd.f32 %v6134, %v6358
        %v6360 = vpop.f32.mrb[0].mxu0
        %6361 = vmatprep.mubr.f32.mxu0 0.0
        %6362 = vmatmul.mubr.f32.gmra.mrb[0].mxu0 %v5899
        %v6363 = vpop.f32.mrb[0].mxu0
        %v6364 = vadd.f32 %v6139, %v6363
        %v6365 = vpop.f32.mrb[0].mxu0
        %6366 = vmatprep.mubr.f32.mxu0 0.0
        %6367 = vmatmul.mubr.f32.gmra.mrb[0].mxu0 %v5900
        %v6368 = vpop.f32.mrb[0].mxu0
        %v6369 = vadd.f32 %v6144, %v6368
        %v6370 = vpop.f32.mrb[0].mxu0
        %6371 = vmatprep.mubr.f32.mxu0 0.0
        %6372 = vmatmul.mubr.f32.gmra.mrb[0].mxu0 %v5901
        %v6373 = vpop.f32.mrb[0].mxu0
        %v6374 = vadd.f32 %v6149, %v6373
        %v6375 = vpop.f32.mrb[0].mxu0
        %6376 = vmatprep.mubr.f32.mxu0 0.0
        %6377 = vmatmul.mubr.f32.gmra.mrb[0].mxu0 %v5902
        %v6378 = vpop.f32.mrb[0].mxu0
        %v6379 = vadd.f32 %v6154, %v6378
        %v6380 = vpop.f32.mrb[0].mxu0
        %6381 = vmatprep.mubr.f32.mxu0 0.0
        %6382 = vmatmul.mubr.f32.gmra.mrb[0].mxu0 %v5903
        %v6383 = vpop.f32.mrb[0].mxu0
        %v6384 = vadd.f32 %v6159, %v6383
        %v6385 = vpop.f32.mrb[0].mxu0
        %6386 = vmatprep.mubr.f32.mxu0 0.0
        %6387 = vmatmul.mubr.f32.gmra.mrb[0].mxu0 %v5904
        %v6388 = vpop.f32.mrb[0].mxu0
        %v6389 = vadd.f32 %v6164, %v6388
        %v6390 = vpop.f32.mrb[0].mxu0
        %6391 = vmatprep.mubr.f32.mxu0 0.0
        %6392 = vmatmul.mubr.f32.gmra.mrb[0].mxu0 %v5905
        %v6393 = vpop.f32.mrb[0].mxu0
        %v6394 = vadd.f32 %v6169, %v6393
        %v6395 = vpop.f32.mrb[0].mxu0
        %6396 = vmatprep.mubr.f32.mxu0 0.0
        %6397 = vmatmul.mubr.f32.gmra.mrb[0].mxu0 %v5906
        %v6398 = vpop.f32.mrb[0].mxu0
        %v6399 = vadd.f32 %v6174, %v6398
        %v6400 = vpop.f32.mrb[0].mxu0
        %6401 = vmatprep.mubr.f32.mxu0 0.0
        %6402 = vmatmul.mubr.f32.gmra.mrb[0].mxu0 %v5907
        %v6403 = vpop.f32.mrb[0].mxu0
        %v6404 = vadd.f32 %v6179, %v6403
        %v6405 = vpop.f32.mrb[0].mxu0
        %6406 = vmatprep.mubr.f32.mxu0 0.0
        %6407 = vmatmul.mubr.f32.gmra.mrb[0].mxu0 %v5908
        %v6408 = vpop.f32.mrb[0].mxu0
        %v6409 = vadd.f32 %v6184, %v6408
        %v6410 = vpop.f32.mrb[0].mxu0
        %6411 = vmatprep.mubr.f32.mxu0 0.0
        %6412 = vmatmul.mubr.f32.gmra.mrb[0].mxu0 %v5909
        %v6413 = vpop.f32.mrb[0].mxu0
        %v6414 = vadd.f32 %v6189, %v6413
        %v6415 = vpop.f32.mrb[0].mxu0
        %6416 = vmatprep.mubr.f32.mxu0 0.0
        %6417 = vmatmul.mubr.f32.gmra.mrb[0].mxu0 %v5910
        %v6418 = vpop.f32.mrb[0].mxu0
        %v6419 = vadd.f32 %v6194, %v6418
        %v6420 = vpop.f32.mrb[0].mxu0
        %6421 = vmatprep.mubr.f32.mxu0 0.0
        %6422 = vmatmul.mubr.f32.gmra.mrb[0].mxu0 %v5911
        %v6423 = vpop.f32.mrb[0].mxu0
        %v6424 = vadd.f32 %v6199, %v6423
        %v6425 = vpop.f32.mrb[0].mxu0
        %6426 = vdwg.mxu0
        %v6427 = vld [vmem:[#allocation2 + $0x2] sm:$0xff]
        %v6428 = vld [vmem:[#allocation2 + $0xa] sm:$0xff]
        %v6429 = vld [vmem:[#allocation2 + $0x1a] sm:$0xff]
        %v6430 = vld [vmem:[#allocation2 + $0x22] sm:$0xff]
        %v6431 = vld [vmem:[#allocation2 + $0x32] sm:$0xff]
        %v6432 = vld [vmem:[#allocation2 + $0x3a] sm:$0xff]
        %v6433 = vld [vmem:[#allocation2 + $0x4a] sm:$0xff]
        %v6434 = vld [vmem:[#allocation2 + $0x52] sm:$0xff]
        %v6435 = vld [vmem:[#allocation2 + $0x62] sm:$0xff]
        %v6436 = vld [vmem:[#allocation2 + $0x6a] sm:$0xff]
        %v6437 = vld [vmem:[#allocation2 + $0x7a] sm:$0xff]
        %v6438 = vld [vmem:[#allocation2 + $0x82] sm:$0xff]
        %v6439 = vld [vmem:[#allocation2 + $0x92] sm:$0xff]
        %v6440 = vld [vmem:[#allocation2 + $0x9a] sm:$0xff]
        %v6441 = vld [vmem:[#allocation2 + $0xaa] sm:$0xff]
        %v6442 = vld [vmem:[#allocation2 + $0xb2] sm:$0xff]
        %v6443 = vld [vmem:[#allocation2 + $0xc2] sm:$0xff]
        %v6444 = vld [vmem:[#allocation2 + $0xca] sm:$0xff]
        %v6445 = vld [vmem:[#allocation2 + $0xda] sm:$0xff]
        %v6446 = vld [vmem:[#allocation2 + $0xe2] sm:$0xff]
        %v6447 = vld [vmem:[#allocation2 + $0xf2] sm:$0xff]
        %v6448 = vld [vmem:[#allocation2 + $0xfa] sm:$0xff]
        %v6449 = vld [vmem:[#allocation2 + $0x10a] sm:$0xff]
        %v6450 = vld [vmem:[#allocation2 + $0x112] sm:$0xff]
        %v6451 = vld [vmem:[#allocation2 + $0x122] sm:$0xff]
        %v6452 = vld [vmem:[#allocation2 + $0x12a] sm:$0xff]
        %v6453 = vld [vmem:[#allocation2 + $0x13a] sm:$0xff]
        %v6454 = vld [vmem:[#allocation2 + $0x142] sm:$0xff]
        %v6455 = vld [vmem:[#allocation2 + $0x152] sm:$0xff]
        %v6456 = vld [vmem:[#allocation2 + $0x15a] sm:$0xff]
        %v6457 = vld [vmem:[#allocation2 + $0x16a] sm:$0xff]
        %v6458 = vld [vmem:[#allocation2 + $0x172] sm:$0xff]
        %s6459 = scalar_lea.vmem %s3, 256
        %v6460 = vld [vmem:[%s6459] sm:$0xff]
        %v6461 = vld [vmem:[%s6459 + $0x8] sm:$0xff]
        %v6462 = vld [vmem:[%s6459 + $0x10] sm:$0xff]
        %v6463 = vld [vmem:[%s6459 + $0x18] sm:$0xff]
        %v6464 = vld [vmem:[%s6459 + $0x20] sm:$0xff]
        %v6465 = vld [vmem:[%s6459 + $0x28] sm:$0xff]
        %v6466 = vld [vmem:[%s6459 + $0x30] sm:$0xff]
        %v6467 = vld [vmem:[%s6459 + $0x38] sm:$0xff]
        %v6468 = vld [vmem:[%s6459 + $0x40] sm:$0xff]
        %v6469 = vld [vmem:[%s6459 + $0x48] sm:$0xff]
        %v6470 = vld [vmem:[%s6459 + $0x50] sm:$0xff]
        %v6471 = vld [vmem:[%s6459 + $0x58] sm:$0xff]
        %v6472 = vld [vmem:[%s6459 + $0x60] sm:$0xff]
        %v6473 = vld [vmem:[%s6459 + $0x68] sm:$0xff]
        %v6474 = vld [vmem:[%s6459 + $0x70] sm:$0xff]
        %v6475 = vld [vmem:[%s6459 + $0x78] sm:$0xff]
        %6476 = vmatprep.subr.mxu0 0.0
        %6477 = vmatpush1.msra.mxu0 %v6460
        %6478 = vmatprep.subr.mxu0 0.0
        %6479 = vmatpush1.msra.mxu0 %v6461
        %6480 = vmatprep.subr.mxu0 0.0
        %6481 = vmatpush1.msra.mxu0 %v6462
        %6482 = vmatprep.subr.mxu0 0.0
        %6483 = vmatpush1.msra.mxu0 %v6463
        %6484 = vmatprep.subr.mxu0 0.0
        %6485 = vmatpush1.msra.mxu0 %v6464
        %6486 = vmatprep.subr.mxu0 0.0
        %6487 = vmatpush1.msra.mxu0 %v6465
        %6488 = vmatprep.subr.mxu0 0.0
        %6489 = vmatpush1.msra.mxu0 %v6466
        %6490 = vmatprep.subr.mxu0 0.0
        %6491 = vmatpush1.msra.mxu0 %v6467
        %6492 = vmatprep.subr.mxu0 0.0
        %6493 = vmatpush1.msra.mxu0 %v6468
        %6494 = vmatprep.subr.mxu0 0.0
        %6495 = vmatpush1.msra.mxu0 %v6469
        %6496 = vmatprep.subr.mxu0 0.0
        %6497 = vmatpush1.msra.mxu0 %v6470
        %6498 = vmatprep.subr.mxu0 0.0
        %6499 = vmatpush1.msra.mxu0 %v6471
        %6500 = vmatprep.subr.mxu0 0.0
        %6501 = vmatpush1.msra.mxu0 %v6472
        %6502 = vmatprep.subr.mxu0 0.0
        %6503 = vmatpush1.msra.mxu0 %v6473
        %6504 = vmatprep.subr.mxu0 0.0
        %6505 = vmatpush1.msra.mxu0 %v6474
        %6506 = vmatprep.subr.mxu0 0.0
        %6507 = vmatpush1.msra.mxu0 %v6475
        %6508 = vmatprep.subr.mxu0 0.0
        %6509 = vmatpush1.msra.mxu0 0.0
        %6510 = vmatprep.subr.mxu0 0.0
        %6511 = vmatpush1.msra.mxu0 0.0
        %6512 = vmatprep.subr.mxu0 0.0
        %6513 = vmatpush1.msra.mxu0 0.0
        %6514 = vmatprep.subr.mxu0 0.0
        %6515 = vmatpush1.msra.mxu0 0.0
        %6516 = vmatprep.subr.mxu0 0.0
        %6517 = vmatpush1.msra.mxu0 0.0
        %6518 = vmatprep.subr.mxu0 0.0
        %6519 = vmatpush1.msra.mxu0 0.0
        %6520 = vmatprep.subr.mxu0 0.0
        %6521 = vmatpush1.msra.mxu0 0.0
        %6522 = vmatprep.subr.mxu0 0.0
        %6523 = vmatpush1.msra.mxu0 0.0
        %6524 = vmatprep.subr.mxu0 0.0
        %6525 = vmatpush1.msra.mxu0 0.0
        %6526 = vmatprep.subr.mxu0 0.0
        %6527 = vmatpush1.msra.mxu0 0.0
        %6528 = vmatprep.subr.mxu0 0.0
        %6529 = vmatpush1.msra.mxu0 0.0
        %6530 = vmatprep.subr.mxu0 0.0
        %6531 = vmatpush1.msra.mxu0 0.0
        %6532 = vmatprep.subr.mxu0 0.0
        %6533 = vmatpush1.msra.mxu0 0.0
        %6534 = vmatprep.subr.mxu0 0.0
        %6535 = vmatpush1.msra.mxu0 0.0
        %6536 = vmatprep.subr.mxu0 0.0
        %6537 = vmatpush1.msra.mxu0 0.0
        %6538 = vmatprep.subr.mxu0 0.0
        %6539 = vmatpush1.msra.mxu0 0.0
        %6540 = vmatprep.mubr.f32.mxu0 0.0
        %6541 = vmatmul.mubr.f32.gmra.mrb[0].mxu0 %v6427
        %v6542 = vpop.f32.mrb[0].mxu0
        %v6543 = vadd.f32 0.0, %v6542
        %v6544 = vpop.f32.mrb[0].mxu0
        %6545 = vmatprep.mubr.f32.mxu0 0.0
        %6546 = vmatmul.mubr.f32.gmra.mrb[0].mxu0 %v6428
        %v6547 = vpop.f32.mrb[0].mxu0
        %v6548 = vadd.f32 0.0, %v6547
        %v6549 = vpop.f32.mrb[0].mxu0
        %6550 = vmatprep.mubr.f32.mxu0 0.0
        %6551 = vmatmul.mubr.f32.gmra.mrb[0].mxu0 %v6429
        %v6552 = vpop.f32.mrb[0].mxu0
        %v6553 = vadd.f32 0.0, %v6552
        %v6554 = vpop.f32.mrb[0].mxu0
        %6555 = vmatprep.mubr.f32.mxu0 0.0
        %6556 = vmatmul.mubr.f32.gmra.mrb[0].mxu0 %v6430
        %v6557 = vpop.f32.mrb[0].mxu0
        %v6558 = vadd.f32 0.0, %v6557
        %v6559 = vpop.f32.mrb[0].mxu0
        %6560 = vmatprep.mubr.f32.mxu0 0.0
        %6561 = vmatmul.mubr.f32.gmra.mrb[0].mxu0 %v6431
        %v6562 = vpop.f32.mrb[0].mxu0
        %v6563 = vadd.f32 0.0, %v6562
        %v6564 = vpop.f32.mrb[0].mxu0
        %6565 = vmatprep.mubr.f32.mxu0 0.0
        %6566 = vmatmul.mubr.f32.gmra.mrb[0].mxu0 %v6432
        %v6567 = vpop.f32.mrb[0].mxu0
        %v6568 = vadd.f32 0.0, %v6567
        %v6569 = vpop.f32.mrb[0].mxu0
        %6570 = vmatprep.mubr.f32.mxu0 0.0
        %6571 = vmatmul.mubr.f32.gmra.mrb[0].mxu0 %v6433
        %v6572 = vpop.f32.mrb[0].mxu0
        %v6573 = vadd.f32 0.0, %v6572
        %v6574 = vpop.f32.mrb[0].mxu0
        %6575 = vmatprep.mubr.f32.mxu0 0.0
        %6576 = vmatmul.mubr.f32.gmra.mrb[0].mxu0 %v6434
        %v6577 = vpop.f32.mrb[0].mxu0
        %v6578 = vadd.f32 0.0, %v6577
        %v6579 = vpop.f32.mrb[0].mxu0
        %6580 = vmatprep.mubr.f32.mxu0 0.0
        %6581 = vmatmul.mubr.f32.gmra.mrb[0].mxu0 %v6435
        %v6582 = vpop.f32.mrb[0].mxu0
        %v6583 = vadd.f32 0.0, %v6582
        %v6584 = vpop.f32.mrb[0].mxu0
        %6585 = vmatprep.mubr.f32.mxu0 0.0
        %6586 = vmatmul.mubr.f32.gmra.mrb[0].mxu0 %v6436
        %v6587 = vpop.f32.mrb[0].mxu0
        %v6588 = vadd.f32 0.0, %v6587
        %v6589 = vpop.f32.mrb[0].mxu0
        %6590 = vmatprep.mubr.f32.mxu0 0.0
        %6591 = vmatmul.mubr.f32.gmra.mrb[0].mxu0 %v6437
        %v6592 = vpop.f32.mrb[0].mxu0
        %v6593 = vadd.f32 0.0, %v6592
        %v6594 = vpop.f32.mrb[0].mxu0
        %6595 = vmatprep.mubr.f32.mxu0 0.0
        %6596 = vmatmul.mubr.f32.gmra.mrb[0].mxu0 %v6438
        %v6597 = vpop.f32.mrb[0].mxu0
        %v6598 = vadd.f32 0.0, %v6597
        %v6599 = vpop.f32.mrb[0].mxu0
        %6600 = vmatprep.mubr.f32.mxu0 0.0
        %6601 = vmatmul.mubr.f32.gmra.mrb[0].mxu0 %v6439
        %v6602 = vpop.f32.mrb[0].mxu0
        %v6603 = vadd.f32 0.0, %v6602
        %v6604 = vpop.f32.mrb[0].mxu0
        %6605 = vmatprep.mubr.f32.mxu0 0.0
        %6606 = vmatmul.mubr.f32.gmra.mrb[0].mxu0 %v6440
        %v6607 = vpop.f32.mrb[0].mxu0
        %v6608 = vadd.f32 0.0, %v6607
        %v6609 = vpop.f32.mrb[0].mxu0
        %6610 = vmatprep.mubr.f32.mxu0 0.0
        %6611 = vmatmul.mubr.f32.gmra.mrb[0].mxu0 %v6441
        %v6612 = vpop.f32.mrb[0].mxu0
        %v6613 = vadd.f32 0.0, %v6612
        %v6614 = vpop.f32.mrb[0].mxu0
        %6615 = vmatprep.mubr.f32.mxu0 0.0
        %6616 = vmatmul.mubr.f32.gmra.mrb[0].mxu0 %v6442
        %v6617 = vpop.f32.mrb[0].mxu0
        %v6618 = vadd.f32 0.0, %v6617
        %v6619 = vpop.f32.mrb[0].mxu0
        %6620 = vmatprep.mubr.f32.mxu0 0.0
        %6621 = vmatmul.mubr.f32.gmra.mrb[0].mxu0 %v6443
        %v6622 = vpop.f32.mrb[0].mxu0
        %v6623 = vadd.f32 0.0, %v6622
        %v6624 = vpop.f32.mrb[0].mxu0
        %6625 = vmatprep.mubr.f32.mxu0 0.0
        %6626 = vmatmul.mubr.f32.gmra.mrb[0].mxu0 %v6444
        %v6627 = vpop.f32.mrb[0].mxu0
        %v6628 = vadd.f32 0.0, %v6627
        %v6629 = vpop.f32.mrb[0].mxu0
        %6630 = vmatprep.mubr.f32.mxu0 0.0
        %6631 = vmatmul.mubr.f32.gmra.mrb[0].mxu0 %v6445
        %v6632 = vpop.f32.mrb[0].mxu0
        %v6633 = vadd.f32 0.0, %v6632
        %v6634 = vpop.f32.mrb[0].mxu0
        %6635 = vmatprep.mubr.f32.mxu0 0.0
        %6636 = vmatmul.mubr.f32.gmra.mrb[0].mxu0 %v6446
        %v6637 = vpop.f32.mrb[0].mxu0
        %v6638 = vadd.f32 0.0, %v6637
        %v6639 = vpop.f32.mrb[0].mxu0
        %6640 = vmatprep.mubr.f32.mxu0 0.0
        %6641 = vmatmul.mubr.f32.gmra.mrb[0].mxu0 %v6447
        %v6642 = vpop.f32.mrb[0].mxu0
        %v6643 = vadd.f32 0.0, %v6642
        %v6644 = vpop.f32.mrb[0].mxu0
        %6645 = vmatprep.mubr.f32.mxu0 0.0
        %6646 = vmatmul.mubr.f32.gmra.mrb[0].mxu0 %v6448
        %v6647 = vpop.f32.mrb[0].mxu0
        %v6648 = vadd.f32 0.0, %v6647
        %v6649 = vpop.f32.mrb[0].mxu0
        %6650 = vmatprep.mubr.f32.mxu0 0.0
        %6651 = vmatmul.mubr.f32.gmra.mrb[0].mxu0 %v6449
        %v6652 = vpop.f32.mrb[0].mxu0
        %v6653 = vadd.f32 0.0, %v6652
        %v6654 = vpop.f32.mrb[0].mxu0
        %6655 = vmatprep.mubr.f32.mxu0 0.0
        %6656 = vmatmul.mubr.f32.gmra.mrb[0].mxu0 %v6450
        %v6657 = vpop.f32.mrb[0].mxu0
        %v6658 = vadd.f32 0.0, %v6657
        %v6659 = vpop.f32.mrb[0].mxu0
        %6660 = vmatprep.mubr.f32.mxu0 0.0
        %6661 = vmatmul.mubr.f32.gmra.mrb[0].mxu0 %v6451
        %v6662 = vpop.f32.mrb[0].mxu0
        %v6663 = vadd.f32 0.0, %v6662
        %v6664 = vpop.f32.mrb[0].mxu0
        %6665 = vmatprep.mubr.f32.mxu0 0.0
        %6666 = vmatmul.mubr.f32.gmra.mrb[0].mxu0 %v6452
        %v6667 = vpop.f32.mrb[0].mxu0
        %v6668 = vadd.f32 0.0, %v6667
        %v6669 = vpop.f32.mrb[0].mxu0
        %6670 = vmatprep.mubr.f32.mxu0 0.0
        %6671 = vmatmul.mubr.f32.gmra.mrb[0].mxu0 %v6453
        %v6672 = vpop.f32.mrb[0].mxu0
        %v6673 = vadd.f32 0.0, %v6672
        %v6674 = vpop.f32.mrb[0].mxu0
        %6675 = vmatprep.mubr.f32.mxu0 0.0
        %6676 = vmatmul.mubr.f32.gmra.mrb[0].mxu0 %v6454
        %v6677 = vpop.f32.mrb[0].mxu0
        %v6678 = vadd.f32 0.0, %v6677
        %v6679 = vpop.f32.mrb[0].mxu0
        %6680 = vmatprep.mubr.f32.mxu0 0.0
        %6681 = vmatmul.mubr.f32.gmra.mrb[0].mxu0 %v6455
        %v6682 = vpop.f32.mrb[0].mxu0
        %v6683 = vadd.f32 0.0, %v6682
        %v6684 = vpop.f32.mrb[0].mxu0
        %6685 = vmatprep.mubr.f32.mxu0 0.0
        %6686 = vmatmul.mubr.f32.gmra.mrb[0].mxu0 %v6456
        %v6687 = vpop.f32.mrb[0].mxu0
        %v6688 = vadd.f32 0.0, %v6687
        %v6689 = vpop.f32.mrb[0].mxu0
        %6690 = vmatprep.mubr.f32.mxu0 0.0
        %6691 = vmatmul.mubr.f32.gmra.mrb[0].mxu0 %v6457
        %v6692 = vpop.f32.mrb[0].mxu0
        %v6693 = vadd.f32 0.0, %v6692
        %v6694 = vpop.f32.mrb[0].mxu0
        %6695 = vmatprep.mubr.f32.mxu0 0.0
        %6696 = vmatmul.mubr.f32.gmra.mrb[0].mxu0 %v6458
        %v6697 = vpop.f32.mrb[0].mxu0
        %v6698 = vadd.f32 0.0, %v6697
        %v6699 = vpop.f32.mrb[0].mxu0
        %6700 = vdwg.mxu0
        %v6701 = vadd.f32 %v6269, %v6543
        %v6702 = vadd.f32 %v6274, %v6548
        %v6703 = vadd.f32 %v6279, %v6553
        %v6704 = vadd.f32 %v6284, %v6558
        %v6705 = vadd.f32 %v6289, %v6563
        %v6706 = vadd.f32 %v6294, %v6568
        %v6707 = vadd.f32 %v6299, %v6573
        %v6708 = vadd.f32 %v6304, %v6578
        %v6709 = vadd.f32 %v6309, %v6583
        %v6710 = vadd.f32 %v6314, %v6588
        %v6711 = vadd.f32 %v6319, %v6593
        %v6712 = vadd.f32 %v6324, %v6598
        %v6713 = vadd.f32 %v6329, %v6603
        %v6714 = vadd.f32 %v6334, %v6608
        %v6715 = vadd.f32 %v6339, %v6613
        %v6716 = vadd.f32 %v6344, %v6618
        %v6717 = vadd.f32 %v6349, %v6623
        %v6718 = vadd.f32 %v6354, %v6628
        %v6719 = vadd.f32 %v6359, %v6633
        %v6720 = vadd.f32 %v6364, %v6638
        %v6721 = vadd.f32 %v6369, %v6643
        %v6722 = vadd.f32 %v6374, %v6648
        %v6723 = vadd.f32 %v6379, %v6653
        %v6724 = vadd.f32 %v6384, %v6658
        %v6725 = vadd.f32 %v6389, %v6663
        %v6726 = vadd.f32 %v6394, %v6668
        %v6727 = vadd.f32 %v6399, %v6673
        %v6728 = vadd.f32 %v6404, %v6678
        %v6729 = vadd.f32 %v6409, %v6683
        %v6730 = vadd.f32 %v6414, %v6688
        %v6731 = vadd.f32 %v6419, %v6693
        %v6732 = vadd.f32 %v6424, %v6698
        %s6733 = scalar_lea.vmem [#allocation2], 24
        %v6734 = vld [vmem:[%s6733] sm:$0xff]
        %v6735 = vld [vmem:[%s6733 + $0x8] sm:$0xff]
        %v6736 = vld [vmem:[%s6733 + $0x18] sm:$0xff]
        %v6737 = vld [vmem:[%s6733 + $0x20] sm:$0xff]
        %v6738 = vld [vmem:[%s6733 + $0x30] sm:$0xff]
        %v6739 = vld [vmem:[%s6733 + $0x38] sm:$0xff]
        %v6740 = vld [vmem:[%s6733 + $0x48] sm:$0xff]
        %v6741 = vld [vmem:[%s6733 + $0x50] sm:$0xff]
        %v6742 = vld [vmem:[%s6733 + $0x60] sm:$0xff]
        %v6743 = vld [vmem:[%s6733 + $0x68] sm:$0xff]
        %v6744 = vld [vmem:[%s6733 + $0x78] sm:$0xff]
        %v6745 = vld [vmem:[%s6733 + $0x80] sm:$0xff]
        %v6746 = vld [vmem:[%s6733 + $0x90] sm:$0xff]
        %v6747 = vld [vmem:[%s6733 + $0x98] sm:$0xff]
        %v6748 = vld [vmem:[%s6733 + $0xa8] sm:$0xff]
        %v6749 = vld [vmem:[%s6733 + $0xb0] sm:$0xff]
        %v6750 = vld [vmem:[%s6733 + $0xc0] sm:$0xff]
        %v6751 = vld [vmem:[%s6733 + $0xc8] sm:$0xff]
        %v6752 = vld [vmem:[%s6733 + $0xd8] sm:$0xff]
        %v6753 = vld [vmem:[%s6733 + $0xe0] sm:$0xff]
        %v6754 = vld [vmem:[%s6733 + $0xf0] sm:$0xff]
        %v6755 = vld [vmem:[%s6733 + $0xf8] sm:$0xff]
        %v6756 = vld [vmem:[%s6733 + $0x108] sm:$0xff]
        %v6757 = vld [vmem:[%s6733 + $0x110] sm:$0xff]
        %v6758 = vld [vmem:[%s6733 + $0x120] sm:$0xff]
        %v6759 = vld [vmem:[%s6733 + $0x128] sm:$0xff]
        %v6760 = vld [vmem:[%s6733 + $0x138] sm:$0xff]
        %v6761 = vld [vmem:[%s6733 + $0x140] sm:$0xff]
        %v6762 = vld [vmem:[%s6733 + $0x150] sm:$0xff]
        %v6763 = vld [vmem:[%s6733 + $0x158] sm:$0xff]
        %v6764 = vld [vmem:[%s6733 + $0x168] sm:$0xff]
        %v6765 = vld [vmem:[%s6733 + $0x170] sm:$0xff]
        %s6766 = scalar_lea.vmem %s3, 384
        %v6767 = vld [vmem:[%s6766] sm:$0xff]
        %v6768 = vld [vmem:[%s6766 + $0x8] sm:$0xff]
        %v6769 = vld [vmem:[%s6766 + $0x10] sm:$0xff]
        %v6770 = vld [vmem:[%s6766 + $0x18] sm:$0xff]
        %v6771 = vld [vmem:[%s6766 + $0x20] sm:$0xff]
        %v6772 = vld [vmem:[%s6766 + $0x28] sm:$0xff]
        %v6773 = vld [vmem:[%s6766 + $0x30] sm:$0xff]
        %v6774 = vld [vmem:[%s6766 + $0x38] sm:$0xff]
        %v6775 = vld [vmem:[%s6766 + $0x40] sm:$0xff]
        %v6776 = vld [vmem:[%s6766 + $0x48] sm:$0xff]
        %v6777 = vld [vmem:[%s6766 + $0x50] sm:$0xff]
        %v6778 = vld [vmem:[%s6766 + $0x58] sm:$0xff]
        %v6779 = vld [vmem:[%s6766 + $0x60] sm:$0xff]
        %v6780 = vld [vmem:[%s6766 + $0x68] sm:$0xff]
        %v6781 = vld [vmem:[%s6766 + $0x70] sm:$0xff]
        %v6782 = vld [vmem:[%s6766 + $0x78] sm:$0xff]
        %6783 = vmatprep.subr.mxu0 0.0
        %6784 = vmatpush1.msra.mxu0 %v6767
        %6785 = vmatprep.subr.mxu0 0.0
        %6786 = vmatpush1.msra.mxu0 %v6768
        %6787 = vmatprep.subr.mxu0 0.0
        %6788 = vmatpush1.msra.mxu0 %v6769
        %6789 = vmatprep.subr.mxu0 0.0
        %6790 = vmatpush1.msra.mxu0 %v6770
        %6791 = vmatprep.subr.mxu0 0.0
        %6792 = vmatpush1.msra.mxu0 %v6771
        %6793 = vmatprep.subr.mxu0 0.0
        %6794 = vmatpush1.msra.mxu0 %v6772
        %6795 = vmatprep.subr.mxu0 0.0
        %6796 = vmatpush1.msra.mxu0 %v6773
        %6797 = vmatprep.subr.mxu0 0.0
        %6798 = vmatpush1.msra.mxu0 %v6774
        %6799 = vmatprep.subr.mxu0 0.0
        %6800 = vmatpush1.msra.mxu0 %v6775
        %6801 = vmatprep.subr.mxu0 0.0
        %6802 = vmatpush1.msra.mxu0 %v6776
        %6803 = vmatprep.subr.mxu0 0.0
        %6804 = vmatpush1.msra.mxu0 %v6777
        %6805 = vmatprep.subr.mxu0 0.0
        %6806 = vmatpush1.msra.mxu0 %v6778
        %6807 = vmatprep.subr.mxu0 0.0
        %6808 = vmatpush1.msra.mxu0 %v6779
        %6809 = vmatprep.subr.mxu0 0.0
        %6810 = vmatpush1.msra.mxu0 %v6780
        %6811 = vmatprep.subr.mxu0 0.0
        %6812 = vmatpush1.msra.mxu0 %v6781
        %6813 = vmatprep.subr.mxu0 0.0
        %6814 = vmatpush1.msra.mxu0 %v6782
        %6815 = vmatprep.subr.mxu0 0.0
        %6816 = vmatpush1.msra.mxu0 0.0
        %6817 = vmatprep.subr.mxu0 0.0
        %6818 = vmatpush1.msra.mxu0 0.0
        %6819 = vmatprep.subr.mxu0 0.0
        %6820 = vmatpush1.msra.mxu0 0.0
        %6821 = vmatprep.subr.mxu0 0.0
        %6822 = vmatpush1.msra.mxu0 0.0
        %6823 = vmatprep.subr.mxu0 0.0
        %6824 = vmatpush1.msra.mxu0 0.0
        %6825 = vmatprep.subr.mxu0 0.0
        %6826 = vmatpush1.msra.mxu0 0.0
        %6827 = vmatprep.subr.mxu0 0.0
        %6828 = vmatpush1.msra.mxu0 0.0
        %6829 = vmatprep.subr.mxu0 0.0
        %6830 = vmatpush1.msra.mxu0 0.0
        %6831 = vmatprep.subr.mxu0 0.0
        %6832 = vmatpush1.msra.mxu0 0.0
        %6833 = vmatprep.subr.mxu0 0.0
        %6834 = vmatpush1.msra.mxu0 0.0
        %6835 = vmatprep.subr.mxu0 0.0
        %6836 = vmatpush1.msra.mxu0 0.0
        %6837 = vmatprep.subr.mxu0 0.0
        %6838 = vmatpush1.msra.mxu0 0.0
        %6839 = vmatprep.subr.mxu0 0.0
        %6840 = vmatpush1.msra.mxu0 0.0
        %6841 = vmatprep.subr.mxu0 0.0
        %6842 = vmatpush1.msra.mxu0 0.0
        %6843 = vmatprep.subr.mxu0 0.0
        %6844 = vmatpush1.msra.mxu0 0.0
        %6845 = vmatprep.subr.mxu0 0.0
        %6846 = vmatpush1.msra.mxu0 0.0
        %6847 = vmatprep.mubr.f32.mxu0 0.0
        %6848 = vmatmul.mubr.f32.gmra.mrb[0].mxu0 %v6734
        %v6849 = vpop.f32.mrb[0].mxu0
        %v6850 = vadd.f32 0.0, %v6849
        %v6851 = vpop.f32.mrb[0].mxu0
        %6852 = vmatprep.mubr.f32.mxu0 0.0
        %6853 = vmatmul.mubr.f32.gmra.mrb[0].mxu0 %v6735
        %v6854 = vpop.f32.mrb[0].mxu0
        %v6855 = vadd.f32 0.0, %v6854
        %v6856 = vpop.f32.mrb[0].mxu0
        %6857 = vmatprep.mubr.f32.mxu0 0.0
        %6858 = vmatmul.mubr.f32.gmra.mrb[0].mxu0 %v6736
        %v6859 = vpop.f32.mrb[0].mxu0
        %v6860 = vadd.f32 0.0, %v6859
        %v6861 = vpop.f32.mrb[0].mxu0
        %6862 = vmatprep.mubr.f32.mxu0 0.0
        %6863 = vmatmul.mubr.f32.gmra.mrb[0].mxu0 %v6737
        %v6864 = vpop.f32.mrb[0].mxu0
        %v6865 = vadd.f32 0.0, %v6864
        %v6866 = vpop.f32.mrb[0].mxu0
        %6867 = vmatprep.mubr.f32.mxu0 0.0
        %6868 = vmatmul.mubr.f32.gmra.mrb[0].mxu0 %v6738
        %v6869 = vpop.f32.mrb[0].mxu0
        %v6870 = vadd.f32 0.0, %v6869
        %v6871 = vpop.f32.mrb[0].mxu0
        %6872 = vmatprep.mubr.f32.mxu0 0.0
        %6873 = vmatmul.mubr.f32.gmra.mrb[0].mxu0 %v6739
        %v6874 = vpop.f32.mrb[0].mxu0
        %v6875 = vadd.f32 0.0, %v6874
        %v6876 = vpop.f32.mrb[0].mxu0
        %6877 = vmatprep.mubr.f32.mxu0 0.0
        %6878 = vmatmul.mubr.f32.gmra.mrb[0].mxu0 %v6740
        %v6879 = vpop.f32.mrb[0].mxu0
        %v6880 = vadd.f32 0.0, %v6879
        %v6881 = vpop.f32.mrb[0].mxu0
        %6882 = vmatprep.mubr.f32.mxu0 0.0
        %6883 = vmatmul.mubr.f32.gmra.mrb[0].mxu0 %v6741
        %v6884 = vpop.f32.mrb[0].mxu0
        %v6885 = vadd.f32 0.0, %v6884
        %v6886 = vpop.f32.mrb[0].mxu0
        %6887 = vmatprep.mubr.f32.mxu0 0.0
        %6888 = vmatmul.mubr.f32.gmra.mrb[0].mxu0 %v6742
        %v6889 = vpop.f32.mrb[0].mxu0
        %v6890 = vadd.f32 0.0, %v6889
        %v6891 = vpop.f32.mrb[0].mxu0
        %6892 = vmatprep.mubr.f32.mxu0 0.0
        %6893 = vmatmul.mubr.f32.gmra.mrb[0].mxu0 %v6743
        %v6894 = vpop.f32.mrb[0].mxu0
        %v6895 = vadd.f32 0.0, %v6894
        %v6896 = vpop.f32.mrb[0].mxu0
        %6897 = vmatprep.mubr.f32.mxu0 0.0
        %6898 = vmatmul.mubr.f32.gmra.mrb[0].mxu0 %v6744
        %v6899 = vpop.f32.mrb[0].mxu0
        %v6900 = vadd.f32 0.0, %v6899
        %v6901 = vpop.f32.mrb[0].mxu0
        %6902 = vmatprep.mubr.f32.mxu0 0.0
        %6903 = vmatmul.mubr.f32.gmra.mrb[0].mxu0 %v6745
        %v6904 = vpop.f32.mrb[0].mxu0
        %v6905 = vadd.f32 0.0, %v6904
        %v6906 = vpop.f32.mrb[0].mxu0
        %6907 = vmatprep.mubr.f32.mxu0 0.0
        %6908 = vmatmul.mubr.f32.gmra.mrb[0].mxu0 %v6746
        %v6909 = vpop.f32.mrb[0].mxu0
        %v6910 = vadd.f32 0.0, %v6909
        %v6911 = vpop.f32.mrb[0].mxu0
        %6912 = vmatprep.mubr.f32.mxu0 0.0
        %6913 = vmatmul.mubr.f32.gmra.mrb[0].mxu0 %v6747
        %v6914 = vpop.f32.mrb[0].mxu0
        %v6915 = vadd.f32 0.0, %v6914
        %v6916 = vpop.f32.mrb[0].mxu0
        %6917 = vmatprep.mubr.f32.mxu0 0.0
        %6918 = vmatmul.mubr.f32.gmra.mrb[0].mxu0 %v6748
        %v6919 = vpop.f32.mrb[0].mxu0
        %v6920 = vadd.f32 0.0, %v6919
        %v6921 = vpop.f32.mrb[0].mxu0
        %6922 = vmatprep.mubr.f32.mxu0 0.0
        %6923 = vmatmul.mubr.f32.gmra.mrb[0].mxu0 %v6749
        %v6924 = vpop.f32.mrb[0].mxu0
        %v6925 = vadd.f32 0.0, %v6924
        %v6926 = vpop.f32.mrb[0].mxu0
        %6927 = vmatprep.mubr.f32.mxu0 0.0
        %6928 = vmatmul.mubr.f32.gmra.mrb[0].mxu0 %v6750
        %v6929 = vpop.f32.mrb[0].mxu0
        %v6930 = vadd.f32 0.0, %v6929
        %v6931 = vpop.f32.mrb[0].mxu0
        %6932 = vmatprep.mubr.f32.mxu0 0.0
        %6933 = vmatmul.mubr.f32.gmra.mrb[0].mxu0 %v6751
        %v6934 = vpop.f32.mrb[0].mxu0
        %v6935 = vadd.f32 0.0, %v6934
        %v6936 = vpop.f32.mrb[0].mxu0
        %6937 = vmatprep.mubr.f32.mxu0 0.0
        %6938 = vmatmul.mubr.f32.gmra.mrb[0].mxu0 %v6752
        %v6939 = vpop.f32.mrb[0].mxu0
        %v6940 = vadd.f32 0.0, %v6939
        %v6941 = vpop.f32.mrb[0].mxu0
        %6942 = vmatprep.mubr.f32.mxu0 0.0
        %6943 = vmatmul.mubr.f32.gmra.mrb[0].mxu0 %v6753
        %v6944 = vpop.f32.mrb[0].mxu0
        %v6945 = vadd.f32 0.0, %v6944
        %v6946 = vpop.f32.mrb[0].mxu0
        %6947 = vmatprep.mubr.f32.mxu0 0.0
        %6948 = vmatmul.mubr.f32.gmra.mrb[0].mxu0 %v6754
        %v6949 = vpop.f32.mrb[0].mxu0
        %v6950 = vadd.f32 0.0, %v6949
        %v6951 = vpop.f32.mrb[0].mxu0
        %6952 = vmatprep.mubr.f32.mxu0 0.0
        %6953 = vmatmul.mubr.f32.gmra.mrb[0].mxu0 %v6755
        %v6954 = vpop.f32.mrb[0].mxu0
        %v6955 = vadd.f32 0.0, %v6954
        %v6956 = vpop.f32.mrb[0].mxu0
        %6957 = vmatprep.mubr.f32.mxu0 0.0
        %6958 = vmatmul.mubr.f32.gmra.mrb[0].mxu0 %v6756
        %v6959 = vpop.f32.mrb[0].mxu0
        %v6960 = vadd.f32 0.0, %v6959
        %v6961 = vpop.f32.mrb[0].mxu0
        %6962 = vmatprep.mubr.f32.mxu0 0.0
        %6963 = vmatmul.mubr.f32.gmra.mrb[0].mxu0 %v6757
        %v6964 = vpop.f32.mrb[0].mxu0
        %v6965 = vadd.f32 0.0, %v6964
        %v6966 = vpop.f32.mrb[0].mxu0
        %6967 = vmatprep.mubr.f32.mxu0 0.0
        %6968 = vmatmul.mubr.f32.gmra.mrb[0].mxu0 %v6758
        %v6969 = vpop.f32.mrb[0].mxu0
        %v6970 = vadd.f32 0.0, %v6969
        %v6971 = vpop.f32.mrb[0].mxu0
        %6972 = vmatprep.mubr.f32.mxu0 0.0
        %6973 = vmatmul.mubr.f32.gmra.mrb[0].mxu0 %v6759
        %v6974 = vpop.f32.mrb[0].mxu0
        %v6975 = vadd.f32 0.0, %v6974
        %v6976 = vpop.f32.mrb[0].mxu0
        %6977 = vmatprep.mubr.f32.mxu0 0.0
        %6978 = vmatmul.mubr.f32.gmra.mrb[0].mxu0 %v6760
        %v6979 = vpop.f32.mrb[0].mxu0
        %v6980 = vadd.f32 0.0, %v6979
        %v6981 = vpop.f32.mrb[0].mxu0
        %6982 = vmatprep.mubr.f32.mxu0 0.0
        %6983 = vmatmul.mubr.f32.gmra.mrb[0].mxu0 %v6761
        %v6984 = vpop.f32.mrb[0].mxu0
        %v6985 = vadd.f32 0.0, %v6984
        %v6986 = vpop.f32.mrb[0].mxu0
        %6987 = vmatprep.mubr.f32.mxu0 0.0
        %6988 = vmatmul.mubr.f32.gmra.mrb[0].mxu0 %v6762
        %v6989 = vpop.f32.mrb[0].mxu0
        %v6990 = vadd.f32 0.0, %v6989
        %v6991 = vpop.f32.mrb[0].mxu0
        %6992 = vmatprep.mubr.f32.mxu0 0.0
        %6993 = vmatmul.mubr.f32.gmra.mrb[0].mxu0 %v6763
        %v6994 = vpop.f32.mrb[0].mxu0
        %v6995 = vadd.f32 0.0, %v6994
        %v6996 = vpop.f32.mrb[0].mxu0
        %6997 = vmatprep.mubr.f32.mxu0 0.0
        %6998 = vmatmul.mubr.f32.gmra.mrb[0].mxu0 %v6764
        %v6999 = vpop.f32.mrb[0].mxu0
        %v7000 = vadd.f32 0.0, %v6999
        %v7001 = vpop.f32.mrb[0].mxu0
        %7002 = vmatprep.mubr.f32.mxu0 0.0
        %7003 = vmatmul.mubr.f32.gmra.mrb[0].mxu0 %v6765
        %v7004 = vpop.f32.mrb[0].mxu0
        %v7005 = vadd.f32 0.0, %v7004
        %v7006 = vpop.f32.mrb[0].mxu0
        %7007 = vdwg.mxu0
        %v7008 = vadd.f32 %v6701, %v6850
        %v7009 = vadd.f32 %v6702, %v6855
        %v7010 = vadd.f32 %v6703, %v6860
        %v7011 = vadd.f32 %v6704, %v6865
        %v7012 = vadd.f32 %v6705, %v6870
        %v7013 = vadd.f32 %v6706, %v6875
        %v7014 = vadd.f32 %v6707, %v6880
        %v7015 = vadd.f32 %v6708, %v6885
        %v7016 = vadd.f32 %v6709, %v6890
        %v7017 = vadd.f32 %v6710, %v6895
        %v7018 = vadd.f32 %v6711, %v6900
        %v7019 = vadd.f32 %v6712, %v6905
        %v7020 = vadd.f32 %v6713, %v6910
        %v7021 = vadd.f32 %v6714, %v6915
        %v7022 = vadd.f32 %v6715, %v6920
        %v7023 = vadd.f32 %v6716, %v6925
        %v7024 = vadd.f32 %v6717, %v6930
        %v7025 = vadd.f32 %v6718, %v6935
        %v7026 = vadd.f32 %v6719, %v6940
        %v7027 = vadd.f32 %v6720, %v6945
        %v7028 = vadd.f32 %v6721, %v6950
        %v7029 = vadd.f32 %v6722, %v6955
        %v7030 = vadd.f32 %v6723, %v6960
        %v7031 = vadd.f32 %v6724, %v6965
        %v7032 = vadd.f32 %v6725, %v6970
        %v7033 = vadd.f32 %v6726, %v6975
        %v7034 = vadd.f32 %v6727, %v6980
        %v7035 = vadd.f32 %v6728, %v6985
        %v7036 = vadd.f32 %v6729, %v6990
        %v7037 = vadd.f32 %v6730, %v6995
        %v7038 = vadd.f32 %v6731, %v7000
        %v7039 = vadd.f32 %v6732, %v7005
        %v7040 = vld [vmem:[%s6733 + $0x1] sm:$0xff]
        %v7041 = vld [vmem:[%s6733 + $0x9] sm:$0xff]
        %v7042 = vld [vmem:[%s6733 + $0x19] sm:$0xff]
        %v7043 = vld [vmem:[%s6733 + $0x21] sm:$0xff]
        %v7044 = vld [vmem:[%s6733 + $0x31] sm:$0xff]
        %v7045 = vld [vmem:[%s6733 + $0x39] sm:$0xff]
        %v7046 = vld [vmem:[%s6733 + $0x49] sm:$0xff]
        %v7047 = vld [vmem:[%s6733 + $0x51] sm:$0xff]
        %v7048 = vld [vmem:[%s6733 + $0x61] sm:$0xff]
        %v7049 = vld [vmem:[%s6733 + $0x69] sm:$0xff]
        %v7050 = vld [vmem:[%s6733 + $0x79] sm:$0xff]
        %v7051 = vld [vmem:[%s6733 + $0x81] sm:$0xff]
        %v7052 = vld [vmem:[%s6733 + $0x91] sm:$0xff]
        %v7053 = vld [vmem:[%s6733 + $0x99] sm:$0xff]
        %v7054 = vld [vmem:[%s6733 + $0xa9] sm:$0xff]
        %v7055 = vld [vmem:[%s6733 + $0xb1] sm:$0xff]
        %v7056 = vld [vmem:[%s6733 + $0xc1] sm:$0xff]
        %v7057 = vld [vmem:[%s6733 + $0xc9] sm:$0xff]
        %v7058 = vld [vmem:[%s6733 + $0xd9] sm:$0xff]
        %v7059 = vld [vmem:[%s6733 + $0xe1] sm:$0xff]
        %v7060 = vld [vmem:[%s6733 + $0xf1] sm:$0xff]
        %v7061 = vld [vmem:[%s6733 + $0xf9] sm:$0xff]
        %v7062 = vld [vmem:[%s6733 + $0x109] sm:$0xff]
        %v7063 = vld [vmem:[%s6733 + $0x111] sm:$0xff]
        %v7064 = vld [vmem:[%s6733 + $0x121] sm:$0xff]
        %v7065 = vld [vmem:[%s6733 + $0x129] sm:$0xff]
        %v7066 = vld [vmem:[%s6733 + $0x139] sm:$0xff]
        %v7067 = vld [vmem:[%s6733 + $0x141] sm:$0xff]
        %v7068 = vld [vmem:[%s6733 + $0x151] sm:$0xff]
        %v7069 = vld [vmem:[%s6733 + $0x159] sm:$0xff]
        %v7070 = vld [vmem:[%s6733 + $0x169] sm:$0xff]
        %v7071 = vld [vmem:[%s6733 + $0x171] sm:$0xff]
        %s7072 = scalar_lea.vmem %s3, 512
        %v7073 = vld [vmem:[%s7072] sm:$0xff]
        %v7074 = vld [vmem:[%s7072 + $0x8] sm:$0xff]
        %v7075 = vld [vmem:[%s7072 + $0x10] sm:$0xff]
        %v7076 = vld [vmem:[%s7072 + $0x18] sm:$0xff]
        %v7077 = vld [vmem:[%s7072 + $0x20] sm:$0xff]
        %v7078 = vld [vmem:[%s7072 + $0x28] sm:$0xff]
        %v7079 = vld [vmem:[%s7072 + $0x30] sm:$0xff]
        %v7080 = vld [vmem:[%s7072 + $0x38] sm:$0xff]
        %v7081 = vld [vmem:[%s7072 + $0x40] sm:$0xff]
        %v7082 = vld [vmem:[%s7072 + $0x48] sm:$0xff]
        %v7083 = vld [vmem:[%s7072 + $0x50] sm:$0xff]
        %v7084 = vld [vmem:[%s7072 + $0x58] sm:$0xff]
        %v7085 = vld [vmem:[%s7072 + $0x60] sm:$0xff]
        %v7086 = vld [vmem:[%s7072 + $0x68] sm:$0xff]
        %v7087 = vld [vmem:[%s7072 + $0x70] sm:$0xff]
        %v7088 = vld [vmem:[%s7072 + $0x78] sm:$0xff]
        %7089 = vmatprep.subr.mxu0 0.0
        %7090 = vmatpush1.msra.mxu0 %v7073
        %7091 = vmatprep.subr.mxu0 0.0
        %7092 = vmatpush1.msra.mxu0 %v7074
        %7093 = vmatprep.subr.mxu0 0.0
        %7094 = vmatpush1.msra.mxu0 %v7075
        %7095 = vmatprep.subr.mxu0 0.0
        %7096 = vmatpush1.msra.mxu0 %v7076
        %7097 = vmatprep.subr.mxu0 0.0
        %7098 = vmatpush1.msra.mxu0 %v7077
        %7099 = vmatprep.subr.mxu0 0.0
        %7100 = vmatpush1.msra.mxu0 %v7078
        %7101 = vmatprep.subr.mxu0 0.0
        %7102 = vmatpush1.msra.mxu0 %v7079
        %7103 = vmatprep.subr.mxu0 0.0
        %7104 = vmatpush1.msra.mxu0 %v7080
        %7105 = vmatprep.subr.mxu0 0.0
        %7106 = vmatpush1.msra.mxu0 %v7081
        %7107 = vmatprep.subr.mxu0 0.0
        %7108 = vmatpush1.msra.mxu0 %v7082
        %7109 = vmatprep.subr.mxu0 0.0
        %7110 = vmatpush1.msra.mxu0 %v7083
        %7111 = vmatprep.subr.mxu0 0.0
        %7112 = vmatpush1.msra.mxu0 %v7084
        %7113 = vmatprep.subr.mxu0 0.0
        %7114 = vmatpush1.msra.mxu0 %v7085
        %7115 = vmatprep.subr.mxu0 0.0
        %7116 = vmatpush1.msra.mxu0 %v7086
        %7117 = vmatprep.subr.mxu0 0.0
        %7118 = vmatpush1.msra.mxu0 %v7087
        %7119 = vmatprep.subr.mxu0 0.0
        %7120 = vmatpush1.msra.mxu0 %v7088
        %7121 = vmatprep.subr.mxu0 0.0
        %7122 = vmatpush1.msra.mxu0 0.0
        %7123 = vmatprep.subr.mxu0 0.0
        %7124 = vmatpush1.msra.mxu0 0.0
        %7125 = vmatprep.subr.mxu0 0.0
        %7126 = vmatpush1.msra.mxu0 0.0
        %7127 = vmatprep.subr.mxu0 0.0
        %7128 = vmatpush1.msra.mxu0 0.0
        %7129 = vmatprep.subr.mxu0 0.0
        %7130 = vmatpush1.msra.mxu0 0.0
        %7131 = vmatprep.subr.mxu0 0.0
        %7132 = vmatpush1.msra.mxu0 0.0
        %7133 = vmatprep.subr.mxu0 0.0
        %7134 = vmatpush1.msra.mxu0 0.0
        %7135 = vmatprep.subr.mxu0 0.0
        %7136 = vmatpush1.msra.mxu0 0.0
        %7137 = vmatprep.subr.mxu0 0.0
        %7138 = vmatpush1.msra.mxu0 0.0
        %7139 = vmatprep.subr.mxu0 0.0
        %7140 = vmatpush1.msra.mxu0 0.0
        %7141 = vmatprep.subr.mxu0 0.0
        %7142 = vmatpush1.msra.mxu0 0.0
        %7143 = vmatprep.subr.mxu0 0.0
        %7144 = vmatpush1.msra.mxu0 0.0
        %7145 = vmatprep.subr.mxu0 0.0
        %7146 = vmatpush1.msra.mxu0 0.0
        %7147 = vmatprep.subr.mxu0 0.0
        %7148 = vmatpush1.msra.mxu0 0.0
        %7149 = vmatprep.subr.mxu0 0.0
        %7150 = vmatpush1.msra.mxu0 0.0
        %7151 = vmatprep.subr.mxu0 0.0
        %7152 = vmatpush1.msra.mxu0 0.0
        %7153 = vmatprep.mubr.f32.mxu0 0.0
        %7154 = vmatmul.mubr.f32.gmra.mrb[0].mxu0 %v7040
        %v7155 = vpop.f32.mrb[0].mxu0
        %v7156 = vadd.f32 0.0, %v7155
        %v7157 = vpop.f32.mrb[0].mxu0
        %7158 = vmatprep.mubr.f32.mxu0 0.0
        %7159 = vmatmul.mubr.f32.gmra.mrb[0].mxu0 %v7041
        %v7160 = vpop.f32.mrb[0].mxu0
        %v7161 = vadd.f32 0.0, %v7160
        %v7162 = vpop.f32.mrb[0].mxu0
        %7163 = vmatprep.mubr.f32.mxu0 0.0
        %7164 = vmatmul.mubr.f32.gmra.mrb[0].mxu0 %v7042
        %v7165 = vpop.f32.mrb[0].mxu0
        %v7166 = vadd.f32 0.0, %v7165
        %v7167 = vpop.f32.mrb[0].mxu0
        %7168 = vmatprep.mubr.f32.mxu0 0.0
        %7169 = vmatmul.mubr.f32.gmra.mrb[0].mxu0 %v7043
        %v7170 = vpop.f32.mrb[0].mxu0
        %v7171 = vadd.f32 0.0, %v7170
        %v7172 = vpop.f32.mrb[0].mxu0
        %7173 = vmatprep.mubr.f32.mxu0 0.0
        %7174 = vmatmul.mubr.f32.gmra.mrb[0].mxu0 %v7044
        %v7175 = vpop.f32.mrb[0].mxu0
        %v7176 = vadd.f32 0.0, %v7175
        %v7177 = vpop.f32.mrb[0].mxu0
        %7178 = vmatprep.mubr.f32.mxu0 0.0
        %7179 = vmatmul.mubr.f32.gmra.mrb[0].mxu0 %v7045
        %v7180 = vpop.f32.mrb[0].mxu0
        %v7181 = vadd.f32 0.0, %v7180
        %v7182 = vpop.f32.mrb[0].mxu0
        %7183 = vmatprep.mubr.f32.mxu0 0.0
        %7184 = vmatmul.mubr.f32.gmra.mrb[0].mxu0 %v7046
        %v7185 = vpop.f32.mrb[0].mxu0
        %v7186 = vadd.f32 0.0, %v7185
        %v7187 = vpop.f32.mrb[0].mxu0
        %7188 = vmatprep.mubr.f32.mxu0 0.0
        %7189 = vmatmul.mubr.f32.gmra.mrb[0].mxu0 %v7047
        %v7190 = vpop.f32.mrb[0].mxu0
        %v7191 = vadd.f32 0.0, %v7190
        %v7192 = vpop.f32.mrb[0].mxu0
        %7193 = vmatprep.mubr.f32.mxu0 0.0
        %7194 = vmatmul.mubr.f32.gmra.mrb[0].mxu0 %v7048
        %v7195 = vpop.f32.mrb[0].mxu0
        %v7196 = vadd.f32 0.0, %v7195
        %v7197 = vpop.f32.mrb[0].mxu0
        %7198 = vmatprep.mubr.f32.mxu0 0.0
        %7199 = vmatmul.mubr.f32.gmra.mrb[0].mxu0 %v7049
        %v7200 = vpop.f32.mrb[0].mxu0
        %v7201 = vadd.f32 0.0, %v7200
        %v7202 = vpop.f32.mrb[0].mxu0
        %7203 = vmatprep.mubr.f32.mxu0 0.0
        %7204 = vmatmul.mubr.f32.gmra.mrb[0].mxu0 %v7050
        %v7205 = vpop.f32.mrb[0].mxu0
        %v7206 = vadd.f32 0.0, %v7205
        %v7207 = vpop.f32.mrb[0].mxu0
        %7208 = vmatprep.mubr.f32.mxu0 0.0
        %7209 = vmatmul.mubr.f32.gmra.mrb[0].mxu0 %v7051
        %v7210 = vpop.f32.mrb[0].mxu0
        %v7211 = vadd.f32 0.0, %v7210
        %v7212 = vpop.f32.mrb[0].mxu0
        %7213 = vmatprep.mubr.f32.mxu0 0.0
        %7214 = vmatmul.mubr.f32.gmra.mrb[0].mxu0 %v7052
        %v7215 = vpop.f32.mrb[0].mxu0
        %v7216 = vadd.f32 0.0, %v7215
        %v7217 = vpop.f32.mrb[0].mxu0
        %7218 = vmatprep.mubr.f32.mxu0 0.0
        %7219 = vmatmul.mubr.f32.gmra.mrb[0].mxu0 %v7053
        %v7220 = vpop.f32.mrb[0].mxu0
        %v7221 = vadd.f32 0.0, %v7220
        %v7222 = vpop.f32.mrb[0].mxu0
        %7223 = vmatprep.mubr.f32.mxu0 0.0
        %7224 = vmatmul.mubr.f32.gmra.mrb[0].mxu0 %v7054
        %v7225 = vpop.f32.mrb[0].mxu0
        %v7226 = vadd.f32 0.0, %v7225
        %v7227 = vpop.f32.mrb[0].mxu0
        %7228 = vmatprep.mubr.f32.mxu0 0.0
        %7229 = vmatmul.mubr.f32.gmra.mrb[0].mxu0 %v7055
        %v7230 = vpop.f32.mrb[0].mxu0
        %v7231 = vadd.f32 0.0, %v7230
        %v7232 = vpop.f32.mrb[0].mxu0
        %7233 = vmatprep.mubr.f32.mxu0 0.0
        %7234 = vmatmul.mubr.f32.gmra.mrb[0].mxu0 %v7056
        %v7235 = vpop.f32.mrb[0].mxu0
        %v7236 = vadd.f32 0.0, %v7235
        %v7237 = vpop.f32.mrb[0].mxu0
        %7238 = vmatprep.mubr.f32.mxu0 0.0
        %7239 = vmatmul.mubr.f32.gmra.mrb[0].mxu0 %v7057
        %v7240 = vpop.f32.mrb[0].mxu0
        %v7241 = vadd.f32 0.0, %v7240
        %v7242 = vpop.f32.mrb[0].mxu0
        %7243 = vmatprep.mubr.f32.mxu0 0.0
        %7244 = vmatmul.mubr.f32.gmra.mrb[0].mxu0 %v7058
        %v7245 = vpop.f32.mrb[0].mxu0
        %v7246 = vadd.f32 0.0, %v7245
        %v7247 = vpop.f32.mrb[0].mxu0
        %7248 = vmatprep.mubr.f32.mxu0 0.0
        %7249 = vmatmul.mubr.f32.gmra.mrb[0].mxu0 %v7059
        %v7250 = vpop.f32.mrb[0].mxu0
        %v7251 = vadd.f32 0.0, %v7250
        %v7252 = vpop.f32.mrb[0].mxu0
        %7253 = vmatprep.mubr.f32.mxu0 0.0
        %7254 = vmatmul.mubr.f32.gmra.mrb[0].mxu0 %v7060
        %v7255 = vpop.f32.mrb[0].mxu0
        %v7256 = vadd.f32 0.0, %v7255
        %v7257 = vpop.f32.mrb[0].mxu0
        %7258 = vmatprep.mubr.f32.mxu0 0.0
        %7259 = vmatmul.mubr.f32.gmra.mrb[0].mxu0 %v7061
        %v7260 = vpop.f32.mrb[0].mxu0
        %v7261 = vadd.f32 0.0, %v7260
        %v7262 = vpop.f32.mrb[0].mxu0
        %7263 = vmatprep.mubr.f32.mxu0 0.0
        %7264 = vmatmul.mubr.f32.gmra.mrb[0].mxu0 %v7062
        %v7265 = vpop.f32.mrb[0].mxu0
        %v7266 = vadd.f32 0.0, %v7265
        %v7267 = vpop.f32.mrb[0].mxu0
        %7268 = vmatprep.mubr.f32.mxu0 0.0
        %7269 = vmatmul.mubr.f32.gmra.mrb[0].mxu0 %v7063
        %v7270 = vpop.f32.mrb[0].mxu0
        %v7271 = vadd.f32 0.0, %v7270
        %v7272 = vpop.f32.mrb[0].mxu0
        %7273 = vmatprep.mubr.f32.mxu0 0.0
        %7274 = vmatmul.mubr.f32.gmra.mrb[0].mxu0 %v7064
        %v7275 = vpop.f32.mrb[0].mxu0
        %v7276 = vadd.f32 0.0, %v7275
        %v7277 = vpop.f32.mrb[0].mxu0
        %7278 = vmatprep.mubr.f32.mxu0 0.0
        %7279 = vmatmul.mubr.f32.gmra.mrb[0].mxu0 %v7065
        %v7280 = vpop.f32.mrb[0].mxu0
        %v7281 = vadd.f32 0.0, %v7280
        %v7282 = vpop.f32.mrb[0].mxu0
        %7283 = vmatprep.mubr.f32.mxu0 0.0
        %7284 = vmatmul.mubr.f32.gmra.mrb[0].mxu0 %v7066
        %v7285 = vpop.f32.mrb[0].mxu0
        %v7286 = vadd.f32 0.0, %v7285
        %v7287 = vpop.f32.mrb[0].mxu0
        %7288 = vmatprep.mubr.f32.mxu0 0.0
        %7289 = vmatmul.mubr.f32.gmra.mrb[0].mxu0 %v7067
        %v7290 = vpop.f32.mrb[0].mxu0
        %v7291 = vadd.f32 0.0, %v7290
        %v7292 = vpop.f32.mrb[0].mxu0
        %7293 = vmatprep.mubr.f32.mxu0 0.0
        %7294 = vmatmul.mubr.f32.gmra.mrb[0].mxu0 %v7068
        %v7295 = vpop.f32.mrb[0].mxu0
        %v7296 = vadd.f32 0.0, %v7295
        %v7297 = vpop.f32.mrb[0].mxu0
        %7298 = vmatprep.mubr.f32.mxu0 0.0
        %7299 = vmatmul.mubr.f32.gmra.mrb[0].mxu0 %v7069
        %v7300 = vpop.f32.mrb[0].mxu0
        %v7301 = vadd.f32 0.0, %v7300
        %v7302 = vpop.f32.mrb[0].mxu0
        %7303 = vmatprep.mubr.f32.mxu0 0.0
        %7304 = vmatmul.mubr.f32.gmra.mrb[0].mxu0 %v7070
        %v7305 = vpop.f32.mrb[0].mxu0
        %v7306 = vadd.f32 0.0, %v7305
        %v7307 = vpop.f32.mrb[0].mxu0
        %7308 = vmatprep.mubr.f32.mxu0 0.0
        %7309 = vmatmul.mubr.f32.gmra.mrb[0].mxu0 %v7071
        %v7310 = vpop.f32.mrb[0].mxu0
        %v7311 = vadd.f32 0.0, %v7310
        %v7312 = vpop.f32.mrb[0].mxu0
        %7313 = vdwg.mxu0
        %v7314 = vadd.f32 %v7008, %v7156
        %v7315 = vadd.f32 %v7009, %v7161
        %v7316 = vadd.f32 %v7010, %v7166
        %v7317 = vadd.f32 %v7011, %v7171
        %v7318 = vadd.f32 %v7012, %v7176
        %v7319 = vadd.f32 %v7013, %v7181
        %v7320 = vadd.f32 %v7014, %v7186
        %v7321 = vadd.f32 %v7015, %v7191
        %v7322 = vadd.f32 %v7016, %v7196
        %v7323 = vadd.f32 %v7017, %v7201
        %v7324 = vadd.f32 %v7018, %v7206
        %v7325 = vadd.f32 %v7019, %v7211
        %v7326 = vadd.f32 %v7020, %v7216
        %v7327 = vadd.f32 %v7021, %v7221
        %v7328 = vadd.f32 %v7022, %v7226
        %v7329 = vadd.f32 %v7023, %v7231
        %v7330 = vadd.f32 %v7024, %v7236
        %v7331 = vadd.f32 %v7025, %v7241
        %v7332 = vadd.f32 %v7026, %v7246
        %v7333 = vadd.f32 %v7027, %v7251
        %v7334 = vadd.f32 %v7028, %v7256
        %v7335 = vadd.f32 %v7029, %v7261
        %v7336 = vadd.f32 %v7030, %v7266
        %v7337 = vadd.f32 %v7031, %v7271
        %v7338 = vadd.f32 %v7032, %v7276
        %v7339 = vadd.f32 %v7033, %v7281
        %v7340 = vadd.f32 %v7034, %v7286
        %v7341 = vadd.f32 %v7035, %v7291
        %v7342 = vadd.f32 %v7036, %v7296
        %v7343 = vadd.f32 %v7037, %v7301
        %v7344 = vadd.f32 %v7038, %v7306
        %v7345 = vadd.f32 %v7039, %v7311
        %v7346 = vld [vmem:[%s6733 + $0x2] sm:$0xff]
        %v7347 = vld [vmem:[%s6733 + $0xa] sm:$0xff]
        %v7348 = vld [vmem:[%s6733 + $0x1a] sm:$0xff]
        %v7349 = vld [vmem:[%s6733 + $0x22] sm:$0xff]
        %v7350 = vld [vmem:[%s6733 + $0x32] sm:$0xff]
        %v7351 = vld [vmem:[%s6733 + $0x3a] sm:$0xff]
        %v7352 = vld [vmem:[%s6733 + $0x4a] sm:$0xff]
        %v7353 = vld [vmem:[%s6733 + $0x52] sm:$0xff]
        %v7354 = vld [vmem:[%s6733 + $0x62] sm:$0xff]
        %v7355 = vld [vmem:[%s6733 + $0x6a] sm:$0xff]
        %v7356 = vld [vmem:[%s6733 + $0x7a] sm:$0xff]
        %v7357 = vld [vmem:[%s6733 + $0x82] sm:$0xff]
        %v7358 = vld [vmem:[%s6733 + $0x92] sm:$0xff]
        %v7359 = vld [vmem:[%s6733 + $0x9a] sm:$0xff]
        %v7360 = vld [vmem:[%s6733 + $0xaa] sm:$0xff]
        %v7361 = vld [vmem:[%s6733 + $0xb2] sm:$0xff]
        %v7362 = vld [vmem:[%s6733 + $0xc2] sm:$0xff]
        %v7363 = vld [vmem:[%s6733 + $0xca] sm:$0xff]
        %v7364 = vld [vmem:[%s6733 + $0xda] sm:$0xff]
        %v7365 = vld [vmem:[%s6733 + $0xe2] sm:$0xff]
        %v7366 = vld [vmem:[%s6733 + $0xf2] sm:$0xff]
        %v7367 = vld [vmem:[%s6733 + $0xfa] sm:$0xff]
        %v7368 = vld [vmem:[%s6733 + $0x10a] sm:$0xff]
        %v7369 = vld [vmem:[%s6733 + $0x112] sm:$0xff]
        %v7370 = vld [vmem:[%s6733 + $0x122] sm:$0xff]
        %v7371 = vld [vmem:[%s6733 + $0x12a] sm:$0xff]
        %v7372 = vld [vmem:[%s6733 + $0x13a] sm:$0xff]
        %v7373 = vld [vmem:[%s6733 + $0x142] sm:$0xff]
        %v7374 = vld [vmem:[%s6733 + $0x152] sm:$0xff]
        %v7375 = vld [vmem:[%s6733 + $0x15a] sm:$0xff]
        %v7376 = vld [vmem:[%s6733 + $0x16a] sm:$0xff]
        %v7377 = vld [vmem:[%s6733 + $0x172] sm:$0xff]
        %s7378 = scalar_lea.vmem %s3, 640
        %v7379 = vld [vmem:[%s7378] sm:$0xff]
        %v7380 = vld [vmem:[%s7378 + $0x8] sm:$0xff]
        %v7381 = vld [vmem:[%s7378 + $0x10] sm:$0xff]
        %v7382 = vld [vmem:[%s7378 + $0x18] sm:$0xff]
        %v7383 = vld [vmem:[%s7378 + $0x20] sm:$0xff]
        %v7384 = vld [vmem:[%s7378 + $0x28] sm:$0xff]
        %v7385 = vld [vmem:[%s7378 + $0x30] sm:$0xff]
        %v7386 = vld [vmem:[%s7378 + $0x38] sm:$0xff]
        %v7387 = vld [vmem:[%s7378 + $0x40] sm:$0xff]
        %v7388 = vld [vmem:[%s7378 + $0x48] sm:$0xff]
        %v7389 = vld [vmem:[%s7378 + $0x50] sm:$0xff]
        %v7390 = vld [vmem:[%s7378 + $0x58] sm:$0xff]
        %v7391 = vld [vmem:[%s7378 + $0x60] sm:$0xff]
        %v7392 = vld [vmem:[%s7378 + $0x68] sm:$0xff]
        %v7393 = vld [vmem:[%s7378 + $0x70] sm:$0xff]
        %v7394 = vld [vmem:[%s7378 + $0x78] sm:$0xff]
        %7395 = vmatprep.subr.mxu0 0.0
        %7396 = vmatpush1.msra.mxu0 %v7379
        %7397 = vmatprep.subr.mxu0 0.0
        %7398 = vmatpush1.msra.mxu0 %v7380
        %7399 = vmatprep.subr.mxu0 0.0
        %7400 = vmatpush1.msra.mxu0 %v7381
        %7401 = vmatprep.subr.mxu0 0.0
        %7402 = vmatpush1.msra.mxu0 %v7382
        %7403 = vmatprep.subr.mxu0 0.0
        %7404 = vmatpush1.msra.mxu0 %v7383
        %7405 = vmatprep.subr.mxu0 0.0
        %7406 = vmatpush1.msra.mxu0 %v7384
        %7407 = vmatprep.subr.mxu0 0.0
        %7408 = vmatpush1.msra.mxu0 %v7385
        %7409 = vmatprep.subr.mxu0 0.0
        %7410 = vmatpush1.msra.mxu0 %v7386
        %7411 = vmatprep.subr.mxu0 0.0
        %7412 = vmatpush1.msra.mxu0 %v7387
        %7413 = vmatprep.subr.mxu0 0.0
        %7414 = vmatpush1.msra.mxu0 %v7388
        %7415 = vmatprep.subr.mxu0 0.0
        %7416 = vmatpush1.msra.mxu0 %v7389
        %7417 = vmatprep.subr.mxu0 0.0
        %7418 = vmatpush1.msra.mxu0 %v7390
        %7419 = vmatprep.subr.mxu0 0.0
        %7420 = vmatpush1.msra.mxu0 %v7391
        %7421 = vmatprep.subr.mxu0 0.0
        %7422 = vmatpush1.msra.mxu0 %v7392
        %7423 = vmatprep.subr.mxu0 0.0
        %7424 = vmatpush1.msra.mxu0 %v7393
        %7425 = vmatprep.subr.mxu0 0.0
        %7426 = vmatpush1.msra.mxu0 %v7394
        %7427 = vmatprep.subr.mxu0 0.0
        %7428 = vmatpush1.msra.mxu0 0.0
        %7429 = vmatprep.subr.mxu0 0.0
        %7430 = vmatpush1.msra.mxu0 0.0
        %7431 = vmatprep.subr.mxu0 0.0
        %7432 = vmatpush1.msra.mxu0 0.0
        %7433 = vmatprep.subr.mxu0 0.0
        %7434 = vmatpush1.msra.mxu0 0.0
        %7435 = vmatprep.subr.mxu0 0.0
        %7436 = vmatpush1.msra.mxu0 0.0
        %7437 = vmatprep.subr.mxu0 0.0
        %7438 = vmatpush1.msra.mxu0 0.0
        %7439 = vmatprep.subr.mxu0 0.0
        %7440 = vmatpush1.msra.mxu0 0.0
        %7441 = vmatprep.subr.mxu0 0.0
        %7442 = vmatpush1.msra.mxu0 0.0
        %7443 = vmatprep.subr.mxu0 0.0
        %7444 = vmatpush1.msra.mxu0 0.0
        %7445 = vmatprep.subr.mxu0 0.0
        %7446 = vmatpush1.msra.mxu0 0.0
        %7447 = vmatprep.subr.mxu0 0.0
        %7448 = vmatpush1.msra.mxu0 0.0
        %7449 = vmatprep.subr.mxu0 0.0
        %7450 = vmatpush1.msra.mxu0 0.0
        %7451 = vmatprep.subr.mxu0 0.0
        %7452 = vmatpush1.msra.mxu0 0.0
        %7453 = vmatprep.subr.mxu0 0.0
        %7454 = vmatpush1.msra.mxu0 0.0
        %7455 = vmatprep.subr.mxu0 0.0
        %7456 = vmatpush1.msra.mxu0 0.0
        %7457 = vmatprep.subr.mxu0 0.0
        %7458 = vmatpush1.msra.mxu0 0.0
        %7459 = vmatprep.mubr.f32.mxu0 0.0
        %7460 = vmatmul.mubr.f32.gmra.mrb[0].mxu0 %v7346
        %v7461 = vpop.f32.mrb[0].mxu0
        %v7462 = vadd.f32 0.0, %v7461
        %v7463 = vpop.f32.mrb[0].mxu0
        %7464 = vmatprep.mubr.f32.mxu0 0.0
        %7465 = vmatmul.mubr.f32.gmra.mrb[0].mxu0 %v7347
        %v7466 = vpop.f32.mrb[0].mxu0
        %v7467 = vadd.f32 0.0, %v7466
        %v7468 = vpop.f32.mrb[0].mxu0
        %7469 = vmatprep.mubr.f32.mxu0 0.0
        %7470 = vmatmul.mubr.f32.gmra.mrb[0].mxu0 %v7348
        %v7471 = vpop.f32.mrb[0].mxu0
        %v7472 = vadd.f32 0.0, %v7471
        %v7473 = vpop.f32.mrb[0].mxu0
        %7474 = vmatprep.mubr.f32.mxu0 0.0
        %7475 = vmatmul.mubr.f32.gmra.mrb[0].mxu0 %v7349
        %v7476 = vpop.f32.mrb[0].mxu0
        %v7477 = vadd.f32 0.0, %v7476
        %v7478 = vpop.f32.mrb[0].mxu0
        %7479 = vmatprep.mubr.f32.mxu0 0.0
        %7480 = vmatmul.mubr.f32.gmra.mrb[0].mxu0 %v7350
        %v7481 = vpop.f32.mrb[0].mxu0
        %v7482 = vadd.f32 0.0, %v7481
        %v7483 = vpop.f32.mrb[0].mxu0
        %7484 = vmatprep.mubr.f32.mxu0 0.0
        %7485 = vmatmul.mubr.f32.gmra.mrb[0].mxu0 %v7351
        %v7486 = vpop.f32.mrb[0].mxu0
        %v7487 = vadd.f32 0.0, %v7486
        %v7488 = vpop.f32.mrb[0].mxu0
        %7489 = vmatprep.mubr.f32.mxu0 0.0
        %7490 = vmatmul.mubr.f32.gmra.mrb[0].mxu0 %v7352
        %v7491 = vpop.f32.mrb[0].mxu0
        %v7492 = vadd.f32 0.0, %v7491
        %v7493 = vpop.f32.mrb[0].mxu0
        %7494 = vmatprep.mubr.f32.mxu0 0.0
        %7495 = vmatmul.mubr.f32.gmra.mrb[0].mxu0 %v7353
        %v7496 = vpop.f32.mrb[0].mxu0
        %v7497 = vadd.f32 0.0, %v7496
        %v7498 = vpop.f32.mrb[0].mxu0
        %7499 = vmatprep.mubr.f32.mxu0 0.0
        %7500 = vmatmul.mubr.f32.gmra.mrb[0].mxu0 %v7354
        %v7501 = vpop.f32.mrb[0].mxu0
        %v7502 = vadd.f32 0.0, %v7501
        %v7503 = vpop.f32.mrb[0].mxu0
        %7504 = vmatprep.mubr.f32.mxu0 0.0
        %7505 = vmatmul.mubr.f32.gmra.mrb[0].mxu0 %v7355
        %v7506 = vpop.f32.mrb[0].mxu0
        %v7507 = vadd.f32 0.0, %v7506
        %v7508 = vpop.f32.mrb[0].mxu0
        %7509 = vmatprep.mubr.f32.mxu0 0.0
        %7510 = vmatmul.mubr.f32.gmra.mrb[0].mxu0 %v7356
        %v7511 = vpop.f32.mrb[0].mxu0
        %v7512 = vadd.f32 0.0, %v7511
        %v7513 = vpop.f32.mrb[0].mxu0
        %7514 = vmatprep.mubr.f32.mxu0 0.0
        %7515 = vmatmul.mubr.f32.gmra.mrb[0].mxu0 %v7357
        %v7516 = vpop.f32.mrb[0].mxu0
        %v7517 = vadd.f32 0.0, %v7516
        %v7518 = vpop.f32.mrb[0].mxu0
        %7519 = vmatprep.mubr.f32.mxu0 0.0
        %7520 = vmatmul.mubr.f32.gmra.mrb[0].mxu0 %v7358
        %v7521 = vpop.f32.mrb[0].mxu0
        %v7522 = vadd.f32 0.0, %v7521
        %v7523 = vpop.f32.mrb[0].mxu0
        %7524 = vmatprep.mubr.f32.mxu0 0.0
        %7525 = vmatmul.mubr.f32.gmra.mrb[0].mxu0 %v7359
        %v7526 = vpop.f32.mrb[0].mxu0
        %v7527 = vadd.f32 0.0, %v7526
        %v7528 = vpop.f32.mrb[0].mxu0
        %7529 = vmatprep.mubr.f32.mxu0 0.0
        %7530 = vmatmul.mubr.f32.gmra.mrb[0].mxu0 %v7360
        %v7531 = vpop.f32.mrb[0].mxu0
        %v7532 = vadd.f32 0.0, %v7531
        %v7533 = vpop.f32.mrb[0].mxu0
        %7534 = vmatprep.mubr.f32.mxu0 0.0
        %7535 = vmatmul.mubr.f32.gmra.mrb[0].mxu0 %v7361
        %v7536 = vpop.f32.mrb[0].mxu0
        %v7537 = vadd.f32 0.0, %v7536
        %v7538 = vpop.f32.mrb[0].mxu0
        %7539 = vmatprep.mubr.f32.mxu0 0.0
        %7540 = vmatmul.mubr.f32.gmra.mrb[0].mxu0 %v7362
        %v7541 = vpop.f32.mrb[0].mxu0
        %v7542 = vadd.f32 0.0, %v7541
        %v7543 = vpop.f32.mrb[0].mxu0
        %7544 = vmatprep.mubr.f32.mxu0 0.0
        %7545 = vmatmul.mubr.f32.gmra.mrb[0].mxu0 %v7363
        %v7546 = vpop.f32.mrb[0].mxu0
        %v7547 = vadd.f32 0.0, %v7546
        %v7548 = vpop.f32.mrb[0].mxu0
        %7549 = vmatprep.mubr.f32.mxu0 0.0
        %7550 = vmatmul.mubr.f32.gmra.mrb[0].mxu0 %v7364
        %v7551 = vpop.f32.mrb[0].mxu0
        %v7552 = vadd.f32 0.0, %v7551
        %v7553 = vpop.f32.mrb[0].mxu0
        %7554 = vmatprep.mubr.f32.mxu0 0.0
        %7555 = vmatmul.mubr.f32.gmra.mrb[0].mxu0 %v7365
        %v7556 = vpop.f32.mrb[0].mxu0
        %v7557 = vadd.f32 0.0, %v7556
        %v7558 = vpop.f32.mrb[0].mxu0
        %7559 = vmatprep.mubr.f32.mxu0 0.0
        %7560 = vmatmul.mubr.f32.gmra.mrb[0].mxu0 %v7366
        %v7561 = vpop.f32.mrb[0].mxu0
        %v7562 = vadd.f32 0.0, %v7561
        %v7563 = vpop.f32.mrb[0].mxu0
        %7564 = vmatprep.mubr.f32.mxu0 0.0
        %7565 = vmatmul.mubr.f32.gmra.mrb[0].mxu0 %v7367
        %v7566 = vpop.f32.mrb[0].mxu0
        %v7567 = vadd.f32 0.0, %v7566
        %v7568 = vpop.f32.mrb[0].mxu0
        %7569 = vmatprep.mubr.f32.mxu0 0.0
        %7570 = vmatmul.mubr.f32.gmra.mrb[0].mxu0 %v7368
        %v7571 = vpop.f32.mrb[0].mxu0
        %v7572 = vadd.f32 0.0, %v7571
        %v7573 = vpop.f32.mrb[0].mxu0
        %7574 = vmatprep.mubr.f32.mxu0 0.0
        %7575 = vmatmul.mubr.f32.gmra.mrb[0].mxu0 %v7369
        %v7576 = vpop.f32.mrb[0].mxu0
        %v7577 = vadd.f32 0.0, %v7576
        %v7578 = vpop.f32.mrb[0].mxu0
        %7579 = vmatprep.mubr.f32.mxu0 0.0
        %7580 = vmatmul.mubr.f32.gmra.mrb[0].mxu0 %v7370
        %v7581 = vpop.f32.mrb[0].mxu0
        %v7582 = vadd.f32 0.0, %v7581
        %v7583 = vpop.f32.mrb[0].mxu0
        %7584 = vmatprep.mubr.f32.mxu0 0.0
        %7585 = vmatmul.mubr.f32.gmra.mrb[0].mxu0 %v7371
        %v7586 = vpop.f32.mrb[0].mxu0
        %v7587 = vadd.f32 0.0, %v7586
        %v7588 = vpop.f32.mrb[0].mxu0
        %7589 = vmatprep.mubr.f32.mxu0 0.0
        %7590 = vmatmul.mubr.f32.gmra.mrb[0].mxu0 %v7372
        %v7591 = vpop.f32.mrb[0].mxu0
        %v7592 = vadd.f32 0.0, %v7591
        %v7593 = vpop.f32.mrb[0].mxu0
        %7594 = vmatprep.mubr.f32.mxu0 0.0
        %7595 = vmatmul.mubr.f32.gmra.mrb[0].mxu0 %v7373
        %v7596 = vpop.f32.mrb[0].mxu0
        %v7597 = vadd.f32 0.0, %v7596
        %v7598 = vpop.f32.mrb[0].mxu0
        %7599 = vmatprep.mubr.f32.mxu0 0.0
        %7600 = vmatmul.mubr.f32.gmra.mrb[0].mxu0 %v7374
        %v7601 = vpop.f32.mrb[0].mxu0
        %v7602 = vadd.f32 0.0, %v7601
        %v7603 = vpop.f32.mrb[0].mxu0
        %7604 = vmatprep.mubr.f32.mxu0 0.0
        %7605 = vmatmul.mubr.f32.gmra.mrb[0].mxu0 %v7375
        %v7606 = vpop.f32.mrb[0].mxu0
        %v7607 = vadd.f32 0.0, %v7606
        %v7608 = vpop.f32.mrb[0].mxu0
        %7609 = vmatprep.mubr.f32.mxu0 0.0
        %7610 = vmatmul.mubr.f32.gmra.mrb[0].mxu0 %v7376
        %v7611 = vpop.f32.mrb[0].mxu0
        %v7612 = vadd.f32 0.0, %v7611
        %v7613 = vpop.f32.mrb[0].mxu0
        %7614 = vmatprep.mubr.f32.mxu0 0.0
        %7615 = vmatmul.mubr.f32.gmra.mrb[0].mxu0 %v7377
        %v7616 = vpop.f32.mrb[0].mxu0
        %v7617 = vadd.f32 0.0, %v7616
        %v7618 = vpop.f32.mrb[0].mxu0
        %7619 = vdwg.mxu0
        %v7620 = vadd.f32 %v7314, %v7462
        %v7621 = vadd.f32 %v7315, %v7467
        %v7622 = vadd.f32 %v7316, %v7472
        %v7623 = vadd.f32 %v7317, %v7477
        %v7624 = vadd.f32 %v7318, %v7482
        %v7625 = vadd.f32 %v7319, %v7487
        %v7626 = vadd.f32 %v7320, %v7492
        %v7627 = vadd.f32 %v7321, %v7497
        %v7628 = vadd.f32 %v7322, %v7502
        %v7629 = vadd.f32 %v7323, %v7507
        %v7630 = vadd.f32 %v7324, %v7512
        %v7631 = vadd.f32 %v7325, %v7517
        %v7632 = vadd.f32 %v7326, %v7522
        %v7633 = vadd.f32 %v7327, %v7527
        %v7634 = vadd.f32 %v7328, %v7532
        %v7635 = vadd.f32 %v7329, %v7537
        %v7636 = vadd.f32 %v7330, %v7542
        %v7637 = vadd.f32 %v7331, %v7547
        %v7638 = vadd.f32 %v7332, %v7552
        %v7639 = vadd.f32 %v7333, %v7557
        %v7640 = vadd.f32 %v7334, %v7562
        %v7641 = vadd.f32 %v7335, %v7567
        %v7642 = vadd.f32 %v7336, %v7572
        %v7643 = vadd.f32 %v7337, %v7577
        %v7644 = vadd.f32 %v7338, %v7582
        %v7645 = vadd.f32 %v7339, %v7587
        %v7646 = vadd.f32 %v7340, %v7592
        %v7647 = vadd.f32 %v7341, %v7597
        %v7648 = vadd.f32 %v7342, %v7602
        %v7649 = vadd.f32 %v7343, %v7607
        %v7650 = vadd.f32 %v7344, %v7612
        %v7651 = vadd.f32 %v7345, %v7617
        %s7652 = scalar_lea.vmem [#allocation2], 48
        %v7653 = vld [vmem:[%s7652] sm:$0xff]
        %v7654 = vld [vmem:[%s7652 + $0x8] sm:$0xff]
        %v7655 = vld [vmem:[%s7652 + $0x18] sm:$0xff]
        %v7656 = vld [vmem:[%s7652 + $0x20] sm:$0xff]
        %v7657 = vld [vmem:[%s7652 + $0x30] sm:$0xff]
        %v7658 = vld [vmem:[%s7652 + $0x38] sm:$0xff]
        %v7659 = vld [vmem:[%s7652 + $0x48] sm:$0xff]
        %v7660 = vld [vmem:[%s7652 + $0x50] sm:$0xff]
        %v7661 = vld [vmem:[%s7652 + $0x60] sm:$0xff]
        %v7662 = vld [vmem:[%s7652 + $0x68] sm:$0xff]
        %v7663 = vld [vmem:[%s7652 + $0x78] sm:$0xff]
        %v7664 = vld [vmem:[%s7652 + $0x80] sm:$0xff]
        %v7665 = vld [vmem:[%s7652 + $0x90] sm:$0xff]
        %v7666 = vld [vmem:[%s7652 + $0x98] sm:$0xff]
        %v7667 = vld [vmem:[%s7652 + $0xa8] sm:$0xff]
        %v7668 = vld [vmem:[%s7652 + $0xb0] sm:$0xff]
        %v7669 = vld [vmem:[%s7652 + $0xc0] sm:$0xff]
        %v7670 = vld [vmem:[%s7652 + $0xc8] sm:$0xff]
        %v7671 = vld [vmem:[%s7652 + $0xd8] sm:$0xff]
        %v7672 = vld [vmem:[%s7652 + $0xe0] sm:$0xff]
        %v7673 = vld [vmem:[%s7652 + $0xf0] sm:$0xff]
        %v7674 = vld [vmem:[%s7652 + $0xf8] sm:$0xff]
        %v7675 = vld [vmem:[%s7652 + $0x108] sm:$0xff]
        %v7676 = vld [vmem:[%s7652 + $0x110] sm:$0xff]
        %v7677 = vld [vmem:[%s7652 + $0x120] sm:$0xff]
        %v7678 = vld [vmem:[%s7652 + $0x128] sm:$0xff]
        %v7679 = vld [vmem:[%s7652 + $0x138] sm:$0xff]
        %v7680 = vld [vmem:[%s7652 + $0x140] sm:$0xff]
        %v7681 = vld [vmem:[%s7652 + $0x150] sm:$0xff]
        %v7682 = vld [vmem:[%s7652 + $0x158] sm:$0xff]
        %v7683 = vld [vmem:[%s7652 + $0x168] sm:$0xff]
        %v7684 = vld [vmem:[%s7652 + $0x170] sm:$0xff]
        %s7685 = scalar_lea.vmem %s3, 768
        %v7686 = vld [vmem:[%s7685] sm:$0xff]
        %v7687 = vld [vmem:[%s7685 + $0x8] sm:$0xff]
        %v7688 = vld [vmem:[%s7685 + $0x10] sm:$0xff]
        %v7689 = vld [vmem:[%s7685 + $0x18] sm:$0xff]
        %v7690 = vld [vmem:[%s7685 + $0x20] sm:$0xff]
        %v7691 = vld [vmem:[%s7685 + $0x28] sm:$0xff]
        %v7692 = vld [vmem:[%s7685 + $0x30] sm:$0xff]
        %v7693 = vld [vmem:[%s7685 + $0x38] sm:$0xff]
        %v7694 = vld [vmem:[%s7685 + $0x40] sm:$0xff]
        %v7695 = vld [vmem:[%s7685 + $0x48] sm:$0xff]
        %v7696 = vld [vmem:[%s7685 + $0x50] sm:$0xff]
        %v7697 = vld [vmem:[%s7685 + $0x58] sm:$0xff]
        %v7698 = vld [vmem:[%s7685 + $0x60] sm:$0xff]
        %v7699 = vld [vmem:[%s7685 + $0x68] sm:$0xff]
        %v7700 = vld [vmem:[%s7685 + $0x70] sm:$0xff]
        %v7701 = vld [vmem:[%s7685 + $0x78] sm:$0xff]
        %7702 = vmatprep.subr.mxu0 0.0
        %7703 = vmatpush1.msra.mxu0 %v7686
        %7704 = vmatprep.subr.mxu0 0.0
        %7705 = vmatpush1.msra.mxu0 %v7687
        %7706 = vmatprep.subr.mxu0 0.0
        %7707 = vmatpush1.msra.mxu0 %v7688
        %7708 = vmatprep.subr.mxu0 0.0
        %7709 = vmatpush1.msra.mxu0 %v7689
        %7710 = vmatprep.subr.mxu0 0.0
        %7711 = vmatpush1.msra.mxu0 %v7690
        %7712 = vmatprep.subr.mxu0 0.0
        %7713 = vmatpush1.msra.mxu0 %v7691
        %7714 = vmatprep.subr.mxu0 0.0
        %7715 = vmatpush1.msra.mxu0 %v7692
        %7716 = vmatprep.subr.mxu0 0.0
        %7717 = vmatpush1.msra.mxu0 %v7693
        %7718 = vmatprep.subr.mxu0 0.0
        %7719 = vmatpush1.msra.mxu0 %v7694
        %7720 = vmatprep.subr.mxu0 0.0
        %7721 = vmatpush1.msra.mxu0 %v7695
        %7722 = vmatprep.subr.mxu0 0.0
        %7723 = vmatpush1.msra.mxu0 %v7696
        %7724 = vmatprep.subr.mxu0 0.0
        %7725 = vmatpush1.msra.mxu0 %v7697
        %7726 = vmatprep.subr.mxu0 0.0
        %7727 = vmatpush1.msra.mxu0 %v7698
        %7728 = vmatprep.subr.mxu0 0.0
        %7729 = vmatpush1.msra.mxu0 %v7699
        %7730 = vmatprep.subr.mxu0 0.0
        %7731 = vmatpush1.msra.mxu0 %v7700
        %7732 = vmatprep.subr.mxu0 0.0
        %7733 = vmatpush1.msra.mxu0 %v7701
        %7734 = vmatprep.subr.mxu0 0.0
        %7735 = vmatpush1.msra.mxu0 0.0
        %7736 = vmatprep.subr.mxu0 0.0
        %7737 = vmatpush1.msra.mxu0 0.0
        %7738 = vmatprep.subr.mxu0 0.0
        %7739 = vmatpush1.msra.mxu0 0.0
        %7740 = vmatprep.subr.mxu0 0.0
        %7741 = vmatpush1.msra.mxu0 0.0
        %7742 = vmatprep.subr.mxu0 0.0
        %7743 = vmatpush1.msra.mxu0 0.0
        %7744 = vmatprep.subr.mxu0 0.0
        %7745 = vmatpush1.msra.mxu0 0.0
        %7746 = vmatprep.subr.mxu0 0.0
        %7747 = vmatpush1.msra.mxu0 0.0
        %7748 = vmatprep.subr.mxu0 0.0
        %7749 = vmatpush1.msra.mxu0 0.0
        %7750 = vmatprep.subr.mxu0 0.0
        %7751 = vmatpush1.msra.mxu0 0.0
        %7752 = vmatprep.subr.mxu0 0.0
        %7753 = vmatpush1.msra.mxu0 0.0
        %7754 = vmatprep.subr.mxu0 0.0
        %7755 = vmatpush1.msra.mxu0 0.0
        %7756 = vmatprep.subr.mxu0 0.0
        %7757 = vmatpush1.msra.mxu0 0.0
        %7758 = vmatprep.subr.mxu0 0.0
        %7759 = vmatpush1.msra.mxu0 0.0
        %7760 = vmatprep.subr.mxu0 0.0
        %7761 = vmatpush1.msra.mxu0 0.0
        %7762 = vmatprep.subr.mxu0 0.0
        %7763 = vmatpush1.msra.mxu0 0.0
        %7764 = vmatprep.subr.mxu0 0.0
        %7765 = vmatpush1.msra.mxu0 0.0
        %7766 = vmatprep.mubr.f32.mxu0 0.0
        %7767 = vmatmul.mubr.f32.gmra.mrb[0].mxu0 %v7653
        %v7768 = vpop.f32.mrb[0].mxu0
        %v7769 = vadd.f32 0.0, %v7768
        %v7770 = vpop.f32.mrb[0].mxu0
        %7771 = vmatprep.mubr.f32.mxu0 0.0
        %7772 = vmatmul.mubr.f32.gmra.mrb[0].mxu0 %v7654
        %v7773 = vpop.f32.mrb[0].mxu0
        %v7774 = vadd.f32 0.0, %v7773
        %v7775 = vpop.f32.mrb[0].mxu0
        %7776 = vmatprep.mubr.f32.mxu0 0.0
        %7777 = vmatmul.mubr.f32.gmra.mrb[0].mxu0 %v7655
        %v7778 = vpop.f32.mrb[0].mxu0
        %v7779 = vadd.f32 0.0, %v7778
        %v7780 = vpop.f32.mrb[0].mxu0
        %7781 = vmatprep.mubr.f32.mxu0 0.0
        %7782 = vmatmul.mubr.f32.gmra.mrb[0].mxu0 %v7656
        %v7783 = vpop.f32.mrb[0].mxu0
        %v7784 = vadd.f32 0.0, %v7783
        %v7785 = vpop.f32.mrb[0].mxu0
        %7786 = vmatprep.mubr.f32.mxu0 0.0
        %7787 = vmatmul.mubr.f32.gmra.mrb[0].mxu0 %v7657
        %v7788 = vpop.f32.mrb[0].mxu0
        %v7789 = vadd.f32 0.0, %v7788
        %v7790 = vpop.f32.mrb[0].mxu0
        %7791 = vmatprep.mubr.f32.mxu0 0.0
        %7792 = vmatmul.mubr.f32.gmra.mrb[0].mxu0 %v7658
        %v7793 = vpop.f32.mrb[0].mxu0
        %v7794 = vadd.f32 0.0, %v7793
        %v7795 = vpop.f32.mrb[0].mxu0
        %7796 = vmatprep.mubr.f32.mxu0 0.0
        %7797 = vmatmul.mubr.f32.gmra.mrb[0].mxu0 %v7659
        %v7798 = vpop.f32.mrb[0].mxu0
        %v7799 = vadd.f32 0.0, %v7798
        %v7800 = vpop.f32.mrb[0].mxu0
        %7801 = vmatprep.mubr.f32.mxu0 0.0
        %7802 = vmatmul.mubr.f32.gmra.mrb[0].mxu0 %v7660
        %v7803 = vpop.f32.mrb[0].mxu0
        %v7804 = vadd.f32 0.0, %v7803
        %v7805 = vpop.f32.mrb[0].mxu0
        %7806 = vmatprep.mubr.f32.mxu0 0.0
        %7807 = vmatmul.mubr.f32.gmra.mrb[0].mxu0 %v7661
        %v7808 = vpop.f32.mrb[0].mxu0
        %v7809 = vadd.f32 0.0, %v7808
        %v7810 = vpop.f32.mrb[0].mxu0
        %7811 = vmatprep.mubr.f32.mxu0 0.0
        %7812 = vmatmul.mubr.f32.gmra.mrb[0].mxu0 %v7662
        %v7813 = vpop.f32.mrb[0].mxu0
        %v7814 = vadd.f32 0.0, %v7813
        %v7815 = vpop.f32.mrb[0].mxu0
        %7816 = vmatprep.mubr.f32.mxu0 0.0
        %7817 = vmatmul.mubr.f32.gmra.mrb[0].mxu0 %v7663
        %v7818 = vpop.f32.mrb[0].mxu0
        %v7819 = vadd.f32 0.0, %v7818
        %v7820 = vpop.f32.mrb[0].mxu0
        %7821 = vmatprep.mubr.f32.mxu0 0.0
        %7822 = vmatmul.mubr.f32.gmra.mrb[0].mxu0 %v7664
        %v7823 = vpop.f32.mrb[0].mxu0
        %v7824 = vadd.f32 0.0, %v7823
        %v7825 = vpop.f32.mrb[0].mxu0
        %7826 = vmatprep.mubr.f32.mxu0 0.0
        %7827 = vmatmul.mubr.f32.gmra.mrb[0].mxu0 %v7665
        %v7828 = vpop.f32.mrb[0].mxu0
        %v7829 = vadd.f32 0.0, %v7828
        %v7830 = vpop.f32.mrb[0].mxu0
        %7831 = vmatprep.mubr.f32.mxu0 0.0
        %7832 = vmatmul.mubr.f32.gmra.mrb[0].mxu0 %v7666
        %v7833 = vpop.f32.mrb[0].mxu0
        %v7834 = vadd.f32 0.0, %v7833
        %v7835 = vpop.f32.mrb[0].mxu0
        %7836 = vmatprep.mubr.f32.mxu0 0.0
        %7837 = vmatmul.mubr.f32.gmra.mrb[0].mxu0 %v7667
        %v7838 = vpop.f32.mrb[0].mxu0
        %v7839 = vadd.f32 0.0, %v7838
        %v7840 = vpop.f32.mrb[0].mxu0
        %7841 = vmatprep.mubr.f32.mxu0 0.0
        %7842 = vmatmul.mubr.f32.gmra.mrb[0].mxu0 %v7668
        %v7843 = vpop.f32.mrb[0].mxu0
        %v7844 = vadd.f32 0.0, %v7843
        %v7845 = vpop.f32.mrb[0].mxu0
        %7846 = vmatprep.mubr.f32.mxu0 0.0
        %7847 = vmatmul.mubr.f32.gmra.mrb[0].mxu0 %v7669
        %v7848 = vpop.f32.mrb[0].mxu0
        %v7849 = vadd.f32 0.0, %v7848
        %v7850 = vpop.f32.mrb[0].mxu0
        %7851 = vmatprep.mubr.f32.mxu0 0.0
        %7852 = vmatmul.mubr.f32.gmra.mrb[0].mxu0 %v7670
        %v7853 = vpop.f32.mrb[0].mxu0
        %v7854 = vadd.f32 0.0, %v7853
        %v7855 = vpop.f32.mrb[0].mxu0
        %7856 = vmatprep.mubr.f32.mxu0 0.0
        %7857 = vmatmul.mubr.f32.gmra.mrb[0].mxu0 %v7671
        %v7858 = vpop.f32.mrb[0].mxu0
        %v7859 = vadd.f32 0.0, %v7858
        %v7860 = vpop.f32.mrb[0].mxu0
        %7861 = vmatprep.mubr.f32.mxu0 0.0
        %7862 = vmatmul.mubr.f32.gmra.mrb[0].mxu0 %v7672
        %v7863 = vpop.f32.mrb[0].mxu0
        %v7864 = vadd.f32 0.0, %v7863
        %v7865 = vpop.f32.mrb[0].mxu0
        %7866 = vmatprep.mubr.f32.mxu0 0.0
        %7867 = vmatmul.mubr.f32.gmra.mrb[0].mxu0 %v7673
        %v7868 = vpop.f32.mrb[0].mxu0
        %v7869 = vadd.f32 0.0, %v7868
        %v7870 = vpop.f32.mrb[0].mxu0
        %7871 = vmatprep.mubr.f32.mxu0 0.0
        %7872 = vmatmul.mubr.f32.gmra.mrb[0].mxu0 %v7674
        %v7873 = vpop.f32.mrb[0].mxu0
        %v7874 = vadd.f32 0.0, %v7873
        %v7875 = vpop.f32.mrb[0].mxu0
        %7876 = vmatprep.mubr.f32.mxu0 0.0
        %7877 = vmatmul.mubr.f32.gmra.mrb[0].mxu0 %v7675
        %v7878 = vpop.f32.mrb[0].mxu0
        %v7879 = vadd.f32 0.0, %v7878
        %v7880 = vpop.f32.mrb[0].mxu0
        %7881 = vmatprep.mubr.f32.mxu0 0.0
        %7882 = vmatmul.mubr.f32.gmra.mrb[0].mxu0 %v7676
        %v7883 = vpop.f32.mrb[0].mxu0
        %v7884 = vadd.f32 0.0, %v7883
        %v7885 = vpop.f32.mrb[0].mxu0
        %7886 = vmatprep.mubr.f32.mxu0 0.0
        %7887 = vmatmul.mubr.f32.gmra.mrb[0].mxu0 %v7677
        %v7888 = vpop.f32.mrb[0].mxu0
        %v7889 = vadd.f32 0.0, %v7888
        %v7890 = vpop.f32.mrb[0].mxu0
        %7891 = vmatprep.mubr.f32.mxu0 0.0
        %7892 = vmatmul.mubr.f32.gmra.mrb[0].mxu0 %v7678
        %v7893 = vpop.f32.mrb[0].mxu0
        %v7894 = vadd.f32 0.0, %v7893
        %v7895 = vpop.f32.mrb[0].mxu0
        %7896 = vmatprep.mubr.f32.mxu0 0.0
        %7897 = vmatmul.mubr.f32.gmra.mrb[0].mxu0 %v7679
        %v7898 = vpop.f32.mrb[0].mxu0
        %v7899 = vadd.f32 0.0, %v7898
        %v7900 = vpop.f32.mrb[0].mxu0
        %7901 = vmatprep.mubr.f32.mxu0 0.0
        %7902 = vmatmul.mubr.f32.gmra.mrb[0].mxu0 %v7680
        %v7903 = vpop.f32.mrb[0].mxu0
        %v7904 = vadd.f32 0.0, %v7903
        %v7905 = vpop.f32.mrb[0].mxu0
        %7906 = vmatprep.mubr.f32.mxu0 0.0
        %7907 = vmatmul.mubr.f32.gmra.mrb[0].mxu0 %v7681
        %v7908 = vpop.f32.mrb[0].mxu0
        %v7909 = vadd.f32 0.0, %v7908
        %v7910 = vpop.f32.mrb[0].mxu0
        %7911 = vmatprep.mubr.f32.mxu0 0.0
        %7912 = vmatmul.mubr.f32.gmra.mrb[0].mxu0 %v7682
        %v7913 = vpop.f32.mrb[0].mxu0
        %v7914 = vadd.f32 0.0, %v7913
        %v7915 = vpop.f32.mrb[0].mxu0
        %7916 = vmatprep.mubr.f32.mxu0 0.0
        %7917 = vmatmul.mubr.f32.gmra.mrb[0].mxu0 %v7683
        %v7918 = vpop.f32.mrb[0].mxu0
        %v7919 = vadd.f32 0.0, %v7918
        %v7920 = vpop.f32.mrb[0].mxu0
        %7921 = vmatprep.mubr.f32.mxu0 0.0
        %7922 = vmatmul.mubr.f32.gmra.mrb[0].mxu0 %v7684
        %v7923 = vpop.f32.mrb[0].mxu0
        %v7924 = vadd.f32 0.0, %v7923
        %v7925 = vpop.f32.mrb[0].mxu0
        %7926 = vdwg.mxu0
        %v7927 = vadd.f32 %v7620, %v7769
        %v7928 = vadd.f32 %v7621, %v7774
        %v7929 = vadd.f32 %v7622, %v7779
        %v7930 = vadd.f32 %v7623, %v7784
        %v7931 = vadd.f32 %v7624, %v7789
        %v7932 = vadd.f32 %v7625, %v7794
        %v7933 = vadd.f32 %v7626, %v7799
        %v7934 = vadd.f32 %v7627, %v7804
        %v7935 = vadd.f32 %v7628, %v7809
        %v7936 = vadd.f32 %v7629, %v7814
        %v7937 = vadd.f32 %v7630, %v7819
        %v7938 = vadd.f32 %v7631, %v7824
        %v7939 = vadd.f32 %v7632, %v7829
        %v7940 = vadd.f32 %v7633, %v7834
        %v7941 = vadd.f32 %v7634, %v7839
        %v7942 = vadd.f32 %v7635, %v7844
        %v7943 = vadd.f32 %v7636, %v7849
        %v7944 = vadd.f32 %v7637, %v7854
        %v7945 = vadd.f32 %v7638, %v7859
        %v7946 = vadd.f32 %v7639, %v7864
        %v7947 = vadd.f32 %v7640, %v7869
        %v7948 = vadd.f32 %v7641, %v7874
        %v7949 = vadd.f32 %v7642, %v7879
        %v7950 = vadd.f32 %v7643, %v7884
        %v7951 = vadd.f32 %v7644, %v7889
        %v7952 = vadd.f32 %v7645, %v7894
        %v7953 = vadd.f32 %v7646, %v7899
        %v7954 = vadd.f32 %v7647, %v7904
        %v7955 = vadd.f32 %v7648, %v7909
        %v7956 = vadd.f32 %v7649, %v7914
        %v7957 = vadd.f32 %v7650, %v7919
        %v7958 = vadd.f32 %v7651, %v7924
        %v7959 = vld [vmem:[%s7652 + $0x1] sm:$0xff]
        %v7960 = vld [vmem:[%s7652 + $0x9] sm:$0xff]
        %v7961 = vld [vmem:[%s7652 + $0x19] sm:$0xff]
        %v7962 = vld [vmem:[%s7652 + $0x21] sm:$0xff]
        %v7963 = vld [vmem:[%s7652 + $0x31] sm:$0xff]
        %v7964 = vld [vmem:[%s7652 + $0x39] sm:$0xff]
        %v7965 = vld [vmem:[%s7652 + $0x49] sm:$0xff]
        %v7966 = vld [vmem:[%s7652 + $0x51] sm:$0xff]
        %v7967 = vld [vmem:[%s7652 + $0x61] sm:$0xff]
        %v7968 = vld [vmem:[%s7652 + $0x69] sm:$0xff]
        %v7969 = vld [vmem:[%s7652 + $0x79] sm:$0xff]
        %v7970 = vld [vmem:[%s7652 + $0x81] sm:$0xff]
        %v7971 = vld [vmem:[%s7652 + $0x91] sm:$0xff]
        %v7972 = vld [vmem:[%s7652 + $0x99] sm:$0xff]
        %v7973 = vld [vmem:[%s7652 + $0xa9] sm:$0xff]
        %v7974 = vld [vmem:[%s7652 + $0xb1] sm:$0xff]
        %v7975 = vld [vmem:[%s7652 + $0xc1] sm:$0xff]
        %v7976 = vld [vmem:[%s7652 + $0xc9] sm:$0xff]
        %v7977 = vld [vmem:[%s7652 + $0xd9] sm:$0xff]
        %v7978 = vld [vmem:[%s7652 + $0xe1] sm:$0xff]
        %v7979 = vld [vmem:[%s7652 + $0xf1] sm:$0xff]
        %v7980 = vld [vmem:[%s7652 + $0xf9] sm:$0xff]
        %v7981 = vld [vmem:[%s7652 + $0x109] sm:$0xff]
        %v7982 = vld [vmem:[%s7652 + $0x111] sm:$0xff]
        %v7983 = vld [vmem:[%s7652 + $0x121] sm:$0xff]
        %v7984 = vld [vmem:[%s7652 + $0x129] sm:$0xff]
        %v7985 = vld [vmem:[%s7652 + $0x139] sm:$0xff]
        %v7986 = vld [vmem:[%s7652 + $0x141] sm:$0xff]
        %v7987 = vld [vmem:[%s7652 + $0x151] sm:$0xff]
        %v7988 = vld [vmem:[%s7652 + $0x159] sm:$0xff]
        %v7989 = vld [vmem:[%s7652 + $0x169] sm:$0xff]
        %v7990 = vld [vmem:[%s7652 + $0x171] sm:$0xff]
        %s7991 = scalar_lea.vmem %s3, 896
        %v7992 = vld [vmem:[%s7991] sm:$0xff]
        %v7993 = vld [vmem:[%s7991 + $0x8] sm:$0xff]
        %v7994 = vld [vmem:[%s7991 + $0x10] sm:$0xff]
        %v7995 = vld [vmem:[%s7991 + $0x18] sm:$0xff]
        %v7996 = vld [vmem:[%s7991 + $0x20] sm:$0xff]
        %v7997 = vld [vmem:[%s7991 + $0x28] sm:$0xff]
        %v7998 = vld [vmem:[%s7991 + $0x30] sm:$0xff]
        %v7999 = vld [vmem:[%s7991 + $0x38] sm:$0xff]
        %v8000 = vld [vmem:[%s7991 + $0x40] sm:$0xff]
        %v8001 = vld [vmem:[%s7991 + $0x48] sm:$0xff]
        %v8002 = vld [vmem:[%s7991 + $0x50] sm:$0xff]
        %v8003 = vld [vmem:[%s7991 + $0x58] sm:$0xff]
        %v8004 = vld [vmem:[%s7991 + $0x60] sm:$0xff]
        %v8005 = vld [vmem:[%s7991 + $0x68] sm:$0xff]
        %v8006 = vld [vmem:[%s7991 + $0x70] sm:$0xff]
        %v8007 = vld [vmem:[%s7991 + $0x78] sm:$0xff]
        %8008 = vmatprep.subr.mxu0 0.0
        %8009 = vmatpush1.msra.mxu0 %v7992
        %8010 = vmatprep.subr.mxu0 0.0
        %8011 = vmatpush1.msra.mxu0 %v7993
        %8012 = vmatprep.subr.mxu0 0.0
        %8013 = vmatpush1.msra.mxu0 %v7994
        %8014 = vmatprep.subr.mxu0 0.0
        %8015 = vmatpush1.msra.mxu0 %v7995
        %8016 = vmatprep.subr.mxu0 0.0
        %8017 = vmatpush1.msra.mxu0 %v7996
        %8018 = vmatprep.subr.mxu0 0.0
        %8019 = vmatpush1.msra.mxu0 %v7997
        %8020 = vmatprep.subr.mxu0 0.0
        %8021 = vmatpush1.msra.mxu0 %v7998
        %8022 = vmatprep.subr.mxu0 0.0
        %8023 = vmatpush1.msra.mxu0 %v7999
        %8024 = vmatprep.subr.mxu0 0.0
        %8025 = vmatpush1.msra.mxu0 %v8000
        %8026 = vmatprep.subr.mxu0 0.0
        %8027 = vmatpush1.msra.mxu0 %v8001
        %8028 = vmatprep.subr.mxu0 0.0
        %8029 = vmatpush1.msra.mxu0 %v8002
        %8030 = vmatprep.subr.mxu0 0.0
        %8031 = vmatpush1.msra.mxu0 %v8003
        %8032 = vmatprep.subr.mxu0 0.0
        %8033 = vmatpush1.msra.mxu0 %v8004
        %8034 = vmatprep.subr.mxu0 0.0
        %8035 = vmatpush1.msra.mxu0 %v8005
        %8036 = vmatprep.subr.mxu0 0.0
        %8037 = vmatpush1.msra.mxu0 %v8006
        %8038 = vmatprep.subr.mxu0 0.0
        %8039 = vmatpush1.msra.mxu0 %v8007
        %8040 = vmatprep.subr.mxu0 0.0
        %8041 = vmatpush1.msra.mxu0 0.0
        %8042 = vmatprep.subr.mxu0 0.0
        %8043 = vmatpush1.msra.mxu0 0.0
        %8044 = vmatprep.subr.mxu0 0.0
        %8045 = vmatpush1.msra.mxu0 0.0
        %8046 = vmatprep.subr.mxu0 0.0
        %8047 = vmatpush1.msra.mxu0 0.0
        %8048 = vmatprep.subr.mxu0 0.0
        %8049 = vmatpush1.msra.mxu0 0.0
        %8050 = vmatprep.subr.mxu0 0.0
        %8051 = vmatpush1.msra.mxu0 0.0
        %8052 = vmatprep.subr.mxu0 0.0
        %8053 = vmatpush1.msra.mxu0 0.0
        %8054 = vmatprep.subr.mxu0 0.0
        %8055 = vmatpush1.msra.mxu0 0.0
        %8056 = vmatprep.subr.mxu0 0.0
        %8057 = vmatpush1.msra.mxu0 0.0
        %8058 = vmatprep.subr.mxu0 0.0
        %8059 = vmatpush1.msra.mxu0 0.0
        %8060 = vmatprep.subr.mxu0 0.0
        %8061 = vmatpush1.msra.mxu0 0.0
        %8062 = vmatprep.subr.mxu0 0.0
        %8063 = vmatpush1.msra.mxu0 0.0
        %8064 = vmatprep.subr.mxu0 0.0
        %8065 = vmatpush1.msra.mxu0 0.0
        %8066 = vmatprep.subr.mxu0 0.0
        %8067 = vmatpush1.msra.mxu0 0.0
        %8068 = vmatprep.subr.mxu0 0.0
        %8069 = vmatpush1.msra.mxu0 0.0
        %8070 = vmatprep.subr.mxu0 0.0
        %8071 = vmatpush1.msra.mxu0 0.0
        %8072 = vmatprep.mubr.f32.mxu0 0.0
        %8073 = vmatmul.mubr.f32.gmra.mrb[0].mxu0 %v7959
        %v8074 = vpop.f32.mrb[0].mxu0
        %v8075 = vadd.f32 0.0, %v8074
        %v8076 = vpop.f32.mrb[0].mxu0
        %8077 = vmatprep.mubr.f32.mxu0 0.0
        %8078 = vmatmul.mubr.f32.gmra.mrb[0].mxu0 %v7960
        %v8079 = vpop.f32.mrb[0].mxu0
        %v8080 = vadd.f32 0.0, %v8079
        %v8081 = vpop.f32.mrb[0].mxu0
        %8082 = vmatprep.mubr.f32.mxu0 0.0
        %8083 = vmatmul.mubr.f32.gmra.mrb[0].mxu0 %v7961
        %v8084 = vpop.f32.mrb[0].mxu0
        %v8085 = vadd.f32 0.0, %v8084
        %v8086 = vpop.f32.mrb[0].mxu0
        %8087 = vmatprep.mubr.f32.mxu0 0.0
        %8088 = vmatmul.mubr.f32.gmra.mrb[0].mxu0 %v7962
        %v8089 = vpop.f32.mrb[0].mxu0
        %v8090 = vadd.f32 0.0, %v8089
        %v8091 = vpop.f32.mrb[0].mxu0
        %8092 = vmatprep.mubr.f32.mxu0 0.0
        %8093 = vmatmul.mubr.f32.gmra.mrb[0].mxu0 %v7963
        %v8094 = vpop.f32.mrb[0].mxu0
        %v8095 = vadd.f32 0.0, %v8094
        %v8096 = vpop.f32.mrb[0].mxu0
        %8097 = vmatprep.mubr.f32.mxu0 0.0
        %8098 = vmatmul.mubr.f32.gmra.mrb[0].mxu0 %v7964
        %v8099 = vpop.f32.mrb[0].mxu0
        %v8100 = vadd.f32 0.0, %v8099
        %v8101 = vpop.f32.mrb[0].mxu0
        %8102 = vmatprep.mubr.f32.mxu0 0.0
        %8103 = vmatmul.mubr.f32.gmra.mrb[0].mxu0 %v7965
        %v8104 = vpop.f32.mrb[0].mxu0
        %v8105 = vadd.f32 0.0, %v8104
        %v8106 = vpop.f32.mrb[0].mxu0
        %8107 = vmatprep.mubr.f32.mxu0 0.0
        %8108 = vmatmul.mubr.f32.gmra.mrb[0].mxu0 %v7966
        %v8109 = vpop.f32.mrb[0].mxu0
        %v8110 = vadd.f32 0.0, %v8109
        %v8111 = vpop.f32.mrb[0].mxu0
        %8112 = vmatprep.mubr.f32.mxu0 0.0
        %8113 = vmatmul.mubr.f32.gmra.mrb[0].mxu0 %v7967
        %v8114 = vpop.f32.mrb[0].mxu0
        %v8115 = vadd.f32 0.0, %v8114
        %v8116 = vpop.f32.mrb[0].mxu0
        %8117 = vmatprep.mubr.f32.mxu0 0.0
        %8118 = vmatmul.mubr.f32.gmra.mrb[0].mxu0 %v7968
        %v8119 = vpop.f32.mrb[0].mxu0
        %v8120 = vadd.f32 0.0, %v8119
        %v8121 = vpop.f32.mrb[0].mxu0
        %8122 = vmatprep.mubr.f32.mxu0 0.0
        %8123 = vmatmul.mubr.f32.gmra.mrb[0].mxu0 %v7969
        %v8124 = vpop.f32.mrb[0].mxu0
        %v8125 = vadd.f32 0.0, %v8124
        %v8126 = vpop.f32.mrb[0].mxu0
        %8127 = vmatprep.mubr.f32.mxu0 0.0
        %8128 = vmatmul.mubr.f32.gmra.mrb[0].mxu0 %v7970
        %v8129 = vpop.f32.mrb[0].mxu0
        %v8130 = vadd.f32 0.0, %v8129
        %v8131 = vpop.f32.mrb[0].mxu0
        %8132 = vmatprep.mubr.f32.mxu0 0.0
        %8133 = vmatmul.mubr.f32.gmra.mrb[0].mxu0 %v7971
        %v8134 = vpop.f32.mrb[0].mxu0
        %v8135 = vadd.f32 0.0, %v8134
        %v8136 = vpop.f32.mrb[0].mxu0
        %8137 = vmatprep.mubr.f32.mxu0 0.0
        %8138 = vmatmul.mubr.f32.gmra.mrb[0].mxu0 %v7972
        %v8139 = vpop.f32.mrb[0].mxu0
        %v8140 = vadd.f32 0.0, %v8139
        %v8141 = vpop.f32.mrb[0].mxu0
        %8142 = vmatprep.mubr.f32.mxu0 0.0
        %8143 = vmatmul.mubr.f32.gmra.mrb[0].mxu0 %v7973
        %v8144 = vpop.f32.mrb[0].mxu0
        %v8145 = vadd.f32 0.0, %v8144
        %v8146 = vpop.f32.mrb[0].mxu0
        %8147 = vmatprep.mubr.f32.mxu0 0.0
        %8148 = vmatmul.mubr.f32.gmra.mrb[0].mxu0 %v7974
        %v8149 = vpop.f32.mrb[0].mxu0
        %v8150 = vadd.f32 0.0, %v8149
        %v8151 = vpop.f32.mrb[0].mxu0
        %8152 = vmatprep.mubr.f32.mxu0 0.0
        %8153 = vmatmul.mubr.f32.gmra.mrb[0].mxu0 %v7975
        %v8154 = vpop.f32.mrb[0].mxu0
        %v8155 = vadd.f32 0.0, %v8154
        %v8156 = vpop.f32.mrb[0].mxu0
        %8157 = vmatprep.mubr.f32.mxu0 0.0
        %8158 = vmatmul.mubr.f32.gmra.mrb[0].mxu0 %v7976
        %v8159 = vpop.f32.mrb[0].mxu0
        %v8160 = vadd.f32 0.0, %v8159
        %v8161 = vpop.f32.mrb[0].mxu0
        %8162 = vmatprep.mubr.f32.mxu0 0.0
        %8163 = vmatmul.mubr.f32.gmra.mrb[0].mxu0 %v7977
        %v8164 = vpop.f32.mrb[0].mxu0
        %v8165 = vadd.f32 0.0, %v8164
        %v8166 = vpop.f32.mrb[0].mxu0
        %8167 = vmatprep.mubr.f32.mxu0 0.0
        %8168 = vmatmul.mubr.f32.gmra.mrb[0].mxu0 %v7978
        %v8169 = vpop.f32.mrb[0].mxu0
        %v8170 = vadd.f32 0.0, %v8169
        %v8171 = vpop.f32.mrb[0].mxu0
        %8172 = vmatprep.mubr.f32.mxu0 0.0
        %8173 = vmatmul.mubr.f32.gmra.mrb[0].mxu0 %v7979
        %v8174 = vpop.f32.mrb[0].mxu0
        %v8175 = vadd.f32 0.0, %v8174
        %v8176 = vpop.f32.mrb[0].mxu0
        %8177 = vmatprep.mubr.f32.mxu0 0.0
        %8178 = vmatmul.mubr.f32.gmra.mrb[0].mxu0 %v7980
        %v8179 = vpop.f32.mrb[0].mxu0
        %v8180 = vadd.f32 0.0, %v8179
        %v8181 = vpop.f32.mrb[0].mxu0
        %8182 = vmatprep.mubr.f32.mxu0 0.0
        %8183 = vmatmul.mubr.f32.gmra.mrb[0].mxu0 %v7981
        %v8184 = vpop.f32.mrb[0].mxu0
        %v8185 = vadd.f32 0.0, %v8184
        %v8186 = vpop.f32.mrb[0].mxu0
        %8187 = vmatprep.mubr.f32.mxu0 0.0
        %8188 = vmatmul.mubr.f32.gmra.mrb[0].mxu0 %v7982
        %v8189 = vpop.f32.mrb[0].mxu0
        %v8190 = vadd.f32 0.0, %v8189
        %v8191 = vpop.f32.mrb[0].mxu0
        %8192 = vmatprep.mubr.f32.mxu0 0.0
        %8193 = vmatmul.mubr.f32.gmra.mrb[0].mxu0 %v7983
        %v8194 = vpop.f32.mrb[0].mxu0
        %v8195 = vadd.f32 0.0, %v8194
        %v8196 = vpop.f32.mrb[0].mxu0
        %8197 = vmatprep.mubr.f32.mxu0 0.0
        %8198 = vmatmul.mubr.f32.gmra.mrb[0].mxu0 %v7984
        %v8199 = vpop.f32.mrb[0].mxu0
        %v8200 = vadd.f32 0.0, %v8199
        %v8201 = vpop.f32.mrb[0].mxu0
        %8202 = vmatprep.mubr.f32.mxu0 0.0
        %8203 = vmatmul.mubr.f32.gmra.mrb[0].mxu0 %v7985
        %v8204 = vpop.f32.mrb[0].mxu0
        %v8205 = vadd.f32 0.0, %v8204
        %v8206 = vpop.f32.mrb[0].mxu0
        %8207 = vmatprep.mubr.f32.mxu0 0.0
        %8208 = vmatmul.mubr.f32.gmra.mrb[0].mxu0 %v7986
        %v8209 = vpop.f32.mrb[0].mxu0
        %v8210 = vadd.f32 0.0, %v8209
        %v8211 = vpop.f32.mrb[0].mxu0
        %8212 = vmatprep.mubr.f32.mxu0 0.0
        %8213 = vmatmul.mubr.f32.gmra.mrb[0].mxu0 %v7987
        %v8214 = vpop.f32.mrb[0].mxu0
        %v8215 = vadd.f32 0.0, %v8214
        %v8216 = vpop.f32.mrb[0].mxu0
        %8217 = vmatprep.mubr.f32.mxu0 0.0
        %8218 = vmatmul.mubr.f32.gmra.mrb[0].mxu0 %v7988
        %v8219 = vpop.f32.mrb[0].mxu0
        %v8220 = vadd.f32 0.0, %v8219
        %v8221 = vpop.f32.mrb[0].mxu0
        %8222 = vmatprep.mubr.f32.mxu0 0.0
        %8223 = vmatmul.mubr.f32.gmra.mrb[0].mxu0 %v7989
        %v8224 = vpop.f32.mrb[0].mxu0
        %v8225 = vadd.f32 0.0, %v8224
        %v8226 = vpop.f32.mrb[0].mxu0
        %8227 = vmatprep.mubr.f32.mxu0 0.0
        %8228 = vmatmul.mubr.f32.gmra.mrb[0].mxu0 %v7990
        %v8229 = vpop.f32.mrb[0].mxu0
        %v8230 = vadd.f32 0.0, %v8229
        %v8231 = vpop.f32.mrb[0].mxu0
        %8232 = vdwg.mxu0
        %v8233 = vadd.f32 %v7927, %v8075
        %v8234 = vadd.f32 %v7928, %v8080
        %v8235 = vadd.f32 %v7929, %v8085
        %v8236 = vadd.f32 %v7930, %v8090
        %v8237 = vadd.f32 %v7931, %v8095
        %v8238 = vadd.f32 %v7932, %v8100
        %v8239 = vadd.f32 %v7933, %v8105
        %v8240 = vadd.f32 %v7934, %v8110
        %v8241 = vadd.f32 %v7935, %v8115
        %v8242 = vadd.f32 %v7936, %v8120
        %v8243 = vadd.f32 %v7937, %v8125
        %v8244 = vadd.f32 %v7938, %v8130
        %v8245 = vadd.f32 %v7939, %v8135
        %v8246 = vadd.f32 %v7940, %v8140
        %v8247 = vadd.f32 %v7941, %v8145
        %v8248 = vadd.f32 %v7942, %v8150
        %v8249 = vadd.f32 %v7943, %v8155
        %v8250 = vadd.f32 %v7944, %v8160
        %v8251 = vadd.f32 %v7945, %v8165
        %v8252 = vadd.f32 %v7946, %v8170
        %v8253 = vadd.f32 %v7947, %v8175
        %v8254 = vadd.f32 %v7948, %v8180
        %v8255 = vadd.f32 %v7949, %v8185
        %v8256 = vadd.f32 %v7950, %v8190
        %v8257 = vadd.f32 %v7951, %v8195
        %v8258 = vadd.f32 %v7952, %v8200
        %v8259 = vadd.f32 %v7953, %v8205
        %v8260 = vadd.f32 %v7954, %v8210
        %v8261 = vadd.f32 %v7955, %v8215
        %v8262 = vadd.f32 %v7956, %v8220
        %v8263 = vadd.f32 %v7957, %v8225
        %v8264 = vadd.f32 %v7958, %v8230
        %v8265 = vld [vmem:[%s7652 + $0x2] sm:$0xff]
        %v8266 = vld [vmem:[%s7652 + $0xa] sm:$0xff]
        %v8267 = vld [vmem:[%s7652 + $0x1a] sm:$0xff]
        %v8268 = vld [vmem:[%s7652 + $0x22] sm:$0xff]
        %v8269 = vld [vmem:[%s7652 + $0x32] sm:$0xff]
        %v8270 = vld [vmem:[%s7652 + $0x3a] sm:$0xff]
        %v8271 = vld [vmem:[%s7652 + $0x4a] sm:$0xff]
        %v8272 = vld [vmem:[%s7652 + $0x52] sm:$0xff]
        %v8273 = vld [vmem:[%s7652 + $0x62] sm:$0xff]
        %v8274 = vld [vmem:[%s7652 + $0x6a] sm:$0xff]
        %v8275 = vld [vmem:[%s7652 + $0x7a] sm:$0xff]
        %v8276 = vld [vmem:[%s7652 + $0x82] sm:$0xff]
        %v8277 = vld [vmem:[%s7652 + $0x92] sm:$0xff]
        %v8278 = vld [vmem:[%s7652 + $0x9a] sm:$0xff]
        %v8279 = vld [vmem:[%s7652 + $0xaa] sm:$0xff]
        %v8280 = vld [vmem:[%s7652 + $0xb2] sm:$0xff]
        %v8281 = vld [vmem:[%s7652 + $0xc2] sm:$0xff]
        %v8282 = vld [vmem:[%s7652 + $0xca] sm:$0xff]
        %v8283 = vld [vmem:[%s7652 + $0xda] sm:$0xff]
        %v8284 = vld [vmem:[%s7652 + $0xe2] sm:$0xff]
        %v8285 = vld [vmem:[%s7652 + $0xf2] sm:$0xff]
        %v8286 = vld [vmem:[%s7652 + $0xfa] sm:$0xff]
        %v8287 = vld [vmem:[%s7652 + $0x10a] sm:$0xff]
        %v8288 = vld [vmem:[%s7652 + $0x112] sm:$0xff]
        %v8289 = vld [vmem:[%s7652 + $0x122] sm:$0xff]
        %v8290 = vld [vmem:[%s7652 + $0x12a] sm:$0xff]
        %v8291 = vld [vmem:[%s7652 + $0x13a] sm:$0xff]
        %v8292 = vld [vmem:[%s7652 + $0x142] sm:$0xff]
        %v8293 = vld [vmem:[%s7652 + $0x152] sm:$0xff]
        %v8294 = vld [vmem:[%s7652 + $0x15a] sm:$0xff]
        %v8295 = vld [vmem:[%s7652 + $0x16a] sm:$0xff]
        %v8296 = vld [vmem:[%s7652 + $0x172] sm:$0xff]
        %s8297 = scalar_lea.vmem %s3, 1024
        %v8298 = vld [vmem:[%s8297] sm:$0xff]
        %v8299 = vld [vmem:[%s8297 + $0x8] sm:$0xff]
        %v8300 = vld [vmem:[%s8297 + $0x10] sm:$0xff]
        %v8301 = vld [vmem:[%s8297 + $0x18] sm:$0xff]
        %v8302 = vld [vmem:[%s8297 + $0x20] sm:$0xff]
        %v8303 = vld [vmem:[%s8297 + $0x28] sm:$0xff]
        %v8304 = vld [vmem:[%s8297 + $0x30] sm:$0xff]
        %v8305 = vld [vmem:[%s8297 + $0x38] sm:$0xff]
        %v8306 = vld [vmem:[%s8297 + $0x40] sm:$0xff]
        %v8307 = vld [vmem:[%s8297 + $0x48] sm:$0xff]
        %v8308 = vld [vmem:[%s8297 + $0x50] sm:$0xff]
        %v8309 = vld [vmem:[%s8297 + $0x58] sm:$0xff]
        %v8310 = vld [vmem:[%s8297 + $0x60] sm:$0xff]
        %v8311 = vld [vmem:[%s8297 + $0x68] sm:$0xff]
        %v8312 = vld [vmem:[%s8297 + $0x70] sm:$0xff]
        %v8313 = vld [vmem:[%s8297 + $0x78] sm:$0xff]
        %8314 = vmatprep.subr.mxu0 0.0
        %8315 = vmatpush1.msra.mxu0 %v8298
        %8316 = vmatprep.subr.mxu0 0.0
        %8317 = vmatpush1.msra.mxu0 %v8299
        %8318 = vmatprep.subr.mxu0 0.0
        %8319 = vmatpush1.msra.mxu0 %v8300
        %8320 = vmatprep.subr.mxu0 0.0
        %8321 = vmatpush1.msra.mxu0 %v8301
        %8322 = vmatprep.subr.mxu0 0.0
        %8323 = vmatpush1.msra.mxu0 %v8302
        %8324 = vmatprep.subr.mxu0 0.0
        %8325 = vmatpush1.msra.mxu0 %v8303
        %8326 = vmatprep.subr.mxu0 0.0
        %8327 = vmatpush1.msra.mxu0 %v8304
        %8328 = vmatprep.subr.mxu0 0.0
        %8329 = vmatpush1.msra.mxu0 %v8305
        %8330 = vmatprep.subr.mxu0 0.0
        %8331 = vmatpush1.msra.mxu0 %v8306
        %8332 = vmatprep.subr.mxu0 0.0
        %8333 = vmatpush1.msra.mxu0 %v8307
        %8334 = vmatprep.subr.mxu0 0.0
        %8335 = vmatpush1.msra.mxu0 %v8308
        %8336 = vmatprep.subr.mxu0 0.0
        %8337 = vmatpush1.msra.mxu0 %v8309
        %8338 = vmatprep.subr.mxu0 0.0
        %8339 = vmatpush1.msra.mxu0 %v8310
        %8340 = vmatprep.subr.mxu0 0.0
        %8341 = vmatpush1.msra.mxu0 %v8311
        %8342 = vmatprep.subr.mxu0 0.0
        %8343 = vmatpush1.msra.mxu0 %v8312
        %8344 = vmatprep.subr.mxu0 0.0
        %8345 = vmatpush1.msra.mxu0 %v8313
        %8346 = vmatprep.subr.mxu0 0.0
        %8347 = vmatpush1.msra.mxu0 0.0
        %8348 = vmatprep.subr.mxu0 0.0
        %8349 = vmatpush1.msra.mxu0 0.0
        %8350 = vmatprep.subr.mxu0 0.0
        %8351 = vmatpush1.msra.mxu0 0.0
        %8352 = vmatprep.subr.mxu0 0.0
        %8353 = vmatpush1.msra.mxu0 0.0
        %8354 = vmatprep.subr.mxu0 0.0
        %8355 = vmatpush1.msra.mxu0 0.0
        %8356 = vmatprep.subr.mxu0 0.0
        %8357 = vmatpush1.msra.mxu0 0.0
        %8358 = vmatprep.subr.mxu0 0.0
        %8359 = vmatpush1.msra.mxu0 0.0
        %8360 = vmatprep.subr.mxu0 0.0
        %8361 = vmatpush1.msra.mxu0 0.0
        %8362 = vmatprep.subr.mxu0 0.0
        %8363 = vmatpush1.msra.mxu0 0.0
        %8364 = vmatprep.subr.mxu0 0.0
        %8365 = vmatpush1.msra.mxu0 0.0
        %8366 = vmatprep.subr.mxu0 0.0
        %8367 = vmatpush1.msra.mxu0 0.0
        %8368 = vmatprep.subr.mxu0 0.0
        %8369 = vmatpush1.msra.mxu0 0.0
        %8370 = vmatprep.subr.mxu0 0.0
        %8371 = vmatpush1.msra.mxu0 0.0
        %8372 = vmatprep.subr.mxu0 0.0
        %8373 = vmatpush1.msra.mxu0 0.0
        %8374 = vmatprep.subr.mxu0 0.0
        %8375 = vmatpush1.msra.mxu0 0.0
        %8376 = vmatprep.subr.mxu0 0.0
        %8377 = vmatpush1.msra.mxu0 0.0
        %8378 = vmatprep.mubr.f32.mxu0 0.0
        %8379 = vmatmul.mubr.f32.gmra.mrb[0].mxu0 %v8265
        %v8380 = vpop.f32.mrb[0].mxu0
        %v8381 = vadd.f32 0.0, %v8380
        %v8382 = vpop.f32.mrb[0].mxu0
        %8383 = vmatprep.mubr.f32.mxu0 0.0
        %8384 = vmatmul.mubr.f32.gmra.mrb[0].mxu0 %v8266
        %v8385 = vpop.f32.mrb[0].mxu0
        %v8386 = vadd.f32 0.0, %v8385
        %v8387 = vpop.f32.mrb[0].mxu0
        %8388 = vmatprep.mubr.f32.mxu0 0.0
        %8389 = vmatmul.mubr.f32.gmra.mrb[0].mxu0 %v8267
        %v8390 = vpop.f32.mrb[0].mxu0
        %v8391 = vadd.f32 0.0, %v8390
        %v8392 = vpop.f32.mrb[0].mxu0
        %8393 = vmatprep.mubr.f32.mxu0 0.0
        %8394 = vmatmul.mubr.f32.gmra.mrb[0].mxu0 %v8268
        %v8395 = vpop.f32.mrb[0].mxu0
        %v8396 = vadd.f32 0.0, %v8395
        %v8397 = vpop.f32.mrb[0].mxu0
        %8398 = vmatprep.mubr.f32.mxu0 0.0
        %8399 = vmatmul.mubr.f32.gmra.mrb[0].mxu0 %v8269
        %v8400 = vpop.f32.mrb[0].mxu0
        %v8401 = vadd.f32 0.0, %v8400
        %v8402 = vpop.f32.mrb[0].mxu0
        %8403 = vmatprep.mubr.f32.mxu0 0.0
        %8404 = vmatmul.mubr.f32.gmra.mrb[0].mxu0 %v8270
        %v8405 = vpop.f32.mrb[0].mxu0
        %v8406 = vadd.f32 0.0, %v8405
        %v8407 = vpop.f32.mrb[0].mxu0
        %8408 = vmatprep.mubr.f32.mxu0 0.0
        %8409 = vmatmul.mubr.f32.gmra.mrb[0].mxu0 %v8271
        %v8410 = vpop.f32.mrb[0].mxu0
        %v8411 = vadd.f32 0.0, %v8410
        %v8412 = vpop.f32.mrb[0].mxu0
        %8413 = vmatprep.mubr.f32.mxu0 0.0
        %8414 = vmatmul.mubr.f32.gmra.mrb[0].mxu0 %v8272
        %v8415 = vpop.f32.mrb[0].mxu0
        %v8416 = vadd.f32 0.0, %v8415
        %v8417 = vpop.f32.mrb[0].mxu0
        %8418 = vmatprep.mubr.f32.mxu0 0.0
        %8419 = vmatmul.mubr.f32.gmra.mrb[0].mxu0 %v8273
        %v8420 = vpop.f32.mrb[0].mxu0
        %v8421 = vadd.f32 0.0, %v8420
        %v8422 = vpop.f32.mrb[0].mxu0
        %8423 = vmatprep.mubr.f32.mxu0 0.0
        %8424 = vmatmul.mubr.f32.gmra.mrb[0].mxu0 %v8274
        %v8425 = vpop.f32.mrb[0].mxu0
        %v8426 = vadd.f32 0.0, %v8425
        %v8427 = vpop.f32.mrb[0].mxu0
        %8428 = vmatprep.mubr.f32.mxu0 0.0
        %8429 = vmatmul.mubr.f32.gmra.mrb[0].mxu0 %v8275
        %v8430 = vpop.f32.mrb[0].mxu0
        %v8431 = vadd.f32 0.0, %v8430
        %v8432 = vpop.f32.mrb[0].mxu0
        %8433 = vmatprep.mubr.f32.mxu0 0.0
        %8434 = vmatmul.mubr.f32.gmra.mrb[0].mxu0 %v8276
        %v8435 = vpop.f32.mrb[0].mxu0
        %v8436 = vadd.f32 0.0, %v8435
        %v8437 = vpop.f32.mrb[0].mxu0
        %8438 = vmatprep.mubr.f32.mxu0 0.0
        %8439 = vmatmul.mubr.f32.gmra.mrb[0].mxu0 %v8277
        %v8440 = vpop.f32.mrb[0].mxu0
        %v8441 = vadd.f32 0.0, %v8440
        %v8442 = vpop.f32.mrb[0].mxu0
        %8443 = vmatprep.mubr.f32.mxu0 0.0
        %8444 = vmatmul.mubr.f32.gmra.mrb[0].mxu0 %v8278
        %v8445 = vpop.f32.mrb[0].mxu0
        %v8446 = vadd.f32 0.0, %v8445
        %v8447 = vpop.f32.mrb[0].mxu0
        %8448 = vmatprep.mubr.f32.mxu0 0.0
        %8449 = vmatmul.mubr.f32.gmra.mrb[0].mxu0 %v8279
        %v8450 = vpop.f32.mrb[0].mxu0
        %v8451 = vadd.f32 0.0, %v8450
        %v8452 = vpop.f32.mrb[0].mxu0
        %8453 = vmatprep.mubr.f32.mxu0 0.0
        %8454 = vmatmul.mubr.f32.gmra.mrb[0].mxu0 %v8280
        %v8455 = vpop.f32.mrb[0].mxu0
        %v8456 = vadd.f32 0.0, %v8455
        %v8457 = vpop.f32.mrb[0].mxu0
        %8458 = vmatprep.mubr.f32.mxu0 0.0
        %8459 = vmatmul.mubr.f32.gmra.mrb[0].mxu0 %v8281
        %v8460 = vpop.f32.mrb[0].mxu0
        %v8461 = vadd.f32 0.0, %v8460
        %v8462 = vpop.f32.mrb[0].mxu0
        %8463 = vmatprep.mubr.f32.mxu0 0.0
        %8464 = vmatmul.mubr.f32.gmra.mrb[0].mxu0 %v8282
        %v8465 = vpop.f32.mrb[0].mxu0
        %v8466 = vadd.f32 0.0, %v8465
        %v8467 = vpop.f32.mrb[0].mxu0
        %8468 = vmatprep.mubr.f32.mxu0 0.0
        %8469 = vmatmul.mubr.f32.gmra.mrb[0].mxu0 %v8283
        %v8470 = vpop.f32.mrb[0].mxu0
        %v8471 = vadd.f32 0.0, %v8470
        %v8472 = vpop.f32.mrb[0].mxu0
        %8473 = vmatprep.mubr.f32.mxu0 0.0
        %8474 = vmatmul.mubr.f32.gmra.mrb[0].mxu0 %v8284
        %v8475 = vpop.f32.mrb[0].mxu0
        %v8476 = vadd.f32 0.0, %v8475
        %v8477 = vpop.f32.mrb[0].mxu0
        %8478 = vmatprep.mubr.f32.mxu0 0.0
        %8479 = vmatmul.mubr.f32.gmra.mrb[0].mxu0 %v8285
        %v8480 = vpop.f32.mrb[0].mxu0
        %v8481 = vadd.f32 0.0, %v8480
        %v8482 = vpop.f32.mrb[0].mxu0
        %8483 = vmatprep.mubr.f32.mxu0 0.0
        %8484 = vmatmul.mubr.f32.gmra.mrb[0].mxu0 %v8286
        %v8485 = vpop.f32.mrb[0].mxu0
        %v8486 = vadd.f32 0.0, %v8485
        %v8487 = vpop.f32.mrb[0].mxu0
        %8488 = vmatprep.mubr.f32.mxu0 0.0
        %8489 = vmatmul.mubr.f32.gmra.mrb[0].mxu0 %v8287
        %v8490 = vpop.f32.mrb[0].mxu0
        %v8491 = vadd.f32 0.0, %v8490
        %v8492 = vpop.f32.mrb[0].mxu0
        %8493 = vmatprep.mubr.f32.mxu0 0.0
        %8494 = vmatmul.mubr.f32.gmra.mrb[0].mxu0 %v8288
        %v8495 = vpop.f32.mrb[0].mxu0
        %v8496 = vadd.f32 0.0, %v8495
        %v8497 = vpop.f32.mrb[0].mxu0
        %8498 = vmatprep.mubr.f32.mxu0 0.0
        %8499 = vmatmul.mubr.f32.gmra.mrb[0].mxu0 %v8289
        %v8500 = vpop.f32.mrb[0].mxu0
        %v8501 = vadd.f32 0.0, %v8500
        %v8502 = vpop.f32.mrb[0].mxu0
        %8503 = vmatprep.mubr.f32.mxu0 0.0
        %8504 = vmatmul.mubr.f32.gmra.mrb[0].mxu0 %v8290
        %v8505 = vpop.f32.mrb[0].mxu0
        %v8506 = vadd.f32 0.0, %v8505
        %v8507 = vpop.f32.mrb[0].mxu0
        %8508 = vmatprep.mubr.f32.mxu0 0.0
        %8509 = vmatmul.mubr.f32.gmra.mrb[0].mxu0 %v8291
        %v8510 = vpop.f32.mrb[0].mxu0
        %v8511 = vadd.f32 0.0, %v8510
        %v8512 = vpop.f32.mrb[0].mxu0
        %8513 = vmatprep.mubr.f32.mxu0 0.0
        %8514 = vmatmul.mubr.f32.gmra.mrb[0].mxu0 %v8292
        %v8515 = vpop.f32.mrb[0].mxu0
        %v8516 = vadd.f32 0.0, %v8515
        %v8517 = vpop.f32.mrb[0].mxu0
        %8518 = vmatprep.mubr.f32.mxu0 0.0
        %8519 = vmatmul.mubr.f32.gmra.mrb[0].mxu0 %v8293
        %v8520 = vpop.f32.mrb[0].mxu0
        %v8521 = vadd.f32 0.0, %v8520
        %v8522 = vpop.f32.mrb[0].mxu0
        %8523 = vmatprep.mubr.f32.mxu0 0.0
        %8524 = vmatmul.mubr.f32.gmra.mrb[0].mxu0 %v8294
        %v8525 = vpop.f32.mrb[0].mxu0
        %v8526 = vadd.f32 0.0, %v8525
        %v8527 = vpop.f32.mrb[0].mxu0
        %8528 = vmatprep.mubr.f32.mxu0 0.0
        %8529 = vmatmul.mubr.f32.gmra.mrb[0].mxu0 %v8295
        %v8530 = vpop.f32.mrb[0].mxu0
        %v8531 = vadd.f32 0.0, %v8530
        %v8532 = vpop.f32.mrb[0].mxu0
        %8533 = vmatprep.mubr.f32.mxu0 0.0
        %8534 = vmatmul.mubr.f32.gmra.mrb[0].mxu0 %v8296
        %v8535 = vpop.f32.mrb[0].mxu0
        %v8536 = vadd.f32 0.0, %v8535
        %v8537 = vpop.f32.mrb[0].mxu0
        %8538 = vdwg.mxu0
        %v8539 = vadd.f32 %v8233, %v8381
        %v8540 = vadd.f32 %v8234, %v8386
        %v8541 = vadd.f32 %v8235, %v8391
        %v8542 = vadd.f32 %v8236, %v8396
        %v8543 = vadd.f32 %v8237, %v8401
        %v8544 = vadd.f32 %v8238, %v8406
        %v8545 = vadd.f32 %v8239, %v8411
        %v8546 = vadd.f32 %v8240, %v8416
        %v8547 = vadd.f32 %v8241, %v8421
        %v8548 = vadd.f32 %v8242, %v8426
        %v8549 = vadd.f32 %v8243, %v8431
        %v8550 = vadd.f32 %v8244, %v8436
        %v8551 = vadd.f32 %v8245, %v8441
        %v8552 = vadd.f32 %v8246, %v8446
        %v8553 = vadd.f32 %v8247, %v8451
        %v8554 = vadd.f32 %v8248, %v8456
        %v8555 = vadd.f32 %v8249, %v8461
        %v8556 = vadd.f32 %v8250, %v8466
        %v8557 = vadd.f32 %v8251, %v8471
        %v8558 = vadd.f32 %v8252, %v8476
        %v8559 = vadd.f32 %v8253, %v8481
        %v8560 = vadd.f32 %v8254, %v8486
        %v8561 = vadd.f32 %v8255, %v8491
        %v8562 = vadd.f32 %v8256, %v8496
        %v8563 = vadd.f32 %v8257, %v8501
        %v8564 = vadd.f32 %v8258, %v8506
        %v8565 = vadd.f32 %v8259, %v8511
        %v8566 = vadd.f32 %v8260, %v8516
        %v8567 = vadd.f32 %v8261, %v8521
        %v8568 = vadd.f32 %v8262, %v8526
        %v8569 = vadd.f32 %v8263, %v8531
        %v8570 = vadd.f32 %v8264, %v8536
        %v8571 = vld [vmem:[%s4] sm:$0x1]
        %v8573 = vlaneseq
        %v8574 = vshrl.u32 %v8573, 7
        %v8575 = vsub.s32 0, %v8574
        %v8576 = vrot.slane %v8571, %v8575
        %v8578 = vadd.f32 %v8539, %v8576
        %v8579 = vadd.f32 %v8540, %v8576
        %v8580 = vadd.f32 %v8541, %v8576
        %v8581 = vadd.f32 %v8542, %v8576
        %v8582 = vadd.f32 %v8543, %v8576
        %v8583 = vadd.f32 %v8544, %v8576
        %v8584 = vadd.f32 %v8545, %v8576
        %v8585 = vadd.f32 %v8546, %v8576
        %v8586 = vadd.f32 %v8547, %v8576
        %v8587 = vadd.f32 %v8548, %v8576
        %v8588 = vadd.f32 %v8549, %v8576
        %v8589 = vadd.f32 %v8550, %v8576
        %v8590 = vadd.f32 %v8551, %v8576
        %v8591 = vadd.f32 %v8552, %v8576
        %v8592 = vadd.f32 %v8553, %v8576
        %v8593 = vadd.f32 %v8554, %v8576
        %v8594 = vadd.f32 %v8555, %v8576
        %v8595 = vadd.f32 %v8556, %v8576
        %v8596 = vadd.f32 %v8557, %v8576
        %v8597 = vadd.f32 %v8558, %v8576
        %v8598 = vadd.f32 %v8559, %v8576
        %v8599 = vadd.f32 %v8560, %v8576
        %v8600 = vadd.f32 %v8561, %v8576
        %v8601 = vadd.f32 %v8562, %v8576
        %v8602 = vadd.f32 %v8563, %v8576
        %v8603 = vadd.f32 %v8564, %v8576
        %v8604 = vadd.f32 %v8565, %v8576
        %v8605 = vadd.f32 %v8566, %v8576
        %v8606 = vadd.f32 %v8567, %v8576
        %v8607 = vadd.f32 %v8568, %v8576
        %v8608 = vadd.f32 %v8569, %v8576
        %v8609 = vadd.f32 %v8570, %v8576
        %v8610 = vld [vmem:[%s3804 + $0x2] sm:$0xff]
        %v8611 = vld [vmem:[%s3804 + $0xa] sm:$0xff]
        %v8612 = vld [vmem:[%s3804 + $0x22] sm:$0xff]
        %v8613 = vld [vmem:[%s3804 + $0x2a] sm:$0xff]
        %v8614 = vld [vmem:[%s3804 + $0x42] sm:$0xff]
        %v8615 = vld [vmem:[%s3804 + $0x4a] sm:$0xff]
        %v8616 = vld [vmem:[%s3804 + $0x62] sm:$0xff]
        %v8617 = vld [vmem:[%s3804 + $0x6a] sm:$0xff]
        %v8618 = vld [vmem:[%s3804 + $0x82] sm:$0xff]
        %v8619 = vld [vmem:[%s3804 + $0x8a] sm:$0xff]
        %v8620 = vld [vmem:[%s3804 + $0xa2] sm:$0xff]
        %v8621 = vld [vmem:[%s3804 + $0xaa] sm:$0xff]
        %v8622 = vld [vmem:[%s3804 + $0xc2] sm:$0xff]
        %v8623 = vld [vmem:[%s3804 + $0xca] sm:$0xff]
        %v8624 = vld [vmem:[%s3804 + $0xe2] sm:$0xff]
        %v8625 = vld [vmem:[%s3804 + $0xea] sm:$0xff]
        %v8626 = vld [vmem:[%s3804 + $0x102] sm:$0xff]
        %v8627 = vld [vmem:[%s3804 + $0x10a] sm:$0xff]
        %v8628 = vld [vmem:[%s3804 + $0x122] sm:$0xff]
        %v8629 = vld [vmem:[%s3804 + $0x12a] sm:$0xff]
        %v8630 = vld [vmem:[%s3804 + $0x142] sm:$0xff]
        %v8631 = vld [vmem:[%s3804 + $0x14a] sm:$0xff]
        %v8632 = vld [vmem:[%s3804 + $0x162] sm:$0xff]
        %v8633 = vld [vmem:[%s3804 + $0x16a] sm:$0xff]
        %v8634 = vld [vmem:[%s3804 + $0x182] sm:$0xff]
        %v8635 = vld [vmem:[%s3804 + $0x18a] sm:$0xff]
        %v8636 = vld [vmem:[%s3804 + $0x1a2] sm:$0xff]
        %v8637 = vld [vmem:[%s3804 + $0x1aa] sm:$0xff]
        %v8638 = vld [vmem:[%s3804 + $0x1c2] sm:$0xff]
        %v8639 = vld [vmem:[%s3804 + $0x1ca] sm:$0xff]
        %v8640 = vld [vmem:[%s3804 + $0x1e2] sm:$0xff]
        %v8641 = vld [vmem:[%s3804 + $0x1ea] sm:$0xff]
        %v8642 = vld [vmem:[%s5] sm:$0xf]
        %v8644 = vsel %vm361, %v8610, 0
        %v8647 = vsel %vm361, %v8611, 0
        %v8650 = vsel %vm361, %v8612, 0
        %v8653 = vsel %vm361, %v8613, 0
        %v8656 = vsel %vm361, %v8614, 0
        %v8659 = vsel %vm361, %v8615, 0
        %v8662 = vsel %vm361, %v8616, 0
        %v8665 = vsel %vm361, %v8617, 0
        %v8668 = vsel %vm361, %v8618, 0
        %v8671 = vsel %vm361, %v8619, 0
        %v8674 = vsel %vm361, %v8620, 0
        %v8677 = vsel %vm361, %v8621, 0
        %v8680 = vsel %vm361, %v8622, 0
        %v8683 = vsel %vm361, %v8623, 0
        %v8686 = vsel %vm361, %v8624, 0
        %v8689 = vsel %vm361, %v8625, 0
        %v8692 = vsel %vm361, %v8626, 0
        %v8695 = vsel %vm361, %v8627, 0
        %v8698 = vsel %vm361, %v8628, 0
        %v8701 = vsel %vm361, %v8629, 0
        %v8704 = vsel %vm361, %v8630, 0
        %v8707 = vsel %vm361, %v8631, 0
        %v8710 = vsel %vm361, %v8632, 0
        %v8713 = vsel %vm361, %v8633, 0
        %v8716 = vsel %vm361, %v8634, 0
        %v8719 = vsel %vm361, %v8635, 0
        %v8722 = vsel %vm361, %v8636, 0
        %v8725 = vsel %vm361, %v8637, 0
        %v8728 = vsel %vm361, %v8638, 0
        %v8731 = vsel %vm361, %v8639, 0
        %v8734 = vsel %vm361, %v8640, 0
        %v8737 = vsel %vm361, %v8641, 0
        %v8740 = vsel %vm524, %v8642, 0
        %8742 = vmatprep.subr.mxu0 0.0
        %8743 = vmatpush1.msra.mxu0 %v8740
        %8744 = vmatprep.subr.mxu0 0.0
        %8745 = vmatpush1.msra.mxu0 0.0
        %8746 = vmatprep.subr.mxu0 0.0
        %8747 = vmatpush1.msra.mxu0 0.0
        %8748 = vmatprep.subr.mxu0 0.0
        %8749 = vmatpush1.msra.mxu0 0.0
        %8750 = vmatprep.subr.mxu0 0.0
        %8751 = vmatpush1.msra.mxu0 0.0
        %8752 = vmatprep.subr.mxu0 0.0
        %8753 = vmatpush1.msra.mxu0 0.0
        %8754 = vmatprep.subr.mxu0 0.0
        %8755 = vmatpush1.msra.mxu0 0.0
        %8756 = vmatprep.subr.mxu0 0.0
        %8757 = vmatpush1.msra.mxu0 0.0
        %8758 = vmatprep.subr.mxu0 0.0
        %8759 = vmatpush1.msra.mxu0 0.0
        %8760 = vmatprep.subr.mxu0 0.0
        %8761 = vmatpush1.msra.mxu0 0.0
        %8762 = vmatprep.subr.mxu0 0.0
        %8763 = vmatpush1.msra.mxu0 0.0
        %8764 = vmatprep.subr.mxu0 0.0
        %8765 = vmatpush1.msra.mxu0 0.0
        %8766 = vmatprep.subr.mxu0 0.0
        %8767 = vmatpush1.msra.mxu0 0.0
        %8768 = vmatprep.subr.mxu0 0.0
        %8769 = vmatpush1.msra.mxu0 0.0
        %8770 = vmatprep.subr.mxu0 0.0
        %8771 = vmatpush1.msra.mxu0 0.0
        %8772 = vmatprep.subr.mxu0 0.0
        %8773 = vmatpush1.msra.mxu0 0.0
        %8774 = vmatprep.subr.mxu0 0.0
        %8775 = vmatpush1.msra.mxu0 0.0
        %8776 = vmatprep.subr.mxu0 0.0
        %8777 = vmatpush1.msra.mxu0 0.0
        %8778 = vmatprep.subr.mxu0 0.0
        %8779 = vmatpush1.msra.mxu0 0.0
        %8780 = vmatprep.subr.mxu0 0.0
        %8781 = vmatpush1.msra.mxu0 0.0
        %8782 = vmatprep.subr.mxu0 0.0
        %8783 = vmatpush1.msra.mxu0 0.0
        %8784 = vmatprep.subr.mxu0 0.0
        %8785 = vmatpush1.msra.mxu0 0.0
        %8786 = vmatprep.subr.mxu0 0.0
        %8787 = vmatpush1.msra.mxu0 0.0
        %8788 = vmatprep.subr.mxu0 0.0
        %8789 = vmatpush1.msra.mxu0 0.0
        %8790 = vmatprep.subr.mxu0 0.0
        %8791 = vmatpush1.msra.mxu0 0.0
        %8792 = vmatprep.subr.mxu0 0.0
        %8793 = vmatpush1.msra.mxu0 0.0
        %8794 = vmatprep.subr.mxu0 0.0
        %8795 = vmatpush1.msra.mxu0 0.0
        %8796 = vmatprep.subr.mxu0 0.0
        %8797 = vmatpush1.msra.mxu0 0.0
        %8798 = vmatprep.subr.mxu0 0.0
        %8799 = vmatpush1.msra.mxu0 0.0
        %8800 = vmatprep.subr.mxu0 0.0
        %8801 = vmatpush1.msra.mxu0 0.0
        %8802 = vmatprep.subr.mxu0 0.0
        %8803 = vmatpush1.msra.mxu0 0.0
        %8804 = vmatprep.subr.mxu0 0.0
        %8805 = vmatpush1.msra.mxu0 0.0
        %8806 = vmatprep.mubr.f32.mxu0 0.0
        %8807 = vmatmul.mubr.f32.gmra.mrb[0].mxu0 %v8644
        %v8808 = vpop.f32.mrb[0].mxu0
        %v8809 = vadd.f32 0.0, %v8808
        %v8810 = vpop.f32.mrb[0].mxu0
        %8811 = vmatprep.mubr.f32.mxu0 0.0
        %8812 = vmatmul.mubr.f32.gmra.mrb[0].mxu0 %v8647
        %v8813 = vpop.f32.mrb[0].mxu0
        %v8814 = vadd.f32 0.0, %v8813
        %v8815 = vpop.f32.mrb[0].mxu0
        %8816 = vmatprep.mubr.f32.mxu0 0.0
        %8817 = vmatmul.mubr.f32.gmra.mrb[0].mxu0 %v8650
        %v8818 = vpop.f32.mrb[0].mxu0
        %v8819 = vadd.f32 0.0, %v8818
        %v8820 = vpop.f32.mrb[0].mxu0
        %8821 = vmatprep.mubr.f32.mxu0 0.0
        %8822 = vmatmul.mubr.f32.gmra.mrb[0].mxu0 %v8653
        %v8823 = vpop.f32.mrb[0].mxu0
        %v8824 = vadd.f32 0.0, %v8823
        %v8825 = vpop.f32.mrb[0].mxu0
        %8826 = vmatprep.mubr.f32.mxu0 0.0
        %8827 = vmatmul.mubr.f32.gmra.mrb[0].mxu0 %v8656
        %v8828 = vpop.f32.mrb[0].mxu0
        %v8829 = vadd.f32 0.0, %v8828
        %v8830 = vpop.f32.mrb[0].mxu0
        %8831 = vmatprep.mubr.f32.mxu0 0.0
        %8832 = vmatmul.mubr.f32.gmra.mrb[0].mxu0 %v8659
        %v8833 = vpop.f32.mrb[0].mxu0
        %v8834 = vadd.f32 0.0, %v8833
        %v8835 = vpop.f32.mrb[0].mxu0
        %8836 = vmatprep.mubr.f32.mxu0 0.0
        %8837 = vmatmul.mubr.f32.gmra.mrb[0].mxu0 %v8662
        %v8838 = vpop.f32.mrb[0].mxu0
        %v8839 = vadd.f32 0.0, %v8838
        %v8840 = vpop.f32.mrb[0].mxu0
        %8841 = vmatprep.mubr.f32.mxu0 0.0
        %8842 = vmatmul.mubr.f32.gmra.mrb[0].mxu0 %v8665
        %v8843 = vpop.f32.mrb[0].mxu0
        %v8844 = vadd.f32 0.0, %v8843
        %v8845 = vpop.f32.mrb[0].mxu0
        %8846 = vmatprep.mubr.f32.mxu0 0.0
        %8847 = vmatmul.mubr.f32.gmra.mrb[0].mxu0 %v8668
        %v8848 = vpop.f32.mrb[0].mxu0
        %v8849 = vadd.f32 0.0, %v8848
        %v8850 = vpop.f32.mrb[0].mxu0
        %8851 = vmatprep.mubr.f32.mxu0 0.0
        %8852 = vmatmul.mubr.f32.gmra.mrb[0].mxu0 %v8671
        %v8853 = vpop.f32.mrb[0].mxu0
        %v8854 = vadd.f32 0.0, %v8853
        %v8855 = vpop.f32.mrb[0].mxu0
        %8856 = vmatprep.mubr.f32.mxu0 0.0
        %8857 = vmatmul.mubr.f32.gmra.mrb[0].mxu0 %v8674
        %v8858 = vpop.f32.mrb[0].mxu0
        %v8859 = vadd.f32 0.0, %v8858
        %v8860 = vpop.f32.mrb[0].mxu0
        %8861 = vmatprep.mubr.f32.mxu0 0.0
        %8862 = vmatmul.mubr.f32.gmra.mrb[0].mxu0 %v8677
        %v8863 = vpop.f32.mrb[0].mxu0
        %v8864 = vadd.f32 0.0, %v8863
        %v8865 = vpop.f32.mrb[0].mxu0
        %8866 = vmatprep.mubr.f32.mxu0 0.0
        %8867 = vmatmul.mubr.f32.gmra.mrb[0].mxu0 %v8680
        %v8868 = vpop.f32.mrb[0].mxu0
        %v8869 = vadd.f32 0.0, %v8868
        %v8870 = vpop.f32.mrb[0].mxu0
        %8871 = vmatprep.mubr.f32.mxu0 0.0
        %8872 = vmatmul.mubr.f32.gmra.mrb[0].mxu0 %v8683
        %v8873 = vpop.f32.mrb[0].mxu0
        %v8874 = vadd.f32 0.0, %v8873
        %v8875 = vpop.f32.mrb[0].mxu0
        %8876 = vmatprep.mubr.f32.mxu0 0.0
        %8877 = vmatmul.mubr.f32.gmra.mrb[0].mxu0 %v8686
        %v8878 = vpop.f32.mrb[0].mxu0
        %v8879 = vadd.f32 0.0, %v8878
        %v8880 = vpop.f32.mrb[0].mxu0
        %8881 = vmatprep.mubr.f32.mxu0 0.0
        %8882 = vmatmul.mubr.f32.gmra.mrb[0].mxu0 %v8689
        %v8883 = vpop.f32.mrb[0].mxu0
        %v8884 = vadd.f32 0.0, %v8883
        %v8885 = vpop.f32.mrb[0].mxu0
        %8886 = vmatprep.mubr.f32.mxu0 0.0
        %8887 = vmatmul.mubr.f32.gmra.mrb[0].mxu0 %v8692
        %v8888 = vpop.f32.mrb[0].mxu0
        %v8889 = vadd.f32 0.0, %v8888
        %v8890 = vpop.f32.mrb[0].mxu0
        %8891 = vmatprep.mubr.f32.mxu0 0.0
        %8892 = vmatmul.mubr.f32.gmra.mrb[0].mxu0 %v8695
        %v8893 = vpop.f32.mrb[0].mxu0
        %v8894 = vadd.f32 0.0, %v8893
        %v8895 = vpop.f32.mrb[0].mxu0
        %8896 = vmatprep.mubr.f32.mxu0 0.0
        %8897 = vmatmul.mubr.f32.gmra.mrb[0].mxu0 %v8698
        %v8898 = vpop.f32.mrb[0].mxu0
        %v8899 = vadd.f32 0.0, %v8898
        %v8900 = vpop.f32.mrb[0].mxu0
        %8901 = vmatprep.mubr.f32.mxu0 0.0
        %8902 = vmatmul.mubr.f32.gmra.mrb[0].mxu0 %v8701
        %v8903 = vpop.f32.mrb[0].mxu0
        %v8904 = vadd.f32 0.0, %v8903
        %v8905 = vpop.f32.mrb[0].mxu0
        %8906 = vmatprep.mubr.f32.mxu0 0.0
        %8907 = vmatmul.mubr.f32.gmra.mrb[0].mxu0 %v8704
        %v8908 = vpop.f32.mrb[0].mxu0
        %v8909 = vadd.f32 0.0, %v8908
        %v8910 = vpop.f32.mrb[0].mxu0
        %8911 = vmatprep.mubr.f32.mxu0 0.0
        %8912 = vmatmul.mubr.f32.gmra.mrb[0].mxu0 %v8707
        %v8913 = vpop.f32.mrb[0].mxu0
        %v8914 = vadd.f32 0.0, %v8913
        %v8915 = vpop.f32.mrb[0].mxu0
        %8916 = vmatprep.mubr.f32.mxu0 0.0
        %8917 = vmatmul.mubr.f32.gmra.mrb[0].mxu0 %v8710
        %v8918 = vpop.f32.mrb[0].mxu0
        %v8919 = vadd.f32 0.0, %v8918
        %v8920 = vpop.f32.mrb[0].mxu0
        %8921 = vmatprep.mubr.f32.mxu0 0.0
        %8922 = vmatmul.mubr.f32.gmra.mrb[0].mxu0 %v8713
        %v8923 = vpop.f32.mrb[0].mxu0
        %v8924 = vadd.f32 0.0, %v8923
        %v8925 = vpop.f32.mrb[0].mxu0
        %8926 = vmatprep.mubr.f32.mxu0 0.0
        %8927 = vmatmul.mubr.f32.gmra.mrb[0].mxu0 %v8716
        %v8928 = vpop.f32.mrb[0].mxu0
        %v8929 = vadd.f32 0.0, %v8928
        %v8930 = vpop.f32.mrb[0].mxu0
        %8931 = vmatprep.mubr.f32.mxu0 0.0
        %8932 = vmatmul.mubr.f32.gmra.mrb[0].mxu0 %v8719
        %v8933 = vpop.f32.mrb[0].mxu0
        %v8934 = vadd.f32 0.0, %v8933
        %v8935 = vpop.f32.mrb[0].mxu0
        %8936 = vmatprep.mubr.f32.mxu0 0.0
        %8937 = vmatmul.mubr.f32.gmra.mrb[0].mxu0 %v8722
        %v8938 = vpop.f32.mrb[0].mxu0
        %v8939 = vadd.f32 0.0, %v8938
        %v8940 = vpop.f32.mrb[0].mxu0
        %8941 = vmatprep.mubr.f32.mxu0 0.0
        %8942 = vmatmul.mubr.f32.gmra.mrb[0].mxu0 %v8725
        %v8943 = vpop.f32.mrb[0].mxu0
        %v8944 = vadd.f32 0.0, %v8943
        %v8945 = vpop.f32.mrb[0].mxu0
        %8946 = vmatprep.mubr.f32.mxu0 0.0
        %8947 = vmatmul.mubr.f32.gmra.mrb[0].mxu0 %v8728
        %v8948 = vpop.f32.mrb[0].mxu0
        %v8949 = vadd.f32 0.0, %v8948
        %v8950 = vpop.f32.mrb[0].mxu0
        %8951 = vmatprep.mubr.f32.mxu0 0.0
        %8952 = vmatmul.mubr.f32.gmra.mrb[0].mxu0 %v8731
        %v8953 = vpop.f32.mrb[0].mxu0
        %v8954 = vadd.f32 0.0, %v8953
        %v8955 = vpop.f32.mrb[0].mxu0
        %8956 = vmatprep.mubr.f32.mxu0 0.0
        %8957 = vmatmul.mubr.f32.gmra.mrb[0].mxu0 %v8734
        %v8958 = vpop.f32.mrb[0].mxu0
        %v8959 = vadd.f32 0.0, %v8958
        %v8960 = vpop.f32.mrb[0].mxu0
        %8961 = vmatprep.mubr.f32.mxu0 0.0
        %8962 = vmatmul.mubr.f32.gmra.mrb[0].mxu0 %v8737
        %v8963 = vpop.f32.mrb[0].mxu0
        %v8964 = vadd.f32 0.0, %v8963
        %v8965 = vpop.f32.mrb[0].mxu0
        %8966 = vdwg.mxu0
        %v8967 = vadd.f32 %v8578, %v8809
        %v8968 = vadd.f32 %v8579, %v8814
        %v8969 = vadd.f32 %v8580, %v8819
        %v8970 = vadd.f32 %v8581, %v8824
        %v8971 = vadd.f32 %v8582, %v8829
        %v8972 = vadd.f32 %v8583, %v8834
        %v8973 = vadd.f32 %v8584, %v8839
        %v8974 = vadd.f32 %v8585, %v8844
        %v8975 = vadd.f32 %v8586, %v8849
        %v8976 = vadd.f32 %v8587, %v8854
        %v8977 = vadd.f32 %v8588, %v8859
        %v8978 = vadd.f32 %v8589, %v8864
        %v8979 = vadd.f32 %v8590, %v8869
        %v8980 = vadd.f32 %v8591, %v8874
        %v8981 = vadd.f32 %v8592, %v8879
        %v8982 = vadd.f32 %v8593, %v8884
        %v8983 = vadd.f32 %v8594, %v8889
        %v8984 = vadd.f32 %v8595, %v8894
        %v8985 = vadd.f32 %v8596, %v8899
        %v8986 = vadd.f32 %v8597, %v8904
        %v8987 = vadd.f32 %v8598, %v8909
        %v8988 = vadd.f32 %v8599, %v8914
        %v8989 = vadd.f32 %v8600, %v8919
        %v8990 = vadd.f32 %v8601, %v8924
        %v8991 = vadd.f32 %v8602, %v8929
        %v8992 = vadd.f32 %v8603, %v8934
        %v8993 = vadd.f32 %v8604, %v8939
        %v8994 = vadd.f32 %v8605, %v8944
        %v8995 = vadd.f32 %v8606, %v8949
        %v8996 = vadd.f32 %v8607, %v8954
        %v8997 = vadd.f32 %v8608, %v8959
        %v8998 = vadd.f32 %v8609, %v8964
        %v8999 = vmax.f32 %v8967, 0.0
        %v9000 = vmax.f32 %v8968, 0.0
        %v9001 = vmax.f32 %v8969, 0.0
        %v9002 = vmax.f32 %v8970, 0.0
        %v9003 = vmax.f32 %v8971, 0.0
        %v9004 = vmax.f32 %v8972, 0.0
        %v9005 = vmax.f32 %v8973, 0.0
        %v9006 = vmax.f32 %v8974, 0.0
        %v9007 = vmax.f32 %v8975, 0.0
        %v9008 = vmax.f32 %v8976, 0.0
        %v9009 = vmax.f32 %v8977, 0.0
        %v9010 = vmax.f32 %v8978, 0.0
        %v9011 = vmax.f32 %v8979, 0.0
        %v9012 = vmax.f32 %v8980, 0.0
        %v9013 = vmax.f32 %v8981, 0.0
        %v9014 = vmax.f32 %v8982, 0.0
        %v9015 = vmax.f32 %v8983, 0.0
        %v9016 = vmax.f32 %v8984, 0.0
        %v9017 = vmax.f32 %v8985, 0.0
        %v9018 = vmax.f32 %v8986, 0.0
        %v9019 = vmax.f32 %v8987, 0.0
        %v9020 = vmax.f32 %v8988, 0.0
        %v9021 = vmax.f32 %v8989, 0.0
        %v9022 = vmax.f32 %v8990, 0.0
        %v9023 = vmax.f32 %v8991, 0.0
        %v9024 = vmax.f32 %v8992, 0.0
        %v9025 = vmax.f32 %v8993, 0.0
        %v9026 = vmax.f32 %v8994, 0.0
        %v9027 = vmax.f32 %v8995, 0.0
        %v9028 = vmax.f32 %v8996, 0.0
        %v9029 = vmax.f32 %v8997, 0.0
        %v9030 = vmax.f32 %v8998, 0.0
        %9031 = vst [vmem:[%s244] sm:$0xff] %v8999
        %9032 = vst [vmem:[%s244 + $0x8] sm:$0xff] %v9000
        %9033 = vst [vmem:[%s244 + $0x10] sm:$0xff] %v9001
        %9034 = vst [vmem:[%s244 + $0x18] sm:$0xff] %v9002
        %9035 = vst [vmem:[%s244 + $0x20] sm:$0xff] %v9003
        %9036 = vst [vmem:[%s244 + $0x28] sm:$0xff] %v9004
        %9037 = vst [vmem:[%s244 + $0x30] sm:$0xff] %v9005
        %9038 = vst [vmem:[%s244 + $0x38] sm:$0xff] %v9006
        %9039 = vst [vmem:[%s244 + $0x40] sm:$0xff] %v9007
        %9040 = vst [vmem:[%s244 + $0x48] sm:$0xff] %v9008
        %9041 = vst [vmem:[%s244 + $0x50] sm:$0xff] %v9009
        %9042 = vst [vmem:[%s244 + $0x58] sm:$0xff] %v9010
        %9043 = vst [vmem:[%s244 + $0x60] sm:$0xff] %v9011
        %9044 = vst [vmem:[%s244 + $0x68] sm:$0xff] %v9012
        %9045 = vst [vmem:[%s244 + $0x70] sm:$0xff] %v9013
        %9046 = vst [vmem:[%s244 + $0x78] sm:$0xff] %v9014
        %9047 = vst [vmem:[%s244 + $0x80] sm:$0xff] %v9015
        %9048 = vst [vmem:[%s244 + $0x88] sm:$0xff] %v9016
        %9049 = vst [vmem:[%s244 + $0x90] sm:$0xff] %v9017
        %9050 = vst [vmem:[%s244 + $0x98] sm:$0xff] %v9018
        %9051 = vst [vmem:[%s244 + $0xa0] sm:$0xff] %v9019
        %9052 = vst [vmem:[%s244 + $0xa8] sm:$0xff] %v9020
        %9053 = vst [vmem:[%s244 + $0xb0] sm:$0xff] %v9021
        %9054 = vst [vmem:[%s244 + $0xb8] sm:$0xff] %v9022
        %9055 = vst [vmem:[%s244 + $0xc0] sm:$0xff] %v9023
        %9056 = vst [vmem:[%s244 + $0xc8] sm:$0xff] %v9024
        %9057 = vst [vmem:[%s244 + $0xd0] sm:$0xff] %v9025
        %9058 = vst [vmem:[%s244 + $0xd8] sm:$0xff] %v9026
        %9059 = vst [vmem:[%s244 + $0xe0] sm:$0xff] %v9027
        %9060 = vst [vmem:[%s244 + $0xe8] sm:$0xff] %v9028
        %9061 = vst [vmem:[%s244 + $0xf0] sm:$0xff] %v9029
        %9062 = vst [vmem:[%s244 + $0xf8] sm:$0xff] %v9030
        %s9063 = sand.u32 %s159, 1
        %s9064 = scalar_lea.sflag [#allocation4], %s9063
        %s9065 = sand.u32 %s159, 1
        %s9066 = smul.addr %s9065, 256
        %s9067 = scalar_lea.vmem [#allocation3], %s9066
        // Predicated region
        $region45: #{tpu_custom_call.1} parent=43 // pred_check
          %p9068 = pneg %p169
        $region46: #{tpu_custom_call.1} parent=43 // pred_check_branch
          %9070 = sbr.rel (%p9068) target = $region48
        $region47: #{tpu_custom_call.1} parent=43 // pred_region
          %s9072 = ssub.s32 4096, 4096
          %9073 = vsyncadd %s9064, %s9072
          %s9074 = smul.addr %s20, 32
          %s9075 = smul.addr %s9074, 128
          %s9076 = scalar_lea.hbm %s6, %s9075
          %s9077 = sshll.u32 %s9067, 4
          %s9078 = int_to_ptr.vmem [resolvable:$true] %s9077
          %9083 = dma.vmem_to_hbm [thread:$0]  %s9078, 4096, %s9076, %s9064, 128, 128, 8
        $region48: #{tpu_custom_call.1} parent=43 // pred_fallthru
          _
      $region44: #{tpu_custom_call.1} parent=5 // pred_fallthru
        _
      %p9084 = scmp.le.s32.totalorder 2, %s15
      // Predicated region
      $region49: #{tpu_custom_call.1} parent=5 // pred_check
        %p9085 = pneg %p9084
      $region50: #{tpu_custom_call.1} parent=5 // pred_check_branch
        %9087 = sbr.rel (%p9085) target = $region52
      $region51: #{tpu_custom_call.1} parent=5 // pred_region
        %s9088 = ssub.s32 %s15, 2
        // Predicated region
        $region53: #{tpu_custom_call.1} parent=51 // pred_check
          %p9089 = pneg %p175
        $region54: #{tpu_custom_call.1} parent=51 // pred_check_branch
          %9091 = sbr.rel (%p9089) target = $region56
        $region55: #{tpu_custom_call.1} parent=51 // pred_region
          %s9092 = sand.u32 %s160, 1
          %s9093 = scalar_lea.sflag [#allocation4], %s9092
          %s9094 = sand.u32 %s160, 1
          %s9095 = smul.addr %s9094, 256
          %s9096 = scalar_lea.vmem [#allocation3], %s9095
          %9097 = dma.done %s9093, 4096
        $region56: #{tpu_custom_call.1} parent=51 // pred_fallthru
          _
      $region52: #{tpu_custom_call.1} parent=5 // pred_fallthru
        _
    $region6: #{tpu_custom_call.1} parent=1 // loop_footer
      %s19 = sadd.s32 1, %s15
    $region7: #{tpu_custom_call.1} parent=1 // loop_footer_branch
      %14 = sbr.rel target = $region3
    $region8: #{tpu_custom_call.1} parent=1 // loop_exit
      _
    %9098 = vsyncpa [#allocation4], 1
    %s9099 = scalar_lea.sflag [#allocation4], 1
    %9100 = vsyncpa %s9099, 1

</llo_original>
